<compile_context>
chip_gen: v5e
topology: v5e:2x2
jax: 0.10.0
libtpu: 0.0.40
codegen_flags: <defaults>
</compile_context>

<pallas_src>
import functools

import jax
import jax.numpy as jnp
from jax.experimental import pallas as pl
from jax.experimental.pallas import tpu as pltpu


# Interior-first ordering of the 18 (halo-padded) pooled-conv1 columns inside the scratch:
# the 14 real columns come first so the single interior store starts at lane 0.
_WORDER = tuple(list(range(2, 16)) + [0, 1, 16, 17])


# ----------------------------- fused Pallas kernel ------------------------------


def _fused_cnn_kernel(img_ref, w1s_ref, b1t_ref, w2s_ref, b2t_ref, w3s_ref, b3p_ref,
                      o_ref, ppad_scr, *, bt):
    # img_ref : (1, 32*bt, 32) bf16  padded images, row = (y%2)*16*bt + (y//2)*bt + b, lane = x
    # w1s_ref : (160, 512)  bf16     banded conv1 weight: row = kh*32+x, col = dw*256+wp*16+c
    # b1t_ref : (1, 256)    f32      conv1 bias tiled over wp
    # w2s_ref : (1440, 512) bf16     banded conv2 weight: row = kh*288+q*16+cin (q = _WORDER pos),
    #                                col = dw2*256 + w2p*32 + cout
    # b2t_ref : (1, 256)    f32      conv2 bias tiled over w2p
    # w3s_ref : (7, 256, 128) bf16   linear weight per pooled row ho (rows = wo*32+cout, padded)
    # b3p_ref : (1, 128)    f32      linear bias (lane padded)
    # o_ref   : (1, bt, 128) f32     logits (lane dense; sliced to 10 in the wrapper)
    # ppad_scr: (18*bt, 288) bf16    pooled conv1 activations incl. conv2's zero halo
    nb = 14 * bt

    # ---- stage 1: conv1 as ONE banded matmul, then 2x2 maxpool + bias + ReLU ----------
    def _conv1_rows(dh):
        parts = []
        for kh in range(5):
            t = dh + kh                                   # padded-image row y = 2*hp + t
            off = ((t % 2) * 16 + t // 2) * bt            # contiguous, 16-row aligned slice
            parts.append(img_ref[0, off:off + nb, :])
        return jnp.concatenate(parts, axis=1)             # (14*bt, 160)

    x5 = jnp.concatenate([_conv1_rows(0), _conv1_rows(1)], axis=0)       # (28*bt, 160)
    c1 = jnp.dot(x5, w1s_ref[...], preferred_element_type=jnp.float32)   # (28*bt, 512)
    c1 = jnp.maximum(c1[:nb, :], c1[nb:, :])              # 2x2 pool: row (dh) pair
    c1 = jnp.maximum(c1[:, :256], c1[:, 256:])            # 2x2 pool: column (dw) pair
    # relu(maxpool(conv)+b) == maxpool(relu(conv+b)) because the bias is pool-window constant.
    pooled = jnp.maximum(c1 + b1t_ref[...], 0.0).astype(jnp.bfloat16)    # (14*bt, 256)

    # ---- stash pooled conv1 with conv2's zero halo (halo rows/lanes stay 0) ------------
    ppad_scr[...] = jnp.zeros_like(ppad_scr)
    ppad_scr[2 * bt:16 * bt, 0:224] = pooled[:, :224]

    # ---- stage 2: conv2 as ONE banded matmul (all 5 kh taps folded into K) -------------
    s = jnp.concatenate([ppad_scr[kh * bt:kh * bt + nb, :] for kh in range(5)],
                        axis=1)                                           # (14*bt, 1440)
    c2 = jnp.dot(s, w2s_ref[...], preferred_element_type=jnp.float32)     # (14*bt, 512)

    # ---- stage 3: 2x2 maxpool + bias + ReLU + linear, accumulated over the 7 rows ------
    b2t = b2t_ref[...]
    acc = jnp.zeros((bt, 128), jnp.float32)
    for ho in range(7):
        v = jnp.maximum(c2[(2 * ho) * bt:(2 * ho + 1) * bt, :],
                        c2[(2 * ho + 1) * bt:(2 * ho + 2) * bt, :])        # pool over dh2
        v = jnp.maximum(v[:, :256], v[:, 256:])                            # pool over dw2
        v = jnp.maximum(v + b2t, 0.0).astype(jnp.bfloat16)                 # (bt, 256)
        acc = acc + jnp.dot(v, w3s_ref[ho], preferred_element_type=jnp.float32)
    o_ref[0] = (acc + b3p_ref[...]).astype(o_ref.dtype)


def _fused_forward(img, w1s, b1t, w2s, b2t, w3s, b3p, *, bt, grid_g):
    kernel = functools.partial(_fused_cnn_kernel, bt=bt)
    return pl.pallas_call(
        kernel,
        out_shape=jax.ShapeDtypeStruct((grid_g, bt, 128), jnp.float32),
        grid_spec=pltpu.PrefetchScalarGridSpec(
            num_scalar_prefetch=0,
            grid=(grid_g,),
            in_specs=[
                pl.BlockSpec((1, 32 * bt, 32), lambda g: (g, 0, 0)),   # padded images
                pl.BlockSpec((160, 512), lambda g: (0, 0)),            # banded conv1 weight
                pl.BlockSpec((1, 256), lambda g: (0, 0)),              # conv1 bias (tiled)
                pl.BlockSpec((1440, 512), lambda g: (0, 0)),           # banded conv2 weight
                pl.BlockSpec((1, 256), lambda g: (0, 0)),              # conv2 bias (tiled)
                pl.BlockSpec((7, 256, 128), lambda g: (0, 0, 0)),      # linear weight
                pl.BlockSpec((1, 128), lambda g: (0, 0)),              # linear bias
            ],
            out_specs=pl.BlockSpec((1, bt, 128), lambda g: (g, 0, 0)),
            scratch_shapes=[pltpu.VMEM((18 * bt, 288), jnp.bfloat16)],
        ),
        compiler_params=pltpu.CompilerParams(
            dimension_semantics=("parallel",),
            vmem_limit_bytes=48 * 1024 * 1024,
        ),
    )(img, w1s, b1t, w2s, b2t, w3s, b3p)


# ------------------------------- weight preparation ----------------------------------


def _prep_conv1_weight(w1):
    """(5,5,1,16) -> (160, 512) banded weight: row = kh*32 + x_in, col = dw*256 + wp*16 + c."""
    x_in = jnp.arange(32)
    col_w1 = 2 * jnp.arange(16)[None, :] + jnp.arange(2)[:, None]        # (dw, wp) -> w1 column
    d = x_in[:, None, None] - col_w1[None, :, :]                          # (32, 2, 16)
    valid = (d >= 0) & (d <= 4) & (jnp.arange(16)[None, None, :] < 14)
    taps = jnp.take(w1[:, :, 0, :], jnp.clip(d, 0, 4), axis=1)            # (5, 32, 2, 16, 16)
    taps = jnp.where(valid[None, :, :, :, None], taps, 0.0)
    return taps.reshape(160, 512).astype(jnp.bfloat16)


def _prep_conv2_weight(w2):
    """(5,5,16,32) -> (1440, 512): row = kh*288 + q*16 + cin, col = dw2*256 + w2p*32 + cout."""
    w_in = jnp.arange(18)
    col_w2 = 2 * jnp.arange(8)[None, :] + jnp.arange(2)[:, None]          # (dw2, w2p) -> w2 column
    d = w_in[:, None, None] - col_w2[None, :, :]                           # (18, 2, 8)
    valid = (d >= 0) & (d <= 4) & (jnp.arange(8)[None, None, :] < 7)
    taps = jnp.take(w2, jnp.clip(d, 0, 4), axis=1)                         # (5, 18, 2, 8, 16, 32)
    taps = jnp.where(valid[None, :, :, :, None, None], taps, 0.0)
    taps = taps.transpose(0, 1, 4, 2, 3, 5)                                # (kh, w, cin, dw2, w2p, cout)
    taps = taps[:, jnp.array(_WORDER)]                                     # w -> scratch lane order
    return taps.reshape(1440, 512).astype(jnp.bfloat16)


def _prep_linear_weight(w3, b3):
    """PyTorch flatten order is cout*49 + ho*7 + wo -> per-ho (wo*32+cout, out) blocks."""
    n_out = w3.shape[1]
    w3r = w3.reshape(32, 7, 7, n_out).transpose(1, 2, 0, 3)                # (ho, wo, cout, out)
    w3s = w3r.reshape(7, 224, n_out)
    w3s = jnp.pad(w3s, ((0, 0), (0, 32), (0, 128 - n_out))).astype(jnp.bfloat16)
    b3p = jnp.pad(b3, (0, 128 - n_out)).reshape(1, 128).astype(jnp.float32)
    return w3s, b3p


# ------------------------------- JAX glue (wrapper) ----------------------------------


def _pick_bt(batch):
    # bf16 packs 16 rows per vreg: bt multiple of 16 keeps every in-kernel row slice a free view.
    return 16 if batch <= 16 else 32


def my_cnn_forward(x_nchw, params):
    w1, b1, w2, b2, w3, b3 = params            # w1:(5,5,1,16) w2:(5,5,16,32) w3:(1568,10)
    B = x_nchw.shape[0]
    assert x_nchw.shape[1:] == (1, 28, 28)
    bt = _pick_bt(B)
    grid_g = -(-B // bt)
    bp = grid_g * bt

    x = x_nchw.reshape(B, 28, 28)
    if bp != B:
        x = jnp.pad(x, ((0, bp - B), (0, 0), (0, 0)))
    xpad = jnp.pad(x, ((0, 0), (2, 2), (2, 2)))                            # (bp, 32, 32)
    # rows ordered (row parity, y//2, batch) so every conv1 tap slice is contiguous in-kernel
    img = (xpad.reshape(grid_g, bt, 16, 2, 32)
               .transpose(0, 3, 2, 1, 4)
               .reshape(grid_g, 32 * bt, 32)
               .astype(jnp.bfloat16))

    # one-time weight reshuffles (banded / pool-folded layouts)
    w1s = _prep_conv1_weight(w1)
    b1t = jnp.tile(b1.astype(jnp.float32), 16).reshape(1, 256)
    w2s = _prep_conv2_weight(w2)
    b2t = jnp.tile(b2.astype(jnp.float32), 8).reshape(1, 256)
    w3s, b3p = _prep_linear_weight(w3, b3)
    n_out = w3.shape[1]

    out = _fused_forward(img, w1s, b1t, w2s, b2t, w3s, b3p, bt=bt, grid_g=grid_g)
    return out.reshape(bp, 128)[:B, :n_out]


def _reference_forward(x_nchw, params):
    """Pure-JAX reference (XLA conv, f32) for correctness check."""
    w1, b1, w2, b2, w3, b3 = params

    def stage(x, w_hwio, b):
        w_oihw = jnp.transpose(w_hwio, (3, 2, 0, 1))
        y = jax.lax.conv_general_dilated(
            x, w_oihw, window_strides=(1, 1), padding=[(2, 2), (2, 2)],
            dimension_numbers=("NCHW", "OIHW", "NCHW"),
            precision=jax.lax.Precision.HIGHEST)
        y = jax.nn.relu(y + b.reshape(1, -1, 1, 1))
        B, C, H, W = y.shape
        return y.reshape(B, C, H // 2, 2, W // 2, 2).max(axis=(3, 5))

    y = stage(x_nchw, w1, b1)
    y = stage(y, w2, b2)
    flat = y.reshape(y.shape[0], -1)
    return jnp.dot(flat, w3, precision=jax.lax.Precision.HIGHEST) + b3


# ------------------------------------- main ------------------------------------------

if __name__ == "__main__":
    key = jax.random.PRNGKey(0)
    kx, k1, k2, k3, k4, k5, k6 = jax.random.split(key, 7)

    B = 2  # MNIST-sized input required by the 32*7*7 linear layer
    x = jax.random.normal(kx, (B, 1, 28, 28), dtype=jnp.float32)

    def u(k, shape, fan_in):
        bound = float(fan_in) ** -0.5
        return jax.random.uniform(k, shape, jnp.float32, -bound, bound)

    w1 = u(k1, (5, 5, 1, 16), 5 * 5 * 1)      # conv1 weight (KH, KW, Cin, Cout)
    b1 = u(k2, (16,), 5 * 5 * 1)
    w2 = u(k3, (5, 5, 16, 32), 5 * 5 * 16)    # conv2 weight
    b2 = u(k4, (32,), 5 * 5 * 16)
    w3 = u(k5, (32 * 7 * 7, 10), 32 * 7 * 7)  # linear weight (in, out)
    b3 = u(k6, (10,), 32 * 7 * 7)
    params = (w1, b1, w2, b2, w3, b3)

    out = jax.jit(my_cnn_forward)(x, params)
    out = jax.block_until_ready(out)
    assert out.shape == (B, 10) and out.dtype == jnp.float32

    ref = _reference_forward(x, params)
    assert jnp.allclose(out, ref, rtol=2e-2, atol=2e-2), float(jnp.max(jnp.abs(out - ref)))

    print("KERNEL_OK")
</pallas_src>

<mosaic_0001>
module attributes {stable_mosaic.version = 11 : i64} {
  func.func @_fused_cnn_kernel(%arg0: i32, %arg1: memref<1x512x32xbf16, #tpu.memory_space<vmem>>, %arg2: memref<160x512xbf16, #tpu.memory_space<vmem>>, %arg3: memref<1x256xf32, #tpu.memory_space<vmem>>, %arg4: memref<1440x512xbf16, #tpu.memory_space<vmem>>, %arg5: memref<1x256xf32, #tpu.memory_space<vmem>>, %arg6: memref<7x256x128xbf16, #tpu.memory_space<vmem>>, %arg7: memref<1x128xf32, #tpu.memory_space<vmem>>, %arg8: memref<1x16x128xf32, #tpu.memory_space<vmem>>, %arg9: memref<288x288xbf16, #tpu.memory_space<vmem>>) attributes {dimension_semantics = [#tpu.dimension_semantics<parallel>], iteration_bounds = array<i64: 1>, scalar_prefetch = 0 : i64, scratch_operands = 1 : i64, tpu.core_type = #tpu.core_type<tc>, window_params = [{transform_indices = @transform_0, window_bounds = array<i64: 1, 512, 32>}, {pipeline_mode = #tpu.pipeline_mode<synchronous>, transform_indices = @transform_1, window_bounds = array<i64: 160, 512>}, {pipeline_mode = #tpu.pipeline_mode<synchronous>, transform_indices = @transform_2, window_bounds = array<i64: 1, 256>}, {pipeline_mode = #tpu.pipeline_mode<synchronous>, transform_indices = @transform_3, window_bounds = array<i64: 1440, 512>}, {pipeline_mode = #tpu.pipeline_mode<synchronous>, transform_indices = @transform_4, window_bounds = array<i64: 1, 256>}, {pipeline_mode = #tpu.pipeline_mode<synchronous>, transform_indices = @transform_5, window_bounds = array<i64: 7, 256, 128>}, {pipeline_mode = #tpu.pipeline_mode<synchronous>, transform_indices = @transform_6, window_bounds = array<i64: 1, 128>}, {transform_indices = @transform_7, window_bounds = array<i64: 1, 16, 128>}]} {
    %c0 = arith.constant 0 : index
    %c0_0 = arith.constant 0 : index
    %c0_1 = arith.constant 0 : index
    %0 = vector.load %arg1[%c0, %c0_0, %c0_1] : memref<1x512x32xbf16, #tpu.memory_space<vmem>>, vector<1x224x32xbf16>
    %1 = vector.shape_cast %0 : vector<1x224x32xbf16> to vector<224x32xbf16>
    %c0_2 = arith.constant 0 : index
    %c256 = arith.constant 256 : index
    %c0_3 = arith.constant 0 : index
    %2 = vector.load %arg1[%c0_2, %c256, %c0_3] : memref<1x512x32xbf16, #tpu.memory_space<vmem>>, vector<1x224x32xbf16>
    %3 = vector.shape_cast %2 : vector<1x224x32xbf16> to vector<224x32xbf16>
    %c0_4 = arith.constant 0 : index
    %c16 = arith.constant 16 : index
    %c0_5 = arith.constant 0 : index
    %4 = vector.load %arg1[%c0_4, %c16, %c0_5] : memref<1x512x32xbf16, #tpu.memory_space<vmem>>, vector<1x224x32xbf16>
    %5 = vector.shape_cast %4 : vector<1x224x32xbf16> to vector<224x32xbf16>
    %c0_6 = arith.constant 0 : index
    %c272 = arith.constant 272 : index
    %c0_7 = arith.constant 0 : index
    %6 = vector.load %arg1[%c0_6, %c272, %c0_7] : memref<1x512x32xbf16, #tpu.memory_space<vmem>>, vector<1x224x32xbf16>
    %7 = vector.shape_cast %6 : vector<1x224x32xbf16> to vector<224x32xbf16>
    %c0_8 = arith.constant 0 : index
    %c32 = arith.constant 32 : index
    %c0_9 = arith.constant 0 : index
    %8 = vector.load %arg1[%c0_8, %c32, %c0_9] : memref<1x512x32xbf16, #tpu.memory_space<vmem>>, vector<1x224x32xbf16>
    %9 = vector.shape_cast %8 : vector<1x224x32xbf16> to vector<224x32xbf16>
    %10 = tpu.concatenate %1, %3, %5, %7, %9 in 1 : vector<224x32xbf16>, vector<224x32xbf16>, vector<224x32xbf16>, vector<224x32xbf16>, vector<224x32xbf16> -> vector<224x160xbf16>
    %c0_10 = arith.constant 0 : index
    %c256_11 = arith.constant 256 : index
    %c0_12 = arith.constant 0 : index
    %11 = vector.load %arg1[%c0_10, %c256_11, %c0_12] : memref<1x512x32xbf16, #tpu.memory_space<vmem>>, vector<1x224x32xbf16>
    %12 = vector.shape_cast %11 : vector<1x224x32xbf16> to vector<224x32xbf16>
    %c0_13 = arith.constant 0 : index
    %c16_14 = arith.constant 16 : index
    %c0_15 = arith.constant 0 : index
    %13 = vector.load %arg1[%c0_13, %c16_14, %c0_15] : memref<1x512x32xbf16, #tpu.memory_space<vmem>>, vector<1x224x32xbf16>
    %14 = vector.shape_cast %13 : vector<1x224x32xbf16> to vector<224x32xbf16>
    %c0_16 = arith.constant 0 : index
    %c272_17 = arith.constant 272 : index
    %c0_18 = arith.constant 0 : index
    %15 = vector.load %arg1[%c0_16, %c272_17, %c0_18] : memref<1x512x32xbf16, #tpu.memory_space<vmem>>, vector<1x224x32xbf16>
    %16 = vector.shape_cast %15 : vector<1x224x32xbf16> to vector<224x32xbf16>
    %c0_19 = arith.constant 0 : index
    %c32_20 = arith.constant 32 : index
    %c0_21 = arith.constant 0 : index
    %17 = vector.load %arg1[%c0_19, %c32_20, %c0_21] : memref<1x512x32xbf16, #tpu.memory_space<vmem>>, vector<1x224x32xbf16>
    %18 = vector.shape_cast %17 : vector<1x224x32xbf16> to vector<224x32xbf16>
    %c0_22 = arith.constant 0 : index
    %c288 = arith.constant 288 : index
    %c0_23 = arith.constant 0 : index
    %19 = vector.load %arg1[%c0_22, %c288, %c0_23] : memref<1x512x32xbf16, #tpu.memory_space<vmem>>, vector<1x224x32xbf16>
    %20 = vector.shape_cast %19 : vector<1x224x32xbf16> to vector<224x32xbf16>
    %21 = tpu.concatenate %12, %14, %16, %18, %20 in 1 : vector<224x32xbf16>, vector<224x32xbf16>, vector<224x32xbf16>, vector<224x32xbf16>, vector<224x32xbf16> -> vector<224x160xbf16>
    %22 = tpu.concatenate %10, %21 in 0 : vector<224x160xbf16>, vector<224x160xbf16> -> vector<448x160xbf16>
    %c0_24 = arith.constant 0 : index
    %c0_25 = arith.constant 0 : index
    %23 = vector.load %arg2[%c0_24, %c0_25] : memref<160x512xbf16, #tpu.memory_space<vmem>>, vector<160x512xbf16>
    %cst = arith.constant dense<0.000000e+00> : vector<448x512xf32>
    %24 = tpu.matmul %22, %23, %cst {dimension_numbers = #tpu.dot_dimension_numbers<[1], [0], [0], [1], [0, 0, 1, 1], [], []>} : vector<448x160xbf16>, vector<160x512xbf16>, vector<448x512xf32> -> vector<448x512xf32>
    %25 = vector.extract_strided_slice %24 {offsets = [0, 0], sizes = [224, 512], strides = [1, 1]} : vector<448x512xf32> to vector<224x512xf32>
    %26 = vector.extract_strided_slice %24 {offsets = [224, 0], sizes = [224, 512], strides = [1, 1]} : vector<448x512xf32> to vector<224x512xf32>
    %27 = arith.maximumf %25, %26 : vector<224x512xf32>
    %28 = vector.extract_strided_slice %27 {offsets = [0, 0], sizes = [224, 256], strides = [1, 1]} : vector<224x512xf32> to vector<224x256xf32>
    %29 = vector.extract_strided_slice %27 {offsets = [0, 256], sizes = [224, 256], strides = [1, 1]} : vector<224x512xf32> to vector<224x256xf32>
    %30 = arith.maximumf %28, %29 : vector<224x256xf32>
    %c0_26 = arith.constant 0 : index
    %c0_27 = arith.constant 0 : index
    %31 = vector.load %arg3[%c0_26, %c0_27] : memref<1x256xf32, #tpu.memory_space<vmem>>, vector<1x256xf32>
    %32 = vector.broadcast %31 : vector<1x256xf32> to vector<224x256xf32>
    %33 = arith.addf %30, %32 : vector<224x256xf32>
    %cst_28 = arith.constant 0.000000e+00 : f32
    %34 = vector.broadcast %cst_28 : f32 to vector<224x256xf32>
    %35 = arith.maximumf %33, %34 : vector<224x256xf32>
    %36 = arith.truncf %35 : vector<224x256xf32> to vector<224x256xbf16>
    %cst_29 = arith.constant 0.000000e+00 : bf16
    %37 = vector.broadcast %cst_29 : bf16 to vector<288x288xbf16>
    %c0_30 = arith.constant 0 : index
    %c0_31 = arith.constant 0 : index
    %38 = vector.load %arg9[%c0_30, %c0_31] : memref<288x288xbf16, #tpu.memory_space<vmem>>, vector<288x288xbf16>
    tpu.vector_store %arg9[%c0_30, %c0_31], %37 {strides = array<i32>} : memref<288x288xbf16, #tpu.memory_space<vmem>>, vector<288x288xbf16>,
    %39 = vector.extract_strided_slice %36 {offsets = [0, 0], sizes = [224, 224], strides = [1, 1]} : vector<224x256xbf16> to vector<224x224xbf16>
    %c32_32 = arith.constant 32 : index
    %c0_33 = arith.constant 0 : index
    %40 = vector.load %arg9[%c32_32, %c0_33] : memref<288x288xbf16, #tpu.memory_space<vmem>>, vector<224x224xbf16>
    tpu.vector_store %arg9[%c32_32, %c0_33], %39 {strides = array<i32>} : memref<288x288xbf16, #tpu.memory_space<vmem>>, vector<224x224xbf16>,
    %c0_34 = arith.constant 0 : index
    %c0_35 = arith.constant 0 : index
    %41 = vector.load %arg9[%c0_34, %c0_35] : memref<288x288xbf16, #tpu.memory_space<vmem>>, vector<224x288xbf16>
    %c16_36 = arith.constant 16 : index
    %c0_37 = arith.constant 0 : index
    %42 = vector.load %arg9[%c16_36, %c0_37] : memref<288x288xbf16, #tpu.memory_space<vmem>>, vector<224x288xbf16>
    %c32_38 = arith.constant 32 : index
    %c0_39 = arith.constant 0 : index
    %43 = vector.load %arg9[%c32_38, %c0_39] : memref<288x288xbf16, #tpu.memory_space<vmem>>, vector<224x288xbf16>
    %c48 = arith.constant 48 : index
    %c0_40 = arith.constant 0 : index
    %44 = vector.load %arg9[%c48, %c0_40] : memref<288x288xbf16, #tpu.memory_space<vmem>>, vector<224x288xbf16>
    %c64 = arith.constant 64 : index
    %c0_41 = arith.constant 0 : index
    %45 = vector.load %arg9[%c64, %c0_41] : memref<288x288xbf16, #tpu.memory_space<vmem>>, vector<224x288xbf16>
    %46 = tpu.concatenate %41, %42, %43, %44, %45 in 1 : vector<224x288xbf16>, vector<224x288xbf16>, vector<224x288xbf16>, vector<224x288xbf16>, vector<224x288xbf16> -> vector<224x1440xbf16>
    %c0_42 = arith.constant 0 : index
    %c0_43 = arith.constant 0 : index
    %47 = vector.load %arg4[%c0_42, %c0_43] : memref<1440x512xbf16, #tpu.memory_space<vmem>>, vector<1440x512xbf16>
    %cst_44 = arith.constant dense<0.000000e+00> : vector<224x512xf32>
    %48 = tpu.matmul %46, %47, %cst_44 {dimension_numbers = #tpu.dot_dimension_numbers<[1], [0], [0], [1], [0, 0, 1, 1], [], []>} : vector<224x1440xbf16>, vector<1440x512xbf16>, vector<224x512xf32> -> vector<224x512xf32>
    %c0_45 = arith.constant 0 : index
    %c0_46 = arith.constant 0 : index
    %49 = vector.load %arg5[%c0_45, %c0_46] : memref<1x256xf32, #tpu.memory_space<vmem>>, vector<1x256xf32>
    %cst_47 = arith.constant 0.000000e+00 : f32
    %50 = vector.broadcast %cst_47 : f32 to vector<16x128xf32>
    %51 = vector.extract_strided_slice %48 {offsets = [0, 0], sizes = [16, 512], strides = [1, 1]} : vector<224x512xf32> to vector<16x512xf32>
    %52 = vector.extract_strided_slice %48 {offsets = [16, 0], sizes = [16, 512], strides = [1, 1]} : vector<224x512xf32> to vector<16x512xf32>
    %53 = arith.maximumf %51, %52 : vector<16x512xf32>
    %54 = vector.extract_strided_slice %53 {offsets = [0, 0], sizes = [16, 256], strides = [1, 1]} : vector<16x512xf32> to vector<16x256xf32>
    %55 = vector.extract_strided_slice %53 {offsets = [0, 256], sizes = [16, 256], strides = [1, 1]} : vector<16x512xf32> to vector<16x256xf32>
    %56 = arith.maximumf %54, %55 : vector<16x256xf32>
    %57 = vector.broadcast %49 : vector<1x256xf32> to vector<16x256xf32>
    %58 = arith.addf %56, %57 : vector<16x256xf32>
    %cst_48 = arith.constant 0.000000e+00 : f32
    %59 = vector.broadcast %cst_48 : f32 to vector<16x256xf32>
    %60 = arith.maximumf %58, %59 : vector<16x256xf32>
    %61 = arith.truncf %60 : vector<16x256xf32> to vector<16x256xbf16>
    %c0_49 = arith.constant 0 : index
    %c0_50 = arith.constant 0 : index
    %c0_51 = arith.constant 0 : index
    %62 = vector.load %arg6[%c0_49, %c0_50, %c0_51] : memref<7x256x128xbf16, #tpu.memory_space<vmem>>, vector<1x256x128xbf16>
    %63 = vector.shape_cast %62 : vector<1x256x128xbf16> to vector<256x128xbf16>
    %cst_52 = arith.constant dense<0.000000e+00> : vector<16x128xf32>
    %64 = tpu.matmul %61, %63, %cst_52 {dimension_numbers = #tpu.dot_dimension_numbers<[1], [0], [0], [1], [0, 0, 1, 1], [], []>} : vector<16x256xbf16>, vector<256x128xbf16>, vector<16x128xf32> -> vector<16x128xf32>
    %65 = arith.addf %50, %64 : vector<16x128xf32>
    %66 = vector.extract_strided_slice %48 {offsets = [32, 0], sizes = [16, 512], strides = [1, 1]} : vector<224x512xf32> to vector<16x512xf32>
    %67 = vector.extract_strided_slice %48 {offsets = [48, 0], sizes = [16, 512], strides = [1, 1]} : vector<224x512xf32> to vector<16x512xf32>
    %68 = arith.maximumf %66, %67 : vector<16x512xf32>
    %69 = vector.extract_strided_slice %68 {offsets = [0, 0], sizes = [16, 256], strides = [1, 1]} : vector<16x512xf32> to vector<16x256xf32>
    %70 = vector.extract_strided_slice %68 {offsets = [0, 256], sizes = [16, 256], strides = [1, 1]} : vector<16x512xf32> to vector<16x256xf32>
    %71 = arith.maximumf %69, %70 : vector<16x256xf32>
    %72 = vector.broadcast %49 : vector<1x256xf32> to vector<16x256xf32>
    %73 = arith.addf %71, %72 : vector<16x256xf32>
    %cst_53 = arith.constant 0.000000e+00 : f32
    %74 = vector.broadcast %cst_53 : f32 to vector<16x256xf32>
    %75 = arith.maximumf %73, %74 : vector<16x256xf32>
    %76 = arith.truncf %75 : vector<16x256xf32> to vector<16x256xbf16>
    %c1 = arith.constant 1 : index
    %c0_54 = arith.constant 0 : index
    %c0_55 = arith.constant 0 : index
    %77 = vector.load %arg6[%c1, %c0_54, %c0_55] : memref<7x256x128xbf16, #tpu.memory_space<vmem>>, vector<1x256x128xbf16>
    %78 = vector.shape_cast %77 : vector<1x256x128xbf16> to vector<256x128xbf16>
    %cst_56 = arith.constant dense<0.000000e+00> : vector<16x128xf32>
    %79 = tpu.matmul %76, %78, %cst_56 {dimension_numbers = #tpu.dot_dimension_numbers<[1], [0], [0], [1], [0, 0, 1, 1], [], []>} : vector<16x256xbf16>, vector<256x128xbf16>, vector<16x128xf32> -> vector<16x128xf32>
    %80 = arith.addf %65, %79 : vector<16x128xf32>
    %81 = vector.extract_strided_slice %48 {offsets = [64, 0], sizes = [16, 512], strides = [1, 1]} : vector<224x512xf32> to vector<16x512xf32>
    %82 = vector.extract_strided_slice %48 {offsets = [80, 0], sizes = [16, 512], strides = [1, 1]} : vector<224x512xf32> to vector<16x512xf32>
    %83 = arith.maximumf %81, %82 : vector<16x512xf32>
    %84 = vector.extract_strided_slice %83 {offsets = [0, 0], sizes = [16, 256], strides = [1, 1]} : vector<16x512xf32> to vector<16x256xf32>
    %85 = vector.extract_strided_slice %83 {offsets = [0, 256], sizes = [16, 256], strides = [1, 1]} : vector<16x512xf32> to vector<16x256xf32>
    %86 = arith.maximumf %84, %85 : vector<16x256xf32>
    %87 = vector.broadcast %49 : vector<1x256xf32> to vector<16x256xf32>
    %88 = arith.addf %86, %87 : vector<16x256xf32>
    %cst_57 = arith.constant 0.000000e+00 : f32
    %89 = vector.broadcast %cst_57 : f32 to vector<16x256xf32>
    %90 = arith.maximumf %88, %89 : vector<16x256xf32>
    %91 = arith.truncf %90 : vector<16x256xf32> to vector<16x256xbf16>
    %c2 = arith.constant 2 : index
    %c0_58 = arith.constant 0 : index
    %c0_59 = arith.constant 0 : index
    %92 = vector.load %arg6[%c2, %c0_58, %c0_59] : memref<7x256x128xbf16, #tpu.memory_space<vmem>>, vector<1x256x128xbf16>
    %93 = vector.shape_cast %92 : vector<1x256x128xbf16> to vector<256x128xbf16>
    %cst_60 = arith.constant dense<0.000000e+00> : vector<16x128xf32>
    %94 = tpu.matmul %91, %93, %cst_60 {dimension_numbers = #tpu.dot_dimension_numbers<[1], [0], [0], [1], [0, 0, 1, 1], [], []>} : vector<16x256xbf16>, vector<256x128xbf16>, vector<16x128xf32> -> vector<16x128xf32>
    %95 = arith.addf %80, %94 : vector<16x128xf32>
    %96 = vector.extract_strided_slice %48 {offsets = [96, 0], sizes = [16, 512], strides = [1, 1]} : vector<224x512xf32> to vector<16x512xf32>
    %97 = vector.extract_strided_slice %48 {offsets = [112, 0], sizes = [16, 512], strides = [1, 1]} : vector<224x512xf32> to vector<16x512xf32>
    %98 = arith.maximumf %96, %97 : vector<16x512xf32>
    %99 = vector.extract_strided_slice %98 {offsets = [0, 0], sizes = [16, 256], strides = [1, 1]} : vector<16x512xf32> to vector<16x256xf32>
    %100 = vector.extract_strided_slice %98 {offsets = [0, 256], sizes = [16, 256], strides = [1, 1]} : vector<16x512xf32> to vector<16x256xf32>
    %101 = arith.maximumf %99, %100 : vector<16x256xf32>
    %102 = vector.broadcast %49 : vector<1x256xf32> to vector<16x256xf32>
    %103 = arith.addf %101, %102 : vector<16x256xf32>
    %cst_61 = arith.constant 0.000000e+00 : f32
    %104 = vector.broadcast %cst_61 : f32 to vector<16x256xf32>
    %105 = arith.maximumf %103, %104 : vector<16x256xf32>
    %106 = arith.truncf %105 : vector<16x256xf32> to vector<16x256xbf16>
    %c3 = arith.constant 3 : index
    %c0_62 = arith.constant 0 : index
    %c0_63 = arith.constant 0 : index
    %107 = vector.load %arg6[%c3, %c0_62, %c0_63] : memref<7x256x128xbf16, #tpu.memory_space<vmem>>, vector<1x256x128xbf16>
    %108 = vector.shape_cast %107 : vector<1x256x128xbf16> to vector<256x128xbf16>
    %cst_64 = arith.constant dense<0.000000e+00> : vector<16x128xf32>
    %109 = tpu.matmul %106, %108, %cst_64 {dimension_numbers = #tpu.dot_dimension_numbers<[1], [0], [0], [1], [0, 0, 1, 1], [], []>} : vector<16x256xbf16>, vector<256x128xbf16>, vector<16x128xf32> -> vector<16x128xf32>
    %110 = arith.addf %95, %109 : vector<16x128xf32>
    %111 = vector.extract_strided_slice %48 {offsets = [128, 0], sizes = [16, 512], strides = [1, 1]} : vector<224x512xf32> to vector<16x512xf32>
    %112 = vector.extract_strided_slice %48 {offsets = [144, 0], sizes = [16, 512], strides = [1, 1]} : vector<224x512xf32> to vector<16x512xf32>
    %113 = arith.maximumf %111, %112 : vector<16x512xf32>
    %114 = vector.extract_strided_slice %113 {offsets = [0, 0], sizes = [16, 256], strides = [1, 1]} : vector<16x512xf32> to vector<16x256xf32>
    %115 = vector.extract_strided_slice %113 {offsets = [0, 256], sizes = [16, 256], strides = [1, 1]} : vector<16x512xf32> to vector<16x256xf32>
    %116 = arith.maximumf %114, %115 : vector<16x256xf32>
    %117 = vector.broadcast %49 : vector<1x256xf32> to vector<16x256xf32>
    %118 = arith.addf %116, %117 : vector<16x256xf32>
    %cst_65 = arith.constant 0.000000e+00 : f32
    %119 = vector.broadcast %cst_65 : f32 to vector<16x256xf32>
    %120 = arith.maximumf %118, %119 : vector<16x256xf32>
    %121 = arith.truncf %120 : vector<16x256xf32> to vector<16x256xbf16>
    %c4 = arith.constant 4 : index
    %c0_66 = arith.constant 0 : index
    %c0_67 = arith.constant 0 : index
    %122 = vector.load %arg6[%c4, %c0_66, %c0_67] : memref<7x256x128xbf16, #tpu.memory_space<vmem>>, vector<1x256x128xbf16>
    %123 = vector.shape_cast %122 : vector<1x256x128xbf16> to vector<256x128xbf16>
    %cst_68 = arith.constant dense<0.000000e+00> : vector<16x128xf32>
    %124 = tpu.matmul %121, %123, %cst_68 {dimension_numbers = #tpu.dot_dimension_numbers<[1], [0], [0], [1], [0, 0, 1, 1], [], []>} : vector<16x256xbf16>, vector<256x128xbf16>, vector<16x128xf32> -> vector<16x128xf32>
    %125 = arith.addf %110, %124 : vector<16x128xf32>
    %126 = vector.extract_strided_slice %48 {offsets = [160, 0], sizes = [16, 512], strides = [1, 1]} : vector<224x512xf32> to vector<16x512xf32>
    %127 = vector.extract_strided_slice %48 {offsets = [176, 0], sizes = [16, 512], strides = [1, 1]} : vector<224x512xf32> to vector<16x512xf32>
    %128 = arith.maximumf %126, %127 : vector<16x512xf32>
    %129 = vector.extract_strided_slice %128 {offsets = [0, 0], sizes = [16, 256], strides = [1, 1]} : vector<16x512xf32> to vector<16x256xf32>
    %130 = vector.extract_strided_slice %128 {offsets = [0, 256], sizes = [16, 256], strides = [1, 1]} : vector<16x512xf32> to vector<16x256xf32>
    %131 = arith.maximumf %129, %130 : vector<16x256xf32>
    %132 = vector.broadcast %49 : vector<1x256xf32> to vector<16x256xf32>
    %133 = arith.addf %131, %132 : vector<16x256xf32>
    %cst_69 = arith.constant 0.000000e+00 : f32
    %134 = vector.broadcast %cst_69 : f32 to vector<16x256xf32>
    %135 = arith.maximumf %133, %134 : vector<16x256xf32>
    %136 = arith.truncf %135 : vector<16x256xf32> to vector<16x256xbf16>
    %c5 = arith.constant 5 : index
    %c0_70 = arith.constant 0 : index
    %c0_71 = arith.constant 0 : index
    %137 = vector.load %arg6[%c5, %c0_70, %c0_71] : memref<7x256x128xbf16, #tpu.memory_space<vmem>>, vector<1x256x128xbf16>
    %138 = vector.shape_cast %137 : vector<1x256x128xbf16> to vector<256x128xbf16>
    %cst_72 = arith.constant dense<0.000000e+00> : vector<16x128xf32>
    %139 = tpu.matmul %136, %138, %cst_72 {dimension_numbers = #tpu.dot_dimension_numbers<[1], [0], [0], [1], [0, 0, 1, 1], [], []>} : vector<16x256xbf16>, vector<256x128xbf16>, vector<16x128xf32> -> vector<16x128xf32>
    %140 = arith.addf %125, %139 : vector<16x128xf32>
    %141 = vector.extract_strided_slice %48 {offsets = [192, 0], sizes = [16, 512], strides = [1, 1]} : vector<224x512xf32> to vector<16x512xf32>
    %142 = vector.extract_strided_slice %48 {offsets = [208, 0], sizes = [16, 512], strides = [1, 1]} : vector<224x512xf32> to vector<16x512xf32>
    %143 = arith.maximumf %141, %142 : vector<16x512xf32>
    %144 = vector.extract_strided_slice %143 {offsets = [0, 0], sizes = [16, 256], strides = [1, 1]} : vector<16x512xf32> to vector<16x256xf32>
    %145 = vector.extract_strided_slice %143 {offsets = [0, 256], sizes = [16, 256], strides = [1, 1]} : vector<16x512xf32> to vector<16x256xf32>
    %146 = arith.maximumf %144, %145 : vector<16x256xf32>
    %147 = vector.broadcast %49 : vector<1x256xf32> to vector<16x256xf32>
    %148 = arith.addf %146, %147 : vector<16x256xf32>
    %cst_73 = arith.constant 0.000000e+00 : f32
    %149 = vector.broadcast %cst_73 : f32 to vector<16x256xf32>
    %150 = arith.maximumf %148, %149 : vector<16x256xf32>
    %151 = arith.truncf %150 : vector<16x256xf32> to vector<16x256xbf16>
    %c6 = arith.constant 6 : index
    %c0_74 = arith.constant 0 : index
    %c0_75 = arith.constant 0 : index
    %152 = vector.load %arg6[%c6, %c0_74, %c0_75] : memref<7x256x128xbf16, #tpu.memory_space<vmem>>, vector<1x256x128xbf16>
    %153 = vector.shape_cast %152 : vector<1x256x128xbf16> to vector<256x128xbf16>
    %cst_76 = arith.constant dense<0.000000e+00> : vector<16x128xf32>
    %154 = tpu.matmul %151, %153, %cst_76 {dimension_numbers = #tpu.dot_dimension_numbers<[1], [0], [0], [1], [0, 0, 1, 1], [], []>} : vector<16x256xbf16>, vector<256x128xbf16>, vector<16x128xf32> -> vector<16x128xf32>
    %155 = arith.addf %140, %154 : vector<16x128xf32>
    %c0_77 = arith.constant 0 : index
    %c0_78 = arith.constant 0 : index
    %156 = vector.load %arg7[%c0_77, %c0_78] : memref<1x128xf32, #tpu.memory_space<vmem>>, vector<1x128xf32>
    %157 = vector.broadcast %156 : vector<1x128xf32> to vector<16x128xf32>
    %158 = arith.addf %155, %157 : vector<16x128xf32>
    %c0_79 = arith.constant 0 : index
    %c0_80 = arith.constant 0 : index
    %c0_81 = arith.constant 0 : index
    %159 = vector.load %arg8[%c0_79, %c0_80, %c0_81] : memref<1x16x128xf32, #tpu.memory_space<vmem>>, vector<1x16x128xf32>
    %160 = vector.shape_cast %159 : vector<1x16x128xf32> to vector<16x128xf32>
    %161 = vector.shape_cast %158 : vector<16x128xf32> to vector<1x16x128xf32>
    tpu.vector_store %arg8[%c0_79, %c0_80, %c0_81], %161 {strides = array<i32>} : memref<1x16x128xf32, #tpu.memory_space<vmem>>, vector<1x16x128xf32>,
    return
  }
  func.func @transform_0(%arg0: i32) -> (i32, i32, i32) {
    %c0_i32 = arith.constant 0 : i32
    %c0_i32_0 = arith.constant 0 : i32
    %c0_i32_1 = arith.constant 0 : i32
    return %arg0, %c0_i32, %c0_i32_0 : i32, i32, i32
  }
  func.func @transform_1(%arg0: i32) -> (i32, i32) {
    %c0_i32 = arith.constant 0 : i32
    %c0_i32_0 = arith.constant 0 : i32
    %c0_i32_1 = arith.constant 0 : i32
    return %c0_i32, %c0_i32_0 : i32, i32
  }
  func.func @transform_2(%arg0: i32) -> (i32, i32) {
    %c0_i32 = arith.constant 0 : i32
    %c0_i32_0 = arith.constant 0 : i32
    %c0_i32_1 = arith.constant 0 : i32
    return %c0_i32, %c0_i32_0 : i32, i32
  }
  func.func @transform_3(%arg0: i32) -> (i32, i32) {
    %c0_i32 = arith.constant 0 : i32
    %c0_i32_0 = arith.constant 0 : i32
    %c0_i32_1 = arith.constant 0 : i32
    return %c0_i32, %c0_i32_0 : i32, i32
  }
  func.func @transform_4(%arg0: i32) -> (i32, i32) {
    %c0_i32 = arith.constant 0 : i32
    %c0_i32_0 = arith.constant 0 : i32
    %c0_i32_1 = arith.constant 0 : i32
    return %c0_i32, %c0_i32_0 : i32, i32
  }
  func.func @transform_5(%arg0: i32) -> (i32, i32, i32) {
    %c0_i32 = arith.constant 0 : i32
    %c0_i32_0 = arith.constant 0 : i32
    %c0_i32_1 = arith.constant 0 : i32
    %c0_i32_2 = arith.constant 0 : i32
    return %c0_i32, %c0_i32_0, %c0_i32_1 : i32, i32, i32
  }
  func.func @transform_6(%arg0: i32) -> (i32, i32) {
    %c0_i32 = arith.constant 0 : i32
    %c0_i32_0 = arith.constant 0 : i32
    %c0_i32_1 = arith.constant 0 : i32
    return %c0_i32, %c0_i32_0 : i32, i32
  }
  func.func @transform_7(%arg0: i32) -> (i32, i32, i32) {
    %c0_i32 = arith.constant 0 : i32
    %c0_i32_0 = arith.constant 0 : i32
    %c0_i32_1 = arith.constant 0 : i32
    return %arg0, %c0_i32, %c0_i32_0 : i32, i32, i32
  }
}

</mosaic_0001>

<llo_original>
// kernel: tile.13
$region0: #{tile.13}
  #allocation0 [shape = 's32[1]{0}', space=sflag, size = 0x4, scoped, tag = 'scoped memory for tile.13']
  %s0 = inlined_call_operand.vmem [shape: f32[16], index: 0, kind: input, shape index: {}]
  %s1 = inlined_call_operand.vmem [shape: f32[16,16], index: 1, kind: output, shape index: {}]
  // Predicated region
  $region2: #{tile.13} parent=0 // pred_check
    _
  $region3: #{tile.13} parent=0 // pred_check_branch
    %3 = sbr.rel (0) target = $region5
  $region4: #{tile.13} parent=0 // pred_region
    _
  $region5: #{tile.13} parent=0 // pred_fallthru
    _
  %v4 = vld [vmem:[%s0] ss:$0 sm:$0xff]
  %5 = vst [vmem:[%s1] sm:$0xff] %v4
  %s6 = scalar_lea.vmem %s1, 8
  %7 = vst [vmem:[%s6] sm:$0xff] %v4

// kernel: tile.14
$region0: #{tile.14}
  %s0 = inlined_call_operand.vmem [shape: f32[16,16], index: 0, kind: input, shape index: {}]
  %s1 = inlined_call_operand.vmem [shape: f32[1,256], index: 1, kind: output, shape index: {}]
  $region1: #{tile.14} parent=0
    #allocation0 [shape = 'u8[8192]{0}', space=vmem, size = 0x2000, scoped, tag = 'scoped mem for output reshape']
    %s2 = smov 3
    %v3 = vld [vmem:[%s0] ss:$8 sm:%s2]
    %vm4 = vcmask 130048
    %5 = vst.msk [vmem:[#allocation0] ss:$8 sm:$0x3] %vm4, %v3
    %s6 = scalar_lea.vmem %s0, 7
    %s7 = smov 3
    %v8 = vld [vmem:[%s6] ss:$8 sm:%s7]
    %9 = vrot.lane.b32.xlu0 %v8, 112
    %v10 = vpop.permute.xlu0 %9
    %vm11 = vcmask 1048448
    %12 = vst.msk [vmem:[#allocation0] ss:$8 sm:$0x3] %vm11, %v10
    %s13 = scalar_lea.vmem %s0, 6
    %s14 = smov 3
    %v15 = vld [vmem:[%s13] ss:$8 sm:%s14]
    %16 = vrot.lane.b32.xlu0 %v15, 96
    %v17 = vpop.permute.xlu0 %16
    %vm18 = vcmask 917248
    %19 = vst.msk [vmem:[#allocation0] ss:$8 sm:$0x3] %vm18, %v17
    %s20 = scalar_lea.vmem %s0, 5
    %s21 = smov 3
    %v22 = vld [vmem:[%s20] ss:$8 sm:%s21]
    %23 = vrot.lane.b32.xlu0 %v22, 80
    %v24 = vpop.permute.xlu0 %23
    %vm25 = vcmask 786048
    %26 = vst.msk [vmem:[#allocation0] ss:$8 sm:$0x3] %vm25, %v24
    %s27 = scalar_lea.vmem %s0, 4
    %s28 = smov 3
    %v29 = vld [vmem:[%s27] ss:$8 sm:%s28]
    %30 = vrot.lane.b32.xlu0 %v29, 64
    %v31 = vpop.permute.xlu0 %30
    %vm32 = vcmask 654848
    %33 = vst.msk [vmem:[#allocation0] ss:$8 sm:$0x3] %vm32, %v31
    %s34 = scalar_lea.vmem %s0, 3
    %s35 = smov 3
    %v36 = vld [vmem:[%s34] ss:$8 sm:%s35]
    %37 = vrot.lane.b32.xlu0 %v36, 48
    %v38 = vpop.permute.xlu0 %37
    %vm39 = vcmask 523648
    %40 = vst.msk [vmem:[#allocation0] ss:$8 sm:$0x3] %vm39, %v38
    %s41 = scalar_lea.vmem %s0, 2
    %s42 = smov 3
    %v43 = vld [vmem:[%s41] ss:$8 sm:%s42]
    %44 = vrot.lane.b32.xlu0 %v43, 32
    %v45 = vpop.permute.xlu0 %44
    %vm46 = vcmask 392448
    %47 = vst.msk [vmem:[#allocation0] ss:$8 sm:$0x3] %vm46, %v45
    %s48 = scalar_lea.vmem %s0, 1
    %s49 = smov 3
    %v50 = vld [vmem:[%s48] ss:$8 sm:%s49]
    %51 = vrot.lane.b32.xlu0 %v50, 16
    %v52 = vpop.permute.xlu0 %51
    %vm53 = vcmask 261248
    %54 = vst.msk [vmem:[#allocation0] ss:$8 sm:$0x3] %vm53, %v52
    %s56 = ssub.s32 2, 1
    %v57 = vld [vmem:[#allocation0] sm:%s56]
    %s59 = ssub.s32 2, 1
    %60 = vst [vmem:[%s1] sm:%s59] %v57
    %s61 = scalar_lea.vmem [#allocation0], 8
    %v62 = vld [vmem:[%s61] sm:%s56]
    %s64 = ssub.s32 2, 1
    %s65 = scalar_lea.vmem %s1, 1
    %66 = vst [vmem:[%s65] sm:%s64] %v62

// kernel: tile.18
$region0: #{tile.18}
  #allocation0 [shape = 's32[1]{0}', space=sflag, size = 0x4, scoped, tag = 'scoped memory for tile.18']
  %s0 = inlined_call_operand.vmem [shape: f32[32], index: 0, kind: input, shape index: {}]
  %s1 = inlined_call_operand.vmem [shape: f32[8,32], index: 1, kind: output, shape index: {}]
  // Predicated region
  $region2: #{tile.18} parent=0 // pred_check
    _
  $region3: #{tile.18} parent=0 // pred_check_branch
    %3 = sbr.rel (0) target = $region5
  $region4: #{tile.18} parent=0 // pred_region
    _
  $region5: #{tile.18} parent=0 // pred_fallthru
    _
  %v4 = vld [vmem:[%s0] ss:$0 sm:$0xff]
  %5 = vst [vmem:[%s1] sm:$0xff] %v4

// kernel: tile.19
$region0: #{tile.19}
  %s0 = inlined_call_operand.vmem [shape: f32[8,32], index: 0, kind: input, shape index: {}]
  %s1 = inlined_call_operand.vmem [shape: f32[1,256], index: 1, kind: output, shape index: {}]
  $region1: #{tile.19} parent=0
    #allocation0 [shape = 'u8[8192]{0}', space=vmem, size = 0x2000, scoped, tag = 'scoped mem for output reshape']
    %s2 = smov 3
    %v3 = vld [vmem:[%s0] ss:$4 sm:%s2]
    %vm4 = vcmask 261120
    %5 = vst.msk [vmem:[#allocation0] ss:$8 sm:$0x3] %vm4, %v3
    %s6 = scalar_lea.vmem %s0, 3
    %s7 = smov 3
    %v8 = vld [vmem:[%s6] ss:$4 sm:%s7]
    %9 = vrot.lane.b32.xlu0 %v8, 96
    %v10 = vpop.permute.xlu0 %9
    %vm11 = vcmask 1048320
    %12 = vst.msk [vmem:[#allocation0] ss:$8 sm:$0x3] %vm11, %v10
    %s13 = scalar_lea.vmem %s0, 2
    %s14 = smov 3
    %v15 = vld [vmem:[%s13] ss:$4 sm:%s14]
    %16 = vrot.lane.b32.xlu0 %v15, 64
    %v17 = vpop.permute.xlu0 %16
    %vm18 = vcmask 785920
    %19 = vst.msk [vmem:[#allocation0] ss:$8 sm:$0x3] %vm18, %v17
    %s20 = scalar_lea.vmem %s0, 1
    %s21 = smov 3
    %v22 = vld [vmem:[%s20] ss:$4 sm:%s21]
    %23 = vrot.lane.b32.xlu0 %v22, 32
    %v24 = vpop.permute.xlu0 %23
    %vm25 = vcmask 523520
    %26 = vst.msk [vmem:[#allocation0] ss:$8 sm:$0x3] %vm25, %v24
    %s28 = ssub.s32 2, 1
    %v29 = vld [vmem:[#allocation0] sm:%s28]
    %s31 = ssub.s32 2, 1
    %32 = vst [vmem:[%s1] sm:%s31] %v29
    %s33 = scalar_lea.vmem [#allocation0], 8
    %v34 = vld [vmem:[%s33] sm:%s28]
    %s36 = ssub.s32 2, 1
    %s37 = scalar_lea.vmem %s1, 1
    %38 = vst [vmem:[%s37] sm:%s36] %v34

// kernel: my_cnn_forward.1
$region0: #{my_cnn_forward.1}
  #allocation0 [shape = 'u32[]', space=smem, size = 0x4, offset = 0x4, fixed_abs, tag = 'smem constant byte address 0x4 - core index']
  #allocation1 [shape = 'u32[72,128]{1,0:T(1,128)}', space=vmem, size = 0x9000, scoped, tag = 'internal scratch']
  #allocation2 [shape = 'bf16[288,288]{1,0:T(8,128)(2,1)}', space=vmem, size = 0x36000, scoped, tag = 'scratch operand']
  %s0 = inlined_call_operand.vmem [shape: bf16[1,512,32], index: 0, kind: input, shape index: {}]
  %s1 = inlined_call_operand.vmem [shape: bf16[160,512], index: 1, kind: input, shape index: {}]
  %s2 = inlined_call_operand.vmem [shape: f32[1,256], index: 2, kind: input, shape index: {}]
  %s3 = inlined_call_operand.vmem [shape: bf16[1440,512], index: 3, kind: input, shape index: {}]
  %s4 = inlined_call_operand.vmem [shape: f32[1,256], index: 4, kind: input, shape index: {}]
  %s5 = inlined_call_operand.vmem [shape: bf16[7,256,128], index: 5, kind: input, shape index: {}]
  %s6 = inlined_call_operand.vmem [shape: f32[1,128], index: 6, kind: input, shape index: {}]
  %s7 = inlined_call_operand.vmem [shape: f32[1,16,128], index: 7, kind: output, shape index: {}]
  %s8 = sld [smem:[#allocation0]]
  $region38: #{my_cnn_forward.1} parent=0
    _
  %s10 = ssub.s32 1, %s8
  %s11 = scalar_select 0, %s10, %s8
  // Predicated region
  $region2: #{my_cnn_forward.1} parent=0 // pred_check
    _
  $region3: #{my_cnn_forward.1} parent=0 // pred_check_branch
    %13 = sbr.rel (0) target = $region5
  $region4: #{my_cnn_forward.1} parent=0 // pred_region
    _
  $region5: #{my_cnn_forward.1} parent=0 // pred_fallthru
    _
  // Predicated region
  $region6: #{my_cnn_forward.1} parent=0 // pred_check
    _
  $region7: #{my_cnn_forward.1} parent=0 // pred_check_branch
    %15 = sbr.rel (0) target = $region9
  $region8: #{my_cnn_forward.1} parent=0 // pred_region
    _
  $region9: #{my_cnn_forward.1} parent=0 // pred_fallthru
    _
  // Predicated region
  $region10: #{my_cnn_forward.1} parent=0 // pred_check
    _
  $region11: #{my_cnn_forward.1} parent=0 // pred_check_branch
    %17 = sbr.rel (0) target = $region13
  $region12: #{my_cnn_forward.1} parent=0 // pred_region
    _
  $region13: #{my_cnn_forward.1} parent=0 // pred_fallthru
    _
  // Predicated region
  $region14: #{my_cnn_forward.1} parent=0 // pred_check
    _
  $region15: #{my_cnn_forward.1} parent=0 // pred_check_branch
    %19 = sbr.rel (0) target = $region17
  $region16: #{my_cnn_forward.1} parent=0 // pred_region
    _
  $region17: #{my_cnn_forward.1} parent=0 // pred_fallthru
    _
  // Predicated region
  $region18: #{my_cnn_forward.1} parent=0 // pred_check
    _
  $region19: #{my_cnn_forward.1} parent=0 // pred_check_branch
    %21 = sbr.rel (0) target = $region21
  $region20: #{my_cnn_forward.1} parent=0 // pred_region
    _
  $region21: #{my_cnn_forward.1} parent=0 // pred_fallthru
    _
  // Predicated region
  $region22: #{my_cnn_forward.1} parent=0 // pred_check
    _
  $region23: #{my_cnn_forward.1} parent=0 // pred_check_branch
    %23 = sbr.rel (0) target = $region25
  $region24: #{my_cnn_forward.1} parent=0 // pred_region
    _
  $region25: #{my_cnn_forward.1} parent=0 // pred_fallthru
    _
  // Predicated region
  $region26: #{my_cnn_forward.1} parent=0 // pred_check
    _
  $region27: #{my_cnn_forward.1} parent=0 // pred_check_branch
    %25 = sbr.rel (0) target = $region29
  $region28: #{my_cnn_forward.1} parent=0 // pred_region
    _
  $region29: #{my_cnn_forward.1} parent=0 // pred_fallthru
    _
  %v27 = vld [vmem:[%s0] sm:$0xf]
  %v28 = vld [vmem:[%s0 + $0x4] sm:$0xf]
  %v29 = vld [vmem:[%s0 + $0x8] sm:$0xf]
  %v30 = vld [vmem:[%s0 + $0xc] sm:$0xf]
  %v31 = vld [vmem:[%s0 + $0x10] sm:$0xf]
  %v32 = vld [vmem:[%s0 + $0x14] sm:$0xf]
  %v33 = vld [vmem:[%s0 + $0x18] sm:$0xf]
  %v34 = vld [vmem:[%s0 + $0x1c] sm:$0xf]
  %v35 = vld [vmem:[%s0 + $0x20] sm:$0xf]
  %v36 = vld [vmem:[%s0 + $0x24] sm:$0xf]
  %v37 = vld [vmem:[%s0 + $0x28] sm:$0xf]
  %v38 = vld [vmem:[%s0 + $0x2c] sm:$0xf]
  %v39 = vld [vmem:[%s0 + $0x30] sm:$0xf]
  %v40 = vld [vmem:[%s0 + $0x34] sm:$0xf]
  %v41 = vld [vmem:[%s0 + $0x38] sm:$0xf]
  %v42 = vld [vmem:[%s0 + $0x3c] sm:$0xf]
  %v43 = vld [vmem:[%s0 + $0x40] sm:$0xf]
  %v44 = vld [vmem:[%s0 + $0x44] sm:$0xf]
  %v45 = vld [vmem:[%s0 + $0x48] sm:$0xf]
  %v46 = vld [vmem:[%s0 + $0x4c] sm:$0xf]
  %v47 = vld [vmem:[%s0 + $0x50] sm:$0xf]
  %v48 = vld [vmem:[%s0 + $0x54] sm:$0xf]
  %v49 = vld [vmem:[%s0 + $0x58] sm:$0xf]
  %v50 = vld [vmem:[%s0 + $0x5c] sm:$0xf]
  %v51 = vld [vmem:[%s0 + $0x60] sm:$0xf]
  %v52 = vld [vmem:[%s0 + $0x64] sm:$0xf]
  %v53 = vld [vmem:[%s0 + $0x68] sm:$0xf]
  %v54 = vld [vmem:[%s0 + $0x6c] sm:$0xf]
  %v55 = vld [vmem:[%s0 + $0x80] sm:$0xf]
  %v56 = vld [vmem:[%s0 + $0x84] sm:$0xf]
  %v57 = vld [vmem:[%s0 + $0x88] sm:$0xf]
  %v58 = vld [vmem:[%s0 + $0x8c] sm:$0xf]
  %v59 = vld [vmem:[%s0 + $0x90] sm:$0xf]
  %v60 = vld [vmem:[%s0 + $0x94] sm:$0xf]
  %v61 = vld [vmem:[%s0 + $0x98] sm:$0xf]
  %v62 = vld [vmem:[%s0 + $0x9c] sm:$0xf]
  %v63 = vld [vmem:[%s0 + $0xa0] sm:$0xf]
  %v64 = vld [vmem:[%s0 + $0xa4] sm:$0xf]
  %v65 = vld [vmem:[%s0 + $0xa8] sm:$0xf]
  %v66 = vld [vmem:[%s0 + $0xac] sm:$0xf]
  %v67 = vld [vmem:[%s0 + $0xb0] sm:$0xf]
  %v68 = vld [vmem:[%s0 + $0xb4] sm:$0xf]
  %v69 = vld [vmem:[%s0 + $0xb8] sm:$0xf]
  %v70 = vld [vmem:[%s0 + $0xbc] sm:$0xf]
  %v71 = vld [vmem:[%s0 + $0xc0] sm:$0xf]
  %v72 = vld [vmem:[%s0 + $0xc4] sm:$0xf]
  %v73 = vld [vmem:[%s0 + $0xc8] sm:$0xf]
  %v74 = vld [vmem:[%s0 + $0xcc] sm:$0xf]
  %v75 = vld [vmem:[%s0 + $0xd0] sm:$0xf]
  %v76 = vld [vmem:[%s0 + $0xd4] sm:$0xf]
  %v77 = vld [vmem:[%s0 + $0xd8] sm:$0xf]
  %v78 = vld [vmem:[%s0 + $0xdc] sm:$0xf]
  %v79 = vld [vmem:[%s0 + $0xe0] sm:$0xf]
  %v80 = vld [vmem:[%s0 + $0xe4] sm:$0xf]
  %v81 = vld [vmem:[%s0 + $0xe8] sm:$0xf]
  %v82 = vld [vmem:[%s0 + $0xec] sm:$0xf]
  %v83 = vld [vmem:[%s0 + $0x70] sm:$0xf]
  %v84 = vld [vmem:[%s0 + $0x74] sm:$0xf]
  %v85 = vld [vmem:[%s0 + $0xf0] sm:$0xf]
  %v86 = vld [vmem:[%s0 + $0xf4] sm:$0xf]
  %v87 = vld [vmem:[%s0 + $0x78] sm:$0xf]
  %v88 = vld [vmem:[%s0 + $0x7c] sm:$0xf]
  %v117 = vunpack.c.l.b16 %v27
  %v118 = vunpack.c.l.b16 %v28
  %v119 = vunpack.c.l.b16 %v29
  %v120 = vunpack.c.l.b16 %v30
  %v121 = vunpack.c.l.b16 %v31
  %v122 = vunpack.c.l.b16 %v32
  %v123 = vunpack.c.l.b16 %v33
  %v124 = vunpack.c.l.b16 %v34
  %v125 = vunpack.c.l.b16 %v35
  %v126 = vunpack.c.l.b16 %v36
  %v127 = vunpack.c.l.b16 %v37
  %v128 = vunpack.c.l.b16 %v38
  %v129 = vunpack.c.l.b16 %v39
  %v130 = vunpack.c.l.b16 %v40
  %v131 = vunpack.c.l.b16 %v41
  %v132 = vunpack.c.l.b16 %v42
  %v133 = vunpack.c.l.b16 %v43
  %v134 = vunpack.c.l.b16 %v44
  %v135 = vunpack.c.l.b16 %v45
  %v136 = vunpack.c.l.b16 %v46
  %v137 = vunpack.c.l.b16 %v47
  %v138 = vunpack.c.l.b16 %v48
  %v139 = vunpack.c.l.b16 %v49
  %v140 = vunpack.c.l.b16 %v50
  %v141 = vunpack.c.l.b16 %v51
  %v142 = vunpack.c.l.b16 %v52
  %v143 = vunpack.c.l.b16 %v53
  %v144 = vunpack.c.l.b16 %v54
  %v145 = vpack.c.b16 %v118, %v117
  %v146 = vpack.c.b16 %v120, %v119
  %v147 = vpack.c.b16 %v122, %v121
  %v148 = vpack.c.b16 %v124, %v123
  %v149 = vpack.c.b16 %v126, %v125
  %v150 = vpack.c.b16 %v128, %v127
  %v151 = vpack.c.b16 %v130, %v129
  %v152 = vpack.c.b16 %v132, %v131
  %v153 = vpack.c.b16 %v134, %v133
  %v154 = vpack.c.b16 %v136, %v135
  %v155 = vpack.c.b16 %v138, %v137
  %v156 = vpack.c.b16 %v140, %v139
  %v157 = vpack.c.b16 %v142, %v141
  %v158 = vpack.c.b16 %v144, %v143
  %v187 = vunpack.c.l.b16 %v55
  %v188 = vunpack.c.l.b16 %v56
  %v189 = vunpack.c.l.b16 %v57
  %v190 = vunpack.c.l.b16 %v58
  %v191 = vunpack.c.l.b16 %v59
  %v192 = vunpack.c.l.b16 %v60
  %v193 = vunpack.c.l.b16 %v61
  %v194 = vunpack.c.l.b16 %v62
  %v195 = vunpack.c.l.b16 %v63
  %v196 = vunpack.c.l.b16 %v64
  %v197 = vunpack.c.l.b16 %v65
  %v198 = vunpack.c.l.b16 %v66
  %v199 = vunpack.c.l.b16 %v67
  %v200 = vunpack.c.l.b16 %v68
  %v201 = vunpack.c.l.b16 %v69
  %v202 = vunpack.c.l.b16 %v70
  %v203 = vunpack.c.l.b16 %v71
  %v204 = vunpack.c.l.b16 %v72
  %v205 = vunpack.c.l.b16 %v73
  %v206 = vunpack.c.l.b16 %v74
  %v207 = vunpack.c.l.b16 %v75
  %v208 = vunpack.c.l.b16 %v76
  %v209 = vunpack.c.l.b16 %v77
  %v210 = vunpack.c.l.b16 %v78
  %v211 = vunpack.c.l.b16 %v79
  %v212 = vunpack.c.l.b16 %v80
  %v213 = vunpack.c.l.b16 %v81
  %v214 = vunpack.c.l.b16 %v82
  %v215 = vpack.c.b16 %v188, %v187
  %v216 = vpack.c.b16 %v190, %v189
  %v217 = vpack.c.b16 %v192, %v191
  %v218 = vpack.c.b16 %v194, %v193
  %v219 = vpack.c.b16 %v196, %v195
  %v220 = vpack.c.b16 %v198, %v197
  %v221 = vpack.c.b16 %v200, %v199
  %v222 = vpack.c.b16 %v202, %v201
  %v223 = vpack.c.b16 %v204, %v203
  %v224 = vpack.c.b16 %v206, %v205
  %v225 = vpack.c.b16 %v208, %v207
  %v226 = vpack.c.b16 %v210, %v209
  %v227 = vpack.c.b16 %v212, %v211
  %v228 = vpack.c.b16 %v214, %v213
  %229 = vrot.lane.b32.xlu0 %v215, 32
  %v230 = vpop.permute.xlu0 %229
  %231 = vrot.lane.b32.xlu0 %v216, 32
  %v232 = vpop.permute.xlu0 %231
  %233 = vrot.lane.b32.xlu0 %v217, 32
  %v234 = vpop.permute.xlu0 %233
  %235 = vrot.lane.b32.xlu0 %v218, 32
  %v236 = vpop.permute.xlu0 %235
  %237 = vrot.lane.b32.xlu0 %v219, 32
  %v238 = vpop.permute.xlu0 %237
  %239 = vrot.lane.b32.xlu0 %v220, 32
  %v240 = vpop.permute.xlu0 %239
  %241 = vrot.lane.b32.xlu0 %v221, 32
  %v242 = vpop.permute.xlu0 %241
  %243 = vrot.lane.b32.xlu0 %v222, 32
  %v244 = vpop.permute.xlu0 %243
  %245 = vrot.lane.b32.xlu0 %v223, 32
  %v246 = vpop.permute.xlu0 %245
  %247 = vrot.lane.b32.xlu0 %v224, 32
  %v248 = vpop.permute.xlu0 %247
  %249 = vrot.lane.b32.xlu0 %v225, 32
  %v250 = vpop.permute.xlu0 %249
  %251 = vrot.lane.b32.xlu0 %v226, 32
  %v252 = vpop.permute.xlu0 %251
  %253 = vrot.lane.b32.xlu0 %v227, 32
  %v254 = vpop.permute.xlu0 %253
  %255 = vrot.lane.b32.xlu0 %v228, 32
  %v256 = vpop.permute.xlu0 %255
  %v259 = vunpack.c.l.b16 %v83
  %v260 = vunpack.c.l.b16 %v84
  %v261 = vpack.c.b16 %v260, %v259
  %262 = vrot.lane.b32.xlu0 %v146, 64
  %v263 = vpop.permute.xlu0 %262
  %264 = vrot.lane.b32.xlu0 %v147, 64
  %v265 = vpop.permute.xlu0 %264
  %266 = vrot.lane.b32.xlu0 %v148, 64
  %v267 = vpop.permute.xlu0 %266
  %268 = vrot.lane.b32.xlu0 %v149, 64
  %v269 = vpop.permute.xlu0 %268
  %270 = vrot.lane.b32.xlu0 %v150, 64
  %v271 = vpop.permute.xlu0 %270
  %272 = vrot.lane.b32.xlu0 %v151, 64
  %v273 = vpop.permute.xlu0 %272
  %274 = vrot.lane.b32.xlu0 %v152, 64
  %v275 = vpop.permute.xlu0 %274
  %276 = vrot.lane.b32.xlu0 %v153, 64
  %v277 = vpop.permute.xlu0 %276
  %278 = vrot.lane.b32.xlu0 %v154, 64
  %v279 = vpop.permute.xlu0 %278
  %280 = vrot.lane.b32.xlu0 %v155, 64
  %v281 = vpop.permute.xlu0 %280
  %282 = vrot.lane.b32.xlu0 %v156, 64
  %v283 = vpop.permute.xlu0 %282
  %284 = vrot.lane.b32.xlu0 %v157, 64
  %v285 = vpop.permute.xlu0 %284
  %286 = vrot.lane.b32.xlu0 %v158, 64
  %v287 = vpop.permute.xlu0 %286
  %288 = vrot.lane.b32.xlu0 %v261, 64
  %v289 = vpop.permute.xlu0 %288
  %v292 = vunpack.c.l.b16 %v85
  %v293 = vunpack.c.l.b16 %v86
  %v294 = vpack.c.b16 %v293, %v292
  %295 = vrot.lane.b32.xlu0 %v216, 96
  %v296 = vpop.permute.xlu0 %295
  %297 = vrot.lane.b32.xlu0 %v217, 96
  %v298 = vpop.permute.xlu0 %297
  %299 = vrot.lane.b32.xlu0 %v218, 96
  %v300 = vpop.permute.xlu0 %299
  %301 = vrot.lane.b32.xlu0 %v219, 96
  %v302 = vpop.permute.xlu0 %301
  %303 = vrot.lane.b32.xlu0 %v220, 96
  %v304 = vpop.permute.xlu0 %303
  %305 = vrot.lane.b32.xlu0 %v221, 96
  %v306 = vpop.permute.xlu0 %305
  %307 = vrot.lane.b32.xlu0 %v222, 96
  %v308 = vpop.permute.xlu0 %307
  %309 = vrot.lane.b32.xlu0 %v223, 96
  %v310 = vpop.permute.xlu0 %309
  %311 = vrot.lane.b32.xlu0 %v224, 96
  %v312 = vpop.permute.xlu0 %311
  %313 = vrot.lane.b32.xlu0 %v225, 96
  %v314 = vpop.permute.xlu0 %313
  %315 = vrot.lane.b32.xlu0 %v226, 96
  %v316 = vpop.permute.xlu0 %315
  %317 = vrot.lane.b32.xlu0 %v227, 96
  %v318 = vpop.permute.xlu0 %317
  %319 = vrot.lane.b32.xlu0 %v228, 96
  %v320 = vpop.permute.xlu0 %319
  %321 = vrot.lane.b32.xlu0 %v294, 96
  %v322 = vpop.permute.xlu0 %321
  %v325 = vunpack.c.l.b16 %v87
  %v326 = vunpack.c.l.b16 %v88
  %v327 = vpack.c.b16 %v326, %v325
  %vm328 = vcmask 261120
  %v331 = vsel %vm328, %v145, %v230
  %v334 = vsel %vm328, %v146, %v232
  %v337 = vsel %vm328, %v147, %v234
  %v340 = vsel %vm328, %v148, %v236
  %v343 = vsel %vm328, %v149, %v238
  %v346 = vsel %vm328, %v150, %v240
  %v349 = vsel %vm328, %v151, %v242
  %v352 = vsel %vm328, %v152, %v244
  %v355 = vsel %vm328, %v153, %v246
  %v358 = vsel %vm328, %v154, %v248
  %v361 = vsel %vm328, %v155, %v250
  %v364 = vsel %vm328, %v156, %v252
  %v367 = vsel %vm328, %v157, %v254
  %v370 = vsel %vm328, %v158, %v256
  %vm371 = vcmask 523264
  %v373 = vsel %vm371, %v331, %v263
  %v375 = vsel %vm371, %v334, %v265
  %v377 = vsel %vm371, %v337, %v267
  %v379 = vsel %vm371, %v340, %v269
  %v381 = vsel %vm371, %v343, %v271
  %v383 = vsel %vm371, %v346, %v273
  %v385 = vsel %vm371, %v349, %v275
  %v387 = vsel %vm371, %v352, %v277
  %v389 = vsel %vm371, %v355, %v279
  %v391 = vsel %vm371, %v358, %v281
  %v393 = vsel %vm371, %v361, %v283
  %v395 = vsel %vm371, %v364, %v285
  %v397 = vsel %vm371, %v367, %v287
  %v399 = vsel %vm371, %v370, %v289
  %vm400 = vcmask 785408
  %v402 = vsel %vm400, %v373, %v296
  %v405 = vsel %vm400, %v375, %v298
  %v408 = vsel %vm400, %v377, %v300
  %v411 = vsel %vm400, %v379, %v302
  %v414 = vsel %vm400, %v381, %v304
  %v417 = vsel %vm400, %v383, %v306
  %v420 = vsel %vm400, %v385, %v308
  %v423 = vsel %vm400, %v387, %v310
  %v426 = vsel %vm400, %v389, %v312
  %v429 = vsel %vm400, %v391, %v314
  %v432 = vsel %vm400, %v393, %v316
  %v435 = vsel %vm400, %v395, %v318
  %v438 = vsel %vm400, %v397, %v320
  %v441 = vsel %vm400, %v399, %v322
  %v443 = vld [vmem:[%s0 + $0xf8] sm:$0xf]
  %v444 = vld [vmem:[%s0 + $0xfc] sm:$0xf]
  %445 = vrot.lane.b32.xlu0 %v146, 32
  %v446 = vpop.permute.xlu0 %445
  %447 = vrot.lane.b32.xlu0 %v147, 32
  %v448 = vpop.permute.xlu0 %447
  %449 = vrot.lane.b32.xlu0 %v148, 32
  %v450 = vpop.permute.xlu0 %449
  %451 = vrot.lane.b32.xlu0 %v149, 32
  %v452 = vpop.permute.xlu0 %451
  %453 = vrot.lane.b32.xlu0 %v150, 32
  %v454 = vpop.permute.xlu0 %453
  %455 = vrot.lane.b32.xlu0 %v151, 32
  %v456 = vpop.permute.xlu0 %455
  %457 = vrot.lane.b32.xlu0 %v152, 32
  %v458 = vpop.permute.xlu0 %457
  %459 = vrot.lane.b32.xlu0 %v153, 32
  %v460 = vpop.permute.xlu0 %459
  %461 = vrot.lane.b32.xlu0 %v154, 32
  %v462 = vpop.permute.xlu0 %461
  %463 = vrot.lane.b32.xlu0 %v155, 32
  %v464 = vpop.permute.xlu0 %463
  %465 = vrot.lane.b32.xlu0 %v156, 32
  %v466 = vpop.permute.xlu0 %465
  %467 = vrot.lane.b32.xlu0 %v157, 32
  %v468 = vpop.permute.xlu0 %467
  %469 = vrot.lane.b32.xlu0 %v158, 32
  %v470 = vpop.permute.xlu0 %469
  %471 = vrot.lane.b32.xlu0 %v261, 32
  %v472 = vpop.permute.xlu0 %471
  %473 = vrot.lane.b32.xlu0 %v216, 64
  %v474 = vpop.permute.xlu0 %473
  %475 = vrot.lane.b32.xlu0 %v217, 64
  %v476 = vpop.permute.xlu0 %475
  %477 = vrot.lane.b32.xlu0 %v218, 64
  %v478 = vpop.permute.xlu0 %477
  %479 = vrot.lane.b32.xlu0 %v219, 64
  %v480 = vpop.permute.xlu0 %479
  %481 = vrot.lane.b32.xlu0 %v220, 64
  %v482 = vpop.permute.xlu0 %481
  %483 = vrot.lane.b32.xlu0 %v221, 64
  %v484 = vpop.permute.xlu0 %483
  %485 = vrot.lane.b32.xlu0 %v222, 64
  %v486 = vpop.permute.xlu0 %485
  %487 = vrot.lane.b32.xlu0 %v223, 64
  %v488 = vpop.permute.xlu0 %487
  %489 = vrot.lane.b32.xlu0 %v224, 64
  %v490 = vpop.permute.xlu0 %489
  %491 = vrot.lane.b32.xlu0 %v225, 64
  %v492 = vpop.permute.xlu0 %491
  %493 = vrot.lane.b32.xlu0 %v226, 64
  %v494 = vpop.permute.xlu0 %493
  %495 = vrot.lane.b32.xlu0 %v227, 64
  %v496 = vpop.permute.xlu0 %495
  %497 = vrot.lane.b32.xlu0 %v228, 64
  %v498 = vpop.permute.xlu0 %497
  %499 = vrot.lane.b32.xlu0 %v294, 64
  %v500 = vpop.permute.xlu0 %499
  %501 = vrot.lane.b32.xlu0 %v147, 96
  %v502 = vpop.permute.xlu0 %501
  %503 = vrot.lane.b32.xlu0 %v148, 96
  %v504 = vpop.permute.xlu0 %503
  %505 = vrot.lane.b32.xlu0 %v149, 96
  %v506 = vpop.permute.xlu0 %505
  %507 = vrot.lane.b32.xlu0 %v150, 96
  %v508 = vpop.permute.xlu0 %507
  %509 = vrot.lane.b32.xlu0 %v151, 96
  %v510 = vpop.permute.xlu0 %509
  %511 = vrot.lane.b32.xlu0 %v152, 96
  %v512 = vpop.permute.xlu0 %511
  %513 = vrot.lane.b32.xlu0 %v153, 96
  %v514 = vpop.permute.xlu0 %513
  %515 = vrot.lane.b32.xlu0 %v154, 96
  %v516 = vpop.permute.xlu0 %515
  %517 = vrot.lane.b32.xlu0 %v155, 96
  %v518 = vpop.permute.xlu0 %517
  %519 = vrot.lane.b32.xlu0 %v156, 96
  %v520 = vpop.permute.xlu0 %519
  %521 = vrot.lane.b32.xlu0 %v157, 96
  %v522 = vpop.permute.xlu0 %521
  %523 = vrot.lane.b32.xlu0 %v158, 96
  %v524 = vpop.permute.xlu0 %523
  %525 = vrot.lane.b32.xlu0 %v261, 96
  %v526 = vpop.permute.xlu0 %525
  %527 = vrot.lane.b32.xlu0 %v327, 96
  %v528 = vpop.permute.xlu0 %527
  %v531 = vunpack.c.l.b16 %v443
  %v532 = vunpack.c.l.b16 %v444
  %v533 = vpack.c.b16 %v532, %v531
  %v536 = vsel %vm328, %v215, %v446
  %v539 = vsel %vm328, %v216, %v448
  %v542 = vsel %vm328, %v217, %v450
  %v545 = vsel %vm328, %v218, %v452
  %v548 = vsel %vm328, %v219, %v454
  %v551 = vsel %vm328, %v220, %v456
  %v554 = vsel %vm328, %v221, %v458
  %v557 = vsel %vm328, %v222, %v460
  %v560 = vsel %vm328, %v223, %v462
  %v563 = vsel %vm328, %v224, %v464
  %v566 = vsel %vm328, %v225, %v466
  %v569 = vsel %vm328, %v226, %v468
  %v572 = vsel %vm328, %v227, %v470
  %v575 = vsel %vm328, %v228, %v472
  %v577 = vsel %vm371, %v536, %v474
  %v579 = vsel %vm371, %v539, %v476
  %v581 = vsel %vm371, %v542, %v478
  %v583 = vsel %vm371, %v545, %v480
  %v585 = vsel %vm371, %v548, %v482
  %v587 = vsel %vm371, %v551, %v484
  %v589 = vsel %vm371, %v554, %v486
  %v591 = vsel %vm371, %v557, %v488
  %v593 = vsel %vm371, %v560, %v490
  %v595 = vsel %vm371, %v563, %v492
  %v597 = vsel %vm371, %v566, %v494
  %v599 = vsel %vm371, %v569, %v496
  %v601 = vsel %vm371, %v572, %v498
  %v603 = vsel %vm371, %v575, %v500
  %v605 = vsel %vm400, %v577, %v502
  %v608 = vsel %vm400, %v579, %v504
  %v611 = vsel %vm400, %v581, %v506
  %v614 = vsel %vm400, %v583, %v508
  %v617 = vsel %vm400, %v585, %v510
  %v620 = vsel %vm400, %v587, %v512
  %v623 = vsel %vm400, %v589, %v514
  %v626 = vsel %vm400, %v591, %v516
  %v629 = vsel %vm400, %v593, %v518
  %v632 = vsel %vm400, %v595, %v520
  %v635 = vsel %vm400, %v597, %v522
  %v638 = vsel %vm400, %v599, %v524
  %v641 = vsel %vm400, %v601, %v526
  %v644 = vsel %vm400, %v603, %v528
  %v646 = vld [vmem:[%s1] sm:$0xff]
  %v647 = vld [vmem:[%s1 + $0x8] sm:$0xff]
  %v648 = vld [vmem:[%s1 + $0x10] sm:$0xff]
  %v649 = vld [vmem:[%s1 + $0x18] sm:$0xff]
  %v650 = vld [vmem:[%s1 + $0x20] sm:$0xff]
  %v651 = vld [vmem:[%s1 + $0x28] sm:$0xff]
  %v652 = vld [vmem:[%s1 + $0x30] sm:$0xff]
  %v653 = vld [vmem:[%s1 + $0x38] sm:$0xff]
  %v654 = vld [vmem:[%s1 + $0x40] sm:$0xff]
  %v655 = vld [vmem:[%s1 + $0x48] sm:$0xff]
  %v656 = vld [vmem:[%s1 + $0x50] sm:$0xff]
  %v657 = vld [vmem:[%s1 + $0x58] sm:$0xff]
  %v658 = vld [vmem:[%s1 + $0x60] sm:$0xff]
  %v659 = vld [vmem:[%s1 + $0x68] sm:$0xff]
  %v660 = vld [vmem:[%s1 + $0x70] sm:$0xff]
  %v661 = vld [vmem:[%s1 + $0x78] sm:$0xff]
  %v662 = vld [vmem:[%s1 + $0x80] sm:$0xff]
  %v663 = vld [vmem:[%s1 + $0x88] sm:$0xff]
  %v664 = vld [vmem:[%s1 + $0x90] sm:$0xff]
  %v665 = vld [vmem:[%s1 + $0x98] sm:$0xff]
  %v666 = vld [vmem:[%s1 + $0xa0] sm:$0xff]
  %v667 = vld [vmem:[%s1 + $0xa8] sm:$0xff]
  %v668 = vld [vmem:[%s1 + $0xb0] sm:$0xff]
  %v669 = vld [vmem:[%s1 + $0xb8] sm:$0xff]
  %v670 = vld [vmem:[%s1 + $0xc0] sm:$0xff]
  %v671 = vld [vmem:[%s1 + $0xc8] sm:$0xff]
  %v672 = vld [vmem:[%s1 + $0xd0] sm:$0xff]
  %v673 = vld [vmem:[%s1 + $0xd8] sm:$0xff]
  %v674 = vld [vmem:[%s1 + $0xe0] sm:$0xff]
  %v675 = vld [vmem:[%s1 + $0xe8] sm:$0xff]
  %v676 = vld [vmem:[%s1 + $0xf0] sm:$0xff]
  %v677 = vld [vmem:[%s1 + $0xf8] sm:$0xff]
  %v678 = vld [vmem:[%s1 + $0x100] sm:$0xff]
  %v679 = vld [vmem:[%s1 + $0x108] sm:$0xff]
  %v680 = vld [vmem:[%s1 + $0x110] sm:$0xff]
  %v681 = vld [vmem:[%s1 + $0x118] sm:$0xff]
  %v682 = vld [vmem:[%s1 + $0x120] sm:$0xff]
  %v683 = vld [vmem:[%s1 + $0x128] sm:$0xff]
  %v684 = vld [vmem:[%s1 + $0x130] sm:$0xff]
  %v685 = vld [vmem:[%s1 + $0x138] sm:$0xff]
  %v726 = vunpack.c.l.b16 %v646
  %v727 = vunpack.c.h.b16 %v646
  %v728 = vunpack.c.l.b16 %v647
  %v729 = vunpack.c.h.b16 %v647
  %v730 = vunpack.c.l.b16 %v648
  %v731 = vunpack.c.h.b16 %v648
  %v732 = vunpack.c.l.b16 %v649
  %v733 = vunpack.c.h.b16 %v649
  %v734 = vunpack.c.l.b16 %v650
  %v735 = vunpack.c.h.b16 %v650
  %v736 = vunpack.c.l.b16 %v651
  %v737 = vunpack.c.h.b16 %v651
  %v738 = vunpack.c.l.b16 %v652
  %v739 = vunpack.c.h.b16 %v652
  %v740 = vunpack.c.l.b16 %v653
  %v741 = vunpack.c.h.b16 %v653
  %v742 = vunpack.c.l.b16 %v654
  %v743 = vunpack.c.h.b16 %v654
  %v744 = vunpack.c.l.b16 %v655
  %v745 = vunpack.c.h.b16 %v655
  %v746 = vunpack.c.l.b16 %v656
  %v747 = vunpack.c.h.b16 %v656
  %v748 = vunpack.c.l.b16 %v657
  %v749 = vunpack.c.h.b16 %v657
  %v750 = vunpack.c.l.b16 %v658
  %v751 = vunpack.c.h.b16 %v658
  %v752 = vunpack.c.l.b16 %v659
  %v753 = vunpack.c.h.b16 %v659
  %v754 = vunpack.c.l.b16 %v660
  %v755 = vunpack.c.h.b16 %v660
  %v756 = vunpack.c.l.b16 %v661
  %v757 = vunpack.c.h.b16 %v661
  %v758 = vunpack.c.l.b16 %v662
  %v759 = vunpack.c.h.b16 %v662
  %v760 = vunpack.c.l.b16 %v663
  %v761 = vunpack.c.h.b16 %v663
  %v762 = vunpack.c.l.b16 %v664
  %v763 = vunpack.c.h.b16 %v664
  %v764 = vunpack.c.l.b16 %v665
  %v765 = vunpack.c.h.b16 %v665
  %v766 = vunpack.c.l.b16 %v666
  %v767 = vunpack.c.h.b16 %v666
  %v768 = vunpack.c.l.b16 %v667
  %v769 = vunpack.c.h.b16 %v667
  %v770 = vunpack.c.l.b16 %v668
  %v771 = vunpack.c.h.b16 %v668
  %v772 = vunpack.c.l.b16 %v669
  %v773 = vunpack.c.h.b16 %v669
  %v774 = vunpack.c.l.b16 %v670
  %v775 = vunpack.c.h.b16 %v670
  %v776 = vunpack.c.l.b16 %v671
  %v777 = vunpack.c.h.b16 %v671
  %v778 = vunpack.c.l.b16 %v672
  %v779 = vunpack.c.h.b16 %v672
  %v780 = vunpack.c.l.b16 %v673
  %v781 = vunpack.c.h.b16 %v673
  %v782 = vunpack.c.l.b16 %v674
  %v783 = vunpack.c.h.b16 %v674
  %v784 = vunpack.c.l.b16 %v675
  %v785 = vunpack.c.h.b16 %v675
  %v786 = vunpack.c.l.b16 %v676
  %v787 = vunpack.c.h.b16 %v676
  %v788 = vunpack.c.l.b16 %v677
  %v789 = vunpack.c.h.b16 %v677
  %v790 = vunpack.c.l.b16 %v678
  %v791 = vunpack.c.h.b16 %v678
  %v792 = vunpack.c.l.b16 %v679
  %v793 = vunpack.c.h.b16 %v679
  %v794 = vunpack.c.l.b16 %v680
  %v795 = vunpack.c.h.b16 %v680
  %v796 = vunpack.c.l.b16 %v681
  %v797 = vunpack.c.h.b16 %v681
  %v798 = vunpack.c.l.b16 %v682
  %v799 = vunpack.c.h.b16 %v682
  %v800 = vunpack.c.l.b16 %v683
  %v801 = vunpack.c.h.b16 %v683
  %v802 = vunpack.c.l.b16 %v684
  %v803 = vunpack.c.h.b16 %v684
  %v804 = vunpack.c.l.b16 %v685
  %v805 = vunpack.c.h.b16 %v685
  %v806 = vpack.c.b16 %v730, %v726
  %v807 = vpack.c.b16 %v731, %v727
  %v808 = vpack.c.b16 %v732, %v728
  %v809 = vpack.c.b16 %v733, %v729
  %v810 = vpack.c.b16 %v738, %v734
  %v811 = vpack.c.b16 %v739, %v735
  %v812 = vpack.c.b16 %v740, %v736
  %v813 = vpack.c.b16 %v741, %v737
  %v814 = vpack.c.b16 %v746, %v742
  %v815 = vpack.c.b16 %v747, %v743
  %v816 = vpack.c.b16 %v748, %v744
  %v817 = vpack.c.b16 %v749, %v745
  %v818 = vpack.c.b16 %v754, %v750
  %v819 = vpack.c.b16 %v755, %v751
  %v820 = vpack.c.b16 %v756, %v752
  %v821 = vpack.c.b16 %v757, %v753
  %v822 = vpack.c.b16 %v762, %v758
  %v823 = vpack.c.b16 %v763, %v759
  %v824 = vpack.c.b16 %v764, %v760
  %v825 = vpack.c.b16 %v765, %v761
  %v826 = vpack.c.b16 %v770, %v766
  %v827 = vpack.c.b16 %v771, %v767
  %v828 = vpack.c.b16 %v772, %v768
  %v829 = vpack.c.b16 %v773, %v769
  %v830 = vpack.c.b16 %v778, %v774
  %v831 = vpack.c.b16 %v779, %v775
  %v832 = vpack.c.b16 %v780, %v776
  %v833 = vpack.c.b16 %v781, %v777
  %v834 = vpack.c.b16 %v786, %v782
  %v835 = vpack.c.b16 %v787, %v783
  %v836 = vpack.c.b16 %v788, %v784
  %v837 = vpack.c.b16 %v789, %v785
  %v838 = vpack.c.b16 %v794, %v790
  %v839 = vpack.c.b16 %v795, %v791
  %v840 = vpack.c.b16 %v796, %v792
  %v841 = vpack.c.b16 %v797, %v793
  %v842 = vpack.c.b16 %v802, %v798
  %v843 = vpack.c.b16 %v803, %v799
  %v844 = vpack.c.b16 %v804, %v800
  %v845 = vpack.c.b16 %v805, %v801
  %v886 = vsel %vm328, %v147, 0
  %v888 = vsel %vm328, %v148, 0
  %v890 = vsel %vm328, %v149, 0
  %v892 = vsel %vm328, %v150, 0
  %v894 = vsel %vm328, %v151, 0
  %v896 = vsel %vm328, %v152, 0
  %v898 = vsel %vm328, %v153, 0
  %v900 = vsel %vm328, %v154, 0
  %v902 = vsel %vm328, %v155, 0
  %v904 = vsel %vm328, %v156, 0
  %v906 = vsel %vm328, %v157, 0
  %v908 = vsel %vm328, %v158, 0
  %v911 = vsel %vm328, %v261, 0
  %v914 = vsel %vm328, %v327, 0
  %v916 = vsel %vm328, %v217, 0
  %v918 = vsel %vm328, %v218, 0
  %v920 = vsel %vm328, %v219, 0
  %v922 = vsel %vm328, %v220, 0
  %v924 = vsel %vm328, %v221, 0
  %v926 = vsel %vm328, %v222, 0
  %v928 = vsel %vm328, %v223, 0
  %v930 = vsel %vm328, %v224, 0
  %v932 = vsel %vm328, %v225, 0
  %v934 = vsel %vm328, %v226, 0
  %v936 = vsel %vm328, %v227, 0
  %v938 = vsel %vm328, %v228, 0
  %v941 = vsel %vm328, %v294, 0
  %v944 = vsel %vm328, %v533, 0
  %946 = vmatpush.bf16.msra.mxu0 %v834
  %947 = vmatpush.bf16.msra.mxu0 %v830
  %948 = vmatpush.bf16.msra.mxu0 %v826
  %949 = vmatpush.bf16.msra.mxu0 %v822
  %950 = vmatpush.bf16.msra.mxu0 %v818
  %951 = vmatpush.bf16.msra.mxu0 %v814
  %952 = vmatpush.bf16.msra.mxu0 %v810
  %953 = vmatpush.bf16.msra.mxu0 %v806
  %954 = vmatmul.bf16.gmra.mxu0 %v402
  %v955 = vpop.f32.mrf.mxu0
  %v956 = vadd.f32 0.0, %v955
  %v957 = vpop.f32.mrf.mxu0
  %v958 = vadd.f32 0.0, %v957
  %959 = vmatmul.bf16.gmra.mxu0 %v405
  %v960 = vpop.f32.mrf.mxu0
  %v961 = vadd.f32 0.0, %v960
  %v962 = vpop.f32.mrf.mxu0
  %v963 = vadd.f32 0.0, %v962
  %964 = vmatmul.bf16.gmra.mxu0 %v408
  %v965 = vpop.f32.mrf.mxu0
  %v966 = vadd.f32 0.0, %v965
  %v967 = vpop.f32.mrf.mxu0
  %v968 = vadd.f32 0.0, %v967
  %969 = vmatmul.bf16.gmra.mxu0 %v411
  %v970 = vpop.f32.mrf.mxu0
  %v971 = vadd.f32 0.0, %v970
  %v972 = vpop.f32.mrf.mxu0
  %v973 = vadd.f32 0.0, %v972
  %974 = vmatmul.bf16.gmra.mxu0 %v414
  %v975 = vpop.f32.mrf.mxu0
  %v976 = vadd.f32 0.0, %v975
  %v977 = vpop.f32.mrf.mxu0
  %v978 = vadd.f32 0.0, %v977
  %979 = vmatmul.bf16.gmra.mxu0 %v417
  %v980 = vpop.f32.mrf.mxu0
  %v981 = vadd.f32 0.0, %v980
  %v982 = vpop.f32.mrf.mxu0
  %v983 = vadd.f32 0.0, %v982
  %984 = vmatmul.bf16.gmra.mxu0 %v420
  %v985 = vpop.f32.mrf.mxu0
  %v986 = vadd.f32 0.0, %v985
  %v987 = vpop.f32.mrf.mxu0
  %v988 = vadd.f32 0.0, %v987
  %989 = vmatmul.bf16.gmra.mxu0 %v423
  %v990 = vpop.f32.mrf.mxu0
  %v991 = vadd.f32 0.0, %v990
  %v992 = vpop.f32.mrf.mxu0
  %v993 = vadd.f32 0.0, %v992
  %994 = vmatmul.bf16.gmra.mxu0 %v426
  %v995 = vpop.f32.mrf.mxu0
  %v996 = vadd.f32 0.0, %v995
  %v997 = vpop.f32.mrf.mxu0
  %v998 = vadd.f32 0.0, %v997
  %999 = vmatmul.bf16.gmra.mxu0 %v429
  %v1000 = vpop.f32.mrf.mxu0
  %v1001 = vadd.f32 0.0, %v1000
  %v1002 = vpop.f32.mrf.mxu0
  %v1003 = vadd.f32 0.0, %v1002
  %1004 = vmatmul.bf16.gmra.mxu0 %v432
  %v1005 = vpop.f32.mrf.mxu0
  %v1006 = vadd.f32 0.0, %v1005
  %v1007 = vpop.f32.mrf.mxu0
  %v1008 = vadd.f32 0.0, %v1007
  %1009 = vmatmul.bf16.gmra.mxu0 %v435
  %v1010 = vpop.f32.mrf.mxu0
  %v1011 = vadd.f32 0.0, %v1010
  %v1012 = vpop.f32.mrf.mxu0
  %v1013 = vadd.f32 0.0, %v1012
  %1014 = vmatmul.bf16.gmra.mxu0 %v438
  %v1015 = vpop.f32.mrf.mxu0
  %v1016 = vadd.f32 0.0, %v1015
  %v1017 = vpop.f32.mrf.mxu0
  %v1018 = vadd.f32 0.0, %v1017
  %1019 = vmatmul.bf16.gmra.mxu0 %v441
  %v1020 = vpop.f32.mrf.mxu0
  %v1021 = vadd.f32 0.0, %v1020
  %v1022 = vpop.f32.mrf.mxu0
  %v1023 = vadd.f32 0.0, %v1022
  %1024 = vmatmul.bf16.gmra.mxu0 %v605
  %v1025 = vpop.f32.mrf.mxu0
  %v1026 = vadd.f32 0.0, %v1025
  %v1027 = vpop.f32.mrf.mxu0
  %v1028 = vadd.f32 0.0, %v1027
  %1029 = vmatmul.bf16.gmra.mxu0 %v608
  %v1030 = vpop.f32.mrf.mxu0
  %v1031 = vadd.f32 0.0, %v1030
  %v1032 = vpop.f32.mrf.mxu0
  %v1033 = vadd.f32 0.0, %v1032
  %1034 = vmatmul.bf16.gmra.mxu0 %v611
  %v1035 = vpop.f32.mrf.mxu0
  %v1036 = vadd.f32 0.0, %v1035
  %v1037 = vpop.f32.mrf.mxu0
  %v1038 = vadd.f32 0.0, %v1037
  %1039 = vmatmul.bf16.gmra.mxu0 %v614
  %v1040 = vpop.f32.mrf.mxu0
  %v1041 = vadd.f32 0.0, %v1040
  %v1042 = vpop.f32.mrf.mxu0
  %v1043 = vadd.f32 0.0, %v1042
  %1044 = vmatmul.bf16.gmra.mxu0 %v617
  %v1045 = vpop.f32.mrf.mxu0
  %v1046 = vadd.f32 0.0, %v1045
  %v1047 = vpop.f32.mrf.mxu0
  %v1048 = vadd.f32 0.0, %v1047
  %1049 = vmatmul.bf16.gmra.mxu0 %v620
  %v1050 = vpop.f32.mrf.mxu0
  %v1051 = vadd.f32 0.0, %v1050
  %v1052 = vpop.f32.mrf.mxu0
  %v1053 = vadd.f32 0.0, %v1052
  %1054 = vmatmul.bf16.gmra.mxu0 %v623
  %v1055 = vpop.f32.mrf.mxu0
  %v1056 = vadd.f32 0.0, %v1055
  %v1057 = vpop.f32.mrf.mxu0
  %v1058 = vadd.f32 0.0, %v1057
  %1059 = vmatmul.bf16.gmra.mxu0 %v626
  %v1060 = vpop.f32.mrf.mxu0
  %v1061 = vadd.f32 0.0, %v1060
  %v1062 = vpop.f32.mrf.mxu0
  %v1063 = vadd.f32 0.0, %v1062
  %1064 = vmatmul.bf16.gmra.mxu0 %v629
  %v1065 = vpop.f32.mrf.mxu0
  %v1066 = vadd.f32 0.0, %v1065
  %v1067 = vpop.f32.mrf.mxu0
  %v1068 = vadd.f32 0.0, %v1067
  %1069 = vmatmul.bf16.gmra.mxu0 %v632
  %v1070 = vpop.f32.mrf.mxu0
  %v1071 = vadd.f32 0.0, %v1070
  %v1072 = vpop.f32.mrf.mxu0
  %v1073 = vadd.f32 0.0, %v1072
  %1074 = vmatmul.bf16.gmra.mxu0 %v635
  %v1075 = vpop.f32.mrf.mxu0
  %v1076 = vadd.f32 0.0, %v1075
  %v1077 = vpop.f32.mrf.mxu0
  %v1078 = vadd.f32 0.0, %v1077
  %1079 = vmatmul.bf16.gmra.mxu0 %v638
  %v1080 = vpop.f32.mrf.mxu0
  %v1081 = vadd.f32 0.0, %v1080
  %v1082 = vpop.f32.mrf.mxu0
  %v1083 = vadd.f32 0.0, %v1082
  %1084 = vmatmul.bf16.gmra.mxu0 %v641
  %v1085 = vpop.f32.mrf.mxu0
  %v1086 = vadd.f32 0.0, %v1085
  %v1087 = vpop.f32.mrf.mxu0
  %v1088 = vadd.f32 0.0, %v1087
  %1089 = vmatmul.bf16.gmra.mxu0 %v644
  %v1090 = vpop.f32.mrf.mxu0
  %v1091 = vadd.f32 0.0, %v1090
  %v1092 = vpop.f32.mrf.mxu0
  %v1093 = vadd.f32 0.0, %v1092
  %1094 = vdwg.mxu0
  %1095 = vmatpush.bf16.msra.mxu0 0
  %1096 = vmatpush.bf16.msra.mxu0 0
  %1097 = vmatpush.bf16.msra.mxu0 0
  %1098 = vmatpush.bf16.msra.mxu0 0
  %1099 = vmatpush.bf16.msra.mxu0 0
  %1100 = vmatpush.bf16.msra.mxu0 0
  %1101 = vmatpush.bf16.msra.mxu0 %v842
  %1102 = vmatpush.bf16.msra.mxu0 %v838
  %1103 = vmatmul.bf16.gmra.mxu0 %v886
  %v1104 = vpop.f32.mrf.mxu0
  %v1105 = vadd.f32 %v956, %v1104
  %v1106 = vpop.f32.mrf.mxu0
  %v1107 = vadd.f32 %v958, %v1106
  %1108 = vmatmul.bf16.gmra.mxu0 %v888
  %v1109 = vpop.f32.mrf.mxu0
  %v1110 = vadd.f32 %v961, %v1109
  %v1111 = vpop.f32.mrf.mxu0
  %v1112 = vadd.f32 %v963, %v1111
  %1113 = vmatmul.bf16.gmra.mxu0 %v890
  %v1114 = vpop.f32.mrf.mxu0
  %v1115 = vadd.f32 %v966, %v1114
  %v1116 = vpop.f32.mrf.mxu0
  %v1117 = vadd.f32 %v968, %v1116
  %1118 = vmatmul.bf16.gmra.mxu0 %v892
  %v1119 = vpop.f32.mrf.mxu0
  %v1120 = vadd.f32 %v971, %v1119
  %v1121 = vpop.f32.mrf.mxu0
  %v1122 = vadd.f32 %v973, %v1121
  %1123 = vmatmul.bf16.gmra.mxu0 %v894
  %v1124 = vpop.f32.mrf.mxu0
  %v1125 = vadd.f32 %v976, %v1124
  %v1126 = vpop.f32.mrf.mxu0
  %v1127 = vadd.f32 %v978, %v1126
  %1128 = vmatmul.bf16.gmra.mxu0 %v896
  %v1129 = vpop.f32.mrf.mxu0
  %v1130 = vadd.f32 %v981, %v1129
  %v1131 = vpop.f32.mrf.mxu0
  %v1132 = vadd.f32 %v983, %v1131
  %1133 = vmatmul.bf16.gmra.mxu0 %v898
  %v1134 = vpop.f32.mrf.mxu0
  %v1135 = vadd.f32 %v986, %v1134
  %v1136 = vpop.f32.mrf.mxu0
  %v1137 = vadd.f32 %v988, %v1136
  %1138 = vmatmul.bf16.gmra.mxu0 %v900
  %v1139 = vpop.f32.mrf.mxu0
  %v1140 = vadd.f32 %v991, %v1139
  %v1141 = vpop.f32.mrf.mxu0
  %v1142 = vadd.f32 %v993, %v1141
  %1143 = vmatmul.bf16.gmra.mxu0 %v902
  %v1144 = vpop.f32.mrf.mxu0
  %v1145 = vadd.f32 %v996, %v1144
  %v1146 = vpop.f32.mrf.mxu0
  %v1147 = vadd.f32 %v998, %v1146
  %1148 = vmatmul.bf16.gmra.mxu0 %v904
  %v1149 = vpop.f32.mrf.mxu0
  %v1150 = vadd.f32 %v1001, %v1149
  %v1151 = vpop.f32.mrf.mxu0
  %v1152 = vadd.f32 %v1003, %v1151
  %1153 = vmatmul.bf16.gmra.mxu0 %v906
  %v1154 = vpop.f32.mrf.mxu0
  %v1155 = vadd.f32 %v1006, %v1154
  %v1156 = vpop.f32.mrf.mxu0
  %v1157 = vadd.f32 %v1008, %v1156
  %1158 = vmatmul.bf16.gmra.mxu0 %v908
  %v1159 = vpop.f32.mrf.mxu0
  %v1160 = vadd.f32 %v1011, %v1159
  %v1161 = vpop.f32.mrf.mxu0
  %v1162 = vadd.f32 %v1013, %v1161
  %1163 = vmatmul.bf16.gmra.mxu0 %v911
  %v1164 = vpop.f32.mrf.mxu0
  %v1165 = vadd.f32 %v1016, %v1164
  %v1166 = vpop.f32.mrf.mxu0
  %v1167 = vadd.f32 %v1018, %v1166
  %1168 = vmatmul.bf16.gmra.mxu0 %v914
  %v1169 = vpop.f32.mrf.mxu0
  %v1170 = vadd.f32 %v1021, %v1169
  %v1171 = vpop.f32.mrf.mxu0
  %v1172 = vadd.f32 %v1023, %v1171
  %1173 = vmatmul.bf16.gmra.mxu0 %v916
  %v1174 = vpop.f32.mrf.mxu0
  %v1175 = vadd.f32 %v1026, %v1174
  %v1176 = vpop.f32.mrf.mxu0
  %v1177 = vadd.f32 %v1028, %v1176
  %1178 = vmatmul.bf16.gmra.mxu0 %v918
  %v1179 = vpop.f32.mrf.mxu0
  %v1180 = vadd.f32 %v1031, %v1179
  %v1181 = vpop.f32.mrf.mxu0
  %v1182 = vadd.f32 %v1033, %v1181
  %1183 = vmatmul.bf16.gmra.mxu0 %v920
  %v1184 = vpop.f32.mrf.mxu0
  %v1185 = vadd.f32 %v1036, %v1184
  %v1186 = vpop.f32.mrf.mxu0
  %v1187 = vadd.f32 %v1038, %v1186
  %1188 = vmatmul.bf16.gmra.mxu0 %v922
  %v1189 = vpop.f32.mrf.mxu0
  %v1190 = vadd.f32 %v1041, %v1189
  %v1191 = vpop.f32.mrf.mxu0
  %v1192 = vadd.f32 %v1043, %v1191
  %1193 = vmatmul.bf16.gmra.mxu0 %v924
  %v1194 = vpop.f32.mrf.mxu0
  %v1195 = vadd.f32 %v1046, %v1194
  %v1196 = vpop.f32.mrf.mxu0
  %v1197 = vadd.f32 %v1048, %v1196
  %1198 = vmatmul.bf16.gmra.mxu0 %v926
  %v1199 = vpop.f32.mrf.mxu0
  %v1200 = vadd.f32 %v1051, %v1199
  %v1201 = vpop.f32.mrf.mxu0
  %v1202 = vadd.f32 %v1053, %v1201
  %1203 = vmatmul.bf16.gmra.mxu0 %v928
  %v1204 = vpop.f32.mrf.mxu0
  %v1205 = vadd.f32 %v1056, %v1204
  %v1206 = vpop.f32.mrf.mxu0
  %v1207 = vadd.f32 %v1058, %v1206
  %1208 = vmatmul.bf16.gmra.mxu0 %v930
  %v1209 = vpop.f32.mrf.mxu0
  %v1210 = vadd.f32 %v1061, %v1209
  %v1211 = vpop.f32.mrf.mxu0
  %v1212 = vadd.f32 %v1063, %v1211
  %1213 = vmatmul.bf16.gmra.mxu0 %v932
  %v1214 = vpop.f32.mrf.mxu0
  %v1215 = vadd.f32 %v1066, %v1214
  %v1216 = vpop.f32.mrf.mxu0
  %v1217 = vadd.f32 %v1068, %v1216
  %1218 = vmatmul.bf16.gmra.mxu0 %v934
  %v1219 = vpop.f32.mrf.mxu0
  %v1220 = vadd.f32 %v1071, %v1219
  %v1221 = vpop.f32.mrf.mxu0
  %v1222 = vadd.f32 %v1073, %v1221
  %1223 = vmatmul.bf16.gmra.mxu0 %v936
  %v1224 = vpop.f32.mrf.mxu0
  %v1225 = vadd.f32 %v1076, %v1224
  %v1226 = vpop.f32.mrf.mxu0
  %v1227 = vadd.f32 %v1078, %v1226
  %1228 = vmatmul.bf16.gmra.mxu0 %v938
  %v1229 = vpop.f32.mrf.mxu0
  %v1230 = vadd.f32 %v1081, %v1229
  %v1231 = vpop.f32.mrf.mxu0
  %v1232 = vadd.f32 %v1083, %v1231
  %1233 = vmatmul.bf16.gmra.mxu0 %v941
  %v1234 = vpop.f32.mrf.mxu0
  %v1235 = vadd.f32 %v1086, %v1234
  %v1236 = vpop.f32.mrf.mxu0
  %v1237 = vadd.f32 %v1088, %v1236
  %1238 = vmatmul.bf16.gmra.mxu0 %v944
  %v1239 = vpop.f32.mrf.mxu0
  %v1240 = vadd.f32 %v1091, %v1239
  %v1241 = vpop.f32.mrf.mxu0
  %v1242 = vadd.f32 %v1093, %v1241
  %1243 = vdwg.mxu0
  %1244 = vmatpush.bf16.msra.mxu0 %v835
  %1245 = vmatpush.bf16.msra.mxu0 %v831
  %1246 = vmatpush.bf16.msra.mxu0 %v827
  %1247 = vmatpush.bf16.msra.mxu0 %v823
  %1248 = vmatpush.bf16.msra.mxu0 %v819
  %1249 = vmatpush.bf16.msra.mxu0 %v815
  %1250 = vmatpush.bf16.msra.mxu0 %v811
  %1251 = vmatpush.bf16.msra.mxu0 %v807
  %1252 = vmatmul.bf16.gmra.mxu0 %v402
  %v1253 = vpop.f32.mrf.mxu0
  %v1254 = vadd.f32 0.0, %v1253
  %v1255 = vpop.f32.mrf.mxu0
  %v1256 = vadd.f32 0.0, %v1255
  %1257 = vmatmul.bf16.gmra.mxu0 %v405
  %v1258 = vpop.f32.mrf.mxu0
  %v1259 = vadd.f32 0.0, %v1258
  %v1260 = vpop.f32.mrf.mxu0
  %v1261 = vadd.f32 0.0, %v1260
  %1262 = vmatmul.bf16.gmra.mxu0 %v408
  %v1263 = vpop.f32.mrf.mxu0
  %v1264 = vadd.f32 0.0, %v1263
  %v1265 = vpop.f32.mrf.mxu0
  %v1266 = vadd.f32 0.0, %v1265
  %1267 = vmatmul.bf16.gmra.mxu0 %v411
  %v1268 = vpop.f32.mrf.mxu0
  %v1269 = vadd.f32 0.0, %v1268
  %v1270 = vpop.f32.mrf.mxu0
  %v1271 = vadd.f32 0.0, %v1270
  %1272 = vmatmul.bf16.gmra.mxu0 %v414
  %v1273 = vpop.f32.mrf.mxu0
  %v1274 = vadd.f32 0.0, %v1273
  %v1275 = vpop.f32.mrf.mxu0
  %v1276 = vadd.f32 0.0, %v1275
  %1277 = vmatmul.bf16.gmra.mxu0 %v417
  %v1278 = vpop.f32.mrf.mxu0
  %v1279 = vadd.f32 0.0, %v1278
  %v1280 = vpop.f32.mrf.mxu0
  %v1281 = vadd.f32 0.0, %v1280
  %1282 = vmatmul.bf16.gmra.mxu0 %v420
  %v1283 = vpop.f32.mrf.mxu0
  %v1284 = vadd.f32 0.0, %v1283
  %v1285 = vpop.f32.mrf.mxu0
  %v1286 = vadd.f32 0.0, %v1285
  %1287 = vmatmul.bf16.gmra.mxu0 %v423
  %v1288 = vpop.f32.mrf.mxu0
  %v1289 = vadd.f32 0.0, %v1288
  %v1290 = vpop.f32.mrf.mxu0
  %v1291 = vadd.f32 0.0, %v1290
  %1292 = vmatmul.bf16.gmra.mxu0 %v426
  %v1293 = vpop.f32.mrf.mxu0
  %v1294 = vadd.f32 0.0, %v1293
  %v1295 = vpop.f32.mrf.mxu0
  %v1296 = vadd.f32 0.0, %v1295
  %1297 = vmatmul.bf16.gmra.mxu0 %v429
  %v1298 = vpop.f32.mrf.mxu0
  %v1299 = vadd.f32 0.0, %v1298
  %v1300 = vpop.f32.mrf.mxu0
  %v1301 = vadd.f32 0.0, %v1300
  %1302 = vmatmul.bf16.gmra.mxu0 %v432
  %v1303 = vpop.f32.mrf.mxu0
  %v1304 = vadd.f32 0.0, %v1303
  %v1305 = vpop.f32.mrf.mxu0
  %v1306 = vadd.f32 0.0, %v1305
  %1307 = vmatmul.bf16.gmra.mxu0 %v435
  %v1308 = vpop.f32.mrf.mxu0
  %v1309 = vadd.f32 0.0, %v1308
  %v1310 = vpop.f32.mrf.mxu0
  %v1311 = vadd.f32 0.0, %v1310
  %1312 = vmatmul.bf16.gmra.mxu0 %v438
  %v1313 = vpop.f32.mrf.mxu0
  %v1314 = vadd.f32 0.0, %v1313
  %v1315 = vpop.f32.mrf.mxu0
  %v1316 = vadd.f32 0.0, %v1315
  %1317 = vmatmul.bf16.gmra.mxu0 %v441
  %v1318 = vpop.f32.mrf.mxu0
  %v1319 = vadd.f32 0.0, %v1318
  %v1320 = vpop.f32.mrf.mxu0
  %v1321 = vadd.f32 0.0, %v1320
  %1322 = vmatmul.bf16.gmra.mxu0 %v605
  %v1323 = vpop.f32.mrf.mxu0
  %v1324 = vadd.f32 0.0, %v1323
  %v1325 = vpop.f32.mrf.mxu0
  %v1326 = vadd.f32 0.0, %v1325
  %1327 = vmatmul.bf16.gmra.mxu0 %v608
  %v1328 = vpop.f32.mrf.mxu0
  %v1329 = vadd.f32 0.0, %v1328
  %v1330 = vpop.f32.mrf.mxu0
  %v1331 = vadd.f32 0.0, %v1330
  %1332 = vmatmul.bf16.gmra.mxu0 %v611
  %v1333 = vpop.f32.mrf.mxu0
  %v1334 = vadd.f32 0.0, %v1333
  %v1335 = vpop.f32.mrf.mxu0
  %v1336 = vadd.f32 0.0, %v1335
  %1337 = vmatmul.bf16.gmra.mxu0 %v614
  %v1338 = vpop.f32.mrf.mxu0
  %v1339 = vadd.f32 0.0, %v1338
  %v1340 = vpop.f32.mrf.mxu0
  %v1341 = vadd.f32 0.0, %v1340
  %1342 = vmatmul.bf16.gmra.mxu0 %v617
  %v1343 = vpop.f32.mrf.mxu0
  %v1344 = vadd.f32 0.0, %v1343
  %v1345 = vpop.f32.mrf.mxu0
  %v1346 = vadd.f32 0.0, %v1345
  %1347 = vmatmul.bf16.gmra.mxu0 %v620
  %v1348 = vpop.f32.mrf.mxu0
  %v1349 = vadd.f32 0.0, %v1348
  %v1350 = vpop.f32.mrf.mxu0
  %v1351 = vadd.f32 0.0, %v1350
  %1352 = vmatmul.bf16.gmra.mxu0 %v623
  %v1353 = vpop.f32.mrf.mxu0
  %v1354 = vadd.f32 0.0, %v1353
  %v1355 = vpop.f32.mrf.mxu0
  %v1356 = vadd.f32 0.0, %v1355
  %1357 = vmatmul.bf16.gmra.mxu0 %v626
  %v1358 = vpop.f32.mrf.mxu0
  %v1359 = vadd.f32 0.0, %v1358
  %v1360 = vpop.f32.mrf.mxu0
  %v1361 = vadd.f32 0.0, %v1360
  %1362 = vmatmul.bf16.gmra.mxu0 %v629
  %v1363 = vpop.f32.mrf.mxu0
  %v1364 = vadd.f32 0.0, %v1363
  %v1365 = vpop.f32.mrf.mxu0
  %v1366 = vadd.f32 0.0, %v1365
  %1367 = vmatmul.bf16.gmra.mxu0 %v632
  %v1368 = vpop.f32.mrf.mxu0
  %v1369 = vadd.f32 0.0, %v1368
  %v1370 = vpop.f32.mrf.mxu0
  %v1371 = vadd.f32 0.0, %v1370
  %1372 = vmatmul.bf16.gmra.mxu0 %v635
  %v1373 = vpop.f32.mrf.mxu0
  %v1374 = vadd.f32 0.0, %v1373
  %v1375 = vpop.f32.mrf.mxu0
  %v1376 = vadd.f32 0.0, %v1375
  %1377 = vmatmul.bf16.gmra.mxu0 %v638
  %v1378 = vpop.f32.mrf.mxu0
  %v1379 = vadd.f32 0.0, %v1378
  %v1380 = vpop.f32.mrf.mxu0
  %v1381 = vadd.f32 0.0, %v1380
  %1382 = vmatmul.bf16.gmra.mxu0 %v641
  %v1383 = vpop.f32.mrf.mxu0
  %v1384 = vadd.f32 0.0, %v1383
  %v1385 = vpop.f32.mrf.mxu0
  %v1386 = vadd.f32 0.0, %v1385
  %1387 = vmatmul.bf16.gmra.mxu0 %v644
  %v1388 = vpop.f32.mrf.mxu0
  %v1389 = vadd.f32 0.0, %v1388
  %v1390 = vpop.f32.mrf.mxu0
  %v1391 = vadd.f32 0.0, %v1390
  %1392 = vdwg.mxu0
  %1393 = vmatpush.bf16.msra.mxu0 0
  %1394 = vmatpush.bf16.msra.mxu0 0
  %1395 = vmatpush.bf16.msra.mxu0 0
  %1396 = vmatpush.bf16.msra.mxu0 0
  %1397 = vmatpush.bf16.msra.mxu0 0
  %1398 = vmatpush.bf16.msra.mxu0 0
  %1399 = vmatpush.bf16.msra.mxu0 %v843
  %1400 = vmatpush.bf16.msra.mxu0 %v839
  %1401 = vmatmul.bf16.gmra.mxu0 %v886
  %v1402 = vpop.f32.mrf.mxu0
  %v1403 = vadd.f32 %v1254, %v1402
  %v1404 = vpop.f32.mrf.mxu0
  %v1405 = vadd.f32 %v1256, %v1404
  %1406 = vmatmul.bf16.gmra.mxu0 %v888
  %v1407 = vpop.f32.mrf.mxu0
  %v1408 = vadd.f32 %v1259, %v1407
  %v1409 = vpop.f32.mrf.mxu0
  %v1410 = vadd.f32 %v1261, %v1409
  %1411 = vmatmul.bf16.gmra.mxu0 %v890
  %v1412 = vpop.f32.mrf.mxu0
  %v1413 = vadd.f32 %v1264, %v1412
  %v1414 = vpop.f32.mrf.mxu0
  %v1415 = vadd.f32 %v1266, %v1414
  %1416 = vmatmul.bf16.gmra.mxu0 %v892
  %v1417 = vpop.f32.mrf.mxu0
  %v1418 = vadd.f32 %v1269, %v1417
  %v1419 = vpop.f32.mrf.mxu0
  %v1420 = vadd.f32 %v1271, %v1419
  %1421 = vmatmul.bf16.gmra.mxu0 %v894
  %v1422 = vpop.f32.mrf.mxu0
  %v1423 = vadd.f32 %v1274, %v1422
  %v1424 = vpop.f32.mrf.mxu0
  %v1425 = vadd.f32 %v1276, %v1424
  %1426 = vmatmul.bf16.gmra.mxu0 %v896
  %v1427 = vpop.f32.mrf.mxu0
  %v1428 = vadd.f32 %v1279, %v1427
  %v1429 = vpop.f32.mrf.mxu0
  %v1430 = vadd.f32 %v1281, %v1429
  %1431 = vmatmul.bf16.gmra.mxu0 %v898
  %v1432 = vpop.f32.mrf.mxu0
  %v1433 = vadd.f32 %v1284, %v1432
  %v1434 = vpop.f32.mrf.mxu0
  %v1435 = vadd.f32 %v1286, %v1434
  %1436 = vmatmul.bf16.gmra.mxu0 %v900
  %v1437 = vpop.f32.mrf.mxu0
  %v1438 = vadd.f32 %v1289, %v1437
  %v1439 = vpop.f32.mrf.mxu0
  %v1440 = vadd.f32 %v1291, %v1439
  %1441 = vmatmul.bf16.gmra.mxu0 %v902
  %v1442 = vpop.f32.mrf.mxu0
  %v1443 = vadd.f32 %v1294, %v1442
  %v1444 = vpop.f32.mrf.mxu0
  %v1445 = vadd.f32 %v1296, %v1444
  %1446 = vmatmul.bf16.gmra.mxu0 %v904
  %v1447 = vpop.f32.mrf.mxu0
  %v1448 = vadd.f32 %v1299, %v1447
  %v1449 = vpop.f32.mrf.mxu0
  %v1450 = vadd.f32 %v1301, %v1449
  %1451 = vmatmul.bf16.gmra.mxu0 %v906
  %v1452 = vpop.f32.mrf.mxu0
  %v1453 = vadd.f32 %v1304, %v1452
  %v1454 = vpop.f32.mrf.mxu0
  %v1455 = vadd.f32 %v1306, %v1454
  %1456 = vmatmul.bf16.gmra.mxu0 %v908
  %v1457 = vpop.f32.mrf.mxu0
  %v1458 = vadd.f32 %v1309, %v1457
  %v1459 = vpop.f32.mrf.mxu0
  %v1460 = vadd.f32 %v1311, %v1459
  %1461 = vmatmul.bf16.gmra.mxu0 %v911
  %v1462 = vpop.f32.mrf.mxu0
  %v1463 = vadd.f32 %v1314, %v1462
  %v1464 = vpop.f32.mrf.mxu0
  %v1465 = vadd.f32 %v1316, %v1464
  %1466 = vmatmul.bf16.gmra.mxu0 %v914
  %v1467 = vpop.f32.mrf.mxu0
  %v1468 = vadd.f32 %v1319, %v1467
  %v1469 = vpop.f32.mrf.mxu0
  %v1470 = vadd.f32 %v1321, %v1469
  %1471 = vmatmul.bf16.gmra.mxu0 %v916
  %v1472 = vpop.f32.mrf.mxu0
  %v1473 = vadd.f32 %v1324, %v1472
  %v1474 = vpop.f32.mrf.mxu0
  %v1475 = vadd.f32 %v1326, %v1474
  %1476 = vmatmul.bf16.gmra.mxu0 %v918
  %v1477 = vpop.f32.mrf.mxu0
  %v1478 = vadd.f32 %v1329, %v1477
  %v1479 = vpop.f32.mrf.mxu0
  %v1480 = vadd.f32 %v1331, %v1479
  %1481 = vmatmul.bf16.gmra.mxu0 %v920
  %v1482 = vpop.f32.mrf.mxu0
  %v1483 = vadd.f32 %v1334, %v1482
  %v1484 = vpop.f32.mrf.mxu0
  %v1485 = vadd.f32 %v1336, %v1484
  %1486 = vmatmul.bf16.gmra.mxu0 %v922
  %v1487 = vpop.f32.mrf.mxu0
  %v1488 = vadd.f32 %v1339, %v1487
  %v1489 = vpop.f32.mrf.mxu0
  %v1490 = vadd.f32 %v1341, %v1489
  %1491 = vmatmul.bf16.gmra.mxu0 %v924
  %v1492 = vpop.f32.mrf.mxu0
  %v1493 = vadd.f32 %v1344, %v1492
  %v1494 = vpop.f32.mrf.mxu0
  %v1495 = vadd.f32 %v1346, %v1494
  %1496 = vmatmul.bf16.gmra.mxu0 %v926
  %v1497 = vpop.f32.mrf.mxu0
  %v1498 = vadd.f32 %v1349, %v1497
  %v1499 = vpop.f32.mrf.mxu0
  %v1500 = vadd.f32 %v1351, %v1499
  %1501 = vmatmul.bf16.gmra.mxu0 %v928
  %v1502 = vpop.f32.mrf.mxu0
  %v1503 = vadd.f32 %v1354, %v1502
  %v1504 = vpop.f32.mrf.mxu0
  %v1505 = vadd.f32 %v1356, %v1504
  %1506 = vmatmul.bf16.gmra.mxu0 %v930
  %v1507 = vpop.f32.mrf.mxu0
  %v1508 = vadd.f32 %v1359, %v1507
  %v1509 = vpop.f32.mrf.mxu0
  %v1510 = vadd.f32 %v1361, %v1509
  %1511 = vmatmul.bf16.gmra.mxu0 %v932
  %v1512 = vpop.f32.mrf.mxu0
  %v1513 = vadd.f32 %v1364, %v1512
  %v1514 = vpop.f32.mrf.mxu0
  %v1515 = vadd.f32 %v1366, %v1514
  %1516 = vmatmul.bf16.gmra.mxu0 %v934
  %v1517 = vpop.f32.mrf.mxu0
  %v1518 = vadd.f32 %v1369, %v1517
  %v1519 = vpop.f32.mrf.mxu0
  %v1520 = vadd.f32 %v1371, %v1519
  %1521 = vmatmul.bf16.gmra.mxu0 %v936
  %v1522 = vpop.f32.mrf.mxu0
  %v1523 = vadd.f32 %v1374, %v1522
  %v1524 = vpop.f32.mrf.mxu0
  %v1525 = vadd.f32 %v1376, %v1524
  %1526 = vmatmul.bf16.gmra.mxu0 %v938
  %v1527 = vpop.f32.mrf.mxu0
  %v1528 = vadd.f32 %v1379, %v1527
  %v1529 = vpop.f32.mrf.mxu0
  %v1530 = vadd.f32 %v1381, %v1529
  %1531 = vmatmul.bf16.gmra.mxu0 %v941
  %v1532 = vpop.f32.mrf.mxu0
  %v1533 = vadd.f32 %v1384, %v1532
  %v1534 = vpop.f32.mrf.mxu0
  %v1535 = vadd.f32 %v1386, %v1534
  %1536 = vmatmul.bf16.gmra.mxu0 %v944
  %v1537 = vpop.f32.mrf.mxu0
  %v1538 = vadd.f32 %v1389, %v1537
  %v1539 = vpop.f32.mrf.mxu0
  %v1540 = vadd.f32 %v1391, %v1539
  %1541 = vdwg.mxu0
  %1542 = vmatpush.bf16.msra.mxu0 %v836
  %1543 = vmatpush.bf16.msra.mxu0 %v832
  %1544 = vmatpush.bf16.msra.mxu0 %v828
  %1545 = vmatpush.bf16.msra.mxu0 %v824
  %1546 = vmatpush.bf16.msra.mxu0 %v820
  %1547 = vmatpush.bf16.msra.mxu0 %v816
  %1548 = vmatpush.bf16.msra.mxu0 %v812
  %1549 = vmatpush.bf16.msra.mxu0 %v808
  %1550 = vmatmul.bf16.gmra.mxu0 %v402
  %v1551 = vpop.f32.mrf.mxu0
  %v1552 = vadd.f32 0.0, %v1551
  %v1553 = vpop.f32.mrf.mxu0
  %v1554 = vadd.f32 0.0, %v1553
  %1555 = vmatmul.bf16.gmra.mxu0 %v405
  %v1556 = vpop.f32.mrf.mxu0
  %v1557 = vadd.f32 0.0, %v1556
  %v1558 = vpop.f32.mrf.mxu0
  %v1559 = vadd.f32 0.0, %v1558
  %1560 = vmatmul.bf16.gmra.mxu0 %v408
  %v1561 = vpop.f32.mrf.mxu0
  %v1562 = vadd.f32 0.0, %v1561
  %v1563 = vpop.f32.mrf.mxu0
  %v1564 = vadd.f32 0.0, %v1563
  %1565 = vmatmul.bf16.gmra.mxu0 %v411
  %v1566 = vpop.f32.mrf.mxu0
  %v1567 = vadd.f32 0.0, %v1566
  %v1568 = vpop.f32.mrf.mxu0
  %v1569 = vadd.f32 0.0, %v1568
  %1570 = vmatmul.bf16.gmra.mxu0 %v414
  %v1571 = vpop.f32.mrf.mxu0
  %v1572 = vadd.f32 0.0, %v1571
  %v1573 = vpop.f32.mrf.mxu0
  %v1574 = vadd.f32 0.0, %v1573
  %1575 = vmatmul.bf16.gmra.mxu0 %v417
  %v1576 = vpop.f32.mrf.mxu0
  %v1577 = vadd.f32 0.0, %v1576
  %v1578 = vpop.f32.mrf.mxu0
  %v1579 = vadd.f32 0.0, %v1578
  %1580 = vmatmul.bf16.gmra.mxu0 %v420
  %v1581 = vpop.f32.mrf.mxu0
  %v1582 = vadd.f32 0.0, %v1581
  %v1583 = vpop.f32.mrf.mxu0
  %v1584 = vadd.f32 0.0, %v1583
  %1585 = vmatmul.bf16.gmra.mxu0 %v423
  %v1586 = vpop.f32.mrf.mxu0
  %v1587 = vadd.f32 0.0, %v1586
  %v1588 = vpop.f32.mrf.mxu0
  %v1589 = vadd.f32 0.0, %v1588
  %1590 = vmatmul.bf16.gmra.mxu0 %v426
  %v1591 = vpop.f32.mrf.mxu0
  %v1592 = vadd.f32 0.0, %v1591
  %v1593 = vpop.f32.mrf.mxu0
  %v1594 = vadd.f32 0.0, %v1593
  %1595 = vmatmul.bf16.gmra.mxu0 %v429
  %v1596 = vpop.f32.mrf.mxu0
  %v1597 = vadd.f32 0.0, %v1596
  %v1598 = vpop.f32.mrf.mxu0
  %v1599 = vadd.f32 0.0, %v1598
  %1600 = vmatmul.bf16.gmra.mxu0 %v432
  %v1601 = vpop.f32.mrf.mxu0
  %v1602 = vadd.f32 0.0, %v1601
  %v1603 = vpop.f32.mrf.mxu0
  %v1604 = vadd.f32 0.0, %v1603
  %1605 = vmatmul.bf16.gmra.mxu0 %v435
  %v1606 = vpop.f32.mrf.mxu0
  %v1607 = vadd.f32 0.0, %v1606
  %v1608 = vpop.f32.mrf.mxu0
  %v1609 = vadd.f32 0.0, %v1608
  %1610 = vmatmul.bf16.gmra.mxu0 %v438
  %v1611 = vpop.f32.mrf.mxu0
  %v1612 = vadd.f32 0.0, %v1611
  %v1613 = vpop.f32.mrf.mxu0
  %v1614 = vadd.f32 0.0, %v1613
  %1615 = vmatmul.bf16.gmra.mxu0 %v441
  %v1616 = vpop.f32.mrf.mxu0
  %v1617 = vadd.f32 0.0, %v1616
  %v1618 = vpop.f32.mrf.mxu0
  %v1619 = vadd.f32 0.0, %v1618
  %1620 = vmatmul.bf16.gmra.mxu0 %v605
  %v1621 = vpop.f32.mrf.mxu0
  %v1622 = vadd.f32 0.0, %v1621
  %v1623 = vpop.f32.mrf.mxu0
  %v1624 = vadd.f32 0.0, %v1623
  %1625 = vmatmul.bf16.gmra.mxu0 %v608
  %v1626 = vpop.f32.mrf.mxu0
  %v1627 = vadd.f32 0.0, %v1626
  %v1628 = vpop.f32.mrf.mxu0
  %v1629 = vadd.f32 0.0, %v1628
  %1630 = vmatmul.bf16.gmra.mxu0 %v611
  %v1631 = vpop.f32.mrf.mxu0
  %v1632 = vadd.f32 0.0, %v1631
  %v1633 = vpop.f32.mrf.mxu0
  %v1634 = vadd.f32 0.0, %v1633
  %1635 = vmatmul.bf16.gmra.mxu0 %v614
  %v1636 = vpop.f32.mrf.mxu0
  %v1637 = vadd.f32 0.0, %v1636
  %v1638 = vpop.f32.mrf.mxu0
  %v1639 = vadd.f32 0.0, %v1638
  %1640 = vmatmul.bf16.gmra.mxu0 %v617
  %v1641 = vpop.f32.mrf.mxu0
  %v1642 = vadd.f32 0.0, %v1641
  %v1643 = vpop.f32.mrf.mxu0
  %v1644 = vadd.f32 0.0, %v1643
  %1645 = vmatmul.bf16.gmra.mxu0 %v620
  %v1646 = vpop.f32.mrf.mxu0
  %v1647 = vadd.f32 0.0, %v1646
  %v1648 = vpop.f32.mrf.mxu0
  %v1649 = vadd.f32 0.0, %v1648
  %1650 = vmatmul.bf16.gmra.mxu0 %v623
  %v1651 = vpop.f32.mrf.mxu0
  %v1652 = vadd.f32 0.0, %v1651
  %v1653 = vpop.f32.mrf.mxu0
  %v1654 = vadd.f32 0.0, %v1653
  %1655 = vmatmul.bf16.gmra.mxu0 %v626
  %v1656 = vpop.f32.mrf.mxu0
  %v1657 = vadd.f32 0.0, %v1656
  %v1658 = vpop.f32.mrf.mxu0
  %v1659 = vadd.f32 0.0, %v1658
  %1660 = vmatmul.bf16.gmra.mxu0 %v629
  %v1661 = vpop.f32.mrf.mxu0
  %v1662 = vadd.f32 0.0, %v1661
  %v1663 = vpop.f32.mrf.mxu0
  %v1664 = vadd.f32 0.0, %v1663
  %1665 = vmatmul.bf16.gmra.mxu0 %v632
  %v1666 = vpop.f32.mrf.mxu0
  %v1667 = vadd.f32 0.0, %v1666
  %v1668 = vpop.f32.mrf.mxu0
  %v1669 = vadd.f32 0.0, %v1668
  %1670 = vmatmul.bf16.gmra.mxu0 %v635
  %v1671 = vpop.f32.mrf.mxu0
  %v1672 = vadd.f32 0.0, %v1671
  %v1673 = vpop.f32.mrf.mxu0
  %v1674 = vadd.f32 0.0, %v1673
  %1675 = vmatmul.bf16.gmra.mxu0 %v638
  %v1676 = vpop.f32.mrf.mxu0
  %v1677 = vadd.f32 0.0, %v1676
  %v1678 = vpop.f32.mrf.mxu0
  %v1679 = vadd.f32 0.0, %v1678
  %1680 = vmatmul.bf16.gmra.mxu0 %v641
  %v1681 = vpop.f32.mrf.mxu0
  %v1682 = vadd.f32 0.0, %v1681
  %v1683 = vpop.f32.mrf.mxu0
  %v1684 = vadd.f32 0.0, %v1683
  %1685 = vmatmul.bf16.gmra.mxu0 %v644
  %v1686 = vpop.f32.mrf.mxu0
  %v1687 = vadd.f32 0.0, %v1686
  %v1688 = vpop.f32.mrf.mxu0
  %v1689 = vadd.f32 0.0, %v1688
  %1690 = vdwg.mxu0
  %1691 = vmatpush.bf16.msra.mxu0 0
  %1692 = vmatpush.bf16.msra.mxu0 0
  %1693 = vmatpush.bf16.msra.mxu0 0
  %1694 = vmatpush.bf16.msra.mxu0 0
  %1695 = vmatpush.bf16.msra.mxu0 0
  %1696 = vmatpush.bf16.msra.mxu0 0
  %1697 = vmatpush.bf16.msra.mxu0 %v844
  %1698 = vmatpush.bf16.msra.mxu0 %v840
  %1699 = vmatmul.bf16.gmra.mxu0 %v886
  %v1700 = vpop.f32.mrf.mxu0
  %v1701 = vadd.f32 %v1552, %v1700
  %v1702 = vpop.f32.mrf.mxu0
  %v1703 = vadd.f32 %v1554, %v1702
  %1704 = vmatmul.bf16.gmra.mxu0 %v888
  %v1705 = vpop.f32.mrf.mxu0
  %v1706 = vadd.f32 %v1557, %v1705
  %v1707 = vpop.f32.mrf.mxu0
  %v1708 = vadd.f32 %v1559, %v1707
  %1709 = vmatmul.bf16.gmra.mxu0 %v890
  %v1710 = vpop.f32.mrf.mxu0
  %v1711 = vadd.f32 %v1562, %v1710
  %v1712 = vpop.f32.mrf.mxu0
  %v1713 = vadd.f32 %v1564, %v1712
  %1714 = vmatmul.bf16.gmra.mxu0 %v892
  %v1715 = vpop.f32.mrf.mxu0
  %v1716 = vadd.f32 %v1567, %v1715
  %v1717 = vpop.f32.mrf.mxu0
  %v1718 = vadd.f32 %v1569, %v1717
  %1719 = vmatmul.bf16.gmra.mxu0 %v894
  %v1720 = vpop.f32.mrf.mxu0
  %v1721 = vadd.f32 %v1572, %v1720
  %v1722 = vpop.f32.mrf.mxu0
  %v1723 = vadd.f32 %v1574, %v1722
  %1724 = vmatmul.bf16.gmra.mxu0 %v896
  %v1725 = vpop.f32.mrf.mxu0
  %v1726 = vadd.f32 %v1577, %v1725
  %v1727 = vpop.f32.mrf.mxu0
  %v1728 = vadd.f32 %v1579, %v1727
  %1729 = vmatmul.bf16.gmra.mxu0 %v898
  %v1730 = vpop.f32.mrf.mxu0
  %v1731 = vadd.f32 %v1582, %v1730
  %v1732 = vpop.f32.mrf.mxu0
  %v1733 = vadd.f32 %v1584, %v1732
  %1734 = vmatmul.bf16.gmra.mxu0 %v900
  %v1735 = vpop.f32.mrf.mxu0
  %v1736 = vadd.f32 %v1587, %v1735
  %v1737 = vpop.f32.mrf.mxu0
  %v1738 = vadd.f32 %v1589, %v1737
  %1739 = vmatmul.bf16.gmra.mxu0 %v902
  %v1740 = vpop.f32.mrf.mxu0
  %v1741 = vadd.f32 %v1592, %v1740
  %v1742 = vpop.f32.mrf.mxu0
  %v1743 = vadd.f32 %v1594, %v1742
  %1744 = vmatmul.bf16.gmra.mxu0 %v904
  %v1745 = vpop.f32.mrf.mxu0
  %v1746 = vadd.f32 %v1597, %v1745
  %v1747 = vpop.f32.mrf.mxu0
  %v1748 = vadd.f32 %v1599, %v1747
  %1749 = vmatmul.bf16.gmra.mxu0 %v906
  %v1750 = vpop.f32.mrf.mxu0
  %v1751 = vadd.f32 %v1602, %v1750
  %v1752 = vpop.f32.mrf.mxu0
  %v1753 = vadd.f32 %v1604, %v1752
  %1754 = vmatmul.bf16.gmra.mxu0 %v908
  %v1755 = vpop.f32.mrf.mxu0
  %v1756 = vadd.f32 %v1607, %v1755
  %v1757 = vpop.f32.mrf.mxu0
  %v1758 = vadd.f32 %v1609, %v1757
  %1759 = vmatmul.bf16.gmra.mxu0 %v911
  %v1760 = vpop.f32.mrf.mxu0
  %v1761 = vadd.f32 %v1612, %v1760
  %v1762 = vpop.f32.mrf.mxu0
  %v1763 = vadd.f32 %v1614, %v1762
  %1764 = vmatmul.bf16.gmra.mxu0 %v914
  %v1765 = vpop.f32.mrf.mxu0
  %v1766 = vadd.f32 %v1617, %v1765
  %v1767 = vpop.f32.mrf.mxu0
  %v1768 = vadd.f32 %v1619, %v1767
  %1769 = vmatmul.bf16.gmra.mxu0 %v916
  %v1770 = vpop.f32.mrf.mxu0
  %v1771 = vadd.f32 %v1622, %v1770
  %v1772 = vpop.f32.mrf.mxu0
  %v1773 = vadd.f32 %v1624, %v1772
  %1774 = vmatmul.bf16.gmra.mxu0 %v918
  %v1775 = vpop.f32.mrf.mxu0
  %v1776 = vadd.f32 %v1627, %v1775
  %v1777 = vpop.f32.mrf.mxu0
  %v1778 = vadd.f32 %v1629, %v1777
  %1779 = vmatmul.bf16.gmra.mxu0 %v920
  %v1780 = vpop.f32.mrf.mxu0
  %v1781 = vadd.f32 %v1632, %v1780
  %v1782 = vpop.f32.mrf.mxu0
  %v1783 = vadd.f32 %v1634, %v1782
  %1784 = vmatmul.bf16.gmra.mxu0 %v922
  %v1785 = vpop.f32.mrf.mxu0
  %v1786 = vadd.f32 %v1637, %v1785
  %v1787 = vpop.f32.mrf.mxu0
  %v1788 = vadd.f32 %v1639, %v1787
  %1789 = vmatmul.bf16.gmra.mxu0 %v924
  %v1790 = vpop.f32.mrf.mxu0
  %v1791 = vadd.f32 %v1642, %v1790
  %v1792 = vpop.f32.mrf.mxu0
  %v1793 = vadd.f32 %v1644, %v1792
  %1794 = vmatmul.bf16.gmra.mxu0 %v926
  %v1795 = vpop.f32.mrf.mxu0
  %v1796 = vadd.f32 %v1647, %v1795
  %v1797 = vpop.f32.mrf.mxu0
  %v1798 = vadd.f32 %v1649, %v1797
  %1799 = vmatmul.bf16.gmra.mxu0 %v928
  %v1800 = vpop.f32.mrf.mxu0
  %v1801 = vadd.f32 %v1652, %v1800
  %v1802 = vpop.f32.mrf.mxu0
  %v1803 = vadd.f32 %v1654, %v1802
  %1804 = vmatmul.bf16.gmra.mxu0 %v930
  %v1805 = vpop.f32.mrf.mxu0
  %v1806 = vadd.f32 %v1657, %v1805
  %v1807 = vpop.f32.mrf.mxu0
  %v1808 = vadd.f32 %v1659, %v1807
  %1809 = vmatmul.bf16.gmra.mxu0 %v932
  %v1810 = vpop.f32.mrf.mxu0
  %v1811 = vadd.f32 %v1662, %v1810
  %v1812 = vpop.f32.mrf.mxu0
  %v1813 = vadd.f32 %v1664, %v1812
  %1814 = vmatmul.bf16.gmra.mxu0 %v934
  %v1815 = vpop.f32.mrf.mxu0
  %v1816 = vadd.f32 %v1667, %v1815
  %v1817 = vpop.f32.mrf.mxu0
  %v1818 = vadd.f32 %v1669, %v1817
  %1819 = vmatmul.bf16.gmra.mxu0 %v936
  %v1820 = vpop.f32.mrf.mxu0
  %v1821 = vadd.f32 %v1672, %v1820
  %v1822 = vpop.f32.mrf.mxu0
  %v1823 = vadd.f32 %v1674, %v1822
  %1824 = vmatmul.bf16.gmra.mxu0 %v938
  %v1825 = vpop.f32.mrf.mxu0
  %v1826 = vadd.f32 %v1677, %v1825
  %v1827 = vpop.f32.mrf.mxu0
  %v1828 = vadd.f32 %v1679, %v1827
  %1829 = vmatmul.bf16.gmra.mxu0 %v941
  %v1830 = vpop.f32.mrf.mxu0
  %v1831 = vadd.f32 %v1682, %v1830
  %v1832 = vpop.f32.mrf.mxu0
  %v1833 = vadd.f32 %v1684, %v1832
  %1834 = vmatmul.bf16.gmra.mxu0 %v944
  %v1835 = vpop.f32.mrf.mxu0
  %v1836 = vadd.f32 %v1687, %v1835
  %v1837 = vpop.f32.mrf.mxu0
  %v1838 = vadd.f32 %v1689, %v1837
  %1839 = vdwg.mxu0
  %1840 = vmatpush.bf16.msra.mxu0 %v837
  %1841 = vmatpush.bf16.msra.mxu0 %v833
  %1842 = vmatpush.bf16.msra.mxu0 %v829
  %1843 = vmatpush.bf16.msra.mxu0 %v825
  %1844 = vmatpush.bf16.msra.mxu0 %v821
  %1845 = vmatpush.bf16.msra.mxu0 %v817
  %1846 = vmatpush.bf16.msra.mxu0 %v813
  %1847 = vmatpush.bf16.msra.mxu0 %v809
  %1848 = vmatmul.bf16.gmra.mxu0 %v402
  %v1849 = vpop.f32.mrf.mxu0
  %v1850 = vadd.f32 0.0, %v1849
  %v1851 = vpop.f32.mrf.mxu0
  %v1852 = vadd.f32 0.0, %v1851
  %1853 = vmatmul.bf16.gmra.mxu0 %v405
  %v1854 = vpop.f32.mrf.mxu0
  %v1855 = vadd.f32 0.0, %v1854
  %v1856 = vpop.f32.mrf.mxu0
  %v1857 = vadd.f32 0.0, %v1856
  %1858 = vmatmul.bf16.gmra.mxu0 %v408
  %v1859 = vpop.f32.mrf.mxu0
  %v1860 = vadd.f32 0.0, %v1859
  %v1861 = vpop.f32.mrf.mxu0
  %v1862 = vadd.f32 0.0, %v1861
  %1863 = vmatmul.bf16.gmra.mxu0 %v411
  %v1864 = vpop.f32.mrf.mxu0
  %v1865 = vadd.f32 0.0, %v1864
  %v1866 = vpop.f32.mrf.mxu0
  %v1867 = vadd.f32 0.0, %v1866
  %1868 = vmatmul.bf16.gmra.mxu0 %v414
  %v1869 = vpop.f32.mrf.mxu0
  %v1870 = vadd.f32 0.0, %v1869
  %v1871 = vpop.f32.mrf.mxu0
  %v1872 = vadd.f32 0.0, %v1871
  %1873 = vmatmul.bf16.gmra.mxu0 %v417
  %v1874 = vpop.f32.mrf.mxu0
  %v1875 = vadd.f32 0.0, %v1874
  %v1876 = vpop.f32.mrf.mxu0
  %v1877 = vadd.f32 0.0, %v1876
  %1878 = vmatmul.bf16.gmra.mxu0 %v420
  %v1879 = vpop.f32.mrf.mxu0
  %v1880 = vadd.f32 0.0, %v1879
  %v1881 = vpop.f32.mrf.mxu0
  %v1882 = vadd.f32 0.0, %v1881
  %1883 = vmatmul.bf16.gmra.mxu0 %v423
  %v1884 = vpop.f32.mrf.mxu0
  %v1885 = vadd.f32 0.0, %v1884
  %v1886 = vpop.f32.mrf.mxu0
  %v1887 = vadd.f32 0.0, %v1886
  %1888 = vmatmul.bf16.gmra.mxu0 %v426
  %v1889 = vpop.f32.mrf.mxu0
  %v1890 = vadd.f32 0.0, %v1889
  %v1891 = vpop.f32.mrf.mxu0
  %v1892 = vadd.f32 0.0, %v1891
  %1893 = vmatmul.bf16.gmra.mxu0 %v429
  %v1894 = vpop.f32.mrf.mxu0
  %v1895 = vadd.f32 0.0, %v1894
  %v1896 = vpop.f32.mrf.mxu0
  %v1897 = vadd.f32 0.0, %v1896
  %1898 = vmatmul.bf16.gmra.mxu0 %v432
  %v1899 = vpop.f32.mrf.mxu0
  %v1900 = vadd.f32 0.0, %v1899
  %v1901 = vpop.f32.mrf.mxu0
  %v1902 = vadd.f32 0.0, %v1901
  %1903 = vmatmul.bf16.gmra.mxu0 %v435
  %v1904 = vpop.f32.mrf.mxu0
  %v1905 = vadd.f32 0.0, %v1904
  %v1906 = vpop.f32.mrf.mxu0
  %v1907 = vadd.f32 0.0, %v1906
  %1908 = vmatmul.bf16.gmra.mxu0 %v438
  %v1909 = vpop.f32.mrf.mxu0
  %v1910 = vadd.f32 0.0, %v1909
  %v1911 = vpop.f32.mrf.mxu0
  %v1912 = vadd.f32 0.0, %v1911
  %1913 = vmatmul.bf16.gmra.mxu0 %v441
  %v1914 = vpop.f32.mrf.mxu0
  %v1915 = vadd.f32 0.0, %v1914
  %v1916 = vpop.f32.mrf.mxu0
  %v1917 = vadd.f32 0.0, %v1916
  %1918 = vmatmul.bf16.gmra.mxu0 %v605
  %v1919 = vpop.f32.mrf.mxu0
  %v1920 = vadd.f32 0.0, %v1919
  %v1921 = vpop.f32.mrf.mxu0
  %v1922 = vadd.f32 0.0, %v1921
  %1923 = vmatmul.bf16.gmra.mxu0 %v608
  %v1924 = vpop.f32.mrf.mxu0
  %v1925 = vadd.f32 0.0, %v1924
  %v1926 = vpop.f32.mrf.mxu0
  %v1927 = vadd.f32 0.0, %v1926
  %1928 = vmatmul.bf16.gmra.mxu0 %v611
  %v1929 = vpop.f32.mrf.mxu0
  %v1930 = vadd.f32 0.0, %v1929
  %v1931 = vpop.f32.mrf.mxu0
  %v1932 = vadd.f32 0.0, %v1931
  %1933 = vmatmul.bf16.gmra.mxu0 %v614
  %v1934 = vpop.f32.mrf.mxu0
  %v1935 = vadd.f32 0.0, %v1934
  %v1936 = vpop.f32.mrf.mxu0
  %v1937 = vadd.f32 0.0, %v1936
  %1938 = vmatmul.bf16.gmra.mxu0 %v617
  %v1939 = vpop.f32.mrf.mxu0
  %v1940 = vadd.f32 0.0, %v1939
  %v1941 = vpop.f32.mrf.mxu0
  %v1942 = vadd.f32 0.0, %v1941
  %1943 = vmatmul.bf16.gmra.mxu0 %v620
  %v1944 = vpop.f32.mrf.mxu0
  %v1945 = vadd.f32 0.0, %v1944
  %v1946 = vpop.f32.mrf.mxu0
  %v1947 = vadd.f32 0.0, %v1946
  %1948 = vmatmul.bf16.gmra.mxu0 %v623
  %v1949 = vpop.f32.mrf.mxu0
  %v1950 = vadd.f32 0.0, %v1949
  %v1951 = vpop.f32.mrf.mxu0
  %v1952 = vadd.f32 0.0, %v1951
  %1953 = vmatmul.bf16.gmra.mxu0 %v626
  %v1954 = vpop.f32.mrf.mxu0
  %v1955 = vadd.f32 0.0, %v1954
  %v1956 = vpop.f32.mrf.mxu0
  %v1957 = vadd.f32 0.0, %v1956
  %1958 = vmatmul.bf16.gmra.mxu0 %v629
  %v1959 = vpop.f32.mrf.mxu0
  %v1960 = vadd.f32 0.0, %v1959
  %v1961 = vpop.f32.mrf.mxu0
  %v1962 = vadd.f32 0.0, %v1961
  %1963 = vmatmul.bf16.gmra.mxu0 %v632
  %v1964 = vpop.f32.mrf.mxu0
  %v1965 = vadd.f32 0.0, %v1964
  %v1966 = vpop.f32.mrf.mxu0
  %v1967 = vadd.f32 0.0, %v1966
  %1968 = vmatmul.bf16.gmra.mxu0 %v635
  %v1969 = vpop.f32.mrf.mxu0
  %v1970 = vadd.f32 0.0, %v1969
  %v1971 = vpop.f32.mrf.mxu0
  %v1972 = vadd.f32 0.0, %v1971
  %1973 = vmatmul.bf16.gmra.mxu0 %v638
  %v1974 = vpop.f32.mrf.mxu0
  %v1975 = vadd.f32 0.0, %v1974
  %v1976 = vpop.f32.mrf.mxu0
  %v1977 = vadd.f32 0.0, %v1976
  %1978 = vmatmul.bf16.gmra.mxu0 %v641
  %v1979 = vpop.f32.mrf.mxu0
  %v1980 = vadd.f32 0.0, %v1979
  %v1981 = vpop.f32.mrf.mxu0
  %v1982 = vadd.f32 0.0, %v1981
  %1983 = vmatmul.bf16.gmra.mxu0 %v644
  %v1984 = vpop.f32.mrf.mxu0
  %v1985 = vadd.f32 0.0, %v1984
  %v1986 = vpop.f32.mrf.mxu0
  %v1987 = vadd.f32 0.0, %v1986
  %1988 = vdwg.mxu0
  %1989 = vmatpush.bf16.msra.mxu0 0
  %1990 = vmatpush.bf16.msra.mxu0 0
  %1991 = vmatpush.bf16.msra.mxu0 0
  %1992 = vmatpush.bf16.msra.mxu0 0
  %1993 = vmatpush.bf16.msra.mxu0 0
  %1994 = vmatpush.bf16.msra.mxu0 0
  %1995 = vmatpush.bf16.msra.mxu0 %v845
  %1996 = vmatpush.bf16.msra.mxu0 %v841
  %1997 = vmatmul.bf16.gmra.mxu0 %v886
  %v1998 = vpop.f32.mrf.mxu0
  %v1999 = vadd.f32 %v1850, %v1998
  %v2000 = vpop.f32.mrf.mxu0
  %v2001 = vadd.f32 %v1852, %v2000
  %2002 = vmatmul.bf16.gmra.mxu0 %v888
  %v2003 = vpop.f32.mrf.mxu0
  %v2004 = vadd.f32 %v1855, %v2003
  %v2005 = vpop.f32.mrf.mxu0
  %v2006 = vadd.f32 %v1857, %v2005
  %2007 = vmatmul.bf16.gmra.mxu0 %v890
  %v2008 = vpop.f32.mrf.mxu0
  %v2009 = vadd.f32 %v1860, %v2008
  %v2010 = vpop.f32.mrf.mxu0
  %v2011 = vadd.f32 %v1862, %v2010
  %2012 = vmatmul.bf16.gmra.mxu0 %v892
  %v2013 = vpop.f32.mrf.mxu0
  %v2014 = vadd.f32 %v1865, %v2013
  %v2015 = vpop.f32.mrf.mxu0
  %v2016 = vadd.f32 %v1867, %v2015
  %2017 = vmatmul.bf16.gmra.mxu0 %v894
  %v2018 = vpop.f32.mrf.mxu0
  %v2019 = vadd.f32 %v1870, %v2018
  %v2020 = vpop.f32.mrf.mxu0
  %v2021 = vadd.f32 %v1872, %v2020
  %2022 = vmatmul.bf16.gmra.mxu0 %v896
  %v2023 = vpop.f32.mrf.mxu0
  %v2024 = vadd.f32 %v1875, %v2023
  %v2025 = vpop.f32.mrf.mxu0
  %v2026 = vadd.f32 %v1877, %v2025
  %2027 = vmatmul.bf16.gmra.mxu0 %v898
  %v2028 = vpop.f32.mrf.mxu0
  %v2029 = vadd.f32 %v1880, %v2028
  %v2030 = vpop.f32.mrf.mxu0
  %v2031 = vadd.f32 %v1882, %v2030
  %2032 = vmatmul.bf16.gmra.mxu0 %v900
  %v2033 = vpop.f32.mrf.mxu0
  %v2034 = vadd.f32 %v1885, %v2033
  %v2035 = vpop.f32.mrf.mxu0
  %v2036 = vadd.f32 %v1887, %v2035
  %2037 = vmatmul.bf16.gmra.mxu0 %v902
  %v2038 = vpop.f32.mrf.mxu0
  %v2039 = vadd.f32 %v1890, %v2038
  %v2040 = vpop.f32.mrf.mxu0
  %v2041 = vadd.f32 %v1892, %v2040
  %2042 = vmatmul.bf16.gmra.mxu0 %v904
  %v2043 = vpop.f32.mrf.mxu0
  %v2044 = vadd.f32 %v1895, %v2043
  %v2045 = vpop.f32.mrf.mxu0
  %v2046 = vadd.f32 %v1897, %v2045
  %2047 = vmatmul.bf16.gmra.mxu0 %v906
  %v2048 = vpop.f32.mrf.mxu0
  %v2049 = vadd.f32 %v1900, %v2048
  %v2050 = vpop.f32.mrf.mxu0
  %v2051 = vadd.f32 %v1902, %v2050
  %2052 = vmatmul.bf16.gmra.mxu0 %v908
  %v2053 = vpop.f32.mrf.mxu0
  %v2054 = vadd.f32 %v1905, %v2053
  %v2055 = vpop.f32.mrf.mxu0
  %v2056 = vadd.f32 %v1907, %v2055
  %2057 = vmatmul.bf16.gmra.mxu0 %v911
  %v2058 = vpop.f32.mrf.mxu0
  %v2059 = vadd.f32 %v1910, %v2058
  %v2060 = vpop.f32.mrf.mxu0
  %v2061 = vadd.f32 %v1912, %v2060
  %2062 = vmatmul.bf16.gmra.mxu0 %v914
  %v2063 = vpop.f32.mrf.mxu0
  %v2064 = vadd.f32 %v1915, %v2063
  %v2065 = vpop.f32.mrf.mxu0
  %v2066 = vadd.f32 %v1917, %v2065
  %2067 = vmatmul.bf16.gmra.mxu0 %v916
  %v2068 = vpop.f32.mrf.mxu0
  %v2069 = vadd.f32 %v1920, %v2068
  %v2070 = vpop.f32.mrf.mxu0
  %v2071 = vadd.f32 %v1922, %v2070
  %2072 = vmatmul.bf16.gmra.mxu0 %v918
  %v2073 = vpop.f32.mrf.mxu0
  %v2074 = vadd.f32 %v1925, %v2073
  %v2075 = vpop.f32.mrf.mxu0
  %v2076 = vadd.f32 %v1927, %v2075
  %2077 = vmatmul.bf16.gmra.mxu0 %v920
  %v2078 = vpop.f32.mrf.mxu0
  %v2079 = vadd.f32 %v1930, %v2078
  %v2080 = vpop.f32.mrf.mxu0
  %v2081 = vadd.f32 %v1932, %v2080
  %2082 = vmatmul.bf16.gmra.mxu0 %v922
  %v2083 = vpop.f32.mrf.mxu0
  %v2084 = vadd.f32 %v1935, %v2083
  %v2085 = vpop.f32.mrf.mxu0
  %v2086 = vadd.f32 %v1937, %v2085
  %2087 = vmatmul.bf16.gmra.mxu0 %v924
  %v2088 = vpop.f32.mrf.mxu0
  %v2089 = vadd.f32 %v1940, %v2088
  %v2090 = vpop.f32.mrf.mxu0
  %v2091 = vadd.f32 %v1942, %v2090
  %2092 = vmatmul.bf16.gmra.mxu0 %v926
  %v2093 = vpop.f32.mrf.mxu0
  %v2094 = vadd.f32 %v1945, %v2093
  %v2095 = vpop.f32.mrf.mxu0
  %v2096 = vadd.f32 %v1947, %v2095
  %2097 = vmatmul.bf16.gmra.mxu0 %v928
  %v2098 = vpop.f32.mrf.mxu0
  %v2099 = vadd.f32 %v1950, %v2098
  %v2100 = vpop.f32.mrf.mxu0
  %v2101 = vadd.f32 %v1952, %v2100
  %2102 = vmatmul.bf16.gmra.mxu0 %v930
  %v2103 = vpop.f32.mrf.mxu0
  %v2104 = vadd.f32 %v1955, %v2103
  %v2105 = vpop.f32.mrf.mxu0
  %v2106 = vadd.f32 %v1957, %v2105
  %2107 = vmatmul.bf16.gmra.mxu0 %v932
  %v2108 = vpop.f32.mrf.mxu0
  %v2109 = vadd.f32 %v1960, %v2108
  %v2110 = vpop.f32.mrf.mxu0
  %v2111 = vadd.f32 %v1962, %v2110
  %2112 = vmatmul.bf16.gmra.mxu0 %v934
  %v2113 = vpop.f32.mrf.mxu0
  %v2114 = vadd.f32 %v1965, %v2113
  %v2115 = vpop.f32.mrf.mxu0
  %v2116 = vadd.f32 %v1967, %v2115
  %2117 = vmatmul.bf16.gmra.mxu0 %v936
  %v2118 = vpop.f32.mrf.mxu0
  %v2119 = vadd.f32 %v1970, %v2118
  %v2120 = vpop.f32.mrf.mxu0
  %v2121 = vadd.f32 %v1972, %v2120
  %2122 = vmatmul.bf16.gmra.mxu0 %v938
  %v2123 = vpop.f32.mrf.mxu0
  %v2124 = vadd.f32 %v1975, %v2123
  %v2125 = vpop.f32.mrf.mxu0
  %v2126 = vadd.f32 %v1977, %v2125
  %2127 = vmatmul.bf16.gmra.mxu0 %v941
  %v2128 = vpop.f32.mrf.mxu0
  %v2129 = vadd.f32 %v1980, %v2128
  %v2130 = vpop.f32.mrf.mxu0
  %v2131 = vadd.f32 %v1982, %v2130
  %2132 = vmatmul.bf16.gmra.mxu0 %v944
  %v2133 = vpop.f32.mrf.mxu0
  %v2134 = vadd.f32 %v1985, %v2133
  %v2135 = vpop.f32.mrf.mxu0
  %v2136 = vadd.f32 %v1987, %v2135
  %2137 = vdwg.mxu0
  %v2138 = vmax.f32 %v1105, %v1175
  %v2139 = vmax.f32 %v1403, %v1473
  %v2140 = vmax.f32 %v1701, %v1771
  %v2141 = vmax.f32 %v1999, %v2069
  %v2142 = vmax.f32 %v1107, %v1177
  %v2143 = vmax.f32 %v1405, %v1475
  %v2144 = vmax.f32 %v1703, %v1773
  %v2145 = vmax.f32 %v2001, %v2071
  %v2146 = vmax.f32 %v1110, %v1180
  %v2147 = vmax.f32 %v1408, %v1478
  %v2148 = vmax.f32 %v1706, %v1776
  %v2149 = vmax.f32 %v2004, %v2074
  %v2150 = vmax.f32 %v1112, %v1182
  %v2151 = vmax.f32 %v1410, %v1480
  %v2152 = vmax.f32 %v1708, %v1778
  %v2153 = vmax.f32 %v2006, %v2076
  %v2154 = vmax.f32 %v1115, %v1185
  %v2155 = vmax.f32 %v1413, %v1483
  %v2156 = vmax.f32 %v1711, %v1781
  %v2157 = vmax.f32 %v2009, %v2079
  %v2158 = vmax.f32 %v1117, %v1187
  %v2159 = vmax.f32 %v1415, %v1485
  %v2160 = vmax.f32 %v1713, %v1783
  %v2161 = vmax.f32 %v2011, %v2081
  %v2162 = vmax.f32 %v1120, %v1190
  %v2163 = vmax.f32 %v1418, %v1488
  %v2164 = vmax.f32 %v1716, %v1786
  %v2165 = vmax.f32 %v2014, %v2084
  %v2166 = vmax.f32 %v1122, %v1192
  %v2167 = vmax.f32 %v1420, %v1490
  %v2168 = vmax.f32 %v1718, %v1788
  %v2169 = vmax.f32 %v2016, %v2086
  %v2170 = vmax.f32 %v1125, %v1195
  %v2171 = vmax.f32 %v1423, %v1493
  %v2172 = vmax.f32 %v1721, %v1791
  %v2173 = vmax.f32 %v2019, %v2089
  %v2174 = vmax.f32 %v1127, %v1197
  %v2175 = vmax.f32 %v1425, %v1495
  %v2176 = vmax.f32 %v1723, %v1793
  %v2177 = vmax.f32 %v2021, %v2091
  %v2178 = vmax.f32 %v1130, %v1200
  %v2179 = vmax.f32 %v1428, %v1498
  %v2180 = vmax.f32 %v1726, %v1796
  %v2181 = vmax.f32 %v2024, %v2094
  %v2182 = vmax.f32 %v1132, %v1202
  %v2183 = vmax.f32 %v1430, %v1500
  %v2184 = vmax.f32 %v1728, %v1798
  %v2185 = vmax.f32 %v2026, %v2096
  %v2186 = vmax.f32 %v1135, %v1205
  %v2187 = vmax.f32 %v1433, %v1503
  %v2188 = vmax.f32 %v1731, %v1801
  %v2189 = vmax.f32 %v2029, %v2099
  %v2190 = vmax.f32 %v1137, %v1207
  %v2191 = vmax.f32 %v1435, %v1505
  %v2192 = vmax.f32 %v1733, %v1803
  %v2193 = vmax.f32 %v2031, %v2101
  %v2194 = vmax.f32 %v1140, %v1210
  %v2195 = vmax.f32 %v1438, %v1508
  %v2196 = vmax.f32 %v1736, %v1806
  %v2197 = vmax.f32 %v2034, %v2104
  %v2198 = vmax.f32 %v1142, %v1212
  %v2199 = vmax.f32 %v1440, %v1510
  %v2200 = vmax.f32 %v1738, %v1808
  %v2201 = vmax.f32 %v2036, %v2106
  %v2202 = vmax.f32 %v1145, %v1215
  %v2203 = vmax.f32 %v1443, %v1513
  %v2204 = vmax.f32 %v1741, %v1811
  %v2205 = vmax.f32 %v2039, %v2109
  %v2206 = vmax.f32 %v1147, %v1217
  %v2207 = vmax.f32 %v1445, %v1515
  %v2208 = vmax.f32 %v1743, %v1813
  %v2209 = vmax.f32 %v2041, %v2111
  %v2210 = vmax.f32 %v1150, %v1220
  %v2211 = vmax.f32 %v1448, %v1518
  %v2212 = vmax.f32 %v1746, %v1816
  %v2213 = vmax.f32 %v2044, %v2114
  %v2214 = vmax.f32 %v1152, %v1222
  %v2215 = vmax.f32 %v1450, %v1520
  %v2216 = vmax.f32 %v1748, %v1818
  %v2217 = vmax.f32 %v2046, %v2116
  %v2218 = vmax.f32 %v1155, %v1225
  %v2219 = vmax.f32 %v1453, %v1523
  %v2220 = vmax.f32 %v1751, %v1821
  %v2221 = vmax.f32 %v2049, %v2119
  %v2222 = vmax.f32 %v1157, %v1227
  %v2223 = vmax.f32 %v1455, %v1525
  %v2224 = vmax.f32 %v1753, %v1823
  %v2225 = vmax.f32 %v2051, %v2121
  %v2226 = vmax.f32 %v1160, %v1230
  %v2227 = vmax.f32 %v1458, %v1528
  %v2228 = vmax.f32 %v1756, %v1826
  %v2229 = vmax.f32 %v2054, %v2124
  %v2230 = vmax.f32 %v1162, %v1232
  %v2231 = vmax.f32 %v1460, %v1530
  %v2232 = vmax.f32 %v1758, %v1828
  %v2233 = vmax.f32 %v2056, %v2126
  %v2234 = vmax.f32 %v1165, %v1235
  %v2235 = vmax.f32 %v1463, %v1533
  %v2236 = vmax.f32 %v1761, %v1831
  %v2237 = vmax.f32 %v2059, %v2129
  %v2238 = vmax.f32 %v1167, %v1237
  %v2239 = vmax.f32 %v1465, %v1535
  %v2240 = vmax.f32 %v1763, %v1833
  %v2241 = vmax.f32 %v2061, %v2131
  %v2242 = vmax.f32 %v1170, %v1240
  %v2243 = vmax.f32 %v1468, %v1538
  %v2244 = vmax.f32 %v1766, %v1836
  %v2245 = vmax.f32 %v2064, %v2134
  %v2246 = vmax.f32 %v1172, %v1242
  %v2247 = vmax.f32 %v1470, %v1540
  %v2248 = vmax.f32 %v1768, %v1838
  %v2249 = vmax.f32 %v2066, %v2136
  %v2250 = vmax.f32 %v2138, %v2140
  %v2251 = vmax.f32 %v2139, %v2141
  %v2252 = vmax.f32 %v2142, %v2144
  %v2253 = vmax.f32 %v2143, %v2145
  %v2254 = vmax.f32 %v2146, %v2148
  %v2255 = vmax.f32 %v2147, %v2149
  %v2256 = vmax.f32 %v2150, %v2152
  %v2257 = vmax.f32 %v2151, %v2153
  %v2258 = vmax.f32 %v2154, %v2156
  %v2259 = vmax.f32 %v2155, %v2157
  %v2260 = vmax.f32 %v2158, %v2160
  %v2261 = vmax.f32 %v2159, %v2161
  %v2262 = vmax.f32 %v2162, %v2164
  %v2263 = vmax.f32 %v2163, %v2165
  %v2264 = vmax.f32 %v2166, %v2168
  %v2265 = vmax.f32 %v2167, %v2169
  %v2266 = vmax.f32 %v2170, %v2172
  %v2267 = vmax.f32 %v2171, %v2173
  %v2268 = vmax.f32 %v2174, %v2176
  %v2269 = vmax.f32 %v2175, %v2177
  %v2270 = vmax.f32 %v2178, %v2180
  %v2271 = vmax.f32 %v2179, %v2181
  %v2272 = vmax.f32 %v2182, %v2184
  %v2273 = vmax.f32 %v2183, %v2185
  %v2274 = vmax.f32 %v2186, %v2188
  %v2275 = vmax.f32 %v2187, %v2189
  %v2276 = vmax.f32 %v2190, %v2192
  %v2277 = vmax.f32 %v2191, %v2193
  %v2278 = vmax.f32 %v2194, %v2196
  %v2279 = vmax.f32 %v2195, %v2197
  %v2280 = vmax.f32 %v2198, %v2200
  %v2281 = vmax.f32 %v2199, %v2201
  %v2282 = vmax.f32 %v2202, %v2204
  %v2283 = vmax.f32 %v2203, %v2205
  %v2284 = vmax.f32 %v2206, %v2208
  %v2285 = vmax.f32 %v2207, %v2209
  %v2286 = vmax.f32 %v2210, %v2212
  %v2287 = vmax.f32 %v2211, %v2213
  %v2288 = vmax.f32 %v2214, %v2216
  %v2289 = vmax.f32 %v2215, %v2217
  %v2290 = vmax.f32 %v2218, %v2220
  %v2291 = vmax.f32 %v2219, %v2221
  %v2292 = vmax.f32 %v2222, %v2224
  %v2293 = vmax.f32 %v2223, %v2225
  %v2294 = vmax.f32 %v2226, %v2228
  %v2295 = vmax.f32 %v2227, %v2229
  %v2296 = vmax.f32 %v2230, %v2232
  %v2297 = vmax.f32 %v2231, %v2233
  %v2298 = vmax.f32 %v2234, %v2236
  %v2299 = vmax.f32 %v2235, %v2237
  %v2300 = vmax.f32 %v2238, %v2240
  %v2301 = vmax.f32 %v2239, %v2241
  %v2302 = vmax.f32 %v2242, %v2244
  %v2303 = vmax.f32 %v2243, %v2245
  %v2304 = vmax.f32 %v2246, %v2248
  %v2305 = vmax.f32 %v2247, %v2249
  %v2306 = vld [vmem:[%s2] sm:$0x3]
  %v2308 = vperm.slane %v2306, 0
  %v2309 = vperm.slane %v2306, 1
  %v2312 = vadd.f32 %v2250, %v2308
  %v2313 = vadd.f32 %v2251, %v2309
  %v2314 = vadd.f32 %v2252, %v2308
  %v2315 = vadd.f32 %v2253, %v2309
  %v2316 = vadd.f32 %v2254, %v2308
  %v2317 = vadd.f32 %v2255, %v2309
  %v2318 = vadd.f32 %v2256, %v2308
  %v2319 = vadd.f32 %v2257, %v2309
  %v2320 = vadd.f32 %v2258, %v2308
  %v2321 = vadd.f32 %v2259, %v2309
  %v2322 = vadd.f32 %v2260, %v2308
  %v2323 = vadd.f32 %v2261, %v2309
  %v2324 = vadd.f32 %v2262, %v2308
  %v2325 = vadd.f32 %v2263, %v2309
  %v2326 = vadd.f32 %v2264, %v2308
  %v2327 = vadd.f32 %v2265, %v2309
  %v2328 = vadd.f32 %v2266, %v2308
  %v2329 = vadd.f32 %v2267, %v2309
  %v2330 = vadd.f32 %v2268, %v2308
  %v2331 = vadd.f32 %v2269, %v2309
  %v2332 = vadd.f32 %v2270, %v2308
  %v2333 = vadd.f32 %v2271, %v2309
  %v2334 = vadd.f32 %v2272, %v2308
  %v2335 = vadd.f32 %v2273, %v2309
  %v2336 = vadd.f32 %v2274, %v2308
  %v2337 = vadd.f32 %v2275, %v2309
  %v2338 = vadd.f32 %v2276, %v2308
  %v2339 = vadd.f32 %v2277, %v2309
  %v2340 = vadd.f32 %v2278, %v2308
  %v2341 = vadd.f32 %v2279, %v2309
  %v2342 = vadd.f32 %v2280, %v2308
  %v2343 = vadd.f32 %v2281, %v2309
  %v2344 = vadd.f32 %v2282, %v2308
  %v2345 = vadd.f32 %v2283, %v2309
  %v2346 = vadd.f32 %v2284, %v2308
  %v2347 = vadd.f32 %v2285, %v2309
  %v2348 = vadd.f32 %v2286, %v2308
  %v2349 = vadd.f32 %v2287, %v2309
  %v2350 = vadd.f32 %v2288, %v2308
  %v2351 = vadd.f32 %v2289, %v2309
  %v2352 = vadd.f32 %v2290, %v2308
  %v2353 = vadd.f32 %v2291, %v2309
  %v2354 = vadd.f32 %v2292, %v2308
  %v2355 = vadd.f32 %v2293, %v2309
  %v2356 = vadd.f32 %v2294, %v2308
  %v2357 = vadd.f32 %v2295, %v2309
  %v2358 = vadd.f32 %v2296, %v2308
  %v2359 = vadd.f32 %v2297, %v2309
  %v2360 = vadd.f32 %v2298, %v2308
  %v2361 = vadd.f32 %v2299, %v2309
  %v2362 = vadd.f32 %v2300, %v2308
  %v2363 = vadd.f32 %v2301, %v2309
  %v2364 = vadd.f32 %v2302, %v2308
  %v2365 = vadd.f32 %v2303, %v2309
  %v2366 = vadd.f32 %v2304, %v2308
  %v2367 = vadd.f32 %v2305, %v2309
  %v2368 = vmax.f32 %v2312, 0.0
  %v2369 = vmax.f32 %v2313, 0.0
  %v2370 = vmax.f32 %v2314, 0.0
  %v2371 = vmax.f32 %v2315, 0.0
  %v2372 = vmax.f32 %v2316, 0.0
  %v2373 = vmax.f32 %v2317, 0.0
  %v2374 = vmax.f32 %v2318, 0.0
  %v2375 = vmax.f32 %v2319, 0.0
  %v2376 = vmax.f32 %v2320, 0.0
  %v2377 = vmax.f32 %v2321, 0.0
  %v2378 = vmax.f32 %v2322, 0.0
  %v2379 = vmax.f32 %v2323, 0.0
  %v2380 = vmax.f32 %v2324, 0.0
  %v2381 = vmax.f32 %v2325, 0.0
  %v2382 = vmax.f32 %v2326, 0.0
  %v2383 = vmax.f32 %v2327, 0.0
  %v2384 = vmax.f32 %v2328, 0.0
  %v2385 = vmax.f32 %v2329, 0.0
  %v2386 = vmax.f32 %v2330, 0.0
  %v2387 = vmax.f32 %v2331, 0.0
  %v2388 = vmax.f32 %v2332, 0.0
  %v2389 = vmax.f32 %v2333, 0.0
  %v2390 = vmax.f32 %v2334, 0.0
  %v2391 = vmax.f32 %v2335, 0.0
  %v2392 = vmax.f32 %v2336, 0.0
  %v2393 = vmax.f32 %v2337, 0.0
  %v2394 = vmax.f32 %v2338, 0.0
  %v2395 = vmax.f32 %v2339, 0.0
  %v2396 = vmax.f32 %v2340, 0.0
  %v2397 = vmax.f32 %v2341, 0.0
  %v2398 = vmax.f32 %v2342, 0.0
  %v2399 = vmax.f32 %v2343, 0.0
  %v2400 = vmax.f32 %v2344, 0.0
  %v2401 = vmax.f32 %v2345, 0.0
  %v2402 = vmax.f32 %v2346, 0.0
  %v2403 = vmax.f32 %v2347, 0.0
  %v2404 = vmax.f32 %v2348, 0.0
  %v2405 = vmax.f32 %v2349, 0.0
  %v2406 = vmax.f32 %v2350, 0.0
  %v2407 = vmax.f32 %v2351, 0.0
  %v2408 = vmax.f32 %v2352, 0.0
  %v2409 = vmax.f32 %v2353, 0.0
  %v2410 = vmax.f32 %v2354, 0.0
  %v2411 = vmax.f32 %v2355, 0.0
  %v2412 = vmax.f32 %v2356, 0.0
  %v2413 = vmax.f32 %v2357, 0.0
  %v2414 = vmax.f32 %v2358, 0.0
  %v2415 = vmax.f32 %v2359, 0.0
  %v2416 = vmax.f32 %v2360, 0.0
  %v2417 = vmax.f32 %v2361, 0.0
  %v2418 = vmax.f32 %v2362, 0.0
  %v2419 = vmax.f32 %v2363, 0.0
  %v2420 = vmax.f32 %v2364, 0.0
  %v2421 = vmax.f32 %v2365, 0.0
  %v2422 = vmax.f32 %v2366, 0.0
  %v2423 = vmax.f32 %v2367, 0.0
  %v2424 = vpack.c.bf16 %v2369, %v2368
  %v2425 = vpack.c.bf16 %v2371, %v2370
  %v2426 = vpack.c.bf16 %v2373, %v2372
  %v2427 = vpack.c.bf16 %v2375, %v2374
  %v2428 = vpack.c.bf16 %v2377, %v2376
  %v2429 = vpack.c.bf16 %v2379, %v2378
  %v2430 = vpack.c.bf16 %v2381, %v2380
  %v2431 = vpack.c.bf16 %v2383, %v2382
  %v2432 = vpack.c.bf16 %v2385, %v2384
  %v2433 = vpack.c.bf16 %v2387, %v2386
  %v2434 = vpack.c.bf16 %v2389, %v2388
  %v2435 = vpack.c.bf16 %v2391, %v2390
  %v2436 = vpack.c.bf16 %v2393, %v2392
  %v2437 = vpack.c.bf16 %v2395, %v2394
  %v2438 = vpack.c.bf16 %v2397, %v2396
  %v2439 = vpack.c.bf16 %v2399, %v2398
  %v2440 = vpack.c.bf16 %v2401, %v2400
  %v2441 = vpack.c.bf16 %v2403, %v2402
  %v2442 = vpack.c.bf16 %v2405, %v2404
  %v2443 = vpack.c.bf16 %v2407, %v2406
  %v2444 = vpack.c.bf16 %v2409, %v2408
  %v2445 = vpack.c.bf16 %v2411, %v2410
  %v2446 = vpack.c.bf16 %v2413, %v2412
  %v2447 = vpack.c.bf16 %v2415, %v2414
  %v2448 = vpack.c.bf16 %v2417, %v2416
  %v2449 = vpack.c.bf16 %v2419, %v2418
  %v2450 = vpack.c.bf16 %v2421, %v2420
  %v2451 = vpack.c.bf16 %v2423, %v2422
  %2452 = vst [vmem:[#allocation2] sm:$0xff] 0
  %vm2453 = vcmask 257024
  %2454 = vst.msk [vmem:[#allocation2 + $0x8] sm:$0xf] %vm2453, 0
  %2455 = vst [vmem:[#allocation2 + $0xc] sm:$0xff] 0
  %2456 = vst.msk [vmem:[#allocation2 + $0x14] sm:$0xf] %vm2453, 0
  %2457 = vst [vmem:[#allocation2 + $0x18] sm:$0xff] 0
  %2458 = vst.msk [vmem:[#allocation2 + $0x20] sm:$0xf] %vm2453, 0
  %2459 = vst [vmem:[#allocation2 + $0x24] sm:$0xff] 0
  %2460 = vst.msk [vmem:[#allocation2 + $0x2c] sm:$0xf] %vm2453, 0
  %2461 = vst [vmem:[#allocation2 + $0x30] sm:$0xff] 0
  %2462 = vst.msk [vmem:[#allocation2 + $0x38] sm:$0xf] %vm2453, 0
  %2463 = vst [vmem:[#allocation2 + $0x3c] sm:$0xff] 0
  %2464 = vst.msk [vmem:[#allocation2 + $0x44] sm:$0xf] %vm2453, 0
  %2465 = vst [vmem:[#allocation2 + $0x48] sm:$0xff] 0
  %2466 = vst.msk [vmem:[#allocation2 + $0x50] sm:$0xf] %vm2453, 0
  %2467 = vst [vmem:[#allocation2 + $0x54] sm:$0xff] 0
  %2468 = vst.msk [vmem:[#allocation2 + $0x5c] sm:$0xf] %vm2453, 0
  %2469 = vst [vmem:[#allocation2 + $0x60] sm:$0xff] 0
  %2470 = vst.msk [vmem:[#allocation2 + $0x68] sm:$0xf] %vm2453, 0
  %2471 = vst [vmem:[#allocation2 + $0x6c] sm:$0xff] 0
  %2472 = vst.msk [vmem:[#allocation2 + $0x74] sm:$0xf] %vm2453, 0
  %2473 = vst [vmem:[#allocation2 + $0x78] sm:$0xff] 0
  %2474 = vst.msk [vmem:[#allocation2 + $0x80] sm:$0xf] %vm2453, 0
  %2475 = vst [vmem:[#allocation2 + $0x84] sm:$0xff] 0
  %2476 = vst.msk [vmem:[#allocation2 + $0x8c] sm:$0xf] %vm2453, 0
  %2477 = vst [vmem:[#allocation2 + $0x90] sm:$0xff] 0
  %2478 = vst.msk [vmem:[#allocation2 + $0x98] sm:$0xf] %vm2453, 0
  %2479 = vst [vmem:[#allocation2 + $0x9c] sm:$0xff] 0
  %2480 = vst.msk [vmem:[#allocation2 + $0xa4] sm:$0xf] %vm2453, 0
  %2481 = vst [vmem:[#allocation2 + $0xa8] sm:$0xff] 0
  %2482 = vst.msk [vmem:[#allocation2 + $0xb0] sm:$0xf] %vm2453, 0
  %2483 = vst [vmem:[#allocation2 + $0xb4] sm:$0xff] 0
  %2484 = vst.msk [vmem:[#allocation2 + $0xbc] sm:$0xf] %vm2453, 0
  %2485 = vst [vmem:[#allocation2 + $0xc0] sm:$0xff] 0
  %2486 = vst.msk [vmem:[#allocation2 + $0xc8] sm:$0xf] %vm2453, 0
  %2487 = vst [vmem:[#allocation2 + $0xcc] sm:$0xff] 0
  %2488 = vst.msk [vmem:[#allocation2 + $0xd4] sm:$0xf] %vm2453, 0
  %2489 = vst [vmem:[#allocation2 + $0xd8] sm:$0xff] 0
  %2490 = vst.msk [vmem:[#allocation2 + $0xe0] sm:$0xf] %vm2453, 0
  %2491 = vst [vmem:[#allocation2 + $0xe4] sm:$0xff] 0
  %2492 = vst.msk [vmem:[#allocation2 + $0xec] sm:$0xf] %vm2453, 0
  %2493 = vst [vmem:[#allocation2 + $0xf0] sm:$0xff] 0
  %2494 = vst.msk [vmem:[#allocation2 + $0xf8] sm:$0xf] %vm2453, 0
  %2495 = vst [vmem:[#allocation2 + $0xfc] sm:$0xff] 0
  %2496 = vst.msk [vmem:[#allocation2 + $0x104] sm:$0xf] %vm2453, 0
  %2497 = vst [vmem:[#allocation2 + $0x108] sm:$0xff] 0
  %2498 = vst.msk [vmem:[#allocation2 + $0x110] sm:$0xf] %vm2453, 0
  %2499 = vst [vmem:[#allocation2 + $0x114] sm:$0xff] 0
  %2500 = vst.msk [vmem:[#allocation2 + $0x11c] sm:$0xf] %vm2453, 0
  %2501 = vst [vmem:[#allocation2 + $0x120] sm:$0xff] 0
  %2502 = vst.msk [vmem:[#allocation2 + $0x128] sm:$0xf] %vm2453, 0
  %2503 = vst [vmem:[#allocation2 + $0x12c] sm:$0xff] 0
  %2504 = vst.msk [vmem:[#allocation2 + $0x134] sm:$0xf] %vm2453, 0
  %2505 = vst [vmem:[#allocation2 + $0x138] sm:$0xff] 0
  %2506 = vst.msk [vmem:[#allocation2 + $0x140] sm:$0xf] %vm2453, 0
  %2507 = vst [vmem:[#allocation2 + $0x144] sm:$0xff] 0
  %2508 = vst.msk [vmem:[#allocation2 + $0x14c] sm:$0xf] %vm2453, 0
  %2509 = vst [vmem:[#allocation2 + $0x150] sm:$0xff] 0
  %2510 = vst.msk [vmem:[#allocation2 + $0x158] sm:$0xf] %vm2453, 0
  %2511 = vst [vmem:[#allocation2 + $0x15c] sm:$0xff] 0
  %2512 = vst.msk [vmem:[#allocation2 + $0x164] sm:$0xf] %vm2453, 0
  %2513 = vst [vmem:[#allocation2 + $0x168] sm:$0xff] 0
  %2514 = vst.msk [vmem:[#allocation2 + $0x170] sm:$0xf] %vm2453, 0
  %2515 = vst [vmem:[#allocation2 + $0x174] sm:$0xff] 0
  %2516 = vst.msk [vmem:[#allocation2 + $0x17c] sm:$0xf] %vm2453, 0
  %2517 = vst [vmem:[#allocation2 + $0x180] sm:$0xff] 0
  %2518 = vst.msk [vmem:[#allocation2 + $0x188] sm:$0xf] %vm2453, 0
  %2519 = vst [vmem:[#allocation2 + $0x18c] sm:$0xff] 0
  %2520 = vst.msk [vmem:[#allocation2 + $0x194] sm:$0xf] %vm2453, 0
  %2521 = vst [vmem:[#allocation2 + $0x198] sm:$0xff] 0
  %2522 = vst.msk [vmem:[#allocation2 + $0x1a0] sm:$0xf] %vm2453, 0
  %2523 = vst [vmem:[#allocation2 + $0x1a4] sm:$0xff] 0
  %2524 = vst.msk [vmem:[#allocation2 + $0x1ac] sm:$0xf] %vm2453, 0
  %vm2525 = vcmask 1043456
  %vm2526 = vcmask 785412
  %vm2527 = vmor %vm2526, %vm2525
  %2528 = vst.msk [vmem:[#allocation2 + $0x30] sm:$0xff] %vm2527, %v2424
  %2529 = vst.msk [vmem:[#allocation2 + $0x3c] sm:$0xff] %vm2527, %v2425
  %2530 = vst.msk [vmem:[#allocation2 + $0x48] sm:$0xff] %vm2527, %v2426
  %2531 = vst.msk [vmem:[#allocation2 + $0x54] sm:$0xff] %vm2527, %v2427
  %2532 = vst.msk [vmem:[#allocation2 + $0x60] sm:$0xff] %vm2527, %v2428
  %2533 = vst.msk [vmem:[#allocation2 + $0x6c] sm:$0xff] %vm2527, %v2429
  %2534 = vst.msk [vmem:[#allocation2 + $0x78] sm:$0xff] %vm2527, %v2430
  %2535 = vst.msk [vmem:[#allocation2 + $0x84] sm:$0xff] %vm2527, %v2431
  %2536 = vst.msk [vmem:[#allocation2 + $0x90] sm:$0xff] %vm2527, %v2432
  %2537 = vst.msk [vmem:[#allocation2 + $0x9c] sm:$0xff] %vm2527, %v2433
  %2538 = vst.msk [vmem:[#allocation2 + $0xa8] sm:$0xff] %vm2527, %v2434
  %2539 = vst.msk [vmem:[#allocation2 + $0xb4] sm:$0xff] %vm2527, %v2435
  %2540 = vst.msk [vmem:[#allocation2 + $0xc0] sm:$0xff] %vm2527, %v2436
  %2541 = vst.msk [vmem:[#allocation2 + $0xcc] sm:$0xff] %vm2527, %v2437
  %2542 = vst.msk [vmem:[#allocation2 + $0xd8] sm:$0xff] %vm2527, %v2438
  %2543 = vst.msk [vmem:[#allocation2 + $0xe4] sm:$0xff] %vm2527, %v2439
  %2544 = vst.msk [vmem:[#allocation2 + $0xf0] sm:$0xff] %vm2527, %v2440
  %2545 = vst.msk [vmem:[#allocation2 + $0xfc] sm:$0xff] %vm2527, %v2441
  %2546 = vst.msk [vmem:[#allocation2 + $0x108] sm:$0xff] %vm2527, %v2442
  %2547 = vst.msk [vmem:[#allocation2 + $0x114] sm:$0xff] %vm2527, %v2443
  %2548 = vst.msk [vmem:[#allocation2 + $0x120] sm:$0xff] %vm2527, %v2444
  %2549 = vst.msk [vmem:[#allocation2 + $0x12c] sm:$0xff] %vm2527, %v2445
  %2550 = vst.msk [vmem:[#allocation2 + $0x138] sm:$0xff] %vm2527, %v2446
  %2551 = vst.msk [vmem:[#allocation2 + $0x144] sm:$0xff] %vm2527, %v2447
  %2552 = vst.msk [vmem:[#allocation2 + $0x150] sm:$0xff] %vm2527, %v2448
  %2553 = vst.msk [vmem:[#allocation2 + $0x15c] sm:$0xff] %vm2527, %v2449
  %2554 = vst.msk [vmem:[#allocation2 + $0x168] sm:$0xff] %vm2527, %v2450
  %2555 = vst.msk [vmem:[#allocation2 + $0x174] sm:$0xff] %vm2527, %v2451
  %v2556 = vld [vmem:[#allocation2] sm:$0xff]
  %v2557 = vld [vmem:[#allocation2 + $0x8] sm:$0xf]
  %v2558 = vld [vmem:[#allocation2 + $0xc] sm:$0xff]
  %v2559 = vld [vmem:[#allocation2 + $0x14] sm:$0xf]
  %v2560 = vld [vmem:[#allocation2 + $0x18] sm:$0xff]
  %v2561 = vld [vmem:[#allocation2 + $0x20] sm:$0xf]
  %v2562 = vld [vmem:[#allocation2 + $0x24] sm:$0xff]
  %v2563 = vld [vmem:[#allocation2 + $0x2c] sm:$0xf]
  %v2564 = vld [vmem:[#allocation2 + $0x30] sm:$0xff]
  %v2565 = vld [vmem:[#allocation2 + $0x38] sm:$0xf]
  %v2566 = vld [vmem:[#allocation2 + $0x3c] sm:$0xff]
  %v2567 = vld [vmem:[#allocation2 + $0x44] sm:$0xf]
  %v2568 = vld [vmem:[#allocation2 + $0x48] sm:$0xff]
  %v2569 = vld [vmem:[#allocation2 + $0x50] sm:$0xf]
  %v2570 = vld [vmem:[#allocation2 + $0x54] sm:$0xff]
  %v2571 = vld [vmem:[#allocation2 + $0x5c] sm:$0xf]
  %v2572 = vld [vmem:[#allocation2 + $0x60] sm:$0xff]
  %v2573 = vld [vmem:[#allocation2 + $0x68] sm:$0xf]
  %v2574 = vld [vmem:[#allocation2 + $0x6c] sm:$0xff]
  %v2575 = vld [vmem:[#allocation2 + $0x74] sm:$0xf]
  %v2576 = vld [vmem:[#allocation2 + $0x78] sm:$0xff]
  %v2577 = vld [vmem:[#allocation2 + $0x80] sm:$0xf]
  %v2578 = vld [vmem:[#allocation2 + $0x84] sm:$0xff]
  %v2579 = vld [vmem:[#allocation2 + $0x8c] sm:$0xf]
  %v2580 = vld [vmem:[#allocation2 + $0x90] sm:$0xff]
  %v2581 = vld [vmem:[#allocation2 + $0x98] sm:$0xf]
  %v2582 = vld [vmem:[#allocation2 + $0x9c] sm:$0xff]
  %v2583 = vld [vmem:[#allocation2 + $0xa4] sm:$0xf]
  %v2584 = vld [vmem:[#allocation2 + $0xa8] sm:$0xff]
  %v2585 = vld [vmem:[#allocation2 + $0xb0] sm:$0xf]
  %v2586 = vld [vmem:[#allocation2 + $0xb4] sm:$0xff]
  %v2587 = vld [vmem:[#allocation2 + $0xbc] sm:$0xf]
  %v2588 = vld [vmem:[#allocation2 + $0xc0] sm:$0xff]
  %v2589 = vld [vmem:[#allocation2 + $0xc8] sm:$0xf]
  %v2590 = vld [vmem:[#allocation2 + $0xcc] sm:$0xff]
  %v2591 = vld [vmem:[#allocation2 + $0xd4] sm:$0xf]
  %v2592 = vld [vmem:[#allocation2 + $0xd8] sm:$0xff]
  %v2593 = vld [vmem:[#allocation2 + $0xe0] sm:$0xf]
  %v2594 = vld [vmem:[#allocation2 + $0xe4] sm:$0xff]
  %v2595 = vld [vmem:[#allocation2 + $0xec] sm:$0xf]
  %v2596 = vld [vmem:[#allocation2 + $0xf0] sm:$0xff]
  %v2597 = vld [vmem:[#allocation2 + $0xf8] sm:$0xf]
  %v2598 = vld [vmem:[#allocation2 + $0xfc] sm:$0xff]
  %v2599 = vld [vmem:[#allocation2 + $0x104] sm:$0xf]
  %v2600 = vld [vmem:[#allocation2 + $0x108] sm:$0xff]
  %v2601 = vld [vmem:[#allocation2 + $0x110] sm:$0xf]
  %v2602 = vld [vmem:[#allocation2 + $0x114] sm:$0xff]
  %v2603 = vld [vmem:[#allocation2 + $0x11c] sm:$0xf]
  %v2604 = vld [vmem:[#allocation2 + $0x120] sm:$0xff]
  %v2605 = vld [vmem:[#allocation2 + $0x128] sm:$0xf]
  %v2606 = vld [vmem:[#allocation2 + $0x12c] sm:$0xff]
  %v2607 = vld [vmem:[#allocation2 + $0x134] sm:$0xf]
  %v2608 = vld [vmem:[#allocation2 + $0x138] sm:$0xff]
  %v2609 = vld [vmem:[#allocation2 + $0x140] sm:$0xf]
  %v2610 = vld [vmem:[#allocation2 + $0x144] sm:$0xff]
  %v2611 = vld [vmem:[#allocation2 + $0x14c] sm:$0xf]
  %v2612 = vld [vmem:[#allocation2 + $0x150] sm:$0xff]
  %v2613 = vld [vmem:[#allocation2 + $0x158] sm:$0xf]
  %v2614 = vld [vmem:[#allocation2 + $0x15c] sm:$0xff]
  %v2615 = vld [vmem:[#allocation2 + $0x164] sm:$0xf]
  %v2616 = vld [vmem:[#allocation2 + $0x168] sm:$0xff]
  %v2617 = vld [vmem:[#allocation2 + $0x170] sm:$0xf]
  %v2618 = vld [vmem:[#allocation2 + $0x174] sm:$0xff]
  %v2619 = vld [vmem:[#allocation2 + $0x17c] sm:$0xf]
  %v2620 = vld [vmem:[#allocation2 + $0x180] sm:$0xff]
  %v2621 = vld [vmem:[#allocation2 + $0x188] sm:$0xf]
  %v2622 = vld [vmem:[#allocation2 + $0x18c] sm:$0xff]
  %v2623 = vld [vmem:[#allocation2 + $0x194] sm:$0xf]
  %v2624 = vld [vmem:[#allocation2 + $0x198] sm:$0xff]
  %v2625 = vld [vmem:[#allocation2 + $0x1a0] sm:$0xf]
  %v2626 = vld [vmem:[#allocation2 + $0x1a4] sm:$0xff]
  %v2627 = vld [vmem:[#allocation2 + $0x1ac] sm:$0xf]
  %v2684 = vunpack.c.l.b16 %v2556
  %v2685 = vunpack.c.h.b16 %v2556
  %v2686 = vunpack.c.l.b16 %v2557
  %v2687 = vunpack.c.l.b16 %v2558
  %v2688 = vunpack.c.h.b16 %v2558
  %v2689 = vunpack.c.l.b16 %v2559
  %v2690 = vunpack.c.l.b16 %v2560
  %v2691 = vunpack.c.h.b16 %v2560
  %v2692 = vunpack.c.l.b16 %v2561
  %v2693 = vunpack.c.l.b16 %v2562
  %v2694 = vunpack.c.h.b16 %v2562
  %v2695 = vunpack.c.l.b16 %v2563
  %v2696 = vunpack.c.l.b16 %v2564
  %v2697 = vunpack.c.h.b16 %v2564
  %v2698 = vunpack.c.l.b16 %v2565
  %v2699 = vunpack.c.l.b16 %v2566
  %v2700 = vunpack.c.h.b16 %v2566
  %v2701 = vunpack.c.l.b16 %v2567
  %v2702 = vunpack.c.l.b16 %v2568
  %v2703 = vunpack.c.h.b16 %v2568
  %v2704 = vunpack.c.l.b16 %v2569
  %v2705 = vunpack.c.l.b16 %v2570
  %v2706 = vunpack.c.h.b16 %v2570
  %v2707 = vunpack.c.l.b16 %v2571
  %v2708 = vunpack.c.l.b16 %v2572
  %v2709 = vunpack.c.h.b16 %v2572
  %v2710 = vunpack.c.l.b16 %v2573
  %v2711 = vunpack.c.l.b16 %v2574
  %v2712 = vunpack.c.h.b16 %v2574
  %v2713 = vunpack.c.l.b16 %v2575
  %v2714 = vunpack.c.l.b16 %v2576
  %v2715 = vunpack.c.h.b16 %v2576
  %v2716 = vunpack.c.l.b16 %v2577
  %v2717 = vunpack.c.l.b16 %v2578
  %v2718 = vunpack.c.h.b16 %v2578
  %v2719 = vunpack.c.l.b16 %v2579
  %v2720 = vunpack.c.l.b16 %v2580
  %v2721 = vunpack.c.h.b16 %v2580
  %v2722 = vunpack.c.l.b16 %v2581
  %v2723 = vunpack.c.l.b16 %v2582
  %v2724 = vunpack.c.h.b16 %v2582
  %v2725 = vunpack.c.l.b16 %v2583
  %v2726 = vunpack.c.l.b16 %v2584
  %v2727 = vunpack.c.h.b16 %v2584
  %v2728 = vunpack.c.l.b16 %v2585
  %v2729 = vunpack.c.l.b16 %v2586
  %v2730 = vunpack.c.h.b16 %v2586
  %v2731 = vunpack.c.l.b16 %v2587
  %v2732 = vunpack.c.l.b16 %v2588
  %v2733 = vunpack.c.h.b16 %v2588
  %v2734 = vunpack.c.l.b16 %v2589
  %v2735 = vunpack.c.l.b16 %v2590
  %v2736 = vunpack.c.h.b16 %v2590
  %v2737 = vunpack.c.l.b16 %v2591
  %v2738 = vunpack.c.l.b16 %v2592
  %v2739 = vunpack.c.h.b16 %v2592
  %v2740 = vunpack.c.l.b16 %v2593
  %v2741 = vunpack.c.l.b16 %v2594
  %v2742 = vunpack.c.h.b16 %v2594
  %v2743 = vunpack.c.l.b16 %v2595
  %v2744 = vunpack.c.l.b16 %v2596
  %v2745 = vunpack.c.h.b16 %v2596
  %v2746 = vunpack.c.l.b16 %v2597
  %v2747 = vunpack.c.l.b16 %v2598
  %v2748 = vunpack.c.h.b16 %v2598
  %v2749 = vunpack.c.l.b16 %v2599
  %v2750 = vunpack.c.l.b16 %v2600
  %v2751 = vunpack.c.h.b16 %v2600
  %v2752 = vunpack.c.l.b16 %v2601
  %v2753 = vunpack.c.l.b16 %v2602
  %v2754 = vunpack.c.h.b16 %v2602
  %v2755 = vunpack.c.l.b16 %v2603
  %v2756 = vunpack.c.l.b16 %v2604
  %v2757 = vunpack.c.h.b16 %v2604
  %v2758 = vunpack.c.l.b16 %v2605
  %v2759 = vunpack.c.l.b16 %v2606
  %v2760 = vunpack.c.h.b16 %v2606
  %v2761 = vunpack.c.l.b16 %v2607
  %v2762 = vunpack.c.l.b16 %v2608
  %v2763 = vunpack.c.h.b16 %v2608
  %v2764 = vunpack.c.l.b16 %v2609
  %v2765 = vunpack.c.l.b16 %v2610
  %v2766 = vunpack.c.h.b16 %v2610
  %v2767 = vunpack.c.l.b16 %v2611
  %v2768 = vpack.c.b16 %v2687, %v2684
  %v2769 = vpack.c.b16 %v2688, %v2685
  %v2770 = vpack.c.b16 %v2689, %v2686
  %v2771 = vpack.c.b16 %v2693, %v2690
  %v2772 = vpack.c.b16 %v2694, %v2691
  %v2773 = vpack.c.b16 %v2695, %v2692
  %v2774 = vpack.c.b16 %v2699, %v2696
  %v2775 = vpack.c.b16 %v2700, %v2697
  %v2776 = vpack.c.b16 %v2701, %v2698
  %v2777 = vpack.c.b16 %v2705, %v2702
  %v2778 = vpack.c.b16 %v2706, %v2703
  %v2779 = vpack.c.b16 %v2707, %v2704
  %v2780 = vpack.c.b16 %v2711, %v2708
  %v2781 = vpack.c.b16 %v2712, %v2709
  %v2782 = vpack.c.b16 %v2713, %v2710
  %v2783 = vpack.c.b16 %v2717, %v2714
  %v2784 = vpack.c.b16 %v2718, %v2715
  %v2785 = vpack.c.b16 %v2719, %v2716
  %v2786 = vpack.c.b16 %v2723, %v2720
  %v2787 = vpack.c.b16 %v2724, %v2721
  %v2788 = vpack.c.b16 %v2725, %v2722
  %v2789 = vpack.c.b16 %v2729, %v2726
  %v2790 = vpack.c.b16 %v2730, %v2727
  %v2791 = vpack.c.b16 %v2731, %v2728
  %v2792 = vpack.c.b16 %v2735, %v2732
  %v2793 = vpack.c.b16 %v2736, %v2733
  %v2794 = vpack.c.b16 %v2737, %v2734
  %v2795 = vpack.c.b16 %v2741, %v2738
  %v2796 = vpack.c.b16 %v2742, %v2739
  %v2797 = vpack.c.b16 %v2743, %v2740
  %v2798 = vpack.c.b16 %v2747, %v2744
  %v2799 = vpack.c.b16 %v2748, %v2745
  %v2800 = vpack.c.b16 %v2749, %v2746
  %v2801 = vpack.c.b16 %v2753, %v2750
  %v2802 = vpack.c.b16 %v2754, %v2751
  %v2803 = vpack.c.b16 %v2755, %v2752
  %v2804 = vpack.c.b16 %v2759, %v2756
  %v2805 = vpack.c.b16 %v2760, %v2757
  %v2806 = vpack.c.b16 %v2761, %v2758
  %v2807 = vpack.c.b16 %v2765, %v2762
  %v2808 = vpack.c.b16 %v2766, %v2763
  %v2809 = vpack.c.b16 %v2767, %v2764
  %v2842 = vunpack.c.l.b16 %v2612
  %v2843 = vunpack.c.h.b16 %v2612
  %v2844 = vunpack.c.l.b16 %v2613
  %v2845 = vunpack.c.l.b16 %v2614
  %v2846 = vunpack.c.h.b16 %v2614
  %v2847 = vunpack.c.l.b16 %v2615
  %v2848 = vpack.c.b16 %v2845, %v2842
  %v2849 = vpack.c.b16 %v2846, %v2843
  %v2850 = vpack.c.b16 %v2847, %v2844
  %2851 = vrot.lane.b32.xlu0 %v2771, 32
  %v2852 = vpop.permute.xlu0 %2851
  %2853 = vrot.lane.b32.xlu0 %v2772, 32
  %v2854 = vpop.permute.xlu0 %2853
  %2855 = vrot.lane.b32.xlu0 %v2773, 32
  %v2856 = vpop.permute.xlu0 %2855
  %2857 = vrot.lane.b32.xlu0 %v2774, 32
  %v2858 = vpop.permute.xlu0 %2857
  %2859 = vrot.lane.b32.xlu0 %v2775, 32
  %v2860 = vpop.permute.xlu0 %2859
  %2861 = vrot.lane.b32.xlu0 %v2776, 32
  %v2862 = vpop.permute.xlu0 %2861
  %2863 = vrot.lane.b32.xlu0 %v2777, 32
  %v2864 = vpop.permute.xlu0 %2863
  %2865 = vrot.lane.b32.xlu0 %v2778, 32
  %v2866 = vpop.permute.xlu0 %2865
  %2867 = vrot.lane.b32.xlu0 %v2779, 32
  %v2868 = vpop.permute.xlu0 %2867
  %2869 = vrot.lane.b32.xlu0 %v2780, 32
  %v2870 = vpop.permute.xlu0 %2869
  %2871 = vrot.lane.b32.xlu0 %v2781, 32
  %v2872 = vpop.permute.xlu0 %2871
  %2873 = vrot.lane.b32.xlu0 %v2782, 32
  %v2874 = vpop.permute.xlu0 %2873
  %2875 = vrot.lane.b32.xlu0 %v2783, 32
  %v2876 = vpop.permute.xlu0 %2875
  %2877 = vrot.lane.b32.xlu0 %v2784, 32
  %v2878 = vpop.permute.xlu0 %2877
  %2879 = vrot.lane.b32.xlu0 %v2785, 32
  %v2880 = vpop.permute.xlu0 %2879
  %2881 = vrot.lane.b32.xlu0 %v2786, 32
  %v2882 = vpop.permute.xlu0 %2881
  %2883 = vrot.lane.b32.xlu0 %v2787, 32
  %v2884 = vpop.permute.xlu0 %2883
  %2885 = vrot.lane.b32.xlu0 %v2788, 32
  %v2886 = vpop.permute.xlu0 %2885
  %2887 = vrot.lane.b32.xlu0 %v2789, 32
  %v2888 = vpop.permute.xlu0 %2887
  %2889 = vrot.lane.b32.xlu0 %v2790, 32
  %v2890 = vpop.permute.xlu0 %2889
  %2891 = vrot.lane.b32.xlu0 %v2791, 32
  %v2892 = vpop.permute.xlu0 %2891
  %2893 = vrot.lane.b32.xlu0 %v2792, 32
  %v2894 = vpop.permute.xlu0 %2893
  %2895 = vrot.lane.b32.xlu0 %v2793, 32
  %v2896 = vpop.permute.xlu0 %2895
  %2897 = vrot.lane.b32.xlu0 %v2794, 32
  %v2898 = vpop.permute.xlu0 %2897
  %2899 = vrot.lane.b32.xlu0 %v2795, 32
  %v2900 = vpop.permute.xlu0 %2899
  %2901 = vrot.lane.b32.xlu0 %v2796, 32
  %v2902 = vpop.permute.xlu0 %2901
  %2903 = vrot.lane.b32.xlu0 %v2797, 32
  %v2904 = vpop.permute.xlu0 %2903
  %2905 = vrot.lane.b32.xlu0 %v2798, 32
  %v2906 = vpop.permute.xlu0 %2905
  %2907 = vrot.lane.b32.xlu0 %v2799, 32
  %v2908 = vpop.permute.xlu0 %2907
  %2909 = vrot.lane.b32.xlu0 %v2800, 32
  %v2910 = vpop.permute.xlu0 %2909
  %2911 = vrot.lane.b32.xlu0 %v2801, 32
  %v2912 = vpop.permute.xlu0 %2911
  %2913 = vrot.lane.b32.xlu0 %v2802, 32
  %v2914 = vpop.permute.xlu0 %2913
  %2915 = vrot.lane.b32.xlu0 %v2803, 32
  %v2916 = vpop.permute.xlu0 %2915
  %2917 = vrot.lane.b32.xlu0 %v2804, 32
  %v2918 = vpop.permute.xlu0 %2917
  %2919 = vrot.lane.b32.xlu0 %v2805, 32
  %v2920 = vpop.permute.xlu0 %2919
  %2921 = vrot.lane.b32.xlu0 %v2806, 32
  %v2922 = vpop.permute.xlu0 %2921
  %2923 = vrot.lane.b32.xlu0 %v2807, 32
  %v2924 = vpop.permute.xlu0 %2923
  %2925 = vrot.lane.b32.xlu0 %v2808, 32
  %v2926 = vpop.permute.xlu0 %2925
  %2927 = vrot.lane.b32.xlu0 %v2809, 32
  %v2928 = vpop.permute.xlu0 %2927
  %2929 = vrot.lane.b32.xlu0 %v2848, 32
  %v2930 = vpop.permute.xlu0 %2929
  %2931 = vrot.lane.b32.xlu0 %v2849, 32
  %v2932 = vpop.permute.xlu0 %2931
  %2933 = vrot.lane.b32.xlu0 %v2850, 32
  %v2934 = vpop.permute.xlu0 %2933
  %vm2935 = vcmask 261120
  %v2936 = vsel %vm2935, %v2852, %v2854
  %v2937 = vsel %vm2935, %v2854, %v2856
  %v2938 = vsel %vm2935, %v2858, %v2860
  %v2939 = vsel %vm2935, %v2860, %v2862
  %v2940 = vsel %vm2935, %v2864, %v2866
  %v2941 = vsel %vm2935, %v2866, %v2868
  %v2942 = vsel %vm2935, %v2870, %v2872
  %v2943 = vsel %vm2935, %v2872, %v2874
  %v2944 = vsel %vm2935, %v2876, %v2878
  %v2945 = vsel %vm2935, %v2878, %v2880
  %v2946 = vsel %vm2935, %v2882, %v2884
  %v2947 = vsel %vm2935, %v2884, %v2886
  %v2948 = vsel %vm2935, %v2888, %v2890
  %v2949 = vsel %vm2935, %v2890, %v2892
  %v2950 = vsel %vm2935, %v2894, %v2896
  %v2951 = vsel %vm2935, %v2896, %v2898
  %v2952 = vsel %vm2935, %v2900, %v2902
  %v2953 = vsel %vm2935, %v2902, %v2904
  %v2954 = vsel %vm2935, %v2906, %v2908
  %v2955 = vsel %vm2935, %v2908, %v2910
  %v2956 = vsel %vm2935, %v2912, %v2914
  %v2957 = vsel %vm2935, %v2914, %v2916
  %v2958 = vsel %vm2935, %v2918, %v2920
  %v2959 = vsel %vm2935, %v2920, %v2922
  %v2960 = vsel %vm2935, %v2924, %v2926
  %v2961 = vsel %vm2935, %v2926, %v2928
  %v2962 = vsel %vm2935, %v2930, %v2932
  %v2963 = vsel %vm2935, %v2932, %v2934
  %v2982 = vunpack.c.l.b16 %v2616
  %v2983 = vunpack.c.h.b16 %v2616
  %v2984 = vunpack.c.l.b16 %v2617
  %v2985 = vunpack.c.l.b16 %v2618
  %v2986 = vunpack.c.h.b16 %v2618
  %v2987 = vunpack.c.l.b16 %v2619
  %v2988 = vpack.c.b16 %v2985, %v2982
  %v2989 = vpack.c.b16 %v2986, %v2983
  %v2990 = vpack.c.b16 %v2987, %v2984
  %2991 = vrot.lane.b32.xlu0 %v2774, 64
  %v2992 = vpop.permute.xlu0 %2991
  %2993 = vrot.lane.b32.xlu0 %v2775, 64
  %v2994 = vpop.permute.xlu0 %2993
  %2995 = vrot.lane.b32.xlu0 %v2776, 64
  %v2996 = vpop.permute.xlu0 %2995
  %2997 = vrot.lane.b32.xlu0 %v2777, 64
  %v2998 = vpop.permute.xlu0 %2997
  %2999 = vrot.lane.b32.xlu0 %v2778, 64
  %v3000 = vpop.permute.xlu0 %2999
  %3001 = vrot.lane.b32.xlu0 %v2779, 64
  %v3002 = vpop.permute.xlu0 %3001
  %3003 = vrot.lane.b32.xlu0 %v2780, 64
  %v3004 = vpop.permute.xlu0 %3003
  %3005 = vrot.lane.b32.xlu0 %v2781, 64
  %v3006 = vpop.permute.xlu0 %3005
  %3007 = vrot.lane.b32.xlu0 %v2782, 64
  %v3008 = vpop.permute.xlu0 %3007
  %3009 = vrot.lane.b32.xlu0 %v2783, 64
  %v3010 = vpop.permute.xlu0 %3009
  %3011 = vrot.lane.b32.xlu0 %v2784, 64
  %v3012 = vpop.permute.xlu0 %3011
  %3013 = vrot.lane.b32.xlu0 %v2785, 64
  %v3014 = vpop.permute.xlu0 %3013
  %3015 = vrot.lane.b32.xlu0 %v2786, 64
  %v3016 = vpop.permute.xlu0 %3015
  %3017 = vrot.lane.b32.xlu0 %v2787, 64
  %v3018 = vpop.permute.xlu0 %3017
  %3019 = vrot.lane.b32.xlu0 %v2788, 64
  %v3020 = vpop.permute.xlu0 %3019
  %3021 = vrot.lane.b32.xlu0 %v2789, 64
  %v3022 = vpop.permute.xlu0 %3021
  %3023 = vrot.lane.b32.xlu0 %v2790, 64
  %v3024 = vpop.permute.xlu0 %3023
  %3025 = vrot.lane.b32.xlu0 %v2791, 64
  %v3026 = vpop.permute.xlu0 %3025
  %3027 = vrot.lane.b32.xlu0 %v2792, 64
  %v3028 = vpop.permute.xlu0 %3027
  %3029 = vrot.lane.b32.xlu0 %v2793, 64
  %v3030 = vpop.permute.xlu0 %3029
  %3031 = vrot.lane.b32.xlu0 %v2794, 64
  %v3032 = vpop.permute.xlu0 %3031
  %3033 = vrot.lane.b32.xlu0 %v2795, 64
  %v3034 = vpop.permute.xlu0 %3033
  %3035 = vrot.lane.b32.xlu0 %v2796, 64
  %v3036 = vpop.permute.xlu0 %3035
  %3037 = vrot.lane.b32.xlu0 %v2797, 64
  %v3038 = vpop.permute.xlu0 %3037
  %3039 = vrot.lane.b32.xlu0 %v2798, 64
  %v3040 = vpop.permute.xlu0 %3039
  %3041 = vrot.lane.b32.xlu0 %v2799, 64
  %v3042 = vpop.permute.xlu0 %3041
  %3043 = vrot.lane.b32.xlu0 %v2800, 64
  %v3044 = vpop.permute.xlu0 %3043
  %3045 = vrot.lane.b32.xlu0 %v2801, 64
  %v3046 = vpop.permute.xlu0 %3045
  %3047 = vrot.lane.b32.xlu0 %v2802, 64
  %v3048 = vpop.permute.xlu0 %3047
  %3049 = vrot.lane.b32.xlu0 %v2803, 64
  %v3050 = vpop.permute.xlu0 %3049
  %3051 = vrot.lane.b32.xlu0 %v2804, 64
  %v3052 = vpop.permute.xlu0 %3051
  %3053 = vrot.lane.b32.xlu0 %v2805, 64
  %v3054 = vpop.permute.xlu0 %3053
  %3055 = vrot.lane.b32.xlu0 %v2806, 64
  %v3056 = vpop.permute.xlu0 %3055
  %3057 = vrot.lane.b32.xlu0 %v2807, 64
  %v3058 = vpop.permute.xlu0 %3057
  %3059 = vrot.lane.b32.xlu0 %v2808, 64
  %v3060 = vpop.permute.xlu0 %3059
  %3061 = vrot.lane.b32.xlu0 %v2809, 64
  %v3062 = vpop.permute.xlu0 %3061
  %3063 = vrot.lane.b32.xlu0 %v2848, 64
  %v3064 = vpop.permute.xlu0 %3063
  %3065 = vrot.lane.b32.xlu0 %v2849, 64
  %v3066 = vpop.permute.xlu0 %3065
  %3067 = vrot.lane.b32.xlu0 %v2850, 64
  %v3068 = vpop.permute.xlu0 %3067
  %3069 = vrot.lane.b32.xlu0 %v2988, 64
  %v3070 = vpop.permute.xlu0 %3069
  %3071 = vrot.lane.b32.xlu0 %v2989, 64
  %v3072 = vpop.permute.xlu0 %3071
  %3073 = vrot.lane.b32.xlu0 %v2990, 64
  %v3074 = vpop.permute.xlu0 %3073
  %vm3075 = vcmask 523264
  %v3076 = vsel %vm3075, %v2992, %v2994
  %v3077 = vsel %vm3075, %v2994, %v2996
  %v3078 = vsel %vm3075, %v2998, %v3000
  %v3079 = vsel %vm3075, %v3000, %v3002
  %v3080 = vsel %vm3075, %v3004, %v3006
  %v3081 = vsel %vm3075, %v3006, %v3008
  %v3082 = vsel %vm3075, %v3010, %v3012
  %v3083 = vsel %vm3075, %v3012, %v3014
  %v3084 = vsel %vm3075, %v3016, %v3018
  %v3085 = vsel %vm3075, %v3018, %v3020
  %v3086 = vsel %vm3075, %v3022, %v3024
  %v3087 = vsel %vm3075, %v3024, %v3026
  %v3088 = vsel %vm3075, %v3028, %v3030
  %v3089 = vsel %vm3075, %v3030, %v3032
  %v3090 = vsel %vm3075, %v3034, %v3036
  %v3091 = vsel %vm3075, %v3036, %v3038
  %v3092 = vsel %vm3075, %v3040, %v3042
  %v3093 = vsel %vm3075, %v3042, %v3044
  %v3094 = vsel %vm3075, %v3046, %v3048
  %v3095 = vsel %vm3075, %v3048, %v3050
  %v3096 = vsel %vm3075, %v3052, %v3054
  %v3097 = vsel %vm3075, %v3054, %v3056
  %v3098 = vsel %vm3075, %v3058, %v3060
  %v3099 = vsel %vm3075, %v3060, %v3062
  %v3100 = vsel %vm3075, %v3064, %v3066
  %v3101 = vsel %vm3075, %v3066, %v3068
  %v3102 = vsel %vm3075, %v3070, %v3072
  %v3103 = vsel %vm3075, %v3072, %v3074
  %v3122 = vunpack.c.l.b16 %v2620
  %v3123 = vunpack.c.h.b16 %v2620
  %v3124 = vunpack.c.l.b16 %v2621
  %v3125 = vunpack.c.l.b16 %v2622
  %v3126 = vunpack.c.h.b16 %v2622
  %v3127 = vunpack.c.l.b16 %v2623
  %v3128 = vpack.c.b16 %v3125, %v3122
  %v3129 = vpack.c.b16 %v3126, %v3123
  %v3130 = vpack.c.b16 %v3127, %v3124
  %3131 = vrot.lane.b32.xlu0 %v2777, 96
  %v3132 = vpop.permute.xlu0 %3131
  %3133 = vrot.lane.b32.xlu0 %v2778, 96
  %v3134 = vpop.permute.xlu0 %3133
  %3135 = vrot.lane.b32.xlu0 %v2779, 96
  %v3136 = vpop.permute.xlu0 %3135
  %3137 = vrot.lane.b32.xlu0 %v2780, 96
  %v3138 = vpop.permute.xlu0 %3137
  %3139 = vrot.lane.b32.xlu0 %v2781, 96
  %v3140 = vpop.permute.xlu0 %3139
  %3141 = vrot.lane.b32.xlu0 %v2782, 96
  %v3142 = vpop.permute.xlu0 %3141
  %3143 = vrot.lane.b32.xlu0 %v2783, 96
  %v3144 = vpop.permute.xlu0 %3143
  %3145 = vrot.lane.b32.xlu0 %v2784, 96
  %v3146 = vpop.permute.xlu0 %3145
  %3147 = vrot.lane.b32.xlu0 %v2785, 96
  %v3148 = vpop.permute.xlu0 %3147
  %3149 = vrot.lane.b32.xlu0 %v2786, 96
  %v3150 = vpop.permute.xlu0 %3149
  %3151 = vrot.lane.b32.xlu0 %v2787, 96
  %v3152 = vpop.permute.xlu0 %3151
  %3153 = vrot.lane.b32.xlu0 %v2788, 96
  %v3154 = vpop.permute.xlu0 %3153
  %3155 = vrot.lane.b32.xlu0 %v2789, 96
  %v3156 = vpop.permute.xlu0 %3155
  %3157 = vrot.lane.b32.xlu0 %v2790, 96
  %v3158 = vpop.permute.xlu0 %3157
  %3159 = vrot.lane.b32.xlu0 %v2791, 96
  %v3160 = vpop.permute.xlu0 %3159
  %3161 = vrot.lane.b32.xlu0 %v2792, 96
  %v3162 = vpop.permute.xlu0 %3161
  %3163 = vrot.lane.b32.xlu0 %v2793, 96
  %v3164 = vpop.permute.xlu0 %3163
  %3165 = vrot.lane.b32.xlu0 %v2794, 96
  %v3166 = vpop.permute.xlu0 %3165
  %3167 = vrot.lane.b32.xlu0 %v2795, 96
  %v3168 = vpop.permute.xlu0 %3167
  %3169 = vrot.lane.b32.xlu0 %v2796, 96
  %v3170 = vpop.permute.xlu0 %3169
  %3171 = vrot.lane.b32.xlu0 %v2797, 96
  %v3172 = vpop.permute.xlu0 %3171
  %3173 = vrot.lane.b32.xlu0 %v2798, 96
  %v3174 = vpop.permute.xlu0 %3173
  %3175 = vrot.lane.b32.xlu0 %v2799, 96
  %v3176 = vpop.permute.xlu0 %3175
  %3177 = vrot.lane.b32.xlu0 %v2800, 96
  %v3178 = vpop.permute.xlu0 %3177
  %3179 = vrot.lane.b32.xlu0 %v2801, 96
  %v3180 = vpop.permute.xlu0 %3179
  %3181 = vrot.lane.b32.xlu0 %v2802, 96
  %v3182 = vpop.permute.xlu0 %3181
  %3183 = vrot.lane.b32.xlu0 %v2803, 96
  %v3184 = vpop.permute.xlu0 %3183
  %3185 = vrot.lane.b32.xlu0 %v2804, 96
  %v3186 = vpop.permute.xlu0 %3185
  %3187 = vrot.lane.b32.xlu0 %v2805, 96
  %v3188 = vpop.permute.xlu0 %3187
  %3189 = vrot.lane.b32.xlu0 %v2806, 96
  %v3190 = vpop.permute.xlu0 %3189
  %3191 = vrot.lane.b32.xlu0 %v2807, 96
  %v3192 = vpop.permute.xlu0 %3191
  %3193 = vrot.lane.b32.xlu0 %v2808, 96
  %v3194 = vpop.permute.xlu0 %3193
  %3195 = vrot.lane.b32.xlu0 %v2809, 96
  %v3196 = vpop.permute.xlu0 %3195
  %3197 = vrot.lane.b32.xlu0 %v2848, 96
  %v3198 = vpop.permute.xlu0 %3197
  %3199 = vrot.lane.b32.xlu0 %v2849, 96
  %v3200 = vpop.permute.xlu0 %3199
  %3201 = vrot.lane.b32.xlu0 %v2850, 96
  %v3202 = vpop.permute.xlu0 %3201
  %3203 = vrot.lane.b32.xlu0 %v2988, 96
  %v3204 = vpop.permute.xlu0 %3203
  %3205 = vrot.lane.b32.xlu0 %v2989, 96
  %v3206 = vpop.permute.xlu0 %3205
  %3207 = vrot.lane.b32.xlu0 %v2990, 96
  %v3208 = vpop.permute.xlu0 %3207
  %3209 = vrot.lane.b32.xlu0 %v3128, 96
  %v3210 = vpop.permute.xlu0 %3209
  %3211 = vrot.lane.b32.xlu0 %v3129, 96
  %v3212 = vpop.permute.xlu0 %3211
  %3213 = vrot.lane.b32.xlu0 %v3130, 96
  %v3214 = vpop.permute.xlu0 %3213
  %vm3215 = vcmask 785408
  %v3216 = vsel %vm3215, %v3132, %v3134
  %v3217 = vsel %vm3215, %v3134, %v3136
  %v3218 = vsel %vm3215, %v3138, %v3140
  %v3219 = vsel %vm3215, %v3140, %v3142
  %v3220 = vsel %vm3215, %v3144, %v3146
  %v3221 = vsel %vm3215, %v3146, %v3148
  %v3222 = vsel %vm3215, %v3150, %v3152
  %v3223 = vsel %vm3215, %v3152, %v3154
  %v3224 = vsel %vm3215, %v3156, %v3158
  %v3225 = vsel %vm3215, %v3158, %v3160
  %v3226 = vsel %vm3215, %v3162, %v3164
  %v3227 = vsel %vm3215, %v3164, %v3166
  %v3228 = vsel %vm3215, %v3168, %v3170
  %v3229 = vsel %vm3215, %v3170, %v3172
  %v3230 = vsel %vm3215, %v3174, %v3176
  %v3231 = vsel %vm3215, %v3176, %v3178
  %v3232 = vsel %vm3215, %v3180, %v3182
  %v3233 = vsel %vm3215, %v3182, %v3184
  %v3234 = vsel %vm3215, %v3186, %v3188
  %v3235 = vsel %vm3215, %v3188, %v3190
  %v3236 = vsel %vm3215, %v3192, %v3194
  %v3237 = vsel %vm3215, %v3194, %v3196
  %v3238 = vsel %vm3215, %v3198, %v3200
  %v3239 = vsel %vm3215, %v3200, %v3202
  %v3240 = vsel %vm3215, %v3204, %v3206
  %v3241 = vsel %vm3215, %v3206, %v3208
  %v3242 = vsel %vm3215, %v3210, %v3212
  %v3243 = vsel %vm3215, %v3212, %v3214
  %v3276 = vunpack.c.l.b16 %v2624
  %v3277 = vunpack.c.h.b16 %v2624
  %v3278 = vunpack.c.l.b16 %v2625
  %v3279 = vunpack.c.l.b16 %v2626
  %v3280 = vunpack.c.h.b16 %v2626
  %v3281 = vunpack.c.l.b16 %v2627
  %v3282 = vpack.c.b16 %v3279, %v3276
  %v3283 = vpack.c.b16 %v3280, %v3277
  %v3284 = vpack.c.b16 %v3281, %v3278
  %v3295 = vsel %vm328, %v2770, %v2852
  %v3299 = vsel %vm328, %v2773, %v2858
  %v3303 = vsel %vm328, %v2776, %v2864
  %v3307 = vsel %vm328, %v2779, %v2870
  %v3311 = vsel %vm328, %v2782, %v2876
  %v3315 = vsel %vm328, %v2785, %v2882
  %v3319 = vsel %vm328, %v2788, %v2888
  %v3323 = vsel %vm328, %v2791, %v2894
  %v3327 = vsel %vm328, %v2794, %v2900
  %v3331 = vsel %vm328, %v2797, %v2906
  %v3335 = vsel %vm328, %v2800, %v2912
  %v3339 = vsel %vm328, %v2803, %v2918
  %v3343 = vsel %vm328, %v2806, %v2924
  %v3347 = vsel %vm328, %v2809, %v2930
  %v3351 = vsel %vm371, %v2937, %v2992
  %v3355 = vsel %vm371, %v2939, %v2998
  %v3359 = vsel %vm371, %v2941, %v3004
  %v3363 = vsel %vm371, %v2943, %v3010
  %v3367 = vsel %vm371, %v2945, %v3016
  %v3371 = vsel %vm371, %v2947, %v3022
  %v3375 = vsel %vm371, %v2949, %v3028
  %v3379 = vsel %vm371, %v2951, %v3034
  %v3383 = vsel %vm371, %v2953, %v3040
  %v3387 = vsel %vm371, %v2955, %v3046
  %v3391 = vsel %vm371, %v2957, %v3052
  %v3395 = vsel %vm371, %v2959, %v3058
  %v3399 = vsel %vm371, %v2961, %v3064
  %v3403 = vsel %vm371, %v2963, %v3070
  %v3407 = vsel %vm400, %v3077, %v3132
  %v3411 = vsel %vm400, %v3079, %v3138
  %v3415 = vsel %vm400, %v3081, %v3144
  %v3419 = vsel %vm400, %v3083, %v3150
  %v3423 = vsel %vm400, %v3085, %v3156
  %v3427 = vsel %vm400, %v3087, %v3162
  %v3431 = vsel %vm400, %v3089, %v3168
  %v3435 = vsel %vm400, %v3091, %v3174
  %v3439 = vsel %vm400, %v3093, %v3180
  %v3443 = vsel %vm400, %v3095, %v3186
  %v3447 = vsel %vm400, %v3097, %v3192
  %v3451 = vsel %vm400, %v3099, %v3198
  %v3455 = vsel %vm400, %v3101, %v3204
  %v3459 = vsel %vm400, %v3103, %v3210
  %v3461 = vld [vmem:[%s3] sm:$0xff]
  %v3462 = vld [vmem:[%s3 + $0x8] sm:$0xff]
  %v3463 = vld [vmem:[%s3 + $0x10] sm:$0xff]
  %v3464 = vld [vmem:[%s3 + $0x18] sm:$0xff]
  %v3465 = vld [vmem:[%s3 + $0x20] sm:$0xff]
  %v3466 = vld [vmem:[%s3 + $0x28] sm:$0xff]
  %v3467 = vld [vmem:[%s3 + $0x30] sm:$0xff]
  %v3468 = vld [vmem:[%s3 + $0x38] sm:$0xff]
  %v3469 = vld [vmem:[%s3 + $0x40] sm:$0xff]
  %v3470 = vld [vmem:[%s3 + $0x48] sm:$0xff]
  %v3471 = vld [vmem:[%s3 + $0x50] sm:$0xff]
  %v3472 = vld [vmem:[%s3 + $0x58] sm:$0xff]
  %v3473 = vld [vmem:[%s3 + $0x60] sm:$0xff]
  %v3474 = vld [vmem:[%s3 + $0x68] sm:$0xff]
  %v3475 = vld [vmem:[%s3 + $0x70] sm:$0xff]
  %v3476 = vld [vmem:[%s3 + $0x78] sm:$0xff]
  %v3477 = vld [vmem:[%s3 + $0x80] sm:$0xff]
  %v3478 = vld [vmem:[%s3 + $0x88] sm:$0xff]
  %v3479 = vld [vmem:[%s3 + $0x90] sm:$0xff]
  %v3480 = vld [vmem:[%s3 + $0x98] sm:$0xff]
  %v3481 = vld [vmem:[%s3 + $0xa0] sm:$0xff]
  %v3482 = vld [vmem:[%s3 + $0xa8] sm:$0xff]
  %v3483 = vld [vmem:[%s3 + $0xb0] sm:$0xff]
  %v3484 = vld [vmem:[%s3 + $0xb8] sm:$0xff]
  %v3485 = vld [vmem:[%s3 + $0xc0] sm:$0xff]
  %v3486 = vld [vmem:[%s3 + $0xc8] sm:$0xff]
  %v3487 = vld [vmem:[%s3 + $0xd0] sm:$0xff]
  %v3488 = vld [vmem:[%s3 + $0xd8] sm:$0xff]
  %v3489 = vld [vmem:[%s3 + $0xe0] sm:$0xff]
  %v3490 = vld [vmem:[%s3 + $0xe8] sm:$0xff]
  %v3491 = vld [vmem:[%s3 + $0xf0] sm:$0xff]
  %v3492 = vld [vmem:[%s3 + $0xf8] sm:$0xff]
  %v3493 = vld [vmem:[%s3 + $0x100] sm:$0xff]
  %v3494 = vld [vmem:[%s3 + $0x108] sm:$0xff]
  %v3495 = vld [vmem:[%s3 + $0x110] sm:$0xff]
  %v3496 = vld [vmem:[%s3 + $0x118] sm:$0xff]
  %v3497 = vld [vmem:[%s3 + $0x120] sm:$0xff]
  %v3498 = vld [vmem:[%s3 + $0x128] sm:$0xff]
  %v3499 = vld [vmem:[%s3 + $0x130] sm:$0xff]
  %v3500 = vld [vmem:[%s3 + $0x138] sm:$0xff]
  %v3501 = vld [vmem:[%s3 + $0x140] sm:$0xff]
  %v3502 = vld [vmem:[%s3 + $0x148] sm:$0xff]
  %v3503 = vld [vmem:[%s3 + $0x150] sm:$0xff]
  %v3504 = vld [vmem:[%s3 + $0x158] sm:$0xff]
  %v3505 = vld [vmem:[%s3 + $0x160] sm:$0xff]
  %v3506 = vld [vmem:[%s3 + $0x168] sm:$0xff]
  %v3507 = vld [vmem:[%s3 + $0x170] sm:$0xff]
  %v3508 = vld [vmem:[%s3 + $0x178] sm:$0xff]
  %v3509 = vld [vmem:[%s3 + $0x180] sm:$0xff]
  %v3510 = vld [vmem:[%s3 + $0x188] sm:$0xff]
  %v3511 = vld [vmem:[%s3 + $0x190] sm:$0xff]
  %v3512 = vld [vmem:[%s3 + $0x198] sm:$0xff]
  %v3513 = vld [vmem:[%s3 + $0x1a0] sm:$0xff]
  %v3514 = vld [vmem:[%s3 + $0x1a8] sm:$0xff]
  %v3515 = vld [vmem:[%s3 + $0x1b0] sm:$0xff]
  %v3516 = vld [vmem:[%s3 + $0x1b8] sm:$0xff]
  %v3517 = vld [vmem:[%s3 + $0x1c0] sm:$0xff]
  %v3518 = vld [vmem:[%s3 + $0x1c8] sm:$0xff]
  %v3519 = vld [vmem:[%s3 + $0x1d0] sm:$0xff]
  %v3520 = vld [vmem:[%s3 + $0x1d8] sm:$0xff]
  %v3521 = vld [vmem:[%s3 + $0x1e0] sm:$0xff]
  %v3522 = vld [vmem:[%s3 + $0x1e8] sm:$0xff]
  %v3523 = vld [vmem:[%s3 + $0x1f0] sm:$0xff]
  %v3524 = vld [vmem:[%s3 + $0x1f8] sm:$0xff]
  %v3525 = vld [vmem:[%s3 + $0x200] sm:$0xff]
  %v3526 = vld [vmem:[%s3 + $0x208] sm:$0xff]
  %v3527 = vld [vmem:[%s3 + $0x210] sm:$0xff]
  %v3528 = vld [vmem:[%s3 + $0x218] sm:$0xff]
  %v3529 = vld [vmem:[%s3 + $0x220] sm:$0xff]
  %v3530 = vld [vmem:[%s3 + $0x228] sm:$0xff]
  %v3531 = vld [vmem:[%s3 + $0x230] sm:$0xff]
  %v3532 = vld [vmem:[%s3 + $0x238] sm:$0xff]
  %v3533 = vld [vmem:[%s3 + $0x240] sm:$0xff]
  %v3534 = vld [vmem:[%s3 + $0x248] sm:$0xff]
  %v3535 = vld [vmem:[%s3 + $0x250] sm:$0xff]
  %v3536 = vld [vmem:[%s3 + $0x258] sm:$0xff]
  %v3537 = vld [vmem:[%s3 + $0x260] sm:$0xff]
  %v3538 = vld [vmem:[%s3 + $0x268] sm:$0xff]
  %v3539 = vld [vmem:[%s3 + $0x270] sm:$0xff]
  %v3540 = vld [vmem:[%s3 + $0x278] sm:$0xff]
  %v3541 = vld [vmem:[%s3 + $0x280] sm:$0xff]
  %v3542 = vld [vmem:[%s3 + $0x288] sm:$0xff]
  %v3543 = vld [vmem:[%s3 + $0x290] sm:$0xff]
  %v3544 = vld [vmem:[%s3 + $0x298] sm:$0xff]
  %v3545 = vld [vmem:[%s3 + $0x2a0] sm:$0xff]
  %v3546 = vld [vmem:[%s3 + $0x2a8] sm:$0xff]
  %v3547 = vld [vmem:[%s3 + $0x2b0] sm:$0xff]
  %v3548 = vld [vmem:[%s3 + $0x2b8] sm:$0xff]
  %v3549 = vld [vmem:[%s3 + $0x2c0] sm:$0xff]
  %v3550 = vld [vmem:[%s3 + $0x2c8] sm:$0xff]
  %v3551 = vld [vmem:[%s3 + $0x2d0] sm:$0xff]
  %v3552 = vld [vmem:[%s3 + $0x2d8] sm:$0xff]
  %v3553 = vld [vmem:[%s3 + $0x2e0] sm:$0xff]
  %v3554 = vld [vmem:[%s3 + $0x2e8] sm:$0xff]
  %v3555 = vld [vmem:[%s3 + $0x2f0] sm:$0xff]
  %v3556 = vld [vmem:[%s3 + $0x2f8] sm:$0xff]
  %v3557 = vld [vmem:[%s3 + $0x300] sm:$0xff]
  %v3558 = vld [vmem:[%s3 + $0x308] sm:$0xff]
  %v3559 = vld [vmem:[%s3 + $0x310] sm:$0xff]
  %v3560 = vld [vmem:[%s3 + $0x318] sm:$0xff]
  %v3561 = vld [vmem:[%s3 + $0x320] sm:$0xff]
  %v3562 = vld [vmem:[%s3 + $0x328] sm:$0xff]
  %v3563 = vld [vmem:[%s3 + $0x330] sm:$0xff]
  %v3564 = vld [vmem:[%s3 + $0x338] sm:$0xff]
  %v3565 = vld [vmem:[%s3 + $0x340] sm:$0xff]
  %v3566 = vld [vmem:[%s3 + $0x348] sm:$0xff]
  %v3567 = vld [vmem:[%s3 + $0x350] sm:$0xff]
  %v3568 = vld [vmem:[%s3 + $0x358] sm:$0xff]
  %v3569 = vld [vmem:[%s3 + $0x360] sm:$0xff]
  %v3570 = vld [vmem:[%s3 + $0x368] sm:$0xff]
  %v3571 = vld [vmem:[%s3 + $0x370] sm:$0xff]
  %v3572 = vld [vmem:[%s3 + $0x378] sm:$0xff]
  %v3573 = vld [vmem:[%s3 + $0x380] sm:$0xff]
  %v3574 = vld [vmem:[%s3 + $0x388] sm:$0xff]
  %v3575 = vld [vmem:[%s3 + $0x390] sm:$0xff]
  %v3576 = vld [vmem:[%s3 + $0x398] sm:$0xff]
  %v3577 = vld [vmem:[%s3 + $0x3a0] sm:$0xff]
  %v3578 = vld [vmem:[%s3 + $0x3a8] sm:$0xff]
  %v3579 = vld [vmem:[%s3 + $0x3b0] sm:$0xff]
  %v3580 = vld [vmem:[%s3 + $0x3b8] sm:$0xff]
  %v3581 = vld [vmem:[%s3 + $0x3c0] sm:$0xff]
  %v3582 = vld [vmem:[%s3 + $0x3c8] sm:$0xff]
  %v3583 = vld [vmem:[%s3 + $0x3d0] sm:$0xff]
  %v3584 = vld [vmem:[%s3 + $0x3d8] sm:$0xff]
  %v3585 = vld [vmem:[%s3 + $0x3e0] sm:$0xff]
  %v3586 = vld [vmem:[%s3 + $0x3e8] sm:$0xff]
  %v3587 = vld [vmem:[%s3 + $0x3f0] sm:$0xff]
  %v3588 = vld [vmem:[%s3 + $0x3f8] sm:$0xff]
  %v3589 = vld [vmem:[%s3 + $0x400] sm:$0xff]
  %v3590 = vld [vmem:[%s3 + $0x408] sm:$0xff]
  %v3591 = vld [vmem:[%s3 + $0x410] sm:$0xff]
  %v3592 = vld [vmem:[%s3 + $0x418] sm:$0xff]
  %v3593 = vld [vmem:[%s3 + $0x420] sm:$0xff]
  %v3594 = vld [vmem:[%s3 + $0x428] sm:$0xff]
  %v3595 = vld [vmem:[%s3 + $0x430] sm:$0xff]
  %v3596 = vld [vmem:[%s3 + $0x438] sm:$0xff]
  %v3597 = vld [vmem:[%s3 + $0x440] sm:$0xff]
  %v3598 = vld [vmem:[%s3 + $0x448] sm:$0xff]
  %v3599 = vld [vmem:[%s3 + $0x450] sm:$0xff]
  %v3600 = vld [vmem:[%s3 + $0x458] sm:$0xff]
  %v3601 = vld [vmem:[%s3 + $0x460] sm:$0xff]
  %v3602 = vld [vmem:[%s3 + $0x468] sm:$0xff]
  %v3603 = vld [vmem:[%s3 + $0x470] sm:$0xff]
  %v3604 = vld [vmem:[%s3 + $0x478] sm:$0xff]
  %v3605 = vld [vmem:[%s3 + $0x480] sm:$0xff]
  %v3606 = vld [vmem:[%s3 + $0x488] sm:$0xff]
  %v3607 = vld [vmem:[%s3 + $0x490] sm:$0xff]
  %v3608 = vld [vmem:[%s3 + $0x498] sm:$0xff]
  %v3609 = vld [vmem:[%s3 + $0x4a0] sm:$0xff]
  %v3610 = vld [vmem:[%s3 + $0x4a8] sm:$0xff]
  %v3611 = vld [vmem:[%s3 + $0x4b0] sm:$0xff]
  %v3612 = vld [vmem:[%s3 + $0x4b8] sm:$0xff]
  %v3613 = vld [vmem:[%s3 + $0x4c0] sm:$0xff]
  %v3614 = vld [vmem:[%s3 + $0x4c8] sm:$0xff]
  %v3615 = vld [vmem:[%s3 + $0x4d0] sm:$0xff]
  %v3616 = vld [vmem:[%s3 + $0x4d8] sm:$0xff]
  %v3617 = vld [vmem:[%s3 + $0x4e0] sm:$0xff]
  %v3618 = vld [vmem:[%s3 + $0x4e8] sm:$0xff]
  %v3619 = vld [vmem:[%s3 + $0x4f0] sm:$0xff]
  %v3620 = vld [vmem:[%s3 + $0x4f8] sm:$0xff]
  %v3621 = vld [vmem:[%s3 + $0x500] sm:$0xff]
  %v3622 = vld [vmem:[%s3 + $0x508] sm:$0xff]
  %v3623 = vld [vmem:[%s3 + $0x510] sm:$0xff]
  %v3624 = vld [vmem:[%s3 + $0x518] sm:$0xff]
  %v3625 = vld [vmem:[%s3 + $0x520] sm:$0xff]
  %v3626 = vld [vmem:[%s3 + $0x528] sm:$0xff]
  %v3627 = vld [vmem:[%s3 + $0x530] sm:$0xff]
  %v3628 = vld [vmem:[%s3 + $0x538] sm:$0xff]
  %v3629 = vld [vmem:[%s3 + $0x540] sm:$0xff]
  %v3630 = vld [vmem:[%s3 + $0x548] sm:$0xff]
  %v3631 = vld [vmem:[%s3 + $0x550] sm:$0xff]
  %v3632 = vld [vmem:[%s3 + $0x558] sm:$0xff]
  %v3633 = vld [vmem:[%s3 + $0x560] sm:$0xff]
  %v3634 = vld [vmem:[%s3 + $0x568] sm:$0xff]
  %v3635 = vld [vmem:[%s3 + $0x570] sm:$0xff]
  %v3636 = vld [vmem:[%s3 + $0x578] sm:$0xff]
  %v3637 = vld [vmem:[%s3 + $0x580] sm:$0xff]
  %v3638 = vld [vmem:[%s3 + $0x588] sm:$0xff]
  %v3639 = vld [vmem:[%s3 + $0x590] sm:$0xff]
  %v3640 = vld [vmem:[%s3 + $0x598] sm:$0xff]
  %v3641 = vld [vmem:[%s3 + $0x5a0] sm:$0xff]
  %v3642 = vld [vmem:[%s3 + $0x5a8] sm:$0xff]
  %v3643 = vld [vmem:[%s3 + $0x5b0] sm:$0xff]
  %v3644 = vld [vmem:[%s3 + $0x5b8] sm:$0xff]
  %v3645 = vld [vmem:[%s3 + $0x5c0] sm:$0xff]
  %v3646 = vld [vmem:[%s3 + $0x5c8] sm:$0xff]
  %v3647 = vld [vmem:[%s3 + $0x5d0] sm:$0xff]
  %v3648 = vld [vmem:[%s3 + $0x5d8] sm:$0xff]
  %v3649 = vld [vmem:[%s3 + $0x5e0] sm:$0xff]
  %v3650 = vld [vmem:[%s3 + $0x5e8] sm:$0xff]
  %v3651 = vld [vmem:[%s3 + $0x5f0] sm:$0xff]
  %v3652 = vld [vmem:[%s3 + $0x5f8] sm:$0xff]
  %v3653 = vld [vmem:[%s3 + $0x600] sm:$0xff]
  %v3654 = vld [vmem:[%s3 + $0x608] sm:$0xff]
  %v3655 = vld [vmem:[%s3 + $0x610] sm:$0xff]
  %v3656 = vld [vmem:[%s3 + $0x618] sm:$0xff]
  %v3657 = vld [vmem:[%s3 + $0x620] sm:$0xff]
  %v3658 = vld [vmem:[%s3 + $0x628] sm:$0xff]
  %v3659 = vld [vmem:[%s3 + $0x630] sm:$0xff]
  %v3660 = vld [vmem:[%s3 + $0x638] sm:$0xff]
  %v3661 = vld [vmem:[%s3 + $0x640] sm:$0xff]
  %v3662 = vld [vmem:[%s3 + $0x648] sm:$0xff]
  %v3663 = vld [vmem:[%s3 + $0x650] sm:$0xff]
  %v3664 = vld [vmem:[%s3 + $0x658] sm:$0xff]
  %v3665 = vld [vmem:[%s3 + $0x660] sm:$0xff]
  %v3666 = vld [vmem:[%s3 + $0x668] sm:$0xff]
  %v3667 = vld [vmem:[%s3 + $0x670] sm:$0xff]
  %v3668 = vld [vmem:[%s3 + $0x678] sm:$0xff]
  %v3669 = vld [vmem:[%s3 + $0x680] sm:$0xff]
  %v3670 = vld [vmem:[%s3 + $0x688] sm:$0xff]
  %v3671 = vld [vmem:[%s3 + $0x690] sm:$0xff]
  %v3672 = vld [vmem:[%s3 + $0x698] sm:$0xff]
  %v3673 = vld [vmem:[%s3 + $0x6a0] sm:$0xff]
  %v3674 = vld [vmem:[%s3 + $0x6a8] sm:$0xff]
  %v3675 = vld [vmem:[%s3 + $0x6b0] sm:$0xff]
  %v3676 = vld [vmem:[%s3 + $0x6b8] sm:$0xff]
  %v3677 = vld [vmem:[%s3 + $0x6c0] sm:$0xff]
  %v3678 = vld [vmem:[%s3 + $0x6c8] sm:$0xff]
  %v3679 = vld [vmem:[%s3 + $0x6d0] sm:$0xff]
  %v3680 = vld [vmem:[%s3 + $0x6d8] sm:$0xff]
  %v3681 = vld [vmem:[%s3 + $0x6e0] sm:$0xff]
  %v3682 = vld [vmem:[%s3 + $0x6e8] sm:$0xff]
  %v3683 = vld [vmem:[%s3 + $0x6f0] sm:$0xff]
  %v3684 = vld [vmem:[%s3 + $0x6f8] sm:$0xff]
  %v3685 = vld [vmem:[%s3 + $0x700] sm:$0xff]
  %v3686 = vld [vmem:[%s3 + $0x708] sm:$0xff]
  %v3687 = vld [vmem:[%s3 + $0x710] sm:$0xff]
  %v3688 = vld [vmem:[%s3 + $0x718] sm:$0xff]
  %v3689 = vld [vmem:[%s3 + $0x720] sm:$0xff]
  %v3690 = vld [vmem:[%s3 + $0x728] sm:$0xff]
  %v3691 = vld [vmem:[%s3 + $0x730] sm:$0xff]
  %v3692 = vld [vmem:[%s3 + $0x738] sm:$0xff]
  %v3693 = vld [vmem:[%s3 + $0x740] sm:$0xff]
  %v3694 = vld [vmem:[%s3 + $0x748] sm:$0xff]
  %v3695 = vld [vmem:[%s3 + $0x750] sm:$0xff]
  %v3696 = vld [vmem:[%s3 + $0x758] sm:$0xff]
  %v3697 = vld [vmem:[%s3 + $0x760] sm:$0xff]
  %v3698 = vld [vmem:[%s3 + $0x768] sm:$0xff]
  %v3699 = vld [vmem:[%s3 + $0x770] sm:$0xff]
  %v3700 = vld [vmem:[%s3 + $0x778] sm:$0xff]
  %v3701 = vld [vmem:[%s3 + $0x780] sm:$0xff]
  %v3702 = vld [vmem:[%s3 + $0x788] sm:$0xff]
  %v3703 = vld [vmem:[%s3 + $0x790] sm:$0xff]
  %v3704 = vld [vmem:[%s3 + $0x798] sm:$0xff]
  %v3705 = vld [vmem:[%s3 + $0x7a0] sm:$0xff]
  %v3706 = vld [vmem:[%s3 + $0x7a8] sm:$0xff]
  %v3707 = vld [vmem:[%s3 + $0x7b0] sm:$0xff]
  %v3708 = vld [vmem:[%s3 + $0x7b8] sm:$0xff]
  %v3709 = vld [vmem:[%s3 + $0x7c0] sm:$0xff]
  %v3710 = vld [vmem:[%s3 + $0x7c8] sm:$0xff]
  %v3711 = vld [vmem:[%s3 + $0x7d0] sm:$0xff]
  %v3712 = vld [vmem:[%s3 + $0x7d8] sm:$0xff]
  %v3713 = vld [vmem:[%s3 + $0x7e0] sm:$0xff]
  %v3714 = vld [vmem:[%s3 + $0x7e8] sm:$0xff]
  %v3715 = vld [vmem:[%s3 + $0x7f0] sm:$0xff]
  %v3716 = vld [vmem:[%s3 + $0x7f8] sm:$0xff]
  %v3717 = vld [vmem:[%s3 + $0x800] sm:$0xff]
  %v3718 = vld [vmem:[%s3 + $0x808] sm:$0xff]
  %v3719 = vld [vmem:[%s3 + $0x810] sm:$0xff]
  %v3720 = vld [vmem:[%s3 + $0x818] sm:$0xff]
  %v3721 = vld [vmem:[%s3 + $0x820] sm:$0xff]
  %v3722 = vld [vmem:[%s3 + $0x828] sm:$0xff]
  %v3723 = vld [vmem:[%s3 + $0x830] sm:$0xff]
  %v3724 = vld [vmem:[%s3 + $0x838] sm:$0xff]
  %v3725 = vld [vmem:[%s3 + $0x840] sm:$0xff]
  %v3726 = vld [vmem:[%s3 + $0x848] sm:$0xff]
  %v3727 = vld [vmem:[%s3 + $0x850] sm:$0xff]
  %v3728 = vld [vmem:[%s3 + $0x858] sm:$0xff]
  %v3729 = vld [vmem:[%s3 + $0x860] sm:$0xff]
  %v3730 = vld [vmem:[%s3 + $0x868] sm:$0xff]
  %v3731 = vld [vmem:[%s3 + $0x870] sm:$0xff]
  %v3732 = vld [vmem:[%s3 + $0x878] sm:$0xff]
  %v3733 = vld [vmem:[%s3 + $0x880] sm:$0xff]
  %v3734 = vld [vmem:[%s3 + $0x888] sm:$0xff]
  %v3735 = vld [vmem:[%s3 + $0x890] sm:$0xff]
  %v3736 = vld [vmem:[%s3 + $0x898] sm:$0xff]
  %v3737 = vld [vmem:[%s3 + $0x8a0] sm:$0xff]
  %v3738 = vld [vmem:[%s3 + $0x8a8] sm:$0xff]
  %v3739 = vld [vmem:[%s3 + $0x8b0] sm:$0xff]
  %v3740 = vld [vmem:[%s3 + $0x8b8] sm:$0xff]
  %v3741 = vld [vmem:[%s3 + $0x8c0] sm:$0xff]
  %v3742 = vld [vmem:[%s3 + $0x8c8] sm:$0xff]
  %v3743 = vld [vmem:[%s3 + $0x8d0] sm:$0xff]
  %v3744 = vld [vmem:[%s3 + $0x8d8] sm:$0xff]
  %v3745 = vld [vmem:[%s3 + $0x8e0] sm:$0xff]
  %v3746 = vld [vmem:[%s3 + $0x8e8] sm:$0xff]
  %v3747 = vld [vmem:[%s3 + $0x8f0] sm:$0xff]
  %v3748 = vld [vmem:[%s3 + $0x8f8] sm:$0xff]
  %v3749 = vld [vmem:[%s3 + $0x900] sm:$0xff]
  %v3750 = vld [vmem:[%s3 + $0x908] sm:$0xff]
  %v3751 = vld [vmem:[%s3 + $0x910] sm:$0xff]
  %v3752 = vld [vmem:[%s3 + $0x918] sm:$0xff]
  %v3753 = vld [vmem:[%s3 + $0x920] sm:$0xff]
  %v3754 = vld [vmem:[%s3 + $0x928] sm:$0xff]
  %v3755 = vld [vmem:[%s3 + $0x930] sm:$0xff]
  %v3756 = vld [vmem:[%s3 + $0x938] sm:$0xff]
  %v3757 = vld [vmem:[%s3 + $0x940] sm:$0xff]
  %v3758 = vld [vmem:[%s3 + $0x948] sm:$0xff]
  %v3759 = vld [vmem:[%s3 + $0x950] sm:$0xff]
  %v3760 = vld [vmem:[%s3 + $0x958] sm:$0xff]
  %v3761 = vld [vmem:[%s3 + $0x960] sm:$0xff]
  %v3762 = vld [vmem:[%s3 + $0x968] sm:$0xff]
  %v3763 = vld [vmem:[%s3 + $0x970] sm:$0xff]
  %v3764 = vld [vmem:[%s3 + $0x978] sm:$0xff]
  %v3765 = vld [vmem:[%s3 + $0x980] sm:$0xff]
  %v3766 = vld [vmem:[%s3 + $0x988] sm:$0xff]
  %v3767 = vld [vmem:[%s3 + $0x990] sm:$0xff]
  %v3768 = vld [vmem:[%s3 + $0x998] sm:$0xff]
  %v3769 = vld [vmem:[%s3 + $0x9a0] sm:$0xff]
  %v3770 = vld [vmem:[%s3 + $0x9a8] sm:$0xff]
  %v3771 = vld [vmem:[%s3 + $0x9b0] sm:$0xff]
  %v3772 = vld [vmem:[%s3 + $0x9b8] sm:$0xff]
  %v3773 = vld [vmem:[%s3 + $0x9c0] sm:$0xff]
  %v3774 = vld [vmem:[%s3 + $0x9c8] sm:$0xff]
  %v3775 = vld [vmem:[%s3 + $0x9d0] sm:$0xff]
  %v3776 = vld [vmem:[%s3 + $0x9d8] sm:$0xff]
  %v3777 = vld [vmem:[%s3 + $0x9e0] sm:$0xff]
  %v3778 = vld [vmem:[%s3 + $0x9e8] sm:$0xff]
  %v3779 = vld [vmem:[%s3 + $0x9f0] sm:$0xff]
  %v3780 = vld [vmem:[%s3 + $0x9f8] sm:$0xff]
  %v3781 = vld [vmem:[%s3 + $0xa00] sm:$0xff]
  %v3782 = vld [vmem:[%s3 + $0xa08] sm:$0xff]
  %v3783 = vld [vmem:[%s3 + $0xa10] sm:$0xff]
  %v3784 = vld [vmem:[%s3 + $0xa18] sm:$0xff]
  %v3785 = vld [vmem:[%s3 + $0xa20] sm:$0xff]
  %v3786 = vld [vmem:[%s3 + $0xa28] sm:$0xff]
  %v3787 = vld [vmem:[%s3 + $0xa30] sm:$0xff]
  %v3788 = vld [vmem:[%s3 + $0xa38] sm:$0xff]
  %v3789 = vld [vmem:[%s3 + $0xa40] sm:$0xff]
  %v3790 = vld [vmem:[%s3 + $0xa48] sm:$0xff]
  %v3791 = vld [vmem:[%s3 + $0xa50] sm:$0xff]
  %v3792 = vld [vmem:[%s3 + $0xa58] sm:$0xff]
  %v3793 = vld [vmem:[%s3 + $0xa60] sm:$0xff]
  %v3794 = vld [vmem:[%s3 + $0xa68] sm:$0xff]
  %v3795 = vld [vmem:[%s3 + $0xa70] sm:$0xff]
  %v3796 = vld [vmem:[%s3 + $0xa78] sm:$0xff]
  %v3797 = vld [vmem:[%s3 + $0xa80] sm:$0xff]
  %v3798 = vld [vmem:[%s3 + $0xa88] sm:$0xff]
  %v3799 = vld [vmem:[%s3 + $0xa90] sm:$0xff]
  %v3800 = vld [vmem:[%s3 + $0xa98] sm:$0xff]
  %v3801 = vld [vmem:[%s3 + $0xaa0] sm:$0xff]
  %v3802 = vld [vmem:[%s3 + $0xaa8] sm:$0xff]
  %v3803 = vld [vmem:[%s3 + $0xab0] sm:$0xff]
  %v3804 = vld [vmem:[%s3 + $0xab8] sm:$0xff]
  %v3805 = vld [vmem:[%s3 + $0xac0] sm:$0xff]
  %v3806 = vld [vmem:[%s3 + $0xac8] sm:$0xff]
  %v3807 = vld [vmem:[%s3 + $0xad0] sm:$0xff]
  %v3808 = vld [vmem:[%s3 + $0xad8] sm:$0xff]
  %v3809 = vld [vmem:[%s3 + $0xae0] sm:$0xff]
  %v3810 = vld [vmem:[%s3 + $0xae8] sm:$0xff]
  %v3811 = vld [vmem:[%s3 + $0xaf0] sm:$0xff]
  %v3812 = vld [vmem:[%s3 + $0xaf8] sm:$0xff]
  %v3813 = vld [vmem:[%s3 + $0xb00] sm:$0xff]
  %v3814 = vld [vmem:[%s3 + $0xb08] sm:$0xff]
  %v3815 = vld [vmem:[%s3 + $0xb10] sm:$0xff]
  %v3816 = vld [vmem:[%s3 + $0xb18] sm:$0xff]
  %v3817 = vld [vmem:[%s3 + $0xb20] sm:$0xff]
  %v3818 = vld [vmem:[%s3 + $0xb28] sm:$0xff]
  %v3819 = vld [vmem:[%s3 + $0xb30] sm:$0xff]
  %v3820 = vld [vmem:[%s3 + $0xb38] sm:$0xff]
  %v4181 = vunpack.c.l.b16 %v3461
  %v4182 = vunpack.c.h.b16 %v3461
  %v4183 = vunpack.c.l.b16 %v3462
  %v4184 = vunpack.c.h.b16 %v3462
  %v4185 = vunpack.c.l.b16 %v3463
  %v4186 = vunpack.c.h.b16 %v3463
  %v4187 = vunpack.c.l.b16 %v3464
  %v4188 = vunpack.c.h.b16 %v3464
  %v4189 = vunpack.c.l.b16 %v3465
  %v4190 = vunpack.c.h.b16 %v3465
  %v4191 = vunpack.c.l.b16 %v3466
  %v4192 = vunpack.c.h.b16 %v3466
  %v4193 = vunpack.c.l.b16 %v3467
  %v4194 = vunpack.c.h.b16 %v3467
  %v4195 = vunpack.c.l.b16 %v3468
  %v4196 = vunpack.c.h.b16 %v3468
  %v4197 = vunpack.c.l.b16 %v3469
  %v4198 = vunpack.c.h.b16 %v3469
  %v4199 = vunpack.c.l.b16 %v3470
  %v4200 = vunpack.c.h.b16 %v3470
  %v4201 = vunpack.c.l.b16 %v3471
  %v4202 = vunpack.c.h.b16 %v3471
  %v4203 = vunpack.c.l.b16 %v3472
  %v4204 = vunpack.c.h.b16 %v3472
  %v4205 = vunpack.c.l.b16 %v3473
  %v4206 = vunpack.c.h.b16 %v3473
  %v4207 = vunpack.c.l.b16 %v3474
  %v4208 = vunpack.c.h.b16 %v3474
  %v4209 = vunpack.c.l.b16 %v3475
  %v4210 = vunpack.c.h.b16 %v3475
  %v4211 = vunpack.c.l.b16 %v3476
  %v4212 = vunpack.c.h.b16 %v3476
  %v4213 = vunpack.c.l.b16 %v3477
  %v4214 = vunpack.c.h.b16 %v3477
  %v4215 = vunpack.c.l.b16 %v3478
  %v4216 = vunpack.c.h.b16 %v3478
  %v4217 = vunpack.c.l.b16 %v3479
  %v4218 = vunpack.c.h.b16 %v3479
  %v4219 = vunpack.c.l.b16 %v3480
  %v4220 = vunpack.c.h.b16 %v3480
  %v4221 = vunpack.c.l.b16 %v3481
  %v4222 = vunpack.c.h.b16 %v3481
  %v4223 = vunpack.c.l.b16 %v3482
  %v4224 = vunpack.c.h.b16 %v3482
  %v4225 = vunpack.c.l.b16 %v3483
  %v4226 = vunpack.c.h.b16 %v3483
  %v4227 = vunpack.c.l.b16 %v3484
  %v4228 = vunpack.c.h.b16 %v3484
  %v4229 = vunpack.c.l.b16 %v3485
  %v4230 = vunpack.c.h.b16 %v3485
  %v4231 = vunpack.c.l.b16 %v3486
  %v4232 = vunpack.c.h.b16 %v3486
  %v4233 = vunpack.c.l.b16 %v3487
  %v4234 = vunpack.c.h.b16 %v3487
  %v4235 = vunpack.c.l.b16 %v3488
  %v4236 = vunpack.c.h.b16 %v3488
  %v4237 = vunpack.c.l.b16 %v3489
  %v4238 = vunpack.c.h.b16 %v3489
  %v4239 = vunpack.c.l.b16 %v3490
  %v4240 = vunpack.c.h.b16 %v3490
  %v4241 = vunpack.c.l.b16 %v3491
  %v4242 = vunpack.c.h.b16 %v3491
  %v4243 = vunpack.c.l.b16 %v3492
  %v4244 = vunpack.c.h.b16 %v3492
  %v4245 = vunpack.c.l.b16 %v3493
  %v4246 = vunpack.c.h.b16 %v3493
  %v4247 = vunpack.c.l.b16 %v3494
  %v4248 = vunpack.c.h.b16 %v3494
  %v4249 = vunpack.c.l.b16 %v3495
  %v4250 = vunpack.c.h.b16 %v3495
  %v4251 = vunpack.c.l.b16 %v3496
  %v4252 = vunpack.c.h.b16 %v3496
  %v4253 = vunpack.c.l.b16 %v3497
  %v4254 = vunpack.c.h.b16 %v3497
  %v4255 = vunpack.c.l.b16 %v3498
  %v4256 = vunpack.c.h.b16 %v3498
  %v4257 = vunpack.c.l.b16 %v3499
  %v4258 = vunpack.c.h.b16 %v3499
  %v4259 = vunpack.c.l.b16 %v3500
  %v4260 = vunpack.c.h.b16 %v3500
  %v4261 = vunpack.c.l.b16 %v3501
  %v4262 = vunpack.c.h.b16 %v3501
  %v4263 = vunpack.c.l.b16 %v3502
  %v4264 = vunpack.c.h.b16 %v3502
  %v4265 = vunpack.c.l.b16 %v3503
  %v4266 = vunpack.c.h.b16 %v3503
  %v4267 = vunpack.c.l.b16 %v3504
  %v4268 = vunpack.c.h.b16 %v3504
  %v4269 = vunpack.c.l.b16 %v3505
  %v4270 = vunpack.c.h.b16 %v3505
  %v4271 = vunpack.c.l.b16 %v3506
  %v4272 = vunpack.c.h.b16 %v3506
  %v4273 = vunpack.c.l.b16 %v3507
  %v4274 = vunpack.c.h.b16 %v3507
  %v4275 = vunpack.c.l.b16 %v3508
  %v4276 = vunpack.c.h.b16 %v3508
  %v4277 = vunpack.c.l.b16 %v3509
  %v4278 = vunpack.c.h.b16 %v3509
  %v4279 = vunpack.c.l.b16 %v3510
  %v4280 = vunpack.c.h.b16 %v3510
  %v4281 = vunpack.c.l.b16 %v3511
  %v4282 = vunpack.c.h.b16 %v3511
  %v4283 = vunpack.c.l.b16 %v3512
  %v4284 = vunpack.c.h.b16 %v3512
  %v4285 = vunpack.c.l.b16 %v3513
  %v4286 = vunpack.c.h.b16 %v3513
  %v4287 = vunpack.c.l.b16 %v3514
  %v4288 = vunpack.c.h.b16 %v3514
  %v4289 = vunpack.c.l.b16 %v3515
  %v4290 = vunpack.c.h.b16 %v3515
  %v4291 = vunpack.c.l.b16 %v3516
  %v4292 = vunpack.c.h.b16 %v3516
  %v4293 = vunpack.c.l.b16 %v3517
  %v4294 = vunpack.c.h.b16 %v3517
  %v4295 = vunpack.c.l.b16 %v3518
  %v4296 = vunpack.c.h.b16 %v3518
  %v4297 = vunpack.c.l.b16 %v3519
  %v4298 = vunpack.c.h.b16 %v3519
  %v4299 = vunpack.c.l.b16 %v3520
  %v4300 = vunpack.c.h.b16 %v3520
  %v4301 = vunpack.c.l.b16 %v3521
  %v4302 = vunpack.c.h.b16 %v3521
  %v4303 = vunpack.c.l.b16 %v3522
  %v4304 = vunpack.c.h.b16 %v3522
  %v4305 = vunpack.c.l.b16 %v3523
  %v4306 = vunpack.c.h.b16 %v3523
  %v4307 = vunpack.c.l.b16 %v3524
  %v4308 = vunpack.c.h.b16 %v3524
  %v4309 = vunpack.c.l.b16 %v3525
  %v4310 = vunpack.c.h.b16 %v3525
  %v4311 = vunpack.c.l.b16 %v3526
  %v4312 = vunpack.c.h.b16 %v3526
  %v4313 = vunpack.c.l.b16 %v3527
  %v4314 = vunpack.c.h.b16 %v3527
  %v4315 = vunpack.c.l.b16 %v3528
  %v4316 = vunpack.c.h.b16 %v3528
  %v4317 = vunpack.c.l.b16 %v3529
  %v4318 = vunpack.c.h.b16 %v3529
  %v4319 = vunpack.c.l.b16 %v3530
  %v4320 = vunpack.c.h.b16 %v3530
  %v4321 = vunpack.c.l.b16 %v3531
  %v4322 = vunpack.c.h.b16 %v3531
  %v4323 = vunpack.c.l.b16 %v3532
  %v4324 = vunpack.c.h.b16 %v3532
  %v4325 = vunpack.c.l.b16 %v3533
  %v4326 = vunpack.c.h.b16 %v3533
  %v4327 = vunpack.c.l.b16 %v3534
  %v4328 = vunpack.c.h.b16 %v3534
  %v4329 = vunpack.c.l.b16 %v3535
  %v4330 = vunpack.c.h.b16 %v3535
  %v4331 = vunpack.c.l.b16 %v3536
  %v4332 = vunpack.c.h.b16 %v3536
  %v4333 = vunpack.c.l.b16 %v3537
  %v4334 = vunpack.c.h.b16 %v3537
  %v4335 = vunpack.c.l.b16 %v3538
  %v4336 = vunpack.c.h.b16 %v3538
  %v4337 = vunpack.c.l.b16 %v3539
  %v4338 = vunpack.c.h.b16 %v3539
  %v4339 = vunpack.c.l.b16 %v3540
  %v4340 = vunpack.c.h.b16 %v3540
  %v4341 = vunpack.c.l.b16 %v3541
  %v4342 = vunpack.c.h.b16 %v3541
  %v4343 = vunpack.c.l.b16 %v3542
  %v4344 = vunpack.c.h.b16 %v3542
  %v4345 = vunpack.c.l.b16 %v3543
  %v4346 = vunpack.c.h.b16 %v3543
  %v4347 = vunpack.c.l.b16 %v3544
  %v4348 = vunpack.c.h.b16 %v3544
  %v4349 = vunpack.c.l.b16 %v3545
  %v4350 = vunpack.c.h.b16 %v3545
  %v4351 = vunpack.c.l.b16 %v3546
  %v4352 = vunpack.c.h.b16 %v3546
  %v4353 = vunpack.c.l.b16 %v3547
  %v4354 = vunpack.c.h.b16 %v3547
  %v4355 = vunpack.c.l.b16 %v3548
  %v4356 = vunpack.c.h.b16 %v3548
  %v4357 = vunpack.c.l.b16 %v3549
  %v4358 = vunpack.c.h.b16 %v3549
  %v4359 = vunpack.c.l.b16 %v3550
  %v4360 = vunpack.c.h.b16 %v3550
  %v4361 = vunpack.c.l.b16 %v3551
  %v4362 = vunpack.c.h.b16 %v3551
  %v4363 = vunpack.c.l.b16 %v3552
  %v4364 = vunpack.c.h.b16 %v3552
  %v4365 = vunpack.c.l.b16 %v3553
  %v4366 = vunpack.c.h.b16 %v3553
  %v4367 = vunpack.c.l.b16 %v3554
  %v4368 = vunpack.c.h.b16 %v3554
  %v4369 = vunpack.c.l.b16 %v3555
  %v4370 = vunpack.c.h.b16 %v3555
  %v4371 = vunpack.c.l.b16 %v3556
  %v4372 = vunpack.c.h.b16 %v3556
  %v4373 = vunpack.c.l.b16 %v3557
  %v4374 = vunpack.c.h.b16 %v3557
  %v4375 = vunpack.c.l.b16 %v3558
  %v4376 = vunpack.c.h.b16 %v3558
  %v4377 = vunpack.c.l.b16 %v3559
  %v4378 = vunpack.c.h.b16 %v3559
  %v4379 = vunpack.c.l.b16 %v3560
  %v4380 = vunpack.c.h.b16 %v3560
  %v4381 = vunpack.c.l.b16 %v3561
  %v4382 = vunpack.c.h.b16 %v3561
  %v4383 = vunpack.c.l.b16 %v3562
  %v4384 = vunpack.c.h.b16 %v3562
  %v4385 = vunpack.c.l.b16 %v3563
  %v4386 = vunpack.c.h.b16 %v3563
  %v4387 = vunpack.c.l.b16 %v3564
  %v4388 = vunpack.c.h.b16 %v3564
  %v4389 = vunpack.c.l.b16 %v3565
  %v4390 = vunpack.c.h.b16 %v3565
  %v4391 = vunpack.c.l.b16 %v3566
  %v4392 = vunpack.c.h.b16 %v3566
  %v4393 = vunpack.c.l.b16 %v3567
  %v4394 = vunpack.c.h.b16 %v3567
  %v4395 = vunpack.c.l.b16 %v3568
  %v4396 = vunpack.c.h.b16 %v3568
  %v4397 = vunpack.c.l.b16 %v3569
  %v4398 = vunpack.c.h.b16 %v3569
  %v4399 = vunpack.c.l.b16 %v3570
  %v4400 = vunpack.c.h.b16 %v3570
  %v4401 = vunpack.c.l.b16 %v3571
  %v4402 = vunpack.c.h.b16 %v3571
  %v4403 = vunpack.c.l.b16 %v3572
  %v4404 = vunpack.c.h.b16 %v3572
  %v4405 = vunpack.c.l.b16 %v3573
  %v4406 = vunpack.c.h.b16 %v3573
  %v4407 = vunpack.c.l.b16 %v3574
  %v4408 = vunpack.c.h.b16 %v3574
  %v4409 = vunpack.c.l.b16 %v3575
  %v4410 = vunpack.c.h.b16 %v3575
  %v4411 = vunpack.c.l.b16 %v3576
  %v4412 = vunpack.c.h.b16 %v3576
  %v4413 = vunpack.c.l.b16 %v3577
  %v4414 = vunpack.c.h.b16 %v3577
  %v4415 = vunpack.c.l.b16 %v3578
  %v4416 = vunpack.c.h.b16 %v3578
  %v4417 = vunpack.c.l.b16 %v3579
  %v4418 = vunpack.c.h.b16 %v3579
  %v4419 = vunpack.c.l.b16 %v3580
  %v4420 = vunpack.c.h.b16 %v3580
  %v4421 = vunpack.c.l.b16 %v3581
  %v4422 = vunpack.c.h.b16 %v3581
  %v4423 = vunpack.c.l.b16 %v3582
  %v4424 = vunpack.c.h.b16 %v3582
  %v4425 = vunpack.c.l.b16 %v3583
  %v4426 = vunpack.c.h.b16 %v3583
  %v4427 = vunpack.c.l.b16 %v3584
  %v4428 = vunpack.c.h.b16 %v3584
  %v4429 = vunpack.c.l.b16 %v3585
  %v4430 = vunpack.c.h.b16 %v3585
  %v4431 = vunpack.c.l.b16 %v3586
  %v4432 = vunpack.c.h.b16 %v3586
  %v4433 = vunpack.c.l.b16 %v3587
  %v4434 = vunpack.c.h.b16 %v3587
  %v4435 = vunpack.c.l.b16 %v3588
  %v4436 = vunpack.c.h.b16 %v3588
  %v4437 = vunpack.c.l.b16 %v3589
  %v4438 = vunpack.c.h.b16 %v3589
  %v4439 = vunpack.c.l.b16 %v3590
  %v4440 = vunpack.c.h.b16 %v3590
  %v4441 = vunpack.c.l.b16 %v3591
  %v4442 = vunpack.c.h.b16 %v3591
  %v4443 = vunpack.c.l.b16 %v3592
  %v4444 = vunpack.c.h.b16 %v3592
  %v4445 = vunpack.c.l.b16 %v3593
  %v4446 = vunpack.c.h.b16 %v3593
  %v4447 = vunpack.c.l.b16 %v3594
  %v4448 = vunpack.c.h.b16 %v3594
  %v4449 = vunpack.c.l.b16 %v3595
  %v4450 = vunpack.c.h.b16 %v3595
  %v4451 = vunpack.c.l.b16 %v3596
  %v4452 = vunpack.c.h.b16 %v3596
  %v4453 = vunpack.c.l.b16 %v3597
  %v4454 = vunpack.c.h.b16 %v3597
  %v4455 = vunpack.c.l.b16 %v3598
  %v4456 = vunpack.c.h.b16 %v3598
  %v4457 = vunpack.c.l.b16 %v3599
  %v4458 = vunpack.c.h.b16 %v3599
  %v4459 = vunpack.c.l.b16 %v3600
  %v4460 = vunpack.c.h.b16 %v3600
  %v4461 = vunpack.c.l.b16 %v3601
  %v4462 = vunpack.c.h.b16 %v3601
  %v4463 = vunpack.c.l.b16 %v3602
  %v4464 = vunpack.c.h.b16 %v3602
  %v4465 = vunpack.c.l.b16 %v3603
  %v4466 = vunpack.c.h.b16 %v3603
  %v4467 = vunpack.c.l.b16 %v3604
  %v4468 = vunpack.c.h.b16 %v3604
  %v4469 = vunpack.c.l.b16 %v3605
  %v4470 = vunpack.c.h.b16 %v3605
  %v4471 = vunpack.c.l.b16 %v3606
  %v4472 = vunpack.c.h.b16 %v3606
  %v4473 = vunpack.c.l.b16 %v3607
  %v4474 = vunpack.c.h.b16 %v3607
  %v4475 = vunpack.c.l.b16 %v3608
  %v4476 = vunpack.c.h.b16 %v3608
  %v4477 = vunpack.c.l.b16 %v3609
  %v4478 = vunpack.c.h.b16 %v3609
  %v4479 = vunpack.c.l.b16 %v3610
  %v4480 = vunpack.c.h.b16 %v3610
  %v4481 = vunpack.c.l.b16 %v3611
  %v4482 = vunpack.c.h.b16 %v3611
  %v4483 = vunpack.c.l.b16 %v3612
  %v4484 = vunpack.c.h.b16 %v3612
  %v4485 = vunpack.c.l.b16 %v3613
  %v4486 = vunpack.c.h.b16 %v3613
  %v4487 = vunpack.c.l.b16 %v3614
  %v4488 = vunpack.c.h.b16 %v3614
  %v4489 = vunpack.c.l.b16 %v3615
  %v4490 = vunpack.c.h.b16 %v3615
  %v4491 = vunpack.c.l.b16 %v3616
  %v4492 = vunpack.c.h.b16 %v3616
  %v4493 = vunpack.c.l.b16 %v3617
  %v4494 = vunpack.c.h.b16 %v3617
  %v4495 = vunpack.c.l.b16 %v3618
  %v4496 = vunpack.c.h.b16 %v3618
  %v4497 = vunpack.c.l.b16 %v3619
  %v4498 = vunpack.c.h.b16 %v3619
  %v4499 = vunpack.c.l.b16 %v3620
  %v4500 = vunpack.c.h.b16 %v3620
  %v4501 = vunpack.c.l.b16 %v3621
  %v4502 = vunpack.c.h.b16 %v3621
  %v4503 = vunpack.c.l.b16 %v3622
  %v4504 = vunpack.c.h.b16 %v3622
  %v4505 = vunpack.c.l.b16 %v3623
  %v4506 = vunpack.c.h.b16 %v3623
  %v4507 = vunpack.c.l.b16 %v3624
  %v4508 = vunpack.c.h.b16 %v3624
  %v4509 = vunpack.c.l.b16 %v3625
  %v4510 = vunpack.c.h.b16 %v3625
  %v4511 = vunpack.c.l.b16 %v3626
  %v4512 = vunpack.c.h.b16 %v3626
  %v4513 = vunpack.c.l.b16 %v3627
  %v4514 = vunpack.c.h.b16 %v3627
  %v4515 = vunpack.c.l.b16 %v3628
  %v4516 = vunpack.c.h.b16 %v3628
  %v4517 = vunpack.c.l.b16 %v3629
  %v4518 = vunpack.c.h.b16 %v3629
  %v4519 = vunpack.c.l.b16 %v3630
  %v4520 = vunpack.c.h.b16 %v3630
  %v4521 = vunpack.c.l.b16 %v3631
  %v4522 = vunpack.c.h.b16 %v3631
  %v4523 = vunpack.c.l.b16 %v3632
  %v4524 = vunpack.c.h.b16 %v3632
  %v4525 = vunpack.c.l.b16 %v3633
  %v4526 = vunpack.c.h.b16 %v3633
  %v4527 = vunpack.c.l.b16 %v3634
  %v4528 = vunpack.c.h.b16 %v3634
  %v4529 = vunpack.c.l.b16 %v3635
  %v4530 = vunpack.c.h.b16 %v3635
  %v4531 = vunpack.c.l.b16 %v3636
  %v4532 = vunpack.c.h.b16 %v3636
  %v4533 = vunpack.c.l.b16 %v3637
  %v4534 = vunpack.c.h.b16 %v3637
  %v4535 = vunpack.c.l.b16 %v3638
  %v4536 = vunpack.c.h.b16 %v3638
  %v4537 = vunpack.c.l.b16 %v3639
  %v4538 = vunpack.c.h.b16 %v3639
  %v4539 = vunpack.c.l.b16 %v3640
  %v4540 = vunpack.c.h.b16 %v3640
  %v4541 = vunpack.c.l.b16 %v3641
  %v4542 = vunpack.c.h.b16 %v3641
  %v4543 = vunpack.c.l.b16 %v3642
  %v4544 = vunpack.c.h.b16 %v3642
  %v4545 = vunpack.c.l.b16 %v3643
  %v4546 = vunpack.c.h.b16 %v3643
  %v4547 = vunpack.c.l.b16 %v3644
  %v4548 = vunpack.c.h.b16 %v3644
  %v4549 = vunpack.c.l.b16 %v3645
  %v4550 = vunpack.c.h.b16 %v3645
  %v4551 = vunpack.c.l.b16 %v3646
  %v4552 = vunpack.c.h.b16 %v3646
  %v4553 = vunpack.c.l.b16 %v3647
  %v4554 = vunpack.c.h.b16 %v3647
  %v4555 = vunpack.c.l.b16 %v3648
  %v4556 = vunpack.c.h.b16 %v3648
  %v4557 = vunpack.c.l.b16 %v3649
  %v4558 = vunpack.c.h.b16 %v3649
  %v4559 = vunpack.c.l.b16 %v3650
  %v4560 = vunpack.c.h.b16 %v3650
  %v4561 = vunpack.c.l.b16 %v3651
  %v4562 = vunpack.c.h.b16 %v3651
  %v4563 = vunpack.c.l.b16 %v3652
  %v4564 = vunpack.c.h.b16 %v3652
  %v4565 = vunpack.c.l.b16 %v3653
  %v4566 = vunpack.c.h.b16 %v3653
  %v4567 = vunpack.c.l.b16 %v3654
  %v4568 = vunpack.c.h.b16 %v3654
  %v4569 = vunpack.c.l.b16 %v3655
  %v4570 = vunpack.c.h.b16 %v3655
  %v4571 = vunpack.c.l.b16 %v3656
  %v4572 = vunpack.c.h.b16 %v3656
  %v4573 = vunpack.c.l.b16 %v3657
  %v4574 = vunpack.c.h.b16 %v3657
  %v4575 = vunpack.c.l.b16 %v3658
  %v4576 = vunpack.c.h.b16 %v3658
  %v4577 = vunpack.c.l.b16 %v3659
  %v4578 = vunpack.c.h.b16 %v3659
  %v4579 = vunpack.c.l.b16 %v3660
  %v4580 = vunpack.c.h.b16 %v3660
  %v4581 = vunpack.c.l.b16 %v3661
  %v4582 = vunpack.c.h.b16 %v3661
  %v4583 = vunpack.c.l.b16 %v3662
  %v4584 = vunpack.c.h.b16 %v3662
  %v4585 = vunpack.c.l.b16 %v3663
  %v4586 = vunpack.c.h.b16 %v3663
  %v4587 = vunpack.c.l.b16 %v3664
  %v4588 = vunpack.c.h.b16 %v3664
  %v4589 = vunpack.c.l.b16 %v3665
  %v4590 = vunpack.c.h.b16 %v3665
  %v4591 = vunpack.c.l.b16 %v3666
  %v4592 = vunpack.c.h.b16 %v3666
  %v4593 = vunpack.c.l.b16 %v3667
  %v4594 = vunpack.c.h.b16 %v3667
  %v4595 = vunpack.c.l.b16 %v3668
  %v4596 = vunpack.c.h.b16 %v3668
  %v4597 = vunpack.c.l.b16 %v3669
  %v4598 = vunpack.c.h.b16 %v3669
  %v4599 = vunpack.c.l.b16 %v3670
  %v4600 = vunpack.c.h.b16 %v3670
  %v4601 = vunpack.c.l.b16 %v3671
  %v4602 = vunpack.c.h.b16 %v3671
  %v4603 = vunpack.c.l.b16 %v3672
  %v4604 = vunpack.c.h.b16 %v3672
  %v4605 = vunpack.c.l.b16 %v3673
  %v4606 = vunpack.c.h.b16 %v3673
  %v4607 = vunpack.c.l.b16 %v3674
  %v4608 = vunpack.c.h.b16 %v3674
  %v4609 = vunpack.c.l.b16 %v3675
  %v4610 = vunpack.c.h.b16 %v3675
  %v4611 = vunpack.c.l.b16 %v3676
  %v4612 = vunpack.c.h.b16 %v3676
  %v4613 = vunpack.c.l.b16 %v3677
  %v4614 = vunpack.c.h.b16 %v3677
  %v4615 = vunpack.c.l.b16 %v3678
  %v4616 = vunpack.c.h.b16 %v3678
  %v4617 = vunpack.c.l.b16 %v3679
  %v4618 = vunpack.c.h.b16 %v3679
  %v4619 = vunpack.c.l.b16 %v3680
  %v4620 = vunpack.c.h.b16 %v3680
  %v4621 = vunpack.c.l.b16 %v3681
  %v4622 = vunpack.c.h.b16 %v3681
  %v4623 = vunpack.c.l.b16 %v3682
  %v4624 = vunpack.c.h.b16 %v3682
  %v4625 = vunpack.c.l.b16 %v3683
  %v4626 = vunpack.c.h.b16 %v3683
  %v4627 = vunpack.c.l.b16 %v3684
  %v4628 = vunpack.c.h.b16 %v3684
  %v4629 = vunpack.c.l.b16 %v3685
  %v4630 = vunpack.c.h.b16 %v3685
  %v4631 = vunpack.c.l.b16 %v3686
  %v4632 = vunpack.c.h.b16 %v3686
  %v4633 = vunpack.c.l.b16 %v3687
  %v4634 = vunpack.c.h.b16 %v3687
  %v4635 = vunpack.c.l.b16 %v3688
  %v4636 = vunpack.c.h.b16 %v3688
  %v4637 = vunpack.c.l.b16 %v3689
  %v4638 = vunpack.c.h.b16 %v3689
  %v4639 = vunpack.c.l.b16 %v3690
  %v4640 = vunpack.c.h.b16 %v3690
  %v4641 = vunpack.c.l.b16 %v3691
  %v4642 = vunpack.c.h.b16 %v3691
  %v4643 = vunpack.c.l.b16 %v3692
  %v4644 = vunpack.c.h.b16 %v3692
  %v4645 = vunpack.c.l.b16 %v3693
  %v4646 = vunpack.c.h.b16 %v3693
  %v4647 = vunpack.c.l.b16 %v3694
  %v4648 = vunpack.c.h.b16 %v3694
  %v4649 = vunpack.c.l.b16 %v3695
  %v4650 = vunpack.c.h.b16 %v3695
  %v4651 = vunpack.c.l.b16 %v3696
  %v4652 = vunpack.c.h.b16 %v3696
  %v4653 = vunpack.c.l.b16 %v3697
  %v4654 = vunpack.c.h.b16 %v3697
  %v4655 = vunpack.c.l.b16 %v3698
  %v4656 = vunpack.c.h.b16 %v3698
  %v4657 = vunpack.c.l.b16 %v3699
  %v4658 = vunpack.c.h.b16 %v3699
  %v4659 = vunpack.c.l.b16 %v3700
  %v4660 = vunpack.c.h.b16 %v3700
  %v4661 = vunpack.c.l.b16 %v3701
  %v4662 = vunpack.c.h.b16 %v3701
  %v4663 = vunpack.c.l.b16 %v3702
  %v4664 = vunpack.c.h.b16 %v3702
  %v4665 = vunpack.c.l.b16 %v3703
  %v4666 = vunpack.c.h.b16 %v3703
  %v4667 = vunpack.c.l.b16 %v3704
  %v4668 = vunpack.c.h.b16 %v3704
  %v4669 = vunpack.c.l.b16 %v3705
  %v4670 = vunpack.c.h.b16 %v3705
  %v4671 = vunpack.c.l.b16 %v3706
  %v4672 = vunpack.c.h.b16 %v3706
  %v4673 = vunpack.c.l.b16 %v3707
  %v4674 = vunpack.c.h.b16 %v3707
  %v4675 = vunpack.c.l.b16 %v3708
  %v4676 = vunpack.c.h.b16 %v3708
  %v4677 = vunpack.c.l.b16 %v3709
  %v4678 = vunpack.c.h.b16 %v3709
  %v4679 = vunpack.c.l.b16 %v3710
  %v4680 = vunpack.c.h.b16 %v3710
  %v4681 = vunpack.c.l.b16 %v3711
  %v4682 = vunpack.c.h.b16 %v3711
  %v4683 = vunpack.c.l.b16 %v3712
  %v4684 = vunpack.c.h.b16 %v3712
  %v4685 = vunpack.c.l.b16 %v3713
  %v4686 = vunpack.c.h.b16 %v3713
  %v4687 = vunpack.c.l.b16 %v3714
  %v4688 = vunpack.c.h.b16 %v3714
  %v4689 = vunpack.c.l.b16 %v3715
  %v4690 = vunpack.c.h.b16 %v3715
  %v4691 = vunpack.c.l.b16 %v3716
  %v4692 = vunpack.c.h.b16 %v3716
  %v4693 = vunpack.c.l.b16 %v3717
  %v4694 = vunpack.c.h.b16 %v3717
  %v4695 = vunpack.c.l.b16 %v3718
  %v4696 = vunpack.c.h.b16 %v3718
  %v4697 = vunpack.c.l.b16 %v3719
  %v4698 = vunpack.c.h.b16 %v3719
  %v4699 = vunpack.c.l.b16 %v3720
  %v4700 = vunpack.c.h.b16 %v3720
  %v4701 = vunpack.c.l.b16 %v3721
  %v4702 = vunpack.c.h.b16 %v3721
  %v4703 = vunpack.c.l.b16 %v3722
  %v4704 = vunpack.c.h.b16 %v3722
  %v4705 = vunpack.c.l.b16 %v3723
  %v4706 = vunpack.c.h.b16 %v3723
  %v4707 = vunpack.c.l.b16 %v3724
  %v4708 = vunpack.c.h.b16 %v3724
  %v4709 = vunpack.c.l.b16 %v3725
  %v4710 = vunpack.c.h.b16 %v3725
  %v4711 = vunpack.c.l.b16 %v3726
  %v4712 = vunpack.c.h.b16 %v3726
  %v4713 = vunpack.c.l.b16 %v3727
  %v4714 = vunpack.c.h.b16 %v3727
  %v4715 = vunpack.c.l.b16 %v3728
  %v4716 = vunpack.c.h.b16 %v3728
  %v4717 = vunpack.c.l.b16 %v3729
  %v4718 = vunpack.c.h.b16 %v3729
  %v4719 = vunpack.c.l.b16 %v3730
  %v4720 = vunpack.c.h.b16 %v3730
  %v4721 = vunpack.c.l.b16 %v3731
  %v4722 = vunpack.c.h.b16 %v3731
  %v4723 = vunpack.c.l.b16 %v3732
  %v4724 = vunpack.c.h.b16 %v3732
  %v4725 = vunpack.c.l.b16 %v3733
  %v4726 = vunpack.c.h.b16 %v3733
  %v4727 = vunpack.c.l.b16 %v3734
  %v4728 = vunpack.c.h.b16 %v3734
  %v4729 = vunpack.c.l.b16 %v3735
  %v4730 = vunpack.c.h.b16 %v3735
  %v4731 = vunpack.c.l.b16 %v3736
  %v4732 = vunpack.c.h.b16 %v3736
  %v4733 = vunpack.c.l.b16 %v3737
  %v4734 = vunpack.c.h.b16 %v3737
  %v4735 = vunpack.c.l.b16 %v3738
  %v4736 = vunpack.c.h.b16 %v3738
  %v4737 = vunpack.c.l.b16 %v3739
  %v4738 = vunpack.c.h.b16 %v3739
  %v4739 = vunpack.c.l.b16 %v3740
  %v4740 = vunpack.c.h.b16 %v3740
  %v4741 = vunpack.c.l.b16 %v3741
  %v4742 = vunpack.c.h.b16 %v3741
  %v4743 = vunpack.c.l.b16 %v3742
  %v4744 = vunpack.c.h.b16 %v3742
  %v4745 = vunpack.c.l.b16 %v3743
  %v4746 = vunpack.c.h.b16 %v3743
  %v4747 = vunpack.c.l.b16 %v3744
  %v4748 = vunpack.c.h.b16 %v3744
  %v4749 = vunpack.c.l.b16 %v3745
  %v4750 = vunpack.c.h.b16 %v3745
  %v4751 = vunpack.c.l.b16 %v3746
  %v4752 = vunpack.c.h.b16 %v3746
  %v4753 = vunpack.c.l.b16 %v3747
  %v4754 = vunpack.c.h.b16 %v3747
  %v4755 = vunpack.c.l.b16 %v3748
  %v4756 = vunpack.c.h.b16 %v3748
  %v4757 = vunpack.c.l.b16 %v3749
  %v4758 = vunpack.c.h.b16 %v3749
  %v4759 = vunpack.c.l.b16 %v3750
  %v4760 = vunpack.c.h.b16 %v3750
  %v4761 = vunpack.c.l.b16 %v3751
  %v4762 = vunpack.c.h.b16 %v3751
  %v4763 = vunpack.c.l.b16 %v3752
  %v4764 = vunpack.c.h.b16 %v3752
  %v4765 = vunpack.c.l.b16 %v3753
  %v4766 = vunpack.c.h.b16 %v3753
  %v4767 = vunpack.c.l.b16 %v3754
  %v4768 = vunpack.c.h.b16 %v3754
  %v4769 = vunpack.c.l.b16 %v3755
  %v4770 = vunpack.c.h.b16 %v3755
  %v4771 = vunpack.c.l.b16 %v3756
  %v4772 = vunpack.c.h.b16 %v3756
  %v4773 = vunpack.c.l.b16 %v3757
  %v4774 = vunpack.c.h.b16 %v3757
  %v4775 = vunpack.c.l.b16 %v3758
  %v4776 = vunpack.c.h.b16 %v3758
  %v4777 = vunpack.c.l.b16 %v3759
  %v4778 = vunpack.c.h.b16 %v3759
  %v4779 = vunpack.c.l.b16 %v3760
  %v4780 = vunpack.c.h.b16 %v3760
  %v4781 = vunpack.c.l.b16 %v3761
  %v4782 = vunpack.c.h.b16 %v3761
  %v4783 = vunpack.c.l.b16 %v3762
  %v4784 = vunpack.c.h.b16 %v3762
  %v4785 = vunpack.c.l.b16 %v3763
  %v4786 = vunpack.c.h.b16 %v3763
  %v4787 = vunpack.c.l.b16 %v3764
  %v4788 = vunpack.c.h.b16 %v3764
  %v4789 = vunpack.c.l.b16 %v3765
  %v4790 = vunpack.c.h.b16 %v3765
  %v4791 = vunpack.c.l.b16 %v3766
  %v4792 = vunpack.c.h.b16 %v3766
  %v4793 = vunpack.c.l.b16 %v3767
  %v4794 = vunpack.c.h.b16 %v3767
  %v4795 = vunpack.c.l.b16 %v3768
  %v4796 = vunpack.c.h.b16 %v3768
  %v4797 = vunpack.c.l.b16 %v3769
  %v4798 = vunpack.c.h.b16 %v3769
  %v4799 = vunpack.c.l.b16 %v3770
  %v4800 = vunpack.c.h.b16 %v3770
  %v4801 = vunpack.c.l.b16 %v3771
  %v4802 = vunpack.c.h.b16 %v3771
  %v4803 = vunpack.c.l.b16 %v3772
  %v4804 = vunpack.c.h.b16 %v3772
  %v4805 = vunpack.c.l.b16 %v3773
  %v4806 = vunpack.c.h.b16 %v3773
  %v4807 = vunpack.c.l.b16 %v3774
  %v4808 = vunpack.c.h.b16 %v3774
  %v4809 = vunpack.c.l.b16 %v3775
  %v4810 = vunpack.c.h.b16 %v3775
  %v4811 = vunpack.c.l.b16 %v3776
  %v4812 = vunpack.c.h.b16 %v3776
  %v4813 = vunpack.c.l.b16 %v3777
  %v4814 = vunpack.c.h.b16 %v3777
  %v4815 = vunpack.c.l.b16 %v3778
  %v4816 = vunpack.c.h.b16 %v3778
  %v4817 = vunpack.c.l.b16 %v3779
  %v4818 = vunpack.c.h.b16 %v3779
  %v4819 = vunpack.c.l.b16 %v3780
  %v4820 = vunpack.c.h.b16 %v3780
  %v4821 = vunpack.c.l.b16 %v3781
  %v4822 = vunpack.c.h.b16 %v3781
  %v4823 = vunpack.c.l.b16 %v3782
  %v4824 = vunpack.c.h.b16 %v3782
  %v4825 = vunpack.c.l.b16 %v3783
  %v4826 = vunpack.c.h.b16 %v3783
  %v4827 = vunpack.c.l.b16 %v3784
  %v4828 = vunpack.c.h.b16 %v3784
  %v4829 = vunpack.c.l.b16 %v3785
  %v4830 = vunpack.c.h.b16 %v3785
  %v4831 = vunpack.c.l.b16 %v3786
  %v4832 = vunpack.c.h.b16 %v3786
  %v4833 = vunpack.c.l.b16 %v3787
  %v4834 = vunpack.c.h.b16 %v3787
  %v4835 = vunpack.c.l.b16 %v3788
  %v4836 = vunpack.c.h.b16 %v3788
  %v4837 = vunpack.c.l.b16 %v3789
  %v4838 = vunpack.c.h.b16 %v3789
  %v4839 = vunpack.c.l.b16 %v3790
  %v4840 = vunpack.c.h.b16 %v3790
  %v4841 = vunpack.c.l.b16 %v3791
  %v4842 = vunpack.c.h.b16 %v3791
  %v4843 = vunpack.c.l.b16 %v3792
  %v4844 = vunpack.c.h.b16 %v3792
  %v4845 = vunpack.c.l.b16 %v3793
  %v4846 = vunpack.c.h.b16 %v3793
  %v4847 = vunpack.c.l.b16 %v3794
  %v4848 = vunpack.c.h.b16 %v3794
  %v4849 = vunpack.c.l.b16 %v3795
  %v4850 = vunpack.c.h.b16 %v3795
  %v4851 = vunpack.c.l.b16 %v3796
  %v4852 = vunpack.c.h.b16 %v3796
  %v4853 = vunpack.c.l.b16 %v3797
  %v4854 = vunpack.c.h.b16 %v3797
  %v4855 = vunpack.c.l.b16 %v3798
  %v4856 = vunpack.c.h.b16 %v3798
  %v4857 = vunpack.c.l.b16 %v3799
  %v4858 = vunpack.c.h.b16 %v3799
  %v4859 = vunpack.c.l.b16 %v3800
  %v4860 = vunpack.c.h.b16 %v3800
  %v4861 = vunpack.c.l.b16 %v3801
  %v4862 = vunpack.c.h.b16 %v3801
  %v4863 = vunpack.c.l.b16 %v3802
  %v4864 = vunpack.c.h.b16 %v3802
  %v4865 = vunpack.c.l.b16 %v3803
  %v4866 = vunpack.c.h.b16 %v3803
  %v4867 = vunpack.c.l.b16 %v3804
  %v4868 = vunpack.c.h.b16 %v3804
  %v4869 = vunpack.c.l.b16 %v3805
  %v4870 = vunpack.c.h.b16 %v3805
  %v4871 = vunpack.c.l.b16 %v3806
  %v4872 = vunpack.c.h.b16 %v3806
  %v4873 = vunpack.c.l.b16 %v3807
  %v4874 = vunpack.c.h.b16 %v3807
  %v4875 = vunpack.c.l.b16 %v3808
  %v4876 = vunpack.c.h.b16 %v3808
  %v4877 = vunpack.c.l.b16 %v3809
  %v4878 = vunpack.c.h.b16 %v3809
  %v4879 = vunpack.c.l.b16 %v3810
  %v4880 = vunpack.c.h.b16 %v3810
  %v4881 = vunpack.c.l.b16 %v3811
  %v4882 = vunpack.c.h.b16 %v3811
  %v4883 = vunpack.c.l.b16 %v3812
  %v4884 = vunpack.c.h.b16 %v3812
  %v4885 = vunpack.c.l.b16 %v3813
  %v4886 = vunpack.c.h.b16 %v3813
  %v4887 = vunpack.c.l.b16 %v3814
  %v4888 = vunpack.c.h.b16 %v3814
  %v4889 = vunpack.c.l.b16 %v3815
  %v4890 = vunpack.c.h.b16 %v3815
  %v4891 = vunpack.c.l.b16 %v3816
  %v4892 = vunpack.c.h.b16 %v3816
  %v4893 = vunpack.c.l.b16 %v3817
  %v4894 = vunpack.c.h.b16 %v3817
  %v4895 = vunpack.c.l.b16 %v3818
  %v4896 = vunpack.c.h.b16 %v3818
  %v4897 = vunpack.c.l.b16 %v3819
  %v4898 = vunpack.c.h.b16 %v3819
  %v4899 = vunpack.c.l.b16 %v3820
  %v4900 = vunpack.c.h.b16 %v3820
  %v4901 = vpack.c.b16 %v4185, %v4181
  %v4902 = vpack.c.b16 %v4186, %v4182
  %v4903 = vpack.c.b16 %v4187, %v4183
  %v4904 = vpack.c.b16 %v4188, %v4184
  %v4905 = vpack.c.b16 %v4193, %v4189
  %v4906 = vpack.c.b16 %v4194, %v4190
  %v4907 = vpack.c.b16 %v4195, %v4191
  %v4908 = vpack.c.b16 %v4196, %v4192
  %v4909 = vpack.c.b16 %v4201, %v4197
  %v4910 = vpack.c.b16 %v4202, %v4198
  %v4911 = vpack.c.b16 %v4203, %v4199
  %v4912 = vpack.c.b16 %v4204, %v4200
  %v4913 = vpack.c.b16 %v4209, %v4205
  %v4914 = vpack.c.b16 %v4210, %v4206
  %v4915 = vpack.c.b16 %v4211, %v4207
  %v4916 = vpack.c.b16 %v4212, %v4208
  %v4917 = vpack.c.b16 %v4217, %v4213
  %v4918 = vpack.c.b16 %v4218, %v4214
  %v4919 = vpack.c.b16 %v4219, %v4215
  %v4920 = vpack.c.b16 %v4220, %v4216
  %v4921 = vpack.c.b16 %v4225, %v4221
  %v4922 = vpack.c.b16 %v4226, %v4222
  %v4923 = vpack.c.b16 %v4227, %v4223
  %v4924 = vpack.c.b16 %v4228, %v4224
  %v4925 = vpack.c.b16 %v4233, %v4229
  %v4926 = vpack.c.b16 %v4234, %v4230
  %v4927 = vpack.c.b16 %v4235, %v4231
  %v4928 = vpack.c.b16 %v4236, %v4232
  %v4929 = vpack.c.b16 %v4241, %v4237
  %v4930 = vpack.c.b16 %v4242, %v4238
  %v4931 = vpack.c.b16 %v4243, %v4239
  %v4932 = vpack.c.b16 %v4244, %v4240
  %v4933 = vpack.c.b16 %v4249, %v4245
  %v4934 = vpack.c.b16 %v4250, %v4246
  %v4935 = vpack.c.b16 %v4251, %v4247
  %v4936 = vpack.c.b16 %v4252, %v4248
  %v4937 = vpack.c.b16 %v4257, %v4253
  %v4938 = vpack.c.b16 %v4258, %v4254
  %v4939 = vpack.c.b16 %v4259, %v4255
  %v4940 = vpack.c.b16 %v4260, %v4256
  %v4941 = vpack.c.b16 %v4265, %v4261
  %v4942 = vpack.c.b16 %v4266, %v4262
  %v4943 = vpack.c.b16 %v4267, %v4263
  %v4944 = vpack.c.b16 %v4268, %v4264
  %v4945 = vpack.c.b16 %v4273, %v4269
  %v4946 = vpack.c.b16 %v4274, %v4270
  %v4947 = vpack.c.b16 %v4275, %v4271
  %v4948 = vpack.c.b16 %v4276, %v4272
  %v4949 = vpack.c.b16 %v4281, %v4277
  %v4950 = vpack.c.b16 %v4282, %v4278
  %v4951 = vpack.c.b16 %v4283, %v4279
  %v4952 = vpack.c.b16 %v4284, %v4280
  %v4953 = vpack.c.b16 %v4289, %v4285
  %v4954 = vpack.c.b16 %v4290, %v4286
  %v4955 = vpack.c.b16 %v4291, %v4287
  %v4956 = vpack.c.b16 %v4292, %v4288
  %v4957 = vpack.c.b16 %v4297, %v4293
  %v4958 = vpack.c.b16 %v4298, %v4294
  %v4959 = vpack.c.b16 %v4299, %v4295
  %v4960 = vpack.c.b16 %v4300, %v4296
  %v4961 = vpack.c.b16 %v4305, %v4301
  %v4962 = vpack.c.b16 %v4306, %v4302
  %v4963 = vpack.c.b16 %v4307, %v4303
  %v4964 = vpack.c.b16 %v4308, %v4304
  %v4965 = vpack.c.b16 %v4313, %v4309
  %v4966 = vpack.c.b16 %v4314, %v4310
  %v4967 = vpack.c.b16 %v4315, %v4311
  %v4968 = vpack.c.b16 %v4316, %v4312
  %v4969 = vpack.c.b16 %v4321, %v4317
  %v4970 = vpack.c.b16 %v4322, %v4318
  %v4971 = vpack.c.b16 %v4323, %v4319
  %v4972 = vpack.c.b16 %v4324, %v4320
  %v4973 = vpack.c.b16 %v4329, %v4325
  %v4974 = vpack.c.b16 %v4330, %v4326
  %v4975 = vpack.c.b16 %v4331, %v4327
  %v4976 = vpack.c.b16 %v4332, %v4328
  %v4977 = vpack.c.b16 %v4337, %v4333
  %v4978 = vpack.c.b16 %v4338, %v4334
  %v4979 = vpack.c.b16 %v4339, %v4335
  %v4980 = vpack.c.b16 %v4340, %v4336
  %v4981 = vpack.c.b16 %v4345, %v4341
  %v4982 = vpack.c.b16 %v4346, %v4342
  %v4983 = vpack.c.b16 %v4347, %v4343
  %v4984 = vpack.c.b16 %v4348, %v4344
  %v4985 = vpack.c.b16 %v4353, %v4349
  %v4986 = vpack.c.b16 %v4354, %v4350
  %v4987 = vpack.c.b16 %v4355, %v4351
  %v4988 = vpack.c.b16 %v4356, %v4352
  %v4989 = vpack.c.b16 %v4361, %v4357
  %v4990 = vpack.c.b16 %v4362, %v4358
  %v4991 = vpack.c.b16 %v4363, %v4359
  %v4992 = vpack.c.b16 %v4364, %v4360
  %v4993 = vpack.c.b16 %v4369, %v4365
  %v4994 = vpack.c.b16 %v4370, %v4366
  %v4995 = vpack.c.b16 %v4371, %v4367
  %v4996 = vpack.c.b16 %v4372, %v4368
  %v4997 = vpack.c.b16 %v4377, %v4373
  %v4998 = vpack.c.b16 %v4378, %v4374
  %v4999 = vpack.c.b16 %v4379, %v4375
  %v5000 = vpack.c.b16 %v4380, %v4376
  %v5001 = vpack.c.b16 %v4385, %v4381
  %v5002 = vpack.c.b16 %v4386, %v4382
  %v5003 = vpack.c.b16 %v4387, %v4383
  %v5004 = vpack.c.b16 %v4388, %v4384
  %v5005 = vpack.c.b16 %v4393, %v4389
  %v5006 = vpack.c.b16 %v4394, %v4390
  %v5007 = vpack.c.b16 %v4395, %v4391
  %v5008 = vpack.c.b16 %v4396, %v4392
  %v5009 = vpack.c.b16 %v4401, %v4397
  %v5010 = vpack.c.b16 %v4402, %v4398
  %v5011 = vpack.c.b16 %v4403, %v4399
  %v5012 = vpack.c.b16 %v4404, %v4400
  %v5013 = vpack.c.b16 %v4409, %v4405
  %v5014 = vpack.c.b16 %v4410, %v4406
  %v5015 = vpack.c.b16 %v4411, %v4407
  %v5016 = vpack.c.b16 %v4412, %v4408
  %v5017 = vpack.c.b16 %v4417, %v4413
  %v5018 = vpack.c.b16 %v4418, %v4414
  %v5019 = vpack.c.b16 %v4419, %v4415
  %v5020 = vpack.c.b16 %v4420, %v4416
  %v5021 = vpack.c.b16 %v4425, %v4421
  %v5022 = vpack.c.b16 %v4426, %v4422
  %v5023 = vpack.c.b16 %v4427, %v4423
  %v5024 = vpack.c.b16 %v4428, %v4424
  %v5025 = vpack.c.b16 %v4433, %v4429
  %v5026 = vpack.c.b16 %v4434, %v4430
  %v5027 = vpack.c.b16 %v4435, %v4431
  %v5028 = vpack.c.b16 %v4436, %v4432
  %v5029 = vpack.c.b16 %v4441, %v4437
  %v5030 = vpack.c.b16 %v4442, %v4438
  %v5031 = vpack.c.b16 %v4443, %v4439
  %v5032 = vpack.c.b16 %v4444, %v4440
  %v5033 = vpack.c.b16 %v4449, %v4445
  %v5034 = vpack.c.b16 %v4450, %v4446
  %v5035 = vpack.c.b16 %v4451, %v4447
  %v5036 = vpack.c.b16 %v4452, %v4448
  %v5037 = vpack.c.b16 %v4457, %v4453
  %v5038 = vpack.c.b16 %v4458, %v4454
  %v5039 = vpack.c.b16 %v4459, %v4455
  %v5040 = vpack.c.b16 %v4460, %v4456
  %v5041 = vpack.c.b16 %v4465, %v4461
  %v5042 = vpack.c.b16 %v4466, %v4462
  %v5043 = vpack.c.b16 %v4467, %v4463
  %v5044 = vpack.c.b16 %v4468, %v4464
  %v5045 = vpack.c.b16 %v4473, %v4469
  %v5046 = vpack.c.b16 %v4474, %v4470
  %v5047 = vpack.c.b16 %v4475, %v4471
  %v5048 = vpack.c.b16 %v4476, %v4472
  %v5049 = vpack.c.b16 %v4481, %v4477
  %v5050 = vpack.c.b16 %v4482, %v4478
  %v5051 = vpack.c.b16 %v4483, %v4479
  %v5052 = vpack.c.b16 %v4484, %v4480
  %v5053 = vpack.c.b16 %v4489, %v4485
  %v5054 = vpack.c.b16 %v4490, %v4486
  %v5055 = vpack.c.b16 %v4491, %v4487
  %v5056 = vpack.c.b16 %v4492, %v4488
  %v5057 = vpack.c.b16 %v4497, %v4493
  %v5058 = vpack.c.b16 %v4498, %v4494
  %v5059 = vpack.c.b16 %v4499, %v4495
  %v5060 = vpack.c.b16 %v4500, %v4496
  %v5061 = vpack.c.b16 %v4505, %v4501
  %v5062 = vpack.c.b16 %v4506, %v4502
  %v5063 = vpack.c.b16 %v4507, %v4503
  %v5064 = vpack.c.b16 %v4508, %v4504
  %v5065 = vpack.c.b16 %v4513, %v4509
  %v5066 = vpack.c.b16 %v4514, %v4510
  %v5067 = vpack.c.b16 %v4515, %v4511
  %v5068 = vpack.c.b16 %v4516, %v4512
  %v5069 = vpack.c.b16 %v4521, %v4517
  %v5070 = vpack.c.b16 %v4522, %v4518
  %v5071 = vpack.c.b16 %v4523, %v4519
  %v5072 = vpack.c.b16 %v4524, %v4520
  %v5073 = vpack.c.b16 %v4529, %v4525
  %v5074 = vpack.c.b16 %v4530, %v4526
  %v5075 = vpack.c.b16 %v4531, %v4527
  %v5076 = vpack.c.b16 %v4532, %v4528
  %v5077 = vpack.c.b16 %v4537, %v4533
  %v5078 = vpack.c.b16 %v4538, %v4534
  %v5079 = vpack.c.b16 %v4539, %v4535
  %v5080 = vpack.c.b16 %v4540, %v4536
  %v5081 = vpack.c.b16 %v4545, %v4541
  %v5082 = vpack.c.b16 %v4546, %v4542
  %v5083 = vpack.c.b16 %v4547, %v4543
  %v5084 = vpack.c.b16 %v4548, %v4544
  %v5085 = vpack.c.b16 %v4553, %v4549
  %v5086 = vpack.c.b16 %v4554, %v4550
  %v5087 = vpack.c.b16 %v4555, %v4551
  %v5088 = vpack.c.b16 %v4556, %v4552
  %v5089 = vpack.c.b16 %v4561, %v4557
  %v5090 = vpack.c.b16 %v4562, %v4558
  %v5091 = vpack.c.b16 %v4563, %v4559
  %v5092 = vpack.c.b16 %v4564, %v4560
  %v5093 = vpack.c.b16 %v4569, %v4565
  %v5094 = vpack.c.b16 %v4570, %v4566
  %v5095 = vpack.c.b16 %v4571, %v4567
  %v5096 = vpack.c.b16 %v4572, %v4568
  %v5097 = vpack.c.b16 %v4577, %v4573
  %v5098 = vpack.c.b16 %v4578, %v4574
  %v5099 = vpack.c.b16 %v4579, %v4575
  %v5100 = vpack.c.b16 %v4580, %v4576
  %v5101 = vpack.c.b16 %v4585, %v4581
  %v5102 = vpack.c.b16 %v4586, %v4582
  %v5103 = vpack.c.b16 %v4587, %v4583
  %v5104 = vpack.c.b16 %v4588, %v4584
  %v5105 = vpack.c.b16 %v4593, %v4589
  %v5106 = vpack.c.b16 %v4594, %v4590
  %v5107 = vpack.c.b16 %v4595, %v4591
  %v5108 = vpack.c.b16 %v4596, %v4592
  %v5109 = vpack.c.b16 %v4601, %v4597
  %v5110 = vpack.c.b16 %v4602, %v4598
  %v5111 = vpack.c.b16 %v4603, %v4599
  %v5112 = vpack.c.b16 %v4604, %v4600
  %v5113 = vpack.c.b16 %v4609, %v4605
  %v5114 = vpack.c.b16 %v4610, %v4606
  %v5115 = vpack.c.b16 %v4611, %v4607
  %v5116 = vpack.c.b16 %v4612, %v4608
  %v5117 = vpack.c.b16 %v4617, %v4613
  %v5118 = vpack.c.b16 %v4618, %v4614
  %v5119 = vpack.c.b16 %v4619, %v4615
  %v5120 = vpack.c.b16 %v4620, %v4616
  %v5121 = vpack.c.b16 %v4625, %v4621
  %v5122 = vpack.c.b16 %v4626, %v4622
  %v5123 = vpack.c.b16 %v4627, %v4623
  %v5124 = vpack.c.b16 %v4628, %v4624
  %v5125 = vpack.c.b16 %v4633, %v4629
  %v5126 = vpack.c.b16 %v4634, %v4630
  %v5127 = vpack.c.b16 %v4635, %v4631
  %v5128 = vpack.c.b16 %v4636, %v4632
  %v5129 = vpack.c.b16 %v4641, %v4637
  %v5130 = vpack.c.b16 %v4642, %v4638
  %v5131 = vpack.c.b16 %v4643, %v4639
  %v5132 = vpack.c.b16 %v4644, %v4640
  %v5133 = vpack.c.b16 %v4649, %v4645
  %v5134 = vpack.c.b16 %v4650, %v4646
  %v5135 = vpack.c.b16 %v4651, %v4647
  %v5136 = vpack.c.b16 %v4652, %v4648
  %v5137 = vpack.c.b16 %v4657, %v4653
  %v5138 = vpack.c.b16 %v4658, %v4654
  %v5139 = vpack.c.b16 %v4659, %v4655
  %v5140 = vpack.c.b16 %v4660, %v4656
  %v5141 = vpack.c.b16 %v4665, %v4661
  %v5142 = vpack.c.b16 %v4666, %v4662
  %v5143 = vpack.c.b16 %v4667, %v4663
  %v5144 = vpack.c.b16 %v4668, %v4664
  %v5145 = vpack.c.b16 %v4673, %v4669
  %v5146 = vpack.c.b16 %v4674, %v4670
  %v5147 = vpack.c.b16 %v4675, %v4671
  %v5148 = vpack.c.b16 %v4676, %v4672
  %v5149 = vpack.c.b16 %v4681, %v4677
  %v5150 = vpack.c.b16 %v4682, %v4678
  %v5151 = vpack.c.b16 %v4683, %v4679
  %v5152 = vpack.c.b16 %v4684, %v4680
  %v5153 = vpack.c.b16 %v4689, %v4685
  %v5154 = vpack.c.b16 %v4690, %v4686
  %v5155 = vpack.c.b16 %v4691, %v4687
  %v5156 = vpack.c.b16 %v4692, %v4688
  %v5157 = vpack.c.b16 %v4697, %v4693
  %v5158 = vpack.c.b16 %v4698, %v4694
  %v5159 = vpack.c.b16 %v4699, %v4695
  %v5160 = vpack.c.b16 %v4700, %v4696
  %v5161 = vpack.c.b16 %v4705, %v4701
  %v5162 = vpack.c.b16 %v4706, %v4702
  %v5163 = vpack.c.b16 %v4707, %v4703
  %v5164 = vpack.c.b16 %v4708, %v4704
  %v5165 = vpack.c.b16 %v4713, %v4709
  %v5166 = vpack.c.b16 %v4714, %v4710
  %v5167 = vpack.c.b16 %v4715, %v4711
  %v5168 = vpack.c.b16 %v4716, %v4712
  %v5169 = vpack.c.b16 %v4721, %v4717
  %v5170 = vpack.c.b16 %v4722, %v4718
  %v5171 = vpack.c.b16 %v4723, %v4719
  %v5172 = vpack.c.b16 %v4724, %v4720
  %v5173 = vpack.c.b16 %v4729, %v4725
  %v5174 = vpack.c.b16 %v4730, %v4726
  %v5175 = vpack.c.b16 %v4731, %v4727
  %v5176 = vpack.c.b16 %v4732, %v4728
  %v5177 = vpack.c.b16 %v4737, %v4733
  %v5178 = vpack.c.b16 %v4738, %v4734
  %v5179 = vpack.c.b16 %v4739, %v4735
  %v5180 = vpack.c.b16 %v4740, %v4736
  %v5181 = vpack.c.b16 %v4745, %v4741
  %v5182 = vpack.c.b16 %v4746, %v4742
  %v5183 = vpack.c.b16 %v4747, %v4743
  %v5184 = vpack.c.b16 %v4748, %v4744
  %v5185 = vpack.c.b16 %v4753, %v4749
  %v5186 = vpack.c.b16 %v4754, %v4750
  %v5187 = vpack.c.b16 %v4755, %v4751
  %v5188 = vpack.c.b16 %v4756, %v4752
  %v5189 = vpack.c.b16 %v4761, %v4757
  %v5190 = vpack.c.b16 %v4762, %v4758
  %v5191 = vpack.c.b16 %v4763, %v4759
  %v5192 = vpack.c.b16 %v4764, %v4760
  %v5193 = vpack.c.b16 %v4769, %v4765
  %v5194 = vpack.c.b16 %v4770, %v4766
  %v5195 = vpack.c.b16 %v4771, %v4767
  %v5196 = vpack.c.b16 %v4772, %v4768
  %v5197 = vpack.c.b16 %v4777, %v4773
  %v5198 = vpack.c.b16 %v4778, %v4774
  %v5199 = vpack.c.b16 %v4779, %v4775
  %v5200 = vpack.c.b16 %v4780, %v4776
  %v5201 = vpack.c.b16 %v4785, %v4781
  %v5202 = vpack.c.b16 %v4786, %v4782
  %v5203 = vpack.c.b16 %v4787, %v4783
  %v5204 = vpack.c.b16 %v4788, %v4784
  %v5205 = vpack.c.b16 %v4793, %v4789
  %v5206 = vpack.c.b16 %v4794, %v4790
  %v5207 = vpack.c.b16 %v4795, %v4791
  %v5208 = vpack.c.b16 %v4796, %v4792
  %v5209 = vpack.c.b16 %v4801, %v4797
  %v5210 = vpack.c.b16 %v4802, %v4798
  %v5211 = vpack.c.b16 %v4803, %v4799
  %v5212 = vpack.c.b16 %v4804, %v4800
  %v5213 = vpack.c.b16 %v4809, %v4805
  %v5214 = vpack.c.b16 %v4810, %v4806
  %v5215 = vpack.c.b16 %v4811, %v4807
  %v5216 = vpack.c.b16 %v4812, %v4808
  %v5217 = vpack.c.b16 %v4817, %v4813
  %v5218 = vpack.c.b16 %v4818, %v4814
  %v5219 = vpack.c.b16 %v4819, %v4815
  %v5220 = vpack.c.b16 %v4820, %v4816
  %v5221 = vpack.c.b16 %v4825, %v4821
  %v5222 = vpack.c.b16 %v4826, %v4822
  %v5223 = vpack.c.b16 %v4827, %v4823
  %v5224 = vpack.c.b16 %v4828, %v4824
  %v5225 = vpack.c.b16 %v4833, %v4829
  %v5226 = vpack.c.b16 %v4834, %v4830
  %v5227 = vpack.c.b16 %v4835, %v4831
  %v5228 = vpack.c.b16 %v4836, %v4832
  %v5229 = vpack.c.b16 %v4841, %v4837
  %v5230 = vpack.c.b16 %v4842, %v4838
  %v5231 = vpack.c.b16 %v4843, %v4839
  %v5232 = vpack.c.b16 %v4844, %v4840
  %v5233 = vpack.c.b16 %v4849, %v4845
  %v5234 = vpack.c.b16 %v4850, %v4846
  %v5235 = vpack.c.b16 %v4851, %v4847
  %v5236 = vpack.c.b16 %v4852, %v4848
  %v5237 = vpack.c.b16 %v4857, %v4853
  %v5238 = vpack.c.b16 %v4858, %v4854
  %v5239 = vpack.c.b16 %v4859, %v4855
  %v5240 = vpack.c.b16 %v4860, %v4856
  %v5241 = vpack.c.b16 %v4865, %v4861
  %v5242 = vpack.c.b16 %v4866, %v4862
  %v5243 = vpack.c.b16 %v4867, %v4863
  %v5244 = vpack.c.b16 %v4868, %v4864
  %v5245 = vpack.c.b16 %v4873, %v4869
  %v5246 = vpack.c.b16 %v4874, %v4870
  %v5247 = vpack.c.b16 %v4875, %v4871
  %v5248 = vpack.c.b16 %v4876, %v4872
  %v5249 = vpack.c.b16 %v4881, %v4877
  %v5250 = vpack.c.b16 %v4882, %v4878
  %v5251 = vpack.c.b16 %v4883, %v4879
  %v5252 = vpack.c.b16 %v4884, %v4880
  %v5253 = vpack.c.b16 %v4889, %v4885
  %v5254 = vpack.c.b16 %v4890, %v4886
  %v5255 = vpack.c.b16 %v4891, %v4887
  %v5256 = vpack.c.b16 %v4892, %v4888
  %v5257 = vpack.c.b16 %v4897, %v4893
  %v5258 = vpack.c.b16 %v4898, %v4894
  %v5259 = vpack.c.b16 %v4899, %v4895
  %v5260 = vpack.c.b16 %v4900, %v4896
  %v5621 = vsel %vm328, %v2782, 0
  %v5623 = vsel %vm328, %v2785, 0
  %v5625 = vsel %vm328, %v2788, 0
  %v5627 = vsel %vm328, %v2791, 0
  %v5629 = vsel %vm328, %v2794, 0
  %v5631 = vsel %vm328, %v2797, 0
  %v5633 = vsel %vm328, %v2800, 0
  %v5635 = vsel %vm328, %v2803, 0
  %v5637 = vsel %vm328, %v2806, 0
  %v5639 = vsel %vm328, %v2809, 0
  %v5642 = vsel %vm328, %v2850, 0
  %v5645 = vsel %vm328, %v2990, 0
  %v5648 = vsel %vm328, %v3130, 0
  %v5651 = vsel %vm328, %v3284, 0
  %5653 = vmatpush.bf16.msra.mxu0 %v4929
  %5654 = vmatpush.bf16.msra.mxu0 %v4925
  %5655 = vmatpush.bf16.msra.mxu0 %v4921
  %5656 = vmatpush.bf16.msra.mxu0 %v4917
  %5657 = vmatpush.bf16.msra.mxu0 %v4913
  %5658 = vmatpush.bf16.msra.mxu0 %v4909
  %5659 = vmatpush.bf16.msra.mxu0 %v4905
  %5660 = vmatpush.bf16.msra.mxu0 %v4901
  %5661 = vmatmul.bf16.gmra.mxu0 %v2768
  %v5662 = vpop.f32.mrf.mxu0
  %v5663 = vadd.f32 0.0, %v5662
  %v5664 = vpop.f32.mrf.mxu0
  %v5665 = vadd.f32 0.0, %v5664
  %5666 = vmatmul.bf16.gmra.mxu0 %v2771
  %v5667 = vpop.f32.mrf.mxu0
  %v5668 = vadd.f32 0.0, %v5667
  %v5669 = vpop.f32.mrf.mxu0
  %v5670 = vadd.f32 0.0, %v5669
  %5671 = vmatmul.bf16.gmra.mxu0 %v2774
  %v5672 = vpop.f32.mrf.mxu0
  %v5673 = vadd.f32 0.0, %v5672
  %v5674 = vpop.f32.mrf.mxu0
  %v5675 = vadd.f32 0.0, %v5674
  %5676 = vmatmul.bf16.gmra.mxu0 %v2777
  %v5677 = vpop.f32.mrf.mxu0
  %v5678 = vadd.f32 0.0, %v5677
  %v5679 = vpop.f32.mrf.mxu0
  %v5680 = vadd.f32 0.0, %v5679
  %5681 = vmatmul.bf16.gmra.mxu0 %v2780
  %v5682 = vpop.f32.mrf.mxu0
  %v5683 = vadd.f32 0.0, %v5682
  %v5684 = vpop.f32.mrf.mxu0
  %v5685 = vadd.f32 0.0, %v5684
  %5686 = vmatmul.bf16.gmra.mxu0 %v2783
  %v5687 = vpop.f32.mrf.mxu0
  %v5688 = vadd.f32 0.0, %v5687
  %v5689 = vpop.f32.mrf.mxu0
  %v5690 = vadd.f32 0.0, %v5689
  %5691 = vmatmul.bf16.gmra.mxu0 %v2786
  %v5692 = vpop.f32.mrf.mxu0
  %v5693 = vadd.f32 0.0, %v5692
  %v5694 = vpop.f32.mrf.mxu0
  %v5695 = vadd.f32 0.0, %v5694
  %5696 = vmatmul.bf16.gmra.mxu0 %v2789
  %v5697 = vpop.f32.mrf.mxu0
  %v5698 = vadd.f32 0.0, %v5697
  %v5699 = vpop.f32.mrf.mxu0
  %v5700 = vadd.f32 0.0, %v5699
  %5701 = vmatmul.bf16.gmra.mxu0 %v2792
  %v5702 = vpop.f32.mrf.mxu0
  %v5703 = vadd.f32 0.0, %v5702
  %v5704 = vpop.f32.mrf.mxu0
  %v5705 = vadd.f32 0.0, %v5704
  %5706 = vmatmul.bf16.gmra.mxu0 %v2795
  %v5707 = vpop.f32.mrf.mxu0
  %v5708 = vadd.f32 0.0, %v5707
  %v5709 = vpop.f32.mrf.mxu0
  %v5710 = vadd.f32 0.0, %v5709
  %5711 = vmatmul.bf16.gmra.mxu0 %v2798
  %v5712 = vpop.f32.mrf.mxu0
  %v5713 = vadd.f32 0.0, %v5712
  %v5714 = vpop.f32.mrf.mxu0
  %v5715 = vadd.f32 0.0, %v5714
  %5716 = vmatmul.bf16.gmra.mxu0 %v2801
  %v5717 = vpop.f32.mrf.mxu0
  %v5718 = vadd.f32 0.0, %v5717
  %v5719 = vpop.f32.mrf.mxu0
  %v5720 = vadd.f32 0.0, %v5719
  %5721 = vmatmul.bf16.gmra.mxu0 %v2804
  %v5722 = vpop.f32.mrf.mxu0
  %v5723 = vadd.f32 0.0, %v5722
  %v5724 = vpop.f32.mrf.mxu0
  %v5725 = vadd.f32 0.0, %v5724
  %5726 = vmatmul.bf16.gmra.mxu0 %v2807
  %v5727 = vpop.f32.mrf.mxu0
  %v5728 = vadd.f32 0.0, %v5727
  %v5729 = vpop.f32.mrf.mxu0
  %v5730 = vadd.f32 0.0, %v5729
  %5731 = vdwg.mxu0
  %5732 = vmatpush.bf16.msra.mxu0 %v4961
  %5733 = vmatpush.bf16.msra.mxu0 %v4957
  %5734 = vmatpush.bf16.msra.mxu0 %v4953
  %5735 = vmatpush.bf16.msra.mxu0 %v4949
  %5736 = vmatpush.bf16.msra.mxu0 %v4945
  %5737 = vmatpush.bf16.msra.mxu0 %v4941
  %5738 = vmatpush.bf16.msra.mxu0 %v4937
  %5739 = vmatpush.bf16.msra.mxu0 %v4933
  %5740 = vmatmul.bf16.gmra.mxu0 %v2769
  %v5741 = vpop.f32.mrf.mxu0
  %v5742 = vadd.f32 %v5663, %v5741
  %v5743 = vpop.f32.mrf.mxu0
  %v5744 = vadd.f32 %v5665, %v5743
  %5745 = vmatmul.bf16.gmra.mxu0 %v2772
  %v5746 = vpop.f32.mrf.mxu0
  %v5747 = vadd.f32 %v5668, %v5746
  %v5748 = vpop.f32.mrf.mxu0
  %v5749 = vadd.f32 %v5670, %v5748
  %5750 = vmatmul.bf16.gmra.mxu0 %v2775
  %v5751 = vpop.f32.mrf.mxu0
  %v5752 = vadd.f32 %v5673, %v5751
  %v5753 = vpop.f32.mrf.mxu0
  %v5754 = vadd.f32 %v5675, %v5753
  %5755 = vmatmul.bf16.gmra.mxu0 %v2778
  %v5756 = vpop.f32.mrf.mxu0
  %v5757 = vadd.f32 %v5678, %v5756
  %v5758 = vpop.f32.mrf.mxu0
  %v5759 = vadd.f32 %v5680, %v5758
  %5760 = vmatmul.bf16.gmra.mxu0 %v2781
  %v5761 = vpop.f32.mrf.mxu0
  %v5762 = vadd.f32 %v5683, %v5761
  %v5763 = vpop.f32.mrf.mxu0
  %v5764 = vadd.f32 %v5685, %v5763
  %5765 = vmatmul.bf16.gmra.mxu0 %v2784
  %v5766 = vpop.f32.mrf.mxu0
  %v5767 = vadd.f32 %v5688, %v5766
  %v5768 = vpop.f32.mrf.mxu0
  %v5769 = vadd.f32 %v5690, %v5768
  %5770 = vmatmul.bf16.gmra.mxu0 %v2787
  %v5771 = vpop.f32.mrf.mxu0
  %v5772 = vadd.f32 %v5693, %v5771
  %v5773 = vpop.f32.mrf.mxu0
  %v5774 = vadd.f32 %v5695, %v5773
  %5775 = vmatmul.bf16.gmra.mxu0 %v2790
  %v5776 = vpop.f32.mrf.mxu0
  %v5777 = vadd.f32 %v5698, %v5776
  %v5778 = vpop.f32.mrf.mxu0
  %v5779 = vadd.f32 %v5700, %v5778
  %5780 = vmatmul.bf16.gmra.mxu0 %v2793
  %v5781 = vpop.f32.mrf.mxu0
  %v5782 = vadd.f32 %v5703, %v5781
  %v5783 = vpop.f32.mrf.mxu0
  %v5784 = vadd.f32 %v5705, %v5783
  %5785 = vmatmul.bf16.gmra.mxu0 %v2796
  %v5786 = vpop.f32.mrf.mxu0
  %v5787 = vadd.f32 %v5708, %v5786
  %v5788 = vpop.f32.mrf.mxu0
  %v5789 = vadd.f32 %v5710, %v5788
  %5790 = vmatmul.bf16.gmra.mxu0 %v2799
  %v5791 = vpop.f32.mrf.mxu0
  %v5792 = vadd.f32 %v5713, %v5791
  %v5793 = vpop.f32.mrf.mxu0
  %v5794 = vadd.f32 %v5715, %v5793
  %5795 = vmatmul.bf16.gmra.mxu0 %v2802
  %v5796 = vpop.f32.mrf.mxu0
  %v5797 = vadd.f32 %v5718, %v5796
  %v5798 = vpop.f32.mrf.mxu0
  %v5799 = vadd.f32 %v5720, %v5798
  %5800 = vmatmul.bf16.gmra.mxu0 %v2805
  %v5801 = vpop.f32.mrf.mxu0
  %v5802 = vadd.f32 %v5723, %v5801
  %v5803 = vpop.f32.mrf.mxu0
  %v5804 = vadd.f32 %v5725, %v5803
  %5805 = vmatmul.bf16.gmra.mxu0 %v2808
  %v5806 = vpop.f32.mrf.mxu0
  %v5807 = vadd.f32 %v5728, %v5806
  %v5808 = vpop.f32.mrf.mxu0
  %v5809 = vadd.f32 %v5730, %v5808
  %5810 = vdwg.mxu0
  %5811 = vmatpush.bf16.msra.mxu0 %v4993
  %5812 = vmatpush.bf16.msra.mxu0 %v4989
  %5813 = vmatpush.bf16.msra.mxu0 %v4985
  %5814 = vmatpush.bf16.msra.mxu0 %v4981
  %5815 = vmatpush.bf16.msra.mxu0 %v4977
  %5816 = vmatpush.bf16.msra.mxu0 %v4973
  %5817 = vmatpush.bf16.msra.mxu0 %v4969
  %5818 = vmatpush.bf16.msra.mxu0 %v4965
  %5819 = vmatmul.bf16.gmra.mxu0 %v3295
  %v5820 = vpop.f32.mrf.mxu0
  %v5821 = vadd.f32 %v5742, %v5820
  %v5822 = vpop.f32.mrf.mxu0
  %v5823 = vadd.f32 %v5744, %v5822
  %5824 = vmatmul.bf16.gmra.mxu0 %v3299
  %v5825 = vpop.f32.mrf.mxu0
  %v5826 = vadd.f32 %v5747, %v5825
  %v5827 = vpop.f32.mrf.mxu0
  %v5828 = vadd.f32 %v5749, %v5827
  %5829 = vmatmul.bf16.gmra.mxu0 %v3303
  %v5830 = vpop.f32.mrf.mxu0
  %v5831 = vadd.f32 %v5752, %v5830
  %v5832 = vpop.f32.mrf.mxu0
  %v5833 = vadd.f32 %v5754, %v5832
  %5834 = vmatmul.bf16.gmra.mxu0 %v3307
  %v5835 = vpop.f32.mrf.mxu0
  %v5836 = vadd.f32 %v5757, %v5835
  %v5837 = vpop.f32.mrf.mxu0
  %v5838 = vadd.f32 %v5759, %v5837
  %5839 = vmatmul.bf16.gmra.mxu0 %v3311
  %v5840 = vpop.f32.mrf.mxu0
  %v5841 = vadd.f32 %v5762, %v5840
  %v5842 = vpop.f32.mrf.mxu0
  %v5843 = vadd.f32 %v5764, %v5842
  %5844 = vmatmul.bf16.gmra.mxu0 %v3315
  %v5845 = vpop.f32.mrf.mxu0
  %v5846 = vadd.f32 %v5767, %v5845
  %v5847 = vpop.f32.mrf.mxu0
  %v5848 = vadd.f32 %v5769, %v5847
  %5849 = vmatmul.bf16.gmra.mxu0 %v3319
  %v5850 = vpop.f32.mrf.mxu0
  %v5851 = vadd.f32 %v5772, %v5850
  %v5852 = vpop.f32.mrf.mxu0
  %v5853 = vadd.f32 %v5774, %v5852
  %5854 = vmatmul.bf16.gmra.mxu0 %v3323
  %v5855 = vpop.f32.mrf.mxu0
  %v5856 = vadd.f32 %v5777, %v5855
  %v5857 = vpop.f32.mrf.mxu0
  %v5858 = vadd.f32 %v5779, %v5857
  %5859 = vmatmul.bf16.gmra.mxu0 %v3327
  %v5860 = vpop.f32.mrf.mxu0
  %v5861 = vadd.f32 %v5782, %v5860
  %v5862 = vpop.f32.mrf.mxu0
  %v5863 = vadd.f32 %v5784, %v5862
  %5864 = vmatmul.bf16.gmra.mxu0 %v3331
  %v5865 = vpop.f32.mrf.mxu0
  %v5866 = vadd.f32 %v5787, %v5865
  %v5867 = vpop.f32.mrf.mxu0
  %v5868 = vadd.f32 %v5789, %v5867
  %5869 = vmatmul.bf16.gmra.mxu0 %v3335
  %v5870 = vpop.f32.mrf.mxu0
  %v5871 = vadd.f32 %v5792, %v5870
  %v5872 = vpop.f32.mrf.mxu0
  %v5873 = vadd.f32 %v5794, %v5872
  %5874 = vmatmul.bf16.gmra.mxu0 %v3339
  %v5875 = vpop.f32.mrf.mxu0
  %v5876 = vadd.f32 %v5797, %v5875
  %v5877 = vpop.f32.mrf.mxu0
  %v5878 = vadd.f32 %v5799, %v5877
  %5879 = vmatmul.bf16.gmra.mxu0 %v3343
  %v5880 = vpop.f32.mrf.mxu0
  %v5881 = vadd.f32 %v5802, %v5880
  %v5882 = vpop.f32.mrf.mxu0
  %v5883 = vadd.f32 %v5804, %v5882
  %5884 = vmatmul.bf16.gmra.mxu0 %v3347
  %v5885 = vpop.f32.mrf.mxu0
  %v5886 = vadd.f32 %v5807, %v5885
  %v5887 = vpop.f32.mrf.mxu0
  %v5888 = vadd.f32 %v5809, %v5887
  %5889 = vdwg.mxu0
  %5890 = vmatpush.bf16.msra.mxu0 %v5025
  %5891 = vmatpush.bf16.msra.mxu0 %v5021
  %5892 = vmatpush.bf16.msra.mxu0 %v5017
  %5893 = vmatpush.bf16.msra.mxu0 %v5013
  %5894 = vmatpush.bf16.msra.mxu0 %v5009
  %5895 = vmatpush.bf16.msra.mxu0 %v5005
  %5896 = vmatpush.bf16.msra.mxu0 %v5001
  %5897 = vmatpush.bf16.msra.mxu0 %v4997
  %5898 = vmatmul.bf16.gmra.mxu0 %v2936
  %v5899 = vpop.f32.mrf.mxu0
  %v5900 = vadd.f32 %v5821, %v5899
  %v5901 = vpop.f32.mrf.mxu0
  %v5902 = vadd.f32 %v5823, %v5901
  %5903 = vmatmul.bf16.gmra.mxu0 %v2938
  %v5904 = vpop.f32.mrf.mxu0
  %v5905 = vadd.f32 %v5826, %v5904
  %v5906 = vpop.f32.mrf.mxu0
  %v5907 = vadd.f32 %v5828, %v5906
  %5908 = vmatmul.bf16.gmra.mxu0 %v2940
  %v5909 = vpop.f32.mrf.mxu0
  %v5910 = vadd.f32 %v5831, %v5909
  %v5911 = vpop.f32.mrf.mxu0
  %v5912 = vadd.f32 %v5833, %v5911
  %5913 = vmatmul.bf16.gmra.mxu0 %v2942
  %v5914 = vpop.f32.mrf.mxu0
  %v5915 = vadd.f32 %v5836, %v5914
  %v5916 = vpop.f32.mrf.mxu0
  %v5917 = vadd.f32 %v5838, %v5916
  %5918 = vmatmul.bf16.gmra.mxu0 %v2944
  %v5919 = vpop.f32.mrf.mxu0
  %v5920 = vadd.f32 %v5841, %v5919
  %v5921 = vpop.f32.mrf.mxu0
  %v5922 = vadd.f32 %v5843, %v5921
  %5923 = vmatmul.bf16.gmra.mxu0 %v2946
  %v5924 = vpop.f32.mrf.mxu0
  %v5925 = vadd.f32 %v5846, %v5924
  %v5926 = vpop.f32.mrf.mxu0
  %v5927 = vadd.f32 %v5848, %v5926
  %5928 = vmatmul.bf16.gmra.mxu0 %v2948
  %v5929 = vpop.f32.mrf.mxu0
  %v5930 = vadd.f32 %v5851, %v5929
  %v5931 = vpop.f32.mrf.mxu0
  %v5932 = vadd.f32 %v5853, %v5931
  %5933 = vmatmul.bf16.gmra.mxu0 %v2950
  %v5934 = vpop.f32.mrf.mxu0
  %v5935 = vadd.f32 %v5856, %v5934
  %v5936 = vpop.f32.mrf.mxu0
  %v5937 = vadd.f32 %v5858, %v5936
  %5938 = vmatmul.bf16.gmra.mxu0 %v2952
  %v5939 = vpop.f32.mrf.mxu0
  %v5940 = vadd.f32 %v5861, %v5939
  %v5941 = vpop.f32.mrf.mxu0
  %v5942 = vadd.f32 %v5863, %v5941
  %5943 = vmatmul.bf16.gmra.mxu0 %v2954
  %v5944 = vpop.f32.mrf.mxu0
  %v5945 = vadd.f32 %v5866, %v5944
  %v5946 = vpop.f32.mrf.mxu0
  %v5947 = vadd.f32 %v5868, %v5946
  %5948 = vmatmul.bf16.gmra.mxu0 %v2956
  %v5949 = vpop.f32.mrf.mxu0
  %v5950 = vadd.f32 %v5871, %v5949
  %v5951 = vpop.f32.mrf.mxu0
  %v5952 = vadd.f32 %v5873, %v5951
  %5953 = vmatmul.bf16.gmra.mxu0 %v2958
  %v5954 = vpop.f32.mrf.mxu0
  %v5955 = vadd.f32 %v5876, %v5954
  %v5956 = vpop.f32.mrf.mxu0
  %v5957 = vadd.f32 %v5878, %v5956
  %5958 = vmatmul.bf16.gmra.mxu0 %v2960
  %v5959 = vpop.f32.mrf.mxu0
  %v5960 = vadd.f32 %v5881, %v5959
  %v5961 = vpop.f32.mrf.mxu0
  %v5962 = vadd.f32 %v5883, %v5961
  %5963 = vmatmul.bf16.gmra.mxu0 %v2962
  %v5964 = vpop.f32.mrf.mxu0
  %v5965 = vadd.f32 %v5886, %v5964
  %v5966 = vpop.f32.mrf.mxu0
  %v5967 = vadd.f32 %v5888, %v5966
  %5968 = vdwg.mxu0
  %5969 = vmatpush.bf16.msra.mxu0 %v5057
  %5970 = vmatpush.bf16.msra.mxu0 %v5053
  %5971 = vmatpush.bf16.msra.mxu0 %v5049
  %5972 = vmatpush.bf16.msra.mxu0 %v5045
  %5973 = vmatpush.bf16.msra.mxu0 %v5041
  %5974 = vmatpush.bf16.msra.mxu0 %v5037
  %5975 = vmatpush.bf16.msra.mxu0 %v5033
  %5976 = vmatpush.bf16.msra.mxu0 %v5029
  %5977 = vmatmul.bf16.gmra.mxu0 %v3351
  %v5978 = vpop.f32.mrf.mxu0
  %v5979 = vadd.f32 %v5900, %v5978
  %v5980 = vpop.f32.mrf.mxu0
  %v5981 = vadd.f32 %v5902, %v5980
  %5982 = vmatmul.bf16.gmra.mxu0 %v3355
  %v5983 = vpop.f32.mrf.mxu0
  %v5984 = vadd.f32 %v5905, %v5983
  %v5985 = vpop.f32.mrf.mxu0
  %v5986 = vadd.f32 %v5907, %v5985
  %5987 = vmatmul.bf16.gmra.mxu0 %v3359
  %v5988 = vpop.f32.mrf.mxu0
  %v5989 = vadd.f32 %v5910, %v5988
  %v5990 = vpop.f32.mrf.mxu0
  %v5991 = vadd.f32 %v5912, %v5990
  %5992 = vmatmul.bf16.gmra.mxu0 %v3363
  %v5993 = vpop.f32.mrf.mxu0
  %v5994 = vadd.f32 %v5915, %v5993
  %v5995 = vpop.f32.mrf.mxu0
  %v5996 = vadd.f32 %v5917, %v5995
  %5997 = vmatmul.bf16.gmra.mxu0 %v3367
  %v5998 = vpop.f32.mrf.mxu0
  %v5999 = vadd.f32 %v5920, %v5998
  %v6000 = vpop.f32.mrf.mxu0
  %v6001 = vadd.f32 %v5922, %v6000
  %6002 = vmatmul.bf16.gmra.mxu0 %v3371
  %v6003 = vpop.f32.mrf.mxu0
  %v6004 = vadd.f32 %v5925, %v6003
  %v6005 = vpop.f32.mrf.mxu0
  %v6006 = vadd.f32 %v5927, %v6005
  %6007 = vmatmul.bf16.gmra.mxu0 %v3375
  %v6008 = vpop.f32.mrf.mxu0
  %v6009 = vadd.f32 %v5930, %v6008
  %v6010 = vpop.f32.mrf.mxu0
  %v6011 = vadd.f32 %v5932, %v6010
  %6012 = vmatmul.bf16.gmra.mxu0 %v3379
  %v6013 = vpop.f32.mrf.mxu0
  %v6014 = vadd.f32 %v5935, %v6013
  %v6015 = vpop.f32.mrf.mxu0
  %v6016 = vadd.f32 %v5937, %v6015
  %6017 = vmatmul.bf16.gmra.mxu0 %v3383
  %v6018 = vpop.f32.mrf.mxu0
  %v6019 = vadd.f32 %v5940, %v6018
  %v6020 = vpop.f32.mrf.mxu0
  %v6021 = vadd.f32 %v5942, %v6020
  %6022 = vmatmul.bf16.gmra.mxu0 %v3387
  %v6023 = vpop.f32.mrf.mxu0
  %v6024 = vadd.f32 %v5945, %v6023
  %v6025 = vpop.f32.mrf.mxu0
  %v6026 = vadd.f32 %v5947, %v6025
  %6027 = vmatmul.bf16.gmra.mxu0 %v3391
  %v6028 = vpop.f32.mrf.mxu0
  %v6029 = vadd.f32 %v5950, %v6028
  %v6030 = vpop.f32.mrf.mxu0
  %v6031 = vadd.f32 %v5952, %v6030
  %6032 = vmatmul.bf16.gmra.mxu0 %v3395
  %v6033 = vpop.f32.mrf.mxu0
  %v6034 = vadd.f32 %v5955, %v6033
  %v6035 = vpop.f32.mrf.mxu0
  %v6036 = vadd.f32 %v5957, %v6035
  %6037 = vmatmul.bf16.gmra.mxu0 %v3399
  %v6038 = vpop.f32.mrf.mxu0
  %v6039 = vadd.f32 %v5960, %v6038
  %v6040 = vpop.f32.mrf.mxu0
  %v6041 = vadd.f32 %v5962, %v6040
  %6042 = vmatmul.bf16.gmra.mxu0 %v3403
  %v6043 = vpop.f32.mrf.mxu0
  %v6044 = vadd.f32 %v5965, %v6043
  %v6045 = vpop.f32.mrf.mxu0
  %v6046 = vadd.f32 %v5967, %v6045
  %6047 = vdwg.mxu0
  %6048 = vmatpush.bf16.msra.mxu0 %v5089
  %6049 = vmatpush.bf16.msra.mxu0 %v5085
  %6050 = vmatpush.bf16.msra.mxu0 %v5081
  %6051 = vmatpush.bf16.msra.mxu0 %v5077
  %6052 = vmatpush.bf16.msra.mxu0 %v5073
  %6053 = vmatpush.bf16.msra.mxu0 %v5069
  %6054 = vmatpush.bf16.msra.mxu0 %v5065
  %6055 = vmatpush.bf16.msra.mxu0 %v5061
  %6056 = vmatmul.bf16.gmra.mxu0 %v3076
  %v6057 = vpop.f32.mrf.mxu0
  %v6058 = vadd.f32 %v5979, %v6057
  %v6059 = vpop.f32.mrf.mxu0
  %v6060 = vadd.f32 %v5981, %v6059
  %6061 = vmatmul.bf16.gmra.mxu0 %v3078
  %v6062 = vpop.f32.mrf.mxu0
  %v6063 = vadd.f32 %v5984, %v6062
  %v6064 = vpop.f32.mrf.mxu0
  %v6065 = vadd.f32 %v5986, %v6064
  %6066 = vmatmul.bf16.gmra.mxu0 %v3080
  %v6067 = vpop.f32.mrf.mxu0
  %v6068 = vadd.f32 %v5989, %v6067
  %v6069 = vpop.f32.mrf.mxu0
  %v6070 = vadd.f32 %v5991, %v6069
  %6071 = vmatmul.bf16.gmra.mxu0 %v3082
  %v6072 = vpop.f32.mrf.mxu0
  %v6073 = vadd.f32 %v5994, %v6072
  %v6074 = vpop.f32.mrf.mxu0
  %v6075 = vadd.f32 %v5996, %v6074
  %6076 = vmatmul.bf16.gmra.mxu0 %v3084
  %v6077 = vpop.f32.mrf.mxu0
  %v6078 = vadd.f32 %v5999, %v6077
  %v6079 = vpop.f32.mrf.mxu0
  %v6080 = vadd.f32 %v6001, %v6079
  %6081 = vmatmul.bf16.gmra.mxu0 %v3086
  %v6082 = vpop.f32.mrf.mxu0
  %v6083 = vadd.f32 %v6004, %v6082
  %v6084 = vpop.f32.mrf.mxu0
  %v6085 = vadd.f32 %v6006, %v6084
  %6086 = vmatmul.bf16.gmra.mxu0 %v3088
  %v6087 = vpop.f32.mrf.mxu0
  %v6088 = vadd.f32 %v6009, %v6087
  %v6089 = vpop.f32.mrf.mxu0
  %v6090 = vadd.f32 %v6011, %v6089
  %6091 = vmatmul.bf16.gmra.mxu0 %v3090
  %v6092 = vpop.f32.mrf.mxu0
  %v6093 = vadd.f32 %v6014, %v6092
  %v6094 = vpop.f32.mrf.mxu0
  %v6095 = vadd.f32 %v6016, %v6094
  %6096 = vmatmul.bf16.gmra.mxu0 %v3092
  %v6097 = vpop.f32.mrf.mxu0
  %v6098 = vadd.f32 %v6019, %v6097
  %v6099 = vpop.f32.mrf.mxu0
  %v6100 = vadd.f32 %v6021, %v6099
  %6101 = vmatmul.bf16.gmra.mxu0 %v3094
  %v6102 = vpop.f32.mrf.mxu0
  %v6103 = vadd.f32 %v6024, %v6102
  %v6104 = vpop.f32.mrf.mxu0
  %v6105 = vadd.f32 %v6026, %v6104
  %6106 = vmatmul.bf16.gmra.mxu0 %v3096
  %v6107 = vpop.f32.mrf.mxu0
  %v6108 = vadd.f32 %v6029, %v6107
  %v6109 = vpop.f32.mrf.mxu0
  %v6110 = vadd.f32 %v6031, %v6109
  %6111 = vmatmul.bf16.gmra.mxu0 %v3098
  %v6112 = vpop.f32.mrf.mxu0
  %v6113 = vadd.f32 %v6034, %v6112
  %v6114 = vpop.f32.mrf.mxu0
  %v6115 = vadd.f32 %v6036, %v6114
  %6116 = vmatmul.bf16.gmra.mxu0 %v3100
  %v6117 = vpop.f32.mrf.mxu0
  %v6118 = vadd.f32 %v6039, %v6117
  %v6119 = vpop.f32.mrf.mxu0
  %v6120 = vadd.f32 %v6041, %v6119
  %6121 = vmatmul.bf16.gmra.mxu0 %v3102
  %v6122 = vpop.f32.mrf.mxu0
  %v6123 = vadd.f32 %v6044, %v6122
  %v6124 = vpop.f32.mrf.mxu0
  %v6125 = vadd.f32 %v6046, %v6124
  %6126 = vdwg.mxu0
  %6127 = vmatpush.bf16.msra.mxu0 %v5121
  %6128 = vmatpush.bf16.msra.mxu0 %v5117
  %6129 = vmatpush.bf16.msra.mxu0 %v5113
  %6130 = vmatpush.bf16.msra.mxu0 %v5109
  %6131 = vmatpush.bf16.msra.mxu0 %v5105
  %6132 = vmatpush.bf16.msra.mxu0 %v5101
  %6133 = vmatpush.bf16.msra.mxu0 %v5097
  %6134 = vmatpush.bf16.msra.mxu0 %v5093
  %6135 = vmatmul.bf16.gmra.mxu0 %v3407
  %v6136 = vpop.f32.mrf.mxu0
  %v6137 = vadd.f32 %v6058, %v6136
  %v6138 = vpop.f32.mrf.mxu0
  %v6139 = vadd.f32 %v6060, %v6138
  %6140 = vmatmul.bf16.gmra.mxu0 %v3411
  %v6141 = vpop.f32.mrf.mxu0
  %v6142 = vadd.f32 %v6063, %v6141
  %v6143 = vpop.f32.mrf.mxu0
  %v6144 = vadd.f32 %v6065, %v6143
  %6145 = vmatmul.bf16.gmra.mxu0 %v3415
  %v6146 = vpop.f32.mrf.mxu0
  %v6147 = vadd.f32 %v6068, %v6146
  %v6148 = vpop.f32.mrf.mxu0
  %v6149 = vadd.f32 %v6070, %v6148
  %6150 = vmatmul.bf16.gmra.mxu0 %v3419
  %v6151 = vpop.f32.mrf.mxu0
  %v6152 = vadd.f32 %v6073, %v6151
  %v6153 = vpop.f32.mrf.mxu0
  %v6154 = vadd.f32 %v6075, %v6153
  %6155 = vmatmul.bf16.gmra.mxu0 %v3423
  %v6156 = vpop.f32.mrf.mxu0
  %v6157 = vadd.f32 %v6078, %v6156
  %v6158 = vpop.f32.mrf.mxu0
  %v6159 = vadd.f32 %v6080, %v6158
  %6160 = vmatmul.bf16.gmra.mxu0 %v3427
  %v6161 = vpop.f32.mrf.mxu0
  %v6162 = vadd.f32 %v6083, %v6161
  %v6163 = vpop.f32.mrf.mxu0
  %v6164 = vadd.f32 %v6085, %v6163
  %6165 = vmatmul.bf16.gmra.mxu0 %v3431
  %v6166 = vpop.f32.mrf.mxu0
  %v6167 = vadd.f32 %v6088, %v6166
  %v6168 = vpop.f32.mrf.mxu0
  %v6169 = vadd.f32 %v6090, %v6168
  %6170 = vmatmul.bf16.gmra.mxu0 %v3435
  %v6171 = vpop.f32.mrf.mxu0
  %v6172 = vadd.f32 %v6093, %v6171
  %v6173 = vpop.f32.mrf.mxu0
  %v6174 = vadd.f32 %v6095, %v6173
  %6175 = vmatmul.bf16.gmra.mxu0 %v3439
  %v6176 = vpop.f32.mrf.mxu0
  %v6177 = vadd.f32 %v6098, %v6176
  %v6178 = vpop.f32.mrf.mxu0
  %v6179 = vadd.f32 %v6100, %v6178
  %6180 = vmatmul.bf16.gmra.mxu0 %v3443
  %v6181 = vpop.f32.mrf.mxu0
  %v6182 = vadd.f32 %v6103, %v6181
  %v6183 = vpop.f32.mrf.mxu0
  %v6184 = vadd.f32 %v6105, %v6183
  %6185 = vmatmul.bf16.gmra.mxu0 %v3447
  %v6186 = vpop.f32.mrf.mxu0
  %v6187 = vadd.f32 %v6108, %v6186
  %v6188 = vpop.f32.mrf.mxu0
  %v6189 = vadd.f32 %v6110, %v6188
  %6190 = vmatmul.bf16.gmra.mxu0 %v3451
  %v6191 = vpop.f32.mrf.mxu0
  %v6192 = vadd.f32 %v6113, %v6191
  %v6193 = vpop.f32.mrf.mxu0
  %v6194 = vadd.f32 %v6115, %v6193
  %6195 = vmatmul.bf16.gmra.mxu0 %v3455
  %v6196 = vpop.f32.mrf.mxu0
  %v6197 = vadd.f32 %v6118, %v6196
  %v6198 = vpop.f32.mrf.mxu0
  %v6199 = vadd.f32 %v6120, %v6198
  %6200 = vmatmul.bf16.gmra.mxu0 %v3459
  %v6201 = vpop.f32.mrf.mxu0
  %v6202 = vadd.f32 %v6123, %v6201
  %v6203 = vpop.f32.mrf.mxu0
  %v6204 = vadd.f32 %v6125, %v6203
  %6205 = vdwg.mxu0
  %6206 = vmatpush.bf16.msra.mxu0 %v5153
  %6207 = vmatpush.bf16.msra.mxu0 %v5149
  %6208 = vmatpush.bf16.msra.mxu0 %v5145
  %6209 = vmatpush.bf16.msra.mxu0 %v5141
  %6210 = vmatpush.bf16.msra.mxu0 %v5137
  %6211 = vmatpush.bf16.msra.mxu0 %v5133
  %6212 = vmatpush.bf16.msra.mxu0 %v5129
  %6213 = vmatpush.bf16.msra.mxu0 %v5125
  %6214 = vmatmul.bf16.gmra.mxu0 %v3216
  %v6215 = vpop.f32.mrf.mxu0
  %v6216 = vadd.f32 %v6137, %v6215
  %v6217 = vpop.f32.mrf.mxu0
  %v6218 = vadd.f32 %v6139, %v6217
  %6219 = vmatmul.bf16.gmra.mxu0 %v3218
  %v6220 = vpop.f32.mrf.mxu0
  %v6221 = vadd.f32 %v6142, %v6220
  %v6222 = vpop.f32.mrf.mxu0
  %v6223 = vadd.f32 %v6144, %v6222
  %6224 = vmatmul.bf16.gmra.mxu0 %v3220
  %v6225 = vpop.f32.mrf.mxu0
  %v6226 = vadd.f32 %v6147, %v6225
  %v6227 = vpop.f32.mrf.mxu0
  %v6228 = vadd.f32 %v6149, %v6227
  %6229 = vmatmul.bf16.gmra.mxu0 %v3222
  %v6230 = vpop.f32.mrf.mxu0
  %v6231 = vadd.f32 %v6152, %v6230
  %v6232 = vpop.f32.mrf.mxu0
  %v6233 = vadd.f32 %v6154, %v6232
  %6234 = vmatmul.bf16.gmra.mxu0 %v3224
  %v6235 = vpop.f32.mrf.mxu0
  %v6236 = vadd.f32 %v6157, %v6235
  %v6237 = vpop.f32.mrf.mxu0
  %v6238 = vadd.f32 %v6159, %v6237
  %6239 = vmatmul.bf16.gmra.mxu0 %v3226
  %v6240 = vpop.f32.mrf.mxu0
  %v6241 = vadd.f32 %v6162, %v6240
  %v6242 = vpop.f32.mrf.mxu0
  %v6243 = vadd.f32 %v6164, %v6242
  %6244 = vmatmul.bf16.gmra.mxu0 %v3228
  %v6245 = vpop.f32.mrf.mxu0
  %v6246 = vadd.f32 %v6167, %v6245
  %v6247 = vpop.f32.mrf.mxu0
  %v6248 = vadd.f32 %v6169, %v6247
  %6249 = vmatmul.bf16.gmra.mxu0 %v3230
  %v6250 = vpop.f32.mrf.mxu0
  %v6251 = vadd.f32 %v6172, %v6250
  %v6252 = vpop.f32.mrf.mxu0
  %v6253 = vadd.f32 %v6174, %v6252
  %6254 = vmatmul.bf16.gmra.mxu0 %v3232
  %v6255 = vpop.f32.mrf.mxu0
  %v6256 = vadd.f32 %v6177, %v6255
  %v6257 = vpop.f32.mrf.mxu0
  %v6258 = vadd.f32 %v6179, %v6257
  %6259 = vmatmul.bf16.gmra.mxu0 %v3234
  %v6260 = vpop.f32.mrf.mxu0
  %v6261 = vadd.f32 %v6182, %v6260
  %v6262 = vpop.f32.mrf.mxu0
  %v6263 = vadd.f32 %v6184, %v6262
  %6264 = vmatmul.bf16.gmra.mxu0 %v3236
  %v6265 = vpop.f32.mrf.mxu0
  %v6266 = vadd.f32 %v6187, %v6265
  %v6267 = vpop.f32.mrf.mxu0
  %v6268 = vadd.f32 %v6189, %v6267
  %6269 = vmatmul.bf16.gmra.mxu0 %v3238
  %v6270 = vpop.f32.mrf.mxu0
  %v6271 = vadd.f32 %v6192, %v6270
  %v6272 = vpop.f32.mrf.mxu0
  %v6273 = vadd.f32 %v6194, %v6272
  %6274 = vmatmul.bf16.gmra.mxu0 %v3240
  %v6275 = vpop.f32.mrf.mxu0
  %v6276 = vadd.f32 %v6197, %v6275
  %v6277 = vpop.f32.mrf.mxu0
  %v6278 = vadd.f32 %v6199, %v6277
  %6279 = vmatmul.bf16.gmra.mxu0 %v3242
  %v6280 = vpop.f32.mrf.mxu0
  %v6281 = vadd.f32 %v6202, %v6280
  %v6282 = vpop.f32.mrf.mxu0
  %v6283 = vadd.f32 %v6204, %v6282
  %6284 = vdwg.mxu0
  %6285 = vmatpush.bf16.msra.mxu0 %v5185
  %6286 = vmatpush.bf16.msra.mxu0 %v5181
  %6287 = vmatpush.bf16.msra.mxu0 %v5177
  %6288 = vmatpush.bf16.msra.mxu0 %v5173
  %6289 = vmatpush.bf16.msra.mxu0 %v5169
  %6290 = vmatpush.bf16.msra.mxu0 %v5165
  %6291 = vmatpush.bf16.msra.mxu0 %v5161
  %6292 = vmatpush.bf16.msra.mxu0 %v5157
  %6293 = vmatmul.bf16.gmra.mxu0 %v3217
  %v6294 = vpop.f32.mrf.mxu0
  %v6295 = vadd.f32 %v6216, %v6294
  %v6296 = vpop.f32.mrf.mxu0
  %v6297 = vadd.f32 %v6218, %v6296
  %6298 = vmatmul.bf16.gmra.mxu0 %v3219
  %v6299 = vpop.f32.mrf.mxu0
  %v6300 = vadd.f32 %v6221, %v6299
  %v6301 = vpop.f32.mrf.mxu0
  %v6302 = vadd.f32 %v6223, %v6301
  %6303 = vmatmul.bf16.gmra.mxu0 %v3221
  %v6304 = vpop.f32.mrf.mxu0
  %v6305 = vadd.f32 %v6226, %v6304
  %v6306 = vpop.f32.mrf.mxu0
  %v6307 = vadd.f32 %v6228, %v6306
  %6308 = vmatmul.bf16.gmra.mxu0 %v3223
  %v6309 = vpop.f32.mrf.mxu0
  %v6310 = vadd.f32 %v6231, %v6309
  %v6311 = vpop.f32.mrf.mxu0
  %v6312 = vadd.f32 %v6233, %v6311
  %6313 = vmatmul.bf16.gmra.mxu0 %v3225
  %v6314 = vpop.f32.mrf.mxu0
  %v6315 = vadd.f32 %v6236, %v6314
  %v6316 = vpop.f32.mrf.mxu0
  %v6317 = vadd.f32 %v6238, %v6316
  %6318 = vmatmul.bf16.gmra.mxu0 %v3227
  %v6319 = vpop.f32.mrf.mxu0
  %v6320 = vadd.f32 %v6241, %v6319
  %v6321 = vpop.f32.mrf.mxu0
  %v6322 = vadd.f32 %v6243, %v6321
  %6323 = vmatmul.bf16.gmra.mxu0 %v3229
  %v6324 = vpop.f32.mrf.mxu0
  %v6325 = vadd.f32 %v6246, %v6324
  %v6326 = vpop.f32.mrf.mxu0
  %v6327 = vadd.f32 %v6248, %v6326
  %6328 = vmatmul.bf16.gmra.mxu0 %v3231
  %v6329 = vpop.f32.mrf.mxu0
  %v6330 = vadd.f32 %v6251, %v6329
  %v6331 = vpop.f32.mrf.mxu0
  %v6332 = vadd.f32 %v6253, %v6331
  %6333 = vmatmul.bf16.gmra.mxu0 %v3233
  %v6334 = vpop.f32.mrf.mxu0
  %v6335 = vadd.f32 %v6256, %v6334
  %v6336 = vpop.f32.mrf.mxu0
  %v6337 = vadd.f32 %v6258, %v6336
  %6338 = vmatmul.bf16.gmra.mxu0 %v3235
  %v6339 = vpop.f32.mrf.mxu0
  %v6340 = vadd.f32 %v6261, %v6339
  %v6341 = vpop.f32.mrf.mxu0
  %v6342 = vadd.f32 %v6263, %v6341
  %6343 = vmatmul.bf16.gmra.mxu0 %v3237
  %v6344 = vpop.f32.mrf.mxu0
  %v6345 = vadd.f32 %v6266, %v6344
  %v6346 = vpop.f32.mrf.mxu0
  %v6347 = vadd.f32 %v6268, %v6346
  %6348 = vmatmul.bf16.gmra.mxu0 %v3239
  %v6349 = vpop.f32.mrf.mxu0
  %v6350 = vadd.f32 %v6271, %v6349
  %v6351 = vpop.f32.mrf.mxu0
  %v6352 = vadd.f32 %v6273, %v6351
  %6353 = vmatmul.bf16.gmra.mxu0 %v3241
  %v6354 = vpop.f32.mrf.mxu0
  %v6355 = vadd.f32 %v6276, %v6354
  %v6356 = vpop.f32.mrf.mxu0
  %v6357 = vadd.f32 %v6278, %v6356
  %6358 = vmatmul.bf16.gmra.mxu0 %v3243
  %v6359 = vpop.f32.mrf.mxu0
  %v6360 = vadd.f32 %v6281, %v6359
  %v6361 = vpop.f32.mrf.mxu0
  %v6362 = vadd.f32 %v6283, %v6361
  %6363 = vdwg.mxu0
  %6364 = vmatpush.bf16.msra.mxu0 %v5217
  %6365 = vmatpush.bf16.msra.mxu0 %v5213
  %6366 = vmatpush.bf16.msra.mxu0 %v5209
  %6367 = vmatpush.bf16.msra.mxu0 %v5205
  %6368 = vmatpush.bf16.msra.mxu0 %v5201
  %6369 = vmatpush.bf16.msra.mxu0 %v5197
  %6370 = vmatpush.bf16.msra.mxu0 %v5193
  %6371 = vmatpush.bf16.msra.mxu0 %v5189
  %6372 = vmatmul.bf16.gmra.mxu0 %v2780
  %v6373 = vpop.f32.mrf.mxu0
  %v6374 = vadd.f32 %v6295, %v6373
  %v6375 = vpop.f32.mrf.mxu0
  %v6376 = vadd.f32 %v6297, %v6375
  %6377 = vmatmul.bf16.gmra.mxu0 %v2783
  %v6378 = vpop.f32.mrf.mxu0
  %v6379 = vadd.f32 %v6300, %v6378
  %v6380 = vpop.f32.mrf.mxu0
  %v6381 = vadd.f32 %v6302, %v6380
  %6382 = vmatmul.bf16.gmra.mxu0 %v2786
  %v6383 = vpop.f32.mrf.mxu0
  %v6384 = vadd.f32 %v6305, %v6383
  %v6385 = vpop.f32.mrf.mxu0
  %v6386 = vadd.f32 %v6307, %v6385
  %6387 = vmatmul.bf16.gmra.mxu0 %v2789
  %v6388 = vpop.f32.mrf.mxu0
  %v6389 = vadd.f32 %v6310, %v6388
  %v6390 = vpop.f32.mrf.mxu0
  %v6391 = vadd.f32 %v6312, %v6390
  %6392 = vmatmul.bf16.gmra.mxu0 %v2792
  %v6393 = vpop.f32.mrf.mxu0
  %v6394 = vadd.f32 %v6315, %v6393
  %v6395 = vpop.f32.mrf.mxu0
  %v6396 = vadd.f32 %v6317, %v6395
  %6397 = vmatmul.bf16.gmra.mxu0 %v2795
  %v6398 = vpop.f32.mrf.mxu0
  %v6399 = vadd.f32 %v6320, %v6398
  %v6400 = vpop.f32.mrf.mxu0
  %v6401 = vadd.f32 %v6322, %v6400
  %6402 = vmatmul.bf16.gmra.mxu0 %v2798
  %v6403 = vpop.f32.mrf.mxu0
  %v6404 = vadd.f32 %v6325, %v6403
  %v6405 = vpop.f32.mrf.mxu0
  %v6406 = vadd.f32 %v6327, %v6405
  %6407 = vmatmul.bf16.gmra.mxu0 %v2801
  %v6408 = vpop.f32.mrf.mxu0
  %v6409 = vadd.f32 %v6330, %v6408
  %v6410 = vpop.f32.mrf.mxu0
  %v6411 = vadd.f32 %v6332, %v6410
  %6412 = vmatmul.bf16.gmra.mxu0 %v2804
  %v6413 = vpop.f32.mrf.mxu0
  %v6414 = vadd.f32 %v6335, %v6413
  %v6415 = vpop.f32.mrf.mxu0
  %v6416 = vadd.f32 %v6337, %v6415
  %6417 = vmatmul.bf16.gmra.mxu0 %v2807
  %v6418 = vpop.f32.mrf.mxu0
  %v6419 = vadd.f32 %v6340, %v6418
  %v6420 = vpop.f32.mrf.mxu0
  %v6421 = vadd.f32 %v6342, %v6420
  %6422 = vmatmul.bf16.gmra.mxu0 %v2848
  %v6423 = vpop.f32.mrf.mxu0
  %v6424 = vadd.f32 %v6345, %v6423
  %v6425 = vpop.f32.mrf.mxu0
  %v6426 = vadd.f32 %v6347, %v6425
  %6427 = vmatmul.bf16.gmra.mxu0 %v2988
  %v6428 = vpop.f32.mrf.mxu0
  %v6429 = vadd.f32 %v6350, %v6428
  %v6430 = vpop.f32.mrf.mxu0
  %v6431 = vadd.f32 %v6352, %v6430
  %6432 = vmatmul.bf16.gmra.mxu0 %v3128
  %v6433 = vpop.f32.mrf.mxu0
  %v6434 = vadd.f32 %v6355, %v6433
  %v6435 = vpop.f32.mrf.mxu0
  %v6436 = vadd.f32 %v6357, %v6435
  %6437 = vmatmul.bf16.gmra.mxu0 %v3282
  %v6438 = vpop.f32.mrf.mxu0
  %v6439 = vadd.f32 %v6360, %v6438
  %v6440 = vpop.f32.mrf.mxu0
  %v6441 = vadd.f32 %v6362, %v6440
  %6442 = vdwg.mxu0
  %6443 = vmatpush.bf16.msra.mxu0 %v5249
  %6444 = vmatpush.bf16.msra.mxu0 %v5245
  %6445 = vmatpush.bf16.msra.mxu0 %v5241
  %6446 = vmatpush.bf16.msra.mxu0 %v5237
  %6447 = vmatpush.bf16.msra.mxu0 %v5233
  %6448 = vmatpush.bf16.msra.mxu0 %v5229
  %6449 = vmatpush.bf16.msra.mxu0 %v5225
  %6450 = vmatpush.bf16.msra.mxu0 %v5221
  %6451 = vmatmul.bf16.gmra.mxu0 %v2781
  %v6452 = vpop.f32.mrf.mxu0
  %v6453 = vadd.f32 %v6374, %v6452
  %v6454 = vpop.f32.mrf.mxu0
  %v6455 = vadd.f32 %v6376, %v6454
  %6456 = vmatmul.bf16.gmra.mxu0 %v2784
  %v6457 = vpop.f32.mrf.mxu0
  %v6458 = vadd.f32 %v6379, %v6457
  %v6459 = vpop.f32.mrf.mxu0
  %v6460 = vadd.f32 %v6381, %v6459
  %6461 = vmatmul.bf16.gmra.mxu0 %v2787
  %v6462 = vpop.f32.mrf.mxu0
  %v6463 = vadd.f32 %v6384, %v6462
  %v6464 = vpop.f32.mrf.mxu0
  %v6465 = vadd.f32 %v6386, %v6464
  %6466 = vmatmul.bf16.gmra.mxu0 %v2790
  %v6467 = vpop.f32.mrf.mxu0
  %v6468 = vadd.f32 %v6389, %v6467
  %v6469 = vpop.f32.mrf.mxu0
  %v6470 = vadd.f32 %v6391, %v6469
  %6471 = vmatmul.bf16.gmra.mxu0 %v2793
  %v6472 = vpop.f32.mrf.mxu0
  %v6473 = vadd.f32 %v6394, %v6472
  %v6474 = vpop.f32.mrf.mxu0
  %v6475 = vadd.f32 %v6396, %v6474
  %6476 = vmatmul.bf16.gmra.mxu0 %v2796
  %v6477 = vpop.f32.mrf.mxu0
  %v6478 = vadd.f32 %v6399, %v6477
  %v6479 = vpop.f32.mrf.mxu0
  %v6480 = vadd.f32 %v6401, %v6479
  %6481 = vmatmul.bf16.gmra.mxu0 %v2799
  %v6482 = vpop.f32.mrf.mxu0
  %v6483 = vadd.f32 %v6404, %v6482
  %v6484 = vpop.f32.mrf.mxu0
  %v6485 = vadd.f32 %v6406, %v6484
  %6486 = vmatmul.bf16.gmra.mxu0 %v2802
  %v6487 = vpop.f32.mrf.mxu0
  %v6488 = vadd.f32 %v6409, %v6487
  %v6489 = vpop.f32.mrf.mxu0
  %v6490 = vadd.f32 %v6411, %v6489
  %6491 = vmatmul.bf16.gmra.mxu0 %v2805
  %v6492 = vpop.f32.mrf.mxu0
  %v6493 = vadd.f32 %v6414, %v6492
  %v6494 = vpop.f32.mrf.mxu0
  %v6495 = vadd.f32 %v6416, %v6494
  %6496 = vmatmul.bf16.gmra.mxu0 %v2808
  %v6497 = vpop.f32.mrf.mxu0
  %v6498 = vadd.f32 %v6419, %v6497
  %v6499 = vpop.f32.mrf.mxu0
  %v6500 = vadd.f32 %v6421, %v6499
  %6501 = vmatmul.bf16.gmra.mxu0 %v2849
  %v6502 = vpop.f32.mrf.mxu0
  %v6503 = vadd.f32 %v6424, %v6502
  %v6504 = vpop.f32.mrf.mxu0
  %v6505 = vadd.f32 %v6426, %v6504
  %6506 = vmatmul.bf16.gmra.mxu0 %v2989
  %v6507 = vpop.f32.mrf.mxu0
  %v6508 = vadd.f32 %v6429, %v6507
  %v6509 = vpop.f32.mrf.mxu0
  %v6510 = vadd.f32 %v6431, %v6509
  %6511 = vmatmul.bf16.gmra.mxu0 %v3129
  %v6512 = vpop.f32.mrf.mxu0
  %v6513 = vadd.f32 %v6434, %v6512
  %v6514 = vpop.f32.mrf.mxu0
  %v6515 = vadd.f32 %v6436, %v6514
  %6516 = vmatmul.bf16.gmra.mxu0 %v3283
  %v6517 = vpop.f32.mrf.mxu0
  %v6518 = vadd.f32 %v6439, %v6517
  %v6519 = vpop.f32.mrf.mxu0
  %v6520 = vadd.f32 %v6441, %v6519
  %6521 = vdwg.mxu0
  %6522 = vmatpush.bf16.msra.mxu0 0
  %6523 = vmatpush.bf16.msra.mxu0 0
  %6524 = vmatpush.bf16.msra.mxu0 0
  %6525 = vmatpush.bf16.msra.mxu0 0
  %6526 = vmatpush.bf16.msra.mxu0 0
  %6527 = vmatpush.bf16.msra.mxu0 0
  %6528 = vmatpush.bf16.msra.mxu0 %v5257
  %6529 = vmatpush.bf16.msra.mxu0 %v5253
  %6530 = vmatmul.bf16.gmra.mxu0 %v5621
  %v6531 = vpop.f32.mrf.mxu0
  %v6532 = vadd.f32 %v6453, %v6531
  %v6533 = vpop.f32.mrf.mxu0
  %v6534 = vadd.f32 %v6455, %v6533
  %6535 = vmatmul.bf16.gmra.mxu0 %v5623
  %v6536 = vpop.f32.mrf.mxu0
  %v6537 = vadd.f32 %v6458, %v6536
  %v6538 = vpop.f32.mrf.mxu0
  %v6539 = vadd.f32 %v6460, %v6538
  %6540 = vmatmul.bf16.gmra.mxu0 %v5625
  %v6541 = vpop.f32.mrf.mxu0
  %v6542 = vadd.f32 %v6463, %v6541
  %v6543 = vpop.f32.mrf.mxu0
  %v6544 = vadd.f32 %v6465, %v6543
  %6545 = vmatmul.bf16.gmra.mxu0 %v5627
  %v6546 = vpop.f32.mrf.mxu0
  %v6547 = vadd.f32 %v6468, %v6546
  %v6548 = vpop.f32.mrf.mxu0
  %v6549 = vadd.f32 %v6470, %v6548
  %6550 = vmatmul.bf16.gmra.mxu0 %v5629
  %v6551 = vpop.f32.mrf.mxu0
  %v6552 = vadd.f32 %v6473, %v6551
  %v6553 = vpop.f32.mrf.mxu0
  %v6554 = vadd.f32 %v6475, %v6553
  %6555 = vmatmul.bf16.gmra.mxu0 %v5631
  %v6556 = vpop.f32.mrf.mxu0
  %v6557 = vadd.f32 %v6478, %v6556
  %v6558 = vpop.f32.mrf.mxu0
  %v6559 = vadd.f32 %v6480, %v6558
  %6560 = vmatmul.bf16.gmra.mxu0 %v5633
  %v6561 = vpop.f32.mrf.mxu0
  %v6562 = vadd.f32 %v6483, %v6561
  %v6563 = vpop.f32.mrf.mxu0
  %v6564 = vadd.f32 %v6485, %v6563
  %6565 = vmatmul.bf16.gmra.mxu0 %v5635
  %v6566 = vpop.f32.mrf.mxu0
  %v6567 = vadd.f32 %v6488, %v6566
  %v6568 = vpop.f32.mrf.mxu0
  %v6569 = vadd.f32 %v6490, %v6568
  %6570 = vmatmul.bf16.gmra.mxu0 %v5637
  %v6571 = vpop.f32.mrf.mxu0
  %v6572 = vadd.f32 %v6493, %v6571
  %v6573 = vpop.f32.mrf.mxu0
  %v6574 = vadd.f32 %v6495, %v6573
  %6575 = vmatmul.bf16.gmra.mxu0 %v5639
  %v6576 = vpop.f32.mrf.mxu0
  %v6577 = vadd.f32 %v6498, %v6576
  %v6578 = vpop.f32.mrf.mxu0
  %v6579 = vadd.f32 %v6500, %v6578
  %6580 = vmatmul.bf16.gmra.mxu0 %v5642
  %v6581 = vpop.f32.mrf.mxu0
  %v6582 = vadd.f32 %v6503, %v6581
  %v6583 = vpop.f32.mrf.mxu0
  %v6584 = vadd.f32 %v6505, %v6583
  %6585 = vmatmul.bf16.gmra.mxu0 %v5645
  %v6586 = vpop.f32.mrf.mxu0
  %v6587 = vadd.f32 %v6508, %v6586
  %v6588 = vpop.f32.mrf.mxu0
  %v6589 = vadd.f32 %v6510, %v6588
  %6590 = vmatmul.bf16.gmra.mxu0 %v5648
  %v6591 = vpop.f32.mrf.mxu0
  %v6592 = vadd.f32 %v6513, %v6591
  %v6593 = vpop.f32.mrf.mxu0
  %v6594 = vadd.f32 %v6515, %v6593
  %6595 = vmatmul.bf16.gmra.mxu0 %v5651
  %v6596 = vpop.f32.mrf.mxu0
  %v6597 = vadd.f32 %v6518, %v6596
  %v6598 = vpop.f32.mrf.mxu0
  %v6599 = vadd.f32 %v6520, %v6598
  %6600 = vdwg.mxu0
  %6601 = vmatpush.bf16.msra.mxu0 %v4930
  %6602 = vmatpush.bf16.msra.mxu0 %v4926
  %6603 = vmatpush.bf16.msra.mxu0 %v4922
  %6604 = vmatpush.bf16.msra.mxu0 %v4918
  %6605 = vmatpush.bf16.msra.mxu0 %v4914
  %6606 = vmatpush.bf16.msra.mxu0 %v4910
  %6607 = vmatpush.bf16.msra.mxu0 %v4906
  %6608 = vmatpush.bf16.msra.mxu0 %v4902
  %6609 = vmatmul.bf16.gmra.mxu0 %v2768
  %v6610 = vpop.f32.mrf.mxu0
  %v6611 = vadd.f32 0.0, %v6610
  %v6612 = vpop.f32.mrf.mxu0
  %v6613 = vadd.f32 0.0, %v6612
  %6614 = vmatmul.bf16.gmra.mxu0 %v2771
  %v6615 = vpop.f32.mrf.mxu0
  %v6616 = vadd.f32 0.0, %v6615
  %v6617 = vpop.f32.mrf.mxu0
  %v6618 = vadd.f32 0.0, %v6617
  %6619 = vmatmul.bf16.gmra.mxu0 %v2774
  %v6620 = vpop.f32.mrf.mxu0
  %v6621 = vadd.f32 0.0, %v6620
  %v6622 = vpop.f32.mrf.mxu0
  %v6623 = vadd.f32 0.0, %v6622
  %6624 = vmatmul.bf16.gmra.mxu0 %v2777
  %v6625 = vpop.f32.mrf.mxu0
  %v6626 = vadd.f32 0.0, %v6625
  %v6627 = vpop.f32.mrf.mxu0
  %v6628 = vadd.f32 0.0, %v6627
  %6629 = vmatmul.bf16.gmra.mxu0 %v2780
  %v6630 = vpop.f32.mrf.mxu0
  %v6631 = vadd.f32 0.0, %v6630
  %v6632 = vpop.f32.mrf.mxu0
  %v6633 = vadd.f32 0.0, %v6632
  %6634 = vmatmul.bf16.gmra.mxu0 %v2783
  %v6635 = vpop.f32.mrf.mxu0
  %v6636 = vadd.f32 0.0, %v6635
  %v6637 = vpop.f32.mrf.mxu0
  %v6638 = vadd.f32 0.0, %v6637
  %6639 = vmatmul.bf16.gmra.mxu0 %v2786
  %v6640 = vpop.f32.mrf.mxu0
  %v6641 = vadd.f32 0.0, %v6640
  %v6642 = vpop.f32.mrf.mxu0
  %v6643 = vadd.f32 0.0, %v6642
  %6644 = vmatmul.bf16.gmra.mxu0 %v2789
  %v6645 = vpop.f32.mrf.mxu0
  %v6646 = vadd.f32 0.0, %v6645
  %v6647 = vpop.f32.mrf.mxu0
  %v6648 = vadd.f32 0.0, %v6647
  %6649 = vmatmul.bf16.gmra.mxu0 %v2792
  %v6650 = vpop.f32.mrf.mxu0
  %v6651 = vadd.f32 0.0, %v6650
  %v6652 = vpop.f32.mrf.mxu0
  %v6653 = vadd.f32 0.0, %v6652
  %6654 = vmatmul.bf16.gmra.mxu0 %v2795
  %v6655 = vpop.f32.mrf.mxu0
  %v6656 = vadd.f32 0.0, %v6655
  %v6657 = vpop.f32.mrf.mxu0
  %v6658 = vadd.f32 0.0, %v6657
  %6659 = vmatmul.bf16.gmra.mxu0 %v2798
  %v6660 = vpop.f32.mrf.mxu0
  %v6661 = vadd.f32 0.0, %v6660
  %v6662 = vpop.f32.mrf.mxu0
  %v6663 = vadd.f32 0.0, %v6662
  %6664 = vmatmul.bf16.gmra.mxu0 %v2801
  %v6665 = vpop.f32.mrf.mxu0
  %v6666 = vadd.f32 0.0, %v6665
  %v6667 = vpop.f32.mrf.mxu0
  %v6668 = vadd.f32 0.0, %v6667
  %6669 = vmatmul.bf16.gmra.mxu0 %v2804
  %v6670 = vpop.f32.mrf.mxu0
  %v6671 = vadd.f32 0.0, %v6670
  %v6672 = vpop.f32.mrf.mxu0
  %v6673 = vadd.f32 0.0, %v6672
  %6674 = vmatmul.bf16.gmra.mxu0 %v2807
  %v6675 = vpop.f32.mrf.mxu0
  %v6676 = vadd.f32 0.0, %v6675
  %v6677 = vpop.f32.mrf.mxu0
  %v6678 = vadd.f32 0.0, %v6677
  %6679 = vdwg.mxu0
  %6680 = vmatpush.bf16.msra.mxu0 %v4962
  %6681 = vmatpush.bf16.msra.mxu0 %v4958
  %6682 = vmatpush.bf16.msra.mxu0 %v4954
  %6683 = vmatpush.bf16.msra.mxu0 %v4950
  %6684 = vmatpush.bf16.msra.mxu0 %v4946
  %6685 = vmatpush.bf16.msra.mxu0 %v4942
  %6686 = vmatpush.bf16.msra.mxu0 %v4938
  %6687 = vmatpush.bf16.msra.mxu0 %v4934
  %6688 = vmatmul.bf16.gmra.mxu0 %v2769
  %v6689 = vpop.f32.mrf.mxu0
  %v6690 = vadd.f32 %v6611, %v6689
  %v6691 = vpop.f32.mrf.mxu0
  %v6692 = vadd.f32 %v6613, %v6691
  %6693 = vmatmul.bf16.gmra.mxu0 %v2772
  %v6694 = vpop.f32.mrf.mxu0
  %v6695 = vadd.f32 %v6616, %v6694
  %v6696 = vpop.f32.mrf.mxu0
  %v6697 = vadd.f32 %v6618, %v6696
  %6698 = vmatmul.bf16.gmra.mxu0 %v2775
  %v6699 = vpop.f32.mrf.mxu0
  %v6700 = vadd.f32 %v6621, %v6699
  %v6701 = vpop.f32.mrf.mxu0
  %v6702 = vadd.f32 %v6623, %v6701
  %6703 = vmatmul.bf16.gmra.mxu0 %v2778
  %v6704 = vpop.f32.mrf.mxu0
  %v6705 = vadd.f32 %v6626, %v6704
  %v6706 = vpop.f32.mrf.mxu0
  %v6707 = vadd.f32 %v6628, %v6706
  %6708 = vmatmul.bf16.gmra.mxu0 %v2781
  %v6709 = vpop.f32.mrf.mxu0
  %v6710 = vadd.f32 %v6631, %v6709
  %v6711 = vpop.f32.mrf.mxu0
  %v6712 = vadd.f32 %v6633, %v6711
  %6713 = vmatmul.bf16.gmra.mxu0 %v2784
  %v6714 = vpop.f32.mrf.mxu0
  %v6715 = vadd.f32 %v6636, %v6714
  %v6716 = vpop.f32.mrf.mxu0
  %v6717 = vadd.f32 %v6638, %v6716
  %6718 = vmatmul.bf16.gmra.mxu0 %v2787
  %v6719 = vpop.f32.mrf.mxu0
  %v6720 = vadd.f32 %v6641, %v6719
  %v6721 = vpop.f32.mrf.mxu0
  %v6722 = vadd.f32 %v6643, %v6721
  %6723 = vmatmul.bf16.gmra.mxu0 %v2790
  %v6724 = vpop.f32.mrf.mxu0
  %v6725 = vadd.f32 %v6646, %v6724
  %v6726 = vpop.f32.mrf.mxu0
  %v6727 = vadd.f32 %v6648, %v6726
  %6728 = vmatmul.bf16.gmra.mxu0 %v2793
  %v6729 = vpop.f32.mrf.mxu0
  %v6730 = vadd.f32 %v6651, %v6729
  %v6731 = vpop.f32.mrf.mxu0
  %v6732 = vadd.f32 %v6653, %v6731
  %6733 = vmatmul.bf16.gmra.mxu0 %v2796
  %v6734 = vpop.f32.mrf.mxu0
  %v6735 = vadd.f32 %v6656, %v6734
  %v6736 = vpop.f32.mrf.mxu0
  %v6737 = vadd.f32 %v6658, %v6736
  %6738 = vmatmul.bf16.gmra.mxu0 %v2799
  %v6739 = vpop.f32.mrf.mxu0
  %v6740 = vadd.f32 %v6661, %v6739
  %v6741 = vpop.f32.mrf.mxu0
  %v6742 = vadd.f32 %v6663, %v6741
  %6743 = vmatmul.bf16.gmra.mxu0 %v2802
  %v6744 = vpop.f32.mrf.mxu0
  %v6745 = vadd.f32 %v6666, %v6744
  %v6746 = vpop.f32.mrf.mxu0
  %v6747 = vadd.f32 %v6668, %v6746
  %6748 = vmatmul.bf16.gmra.mxu0 %v2805
  %v6749 = vpop.f32.mrf.mxu0
  %v6750 = vadd.f32 %v6671, %v6749
  %v6751 = vpop.f32.mrf.mxu0
  %v6752 = vadd.f32 %v6673, %v6751
  %6753 = vmatmul.bf16.gmra.mxu0 %v2808
  %v6754 = vpop.f32.mrf.mxu0
  %v6755 = vadd.f32 %v6676, %v6754
  %v6756 = vpop.f32.mrf.mxu0
  %v6757 = vadd.f32 %v6678, %v6756
  %6758 = vdwg.mxu0
  %6759 = vmatpush.bf16.msra.mxu0 %v4994
  %6760 = vmatpush.bf16.msra.mxu0 %v4990
  %6761 = vmatpush.bf16.msra.mxu0 %v4986
  %6762 = vmatpush.bf16.msra.mxu0 %v4982
  %6763 = vmatpush.bf16.msra.mxu0 %v4978
  %6764 = vmatpush.bf16.msra.mxu0 %v4974
  %6765 = vmatpush.bf16.msra.mxu0 %v4970
  %6766 = vmatpush.bf16.msra.mxu0 %v4966
  %6767 = vmatmul.bf16.gmra.mxu0 %v3295
  %v6768 = vpop.f32.mrf.mxu0
  %v6769 = vadd.f32 %v6690, %v6768
  %v6770 = vpop.f32.mrf.mxu0
  %v6771 = vadd.f32 %v6692, %v6770
  %6772 = vmatmul.bf16.gmra.mxu0 %v3299
  %v6773 = vpop.f32.mrf.mxu0
  %v6774 = vadd.f32 %v6695, %v6773
  %v6775 = vpop.f32.mrf.mxu0
  %v6776 = vadd.f32 %v6697, %v6775
  %6777 = vmatmul.bf16.gmra.mxu0 %v3303
  %v6778 = vpop.f32.mrf.mxu0
  %v6779 = vadd.f32 %v6700, %v6778
  %v6780 = vpop.f32.mrf.mxu0
  %v6781 = vadd.f32 %v6702, %v6780
  %6782 = vmatmul.bf16.gmra.mxu0 %v3307
  %v6783 = vpop.f32.mrf.mxu0
  %v6784 = vadd.f32 %v6705, %v6783
  %v6785 = vpop.f32.mrf.mxu0
  %v6786 = vadd.f32 %v6707, %v6785
  %6787 = vmatmul.bf16.gmra.mxu0 %v3311
  %v6788 = vpop.f32.mrf.mxu0
  %v6789 = vadd.f32 %v6710, %v6788
  %v6790 = vpop.f32.mrf.mxu0
  %v6791 = vadd.f32 %v6712, %v6790
  %6792 = vmatmul.bf16.gmra.mxu0 %v3315
  %v6793 = vpop.f32.mrf.mxu0
  %v6794 = vadd.f32 %v6715, %v6793
  %v6795 = vpop.f32.mrf.mxu0
  %v6796 = vadd.f32 %v6717, %v6795
  %6797 = vmatmul.bf16.gmra.mxu0 %v3319
  %v6798 = vpop.f32.mrf.mxu0
  %v6799 = vadd.f32 %v6720, %v6798
  %v6800 = vpop.f32.mrf.mxu0
  %v6801 = vadd.f32 %v6722, %v6800
  %6802 = vmatmul.bf16.gmra.mxu0 %v3323
  %v6803 = vpop.f32.mrf.mxu0
  %v6804 = vadd.f32 %v6725, %v6803
  %v6805 = vpop.f32.mrf.mxu0
  %v6806 = vadd.f32 %v6727, %v6805
  %6807 = vmatmul.bf16.gmra.mxu0 %v3327
  %v6808 = vpop.f32.mrf.mxu0
  %v6809 = vadd.f32 %v6730, %v6808
  %v6810 = vpop.f32.mrf.mxu0
  %v6811 = vadd.f32 %v6732, %v6810
  %6812 = vmatmul.bf16.gmra.mxu0 %v3331
  %v6813 = vpop.f32.mrf.mxu0
  %v6814 = vadd.f32 %v6735, %v6813
  %v6815 = vpop.f32.mrf.mxu0
  %v6816 = vadd.f32 %v6737, %v6815
  %6817 = vmatmul.bf16.gmra.mxu0 %v3335
  %v6818 = vpop.f32.mrf.mxu0
  %v6819 = vadd.f32 %v6740, %v6818
  %v6820 = vpop.f32.mrf.mxu0
  %v6821 = vadd.f32 %v6742, %v6820
  %6822 = vmatmul.bf16.gmra.mxu0 %v3339
  %v6823 = vpop.f32.mrf.mxu0
  %v6824 = vadd.f32 %v6745, %v6823
  %v6825 = vpop.f32.mrf.mxu0
  %v6826 = vadd.f32 %v6747, %v6825
  %6827 = vmatmul.bf16.gmra.mxu0 %v3343
  %v6828 = vpop.f32.mrf.mxu0
  %v6829 = vadd.f32 %v6750, %v6828
  %v6830 = vpop.f32.mrf.mxu0
  %v6831 = vadd.f32 %v6752, %v6830
  %6832 = vmatmul.bf16.gmra.mxu0 %v3347
  %v6833 = vpop.f32.mrf.mxu0
  %v6834 = vadd.f32 %v6755, %v6833
  %v6835 = vpop.f32.mrf.mxu0
  %v6836 = vadd.f32 %v6757, %v6835
  %6837 = vdwg.mxu0
  %6838 = vmatpush.bf16.msra.mxu0 %v5026
  %6839 = vmatpush.bf16.msra.mxu0 %v5022
  %6840 = vmatpush.bf16.msra.mxu0 %v5018
  %6841 = vmatpush.bf16.msra.mxu0 %v5014
  %6842 = vmatpush.bf16.msra.mxu0 %v5010
  %6843 = vmatpush.bf16.msra.mxu0 %v5006
  %6844 = vmatpush.bf16.msra.mxu0 %v5002
  %6845 = vmatpush.bf16.msra.mxu0 %v4998
  %6846 = vmatmul.bf16.gmra.mxu0 %v2936
  %v6847 = vpop.f32.mrf.mxu0
  %v6848 = vadd.f32 %v6769, %v6847
  %v6849 = vpop.f32.mrf.mxu0
  %v6850 = vadd.f32 %v6771, %v6849
  %6851 = vmatmul.bf16.gmra.mxu0 %v2938
  %v6852 = vpop.f32.mrf.mxu0
  %v6853 = vadd.f32 %v6774, %v6852
  %v6854 = vpop.f32.mrf.mxu0
  %v6855 = vadd.f32 %v6776, %v6854
  %6856 = vmatmul.bf16.gmra.mxu0 %v2940
  %v6857 = vpop.f32.mrf.mxu0
  %v6858 = vadd.f32 %v6779, %v6857
  %v6859 = vpop.f32.mrf.mxu0
  %v6860 = vadd.f32 %v6781, %v6859
  %6861 = vmatmul.bf16.gmra.mxu0 %v2942
  %v6862 = vpop.f32.mrf.mxu0
  %v6863 = vadd.f32 %v6784, %v6862
  %v6864 = vpop.f32.mrf.mxu0
  %v6865 = vadd.f32 %v6786, %v6864
  %6866 = vmatmul.bf16.gmra.mxu0 %v2944
  %v6867 = vpop.f32.mrf.mxu0
  %v6868 = vadd.f32 %v6789, %v6867
  %v6869 = vpop.f32.mrf.mxu0
  %v6870 = vadd.f32 %v6791, %v6869
  %6871 = vmatmul.bf16.gmra.mxu0 %v2946
  %v6872 = vpop.f32.mrf.mxu0
  %v6873 = vadd.f32 %v6794, %v6872
  %v6874 = vpop.f32.mrf.mxu0
  %v6875 = vadd.f32 %v6796, %v6874
  %6876 = vmatmul.bf16.gmra.mxu0 %v2948
  %v6877 = vpop.f32.mrf.mxu0
  %v6878 = vadd.f32 %v6799, %v6877
  %v6879 = vpop.f32.mrf.mxu0
  %v6880 = vadd.f32 %v6801, %v6879
  %6881 = vmatmul.bf16.gmra.mxu0 %v2950
  %v6882 = vpop.f32.mrf.mxu0
  %v6883 = vadd.f32 %v6804, %v6882
  %v6884 = vpop.f32.mrf.mxu0
  %v6885 = vadd.f32 %v6806, %v6884
  %6886 = vmatmul.bf16.gmra.mxu0 %v2952
  %v6887 = vpop.f32.mrf.mxu0
  %v6888 = vadd.f32 %v6809, %v6887
  %v6889 = vpop.f32.mrf.mxu0
  %v6890 = vadd.f32 %v6811, %v6889
  %6891 = vmatmul.bf16.gmra.mxu0 %v2954
  %v6892 = vpop.f32.mrf.mxu0
  %v6893 = vadd.f32 %v6814, %v6892
  %v6894 = vpop.f32.mrf.mxu0
  %v6895 = vadd.f32 %v6816, %v6894
  %6896 = vmatmul.bf16.gmra.mxu0 %v2956
  %v6897 = vpop.f32.mrf.mxu0
  %v6898 = vadd.f32 %v6819, %v6897
  %v6899 = vpop.f32.mrf.mxu0
  %v6900 = vadd.f32 %v6821, %v6899
  %6901 = vmatmul.bf16.gmra.mxu0 %v2958
  %v6902 = vpop.f32.mrf.mxu0
  %v6903 = vadd.f32 %v6824, %v6902
  %v6904 = vpop.f32.mrf.mxu0
  %v6905 = vadd.f32 %v6826, %v6904
  %6906 = vmatmul.bf16.gmra.mxu0 %v2960
  %v6907 = vpop.f32.mrf.mxu0
  %v6908 = vadd.f32 %v6829, %v6907
  %v6909 = vpop.f32.mrf.mxu0
  %v6910 = vadd.f32 %v6831, %v6909
  %6911 = vmatmul.bf16.gmra.mxu0 %v2962
  %v6912 = vpop.f32.mrf.mxu0
  %v6913 = vadd.f32 %v6834, %v6912
  %v6914 = vpop.f32.mrf.mxu0
  %v6915 = vadd.f32 %v6836, %v6914
  %6916 = vdwg.mxu0
  %6917 = vmatpush.bf16.msra.mxu0 %v5058
  %6918 = vmatpush.bf16.msra.mxu0 %v5054
  %6919 = vmatpush.bf16.msra.mxu0 %v5050
  %6920 = vmatpush.bf16.msra.mxu0 %v5046
  %6921 = vmatpush.bf16.msra.mxu0 %v5042
  %6922 = vmatpush.bf16.msra.mxu0 %v5038
  %6923 = vmatpush.bf16.msra.mxu0 %v5034
  %6924 = vmatpush.bf16.msra.mxu0 %v5030
  %6925 = vmatmul.bf16.gmra.mxu0 %v3351
  %v6926 = vpop.f32.mrf.mxu0
  %v6927 = vadd.f32 %v6848, %v6926
  %v6928 = vpop.f32.mrf.mxu0
  %v6929 = vadd.f32 %v6850, %v6928
  %6930 = vmatmul.bf16.gmra.mxu0 %v3355
  %v6931 = vpop.f32.mrf.mxu0
  %v6932 = vadd.f32 %v6853, %v6931
  %v6933 = vpop.f32.mrf.mxu0
  %v6934 = vadd.f32 %v6855, %v6933
  %6935 = vmatmul.bf16.gmra.mxu0 %v3359
  %v6936 = vpop.f32.mrf.mxu0
  %v6937 = vadd.f32 %v6858, %v6936
  %v6938 = vpop.f32.mrf.mxu0
  %v6939 = vadd.f32 %v6860, %v6938
  %6940 = vmatmul.bf16.gmra.mxu0 %v3363
  %v6941 = vpop.f32.mrf.mxu0
  %v6942 = vadd.f32 %v6863, %v6941
  %v6943 = vpop.f32.mrf.mxu0
  %v6944 = vadd.f32 %v6865, %v6943
  %6945 = vmatmul.bf16.gmra.mxu0 %v3367
  %v6946 = vpop.f32.mrf.mxu0
  %v6947 = vadd.f32 %v6868, %v6946
  %v6948 = vpop.f32.mrf.mxu0
  %v6949 = vadd.f32 %v6870, %v6948
  %6950 = vmatmul.bf16.gmra.mxu0 %v3371
  %v6951 = vpop.f32.mrf.mxu0
  %v6952 = vadd.f32 %v6873, %v6951
  %v6953 = vpop.f32.mrf.mxu0
  %v6954 = vadd.f32 %v6875, %v6953
  %6955 = vmatmul.bf16.gmra.mxu0 %v3375
  %v6956 = vpop.f32.mrf.mxu0
  %v6957 = vadd.f32 %v6878, %v6956
  %v6958 = vpop.f32.mrf.mxu0
  %v6959 = vadd.f32 %v6880, %v6958
  %6960 = vmatmul.bf16.gmra.mxu0 %v3379
  %v6961 = vpop.f32.mrf.mxu0
  %v6962 = vadd.f32 %v6883, %v6961
  %v6963 = vpop.f32.mrf.mxu0
  %v6964 = vadd.f32 %v6885, %v6963
  %6965 = vmatmul.bf16.gmra.mxu0 %v3383
  %v6966 = vpop.f32.mrf.mxu0
  %v6967 = vadd.f32 %v6888, %v6966
  %v6968 = vpop.f32.mrf.mxu0
  %v6969 = vadd.f32 %v6890, %v6968
  %6970 = vmatmul.bf16.gmra.mxu0 %v3387
  %v6971 = vpop.f32.mrf.mxu0
  %v6972 = vadd.f32 %v6893, %v6971
  %v6973 = vpop.f32.mrf.mxu0
  %v6974 = vadd.f32 %v6895, %v6973
  %6975 = vmatmul.bf16.gmra.mxu0 %v3391
  %v6976 = vpop.f32.mrf.mxu0
  %v6977 = vadd.f32 %v6898, %v6976
  %v6978 = vpop.f32.mrf.mxu0
  %v6979 = vadd.f32 %v6900, %v6978
  %6980 = vmatmul.bf16.gmra.mxu0 %v3395
  %v6981 = vpop.f32.mrf.mxu0
  %v6982 = vadd.f32 %v6903, %v6981
  %v6983 = vpop.f32.mrf.mxu0
  %v6984 = vadd.f32 %v6905, %v6983
  %6985 = vmatmul.bf16.gmra.mxu0 %v3399
  %v6986 = vpop.f32.mrf.mxu0
  %v6987 = vadd.f32 %v6908, %v6986
  %v6988 = vpop.f32.mrf.mxu0
  %v6989 = vadd.f32 %v6910, %v6988
  %6990 = vmatmul.bf16.gmra.mxu0 %v3403
  %v6991 = vpop.f32.mrf.mxu0
  %v6992 = vadd.f32 %v6913, %v6991
  %v6993 = vpop.f32.mrf.mxu0
  %v6994 = vadd.f32 %v6915, %v6993
  %6995 = vdwg.mxu0
  %6996 = vmatpush.bf16.msra.mxu0 %v5090
  %6997 = vmatpush.bf16.msra.mxu0 %v5086
  %6998 = vmatpush.bf16.msra.mxu0 %v5082
  %6999 = vmatpush.bf16.msra.mxu0 %v5078
  %7000 = vmatpush.bf16.msra.mxu0 %v5074
  %7001 = vmatpush.bf16.msra.mxu0 %v5070
  %7002 = vmatpush.bf16.msra.mxu0 %v5066
  %7003 = vmatpush.bf16.msra.mxu0 %v5062
  %7004 = vmatmul.bf16.gmra.mxu0 %v3076
  %v7005 = vpop.f32.mrf.mxu0
  %v7006 = vadd.f32 %v6927, %v7005
  %v7007 = vpop.f32.mrf.mxu0
  %v7008 = vadd.f32 %v6929, %v7007
  %7009 = vmatmul.bf16.gmra.mxu0 %v3078
  %v7010 = vpop.f32.mrf.mxu0
  %v7011 = vadd.f32 %v6932, %v7010
  %v7012 = vpop.f32.mrf.mxu0
  %v7013 = vadd.f32 %v6934, %v7012
  %7014 = vmatmul.bf16.gmra.mxu0 %v3080
  %v7015 = vpop.f32.mrf.mxu0
  %v7016 = vadd.f32 %v6937, %v7015
  %v7017 = vpop.f32.mrf.mxu0
  %v7018 = vadd.f32 %v6939, %v7017
  %7019 = vmatmul.bf16.gmra.mxu0 %v3082
  %v7020 = vpop.f32.mrf.mxu0
  %v7021 = vadd.f32 %v6942, %v7020
  %v7022 = vpop.f32.mrf.mxu0
  %v7023 = vadd.f32 %v6944, %v7022
  %7024 = vmatmul.bf16.gmra.mxu0 %v3084
  %v7025 = vpop.f32.mrf.mxu0
  %v7026 = vadd.f32 %v6947, %v7025
  %v7027 = vpop.f32.mrf.mxu0
  %v7028 = vadd.f32 %v6949, %v7027
  %7029 = vmatmul.bf16.gmra.mxu0 %v3086
  %v7030 = vpop.f32.mrf.mxu0
  %v7031 = vadd.f32 %v6952, %v7030
  %v7032 = vpop.f32.mrf.mxu0
  %v7033 = vadd.f32 %v6954, %v7032
  %7034 = vmatmul.bf16.gmra.mxu0 %v3088
  %v7035 = vpop.f32.mrf.mxu0
  %v7036 = vadd.f32 %v6957, %v7035
  %v7037 = vpop.f32.mrf.mxu0
  %v7038 = vadd.f32 %v6959, %v7037
  %7039 = vmatmul.bf16.gmra.mxu0 %v3090
  %v7040 = vpop.f32.mrf.mxu0
  %v7041 = vadd.f32 %v6962, %v7040
  %v7042 = vpop.f32.mrf.mxu0
  %v7043 = vadd.f32 %v6964, %v7042
  %7044 = vmatmul.bf16.gmra.mxu0 %v3092
  %v7045 = vpop.f32.mrf.mxu0
  %v7046 = vadd.f32 %v6967, %v7045
  %v7047 = vpop.f32.mrf.mxu0
  %v7048 = vadd.f32 %v6969, %v7047
  %7049 = vmatmul.bf16.gmra.mxu0 %v3094
  %v7050 = vpop.f32.mrf.mxu0
  %v7051 = vadd.f32 %v6972, %v7050
  %v7052 = vpop.f32.mrf.mxu0
  %v7053 = vadd.f32 %v6974, %v7052
  %7054 = vmatmul.bf16.gmra.mxu0 %v3096
  %v7055 = vpop.f32.mrf.mxu0
  %v7056 = vadd.f32 %v6977, %v7055
  %v7057 = vpop.f32.mrf.mxu0
  %v7058 = vadd.f32 %v6979, %v7057
  %7059 = vmatmul.bf16.gmra.mxu0 %v3098
  %v7060 = vpop.f32.mrf.mxu0
  %v7061 = vadd.f32 %v6982, %v7060
  %v7062 = vpop.f32.mrf.mxu0
  %v7063 = vadd.f32 %v6984, %v7062
  %7064 = vmatmul.bf16.gmra.mxu0 %v3100
  %v7065 = vpop.f32.mrf.mxu0
  %v7066 = vadd.f32 %v6987, %v7065
  %v7067 = vpop.f32.mrf.mxu0
  %v7068 = vadd.f32 %v6989, %v7067
  %7069 = vmatmul.bf16.gmra.mxu0 %v3102
  %v7070 = vpop.f32.mrf.mxu0
  %v7071 = vadd.f32 %v6992, %v7070
  %v7072 = vpop.f32.mrf.mxu0
  %v7073 = vadd.f32 %v6994, %v7072
  %7074 = vdwg.mxu0
  %7075 = vmatpush.bf16.msra.mxu0 %v5122
  %7076 = vmatpush.bf16.msra.mxu0 %v5118
  %7077 = vmatpush.bf16.msra.mxu0 %v5114
  %7078 = vmatpush.bf16.msra.mxu0 %v5110
  %7079 = vmatpush.bf16.msra.mxu0 %v5106
  %7080 = vmatpush.bf16.msra.mxu0 %v5102
  %7081 = vmatpush.bf16.msra.mxu0 %v5098
  %7082 = vmatpush.bf16.msra.mxu0 %v5094
  %7083 = vmatmul.bf16.gmra.mxu0 %v3407
  %v7084 = vpop.f32.mrf.mxu0
  %v7085 = vadd.f32 %v7006, %v7084
  %v7086 = vpop.f32.mrf.mxu0
  %v7087 = vadd.f32 %v7008, %v7086
  %7088 = vmatmul.bf16.gmra.mxu0 %v3411
  %v7089 = vpop.f32.mrf.mxu0
  %v7090 = vadd.f32 %v7011, %v7089
  %v7091 = vpop.f32.mrf.mxu0
  %v7092 = vadd.f32 %v7013, %v7091
  %7093 = vmatmul.bf16.gmra.mxu0 %v3415
  %v7094 = vpop.f32.mrf.mxu0
  %v7095 = vadd.f32 %v7016, %v7094
  %v7096 = vpop.f32.mrf.mxu0
  %v7097 = vadd.f32 %v7018, %v7096
  %7098 = vmatmul.bf16.gmra.mxu0 %v3419
  %v7099 = vpop.f32.mrf.mxu0
  %v7100 = vadd.f32 %v7021, %v7099
  %v7101 = vpop.f32.mrf.mxu0
  %v7102 = vadd.f32 %v7023, %v7101
  %7103 = vmatmul.bf16.gmra.mxu0 %v3423
  %v7104 = vpop.f32.mrf.mxu0
  %v7105 = vadd.f32 %v7026, %v7104
  %v7106 = vpop.f32.mrf.mxu0
  %v7107 = vadd.f32 %v7028, %v7106
  %7108 = vmatmul.bf16.gmra.mxu0 %v3427
  %v7109 = vpop.f32.mrf.mxu0
  %v7110 = vadd.f32 %v7031, %v7109
  %v7111 = vpop.f32.mrf.mxu0
  %v7112 = vadd.f32 %v7033, %v7111
  %7113 = vmatmul.bf16.gmra.mxu0 %v3431
  %v7114 = vpop.f32.mrf.mxu0
  %v7115 = vadd.f32 %v7036, %v7114
  %v7116 = vpop.f32.mrf.mxu0
  %v7117 = vadd.f32 %v7038, %v7116
  %7118 = vmatmul.bf16.gmra.mxu0 %v3435
  %v7119 = vpop.f32.mrf.mxu0
  %v7120 = vadd.f32 %v7041, %v7119
  %v7121 = vpop.f32.mrf.mxu0
  %v7122 = vadd.f32 %v7043, %v7121
  %7123 = vmatmul.bf16.gmra.mxu0 %v3439
  %v7124 = vpop.f32.mrf.mxu0
  %v7125 = vadd.f32 %v7046, %v7124
  %v7126 = vpop.f32.mrf.mxu0
  %v7127 = vadd.f32 %v7048, %v7126
  %7128 = vmatmul.bf16.gmra.mxu0 %v3443
  %v7129 = vpop.f32.mrf.mxu0
  %v7130 = vadd.f32 %v7051, %v7129
  %v7131 = vpop.f32.mrf.mxu0
  %v7132 = vadd.f32 %v7053, %v7131
  %7133 = vmatmul.bf16.gmra.mxu0 %v3447
  %v7134 = vpop.f32.mrf.mxu0
  %v7135 = vadd.f32 %v7056, %v7134
  %v7136 = vpop.f32.mrf.mxu0
  %v7137 = vadd.f32 %v7058, %v7136
  %7138 = vmatmul.bf16.gmra.mxu0 %v3451
  %v7139 = vpop.f32.mrf.mxu0
  %v7140 = vadd.f32 %v7061, %v7139
  %v7141 = vpop.f32.mrf.mxu0
  %v7142 = vadd.f32 %v7063, %v7141
  %7143 = vmatmul.bf16.gmra.mxu0 %v3455
  %v7144 = vpop.f32.mrf.mxu0
  %v7145 = vadd.f32 %v7066, %v7144
  %v7146 = vpop.f32.mrf.mxu0
  %v7147 = vadd.f32 %v7068, %v7146
  %7148 = vmatmul.bf16.gmra.mxu0 %v3459
  %v7149 = vpop.f32.mrf.mxu0
  %v7150 = vadd.f32 %v7071, %v7149
  %v7151 = vpop.f32.mrf.mxu0
  %v7152 = vadd.f32 %v7073, %v7151
  %7153 = vdwg.mxu0
  %7154 = vmatpush.bf16.msra.mxu0 %v5154
  %7155 = vmatpush.bf16.msra.mxu0 %v5150
  %7156 = vmatpush.bf16.msra.mxu0 %v5146
  %7157 = vmatpush.bf16.msra.mxu0 %v5142
  %7158 = vmatpush.bf16.msra.mxu0 %v5138
  %7159 = vmatpush.bf16.msra.mxu0 %v5134
  %7160 = vmatpush.bf16.msra.mxu0 %v5130
  %7161 = vmatpush.bf16.msra.mxu0 %v5126
  %7162 = vmatmul.bf16.gmra.mxu0 %v3216
  %v7163 = vpop.f32.mrf.mxu0
  %v7164 = vadd.f32 %v7085, %v7163
  %v7165 = vpop.f32.mrf.mxu0
  %v7166 = vadd.f32 %v7087, %v7165
  %7167 = vmatmul.bf16.gmra.mxu0 %v3218
  %v7168 = vpop.f32.mrf.mxu0
  %v7169 = vadd.f32 %v7090, %v7168
  %v7170 = vpop.f32.mrf.mxu0
  %v7171 = vadd.f32 %v7092, %v7170
  %7172 = vmatmul.bf16.gmra.mxu0 %v3220
  %v7173 = vpop.f32.mrf.mxu0
  %v7174 = vadd.f32 %v7095, %v7173
  %v7175 = vpop.f32.mrf.mxu0
  %v7176 = vadd.f32 %v7097, %v7175
  %7177 = vmatmul.bf16.gmra.mxu0 %v3222
  %v7178 = vpop.f32.mrf.mxu0
  %v7179 = vadd.f32 %v7100, %v7178
  %v7180 = vpop.f32.mrf.mxu0
  %v7181 = vadd.f32 %v7102, %v7180
  %7182 = vmatmul.bf16.gmra.mxu0 %v3224
  %v7183 = vpop.f32.mrf.mxu0
  %v7184 = vadd.f32 %v7105, %v7183
  %v7185 = vpop.f32.mrf.mxu0
  %v7186 = vadd.f32 %v7107, %v7185
  %7187 = vmatmul.bf16.gmra.mxu0 %v3226
  %v7188 = vpop.f32.mrf.mxu0
  %v7189 = vadd.f32 %v7110, %v7188
  %v7190 = vpop.f32.mrf.mxu0
  %v7191 = vadd.f32 %v7112, %v7190
  %7192 = vmatmul.bf16.gmra.mxu0 %v3228
  %v7193 = vpop.f32.mrf.mxu0
  %v7194 = vadd.f32 %v7115, %v7193
  %v7195 = vpop.f32.mrf.mxu0
  %v7196 = vadd.f32 %v7117, %v7195
  %7197 = vmatmul.bf16.gmra.mxu0 %v3230
  %v7198 = vpop.f32.mrf.mxu0
  %v7199 = vadd.f32 %v7120, %v7198
  %v7200 = vpop.f32.mrf.mxu0
  %v7201 = vadd.f32 %v7122, %v7200
  %7202 = vmatmul.bf16.gmra.mxu0 %v3232
  %v7203 = vpop.f32.mrf.mxu0
  %v7204 = vadd.f32 %v7125, %v7203
  %v7205 = vpop.f32.mrf.mxu0
  %v7206 = vadd.f32 %v7127, %v7205
  %7207 = vmatmul.bf16.gmra.mxu0 %v3234
  %v7208 = vpop.f32.mrf.mxu0
  %v7209 = vadd.f32 %v7130, %v7208
  %v7210 = vpop.f32.mrf.mxu0
  %v7211 = vadd.f32 %v7132, %v7210
  %7212 = vmatmul.bf16.gmra.mxu0 %v3236
  %v7213 = vpop.f32.mrf.mxu0
  %v7214 = vadd.f32 %v7135, %v7213
  %v7215 = vpop.f32.mrf.mxu0
  %v7216 = vadd.f32 %v7137, %v7215
  %7217 = vmatmul.bf16.gmra.mxu0 %v3238
  %v7218 = vpop.f32.mrf.mxu0
  %v7219 = vadd.f32 %v7140, %v7218
  %v7220 = vpop.f32.mrf.mxu0
  %v7221 = vadd.f32 %v7142, %v7220
  %7222 = vmatmul.bf16.gmra.mxu0 %v3240
  %v7223 = vpop.f32.mrf.mxu0
  %v7224 = vadd.f32 %v7145, %v7223
  %v7225 = vpop.f32.mrf.mxu0
  %v7226 = vadd.f32 %v7147, %v7225
  %7227 = vmatmul.bf16.gmra.mxu0 %v3242
  %v7228 = vpop.f32.mrf.mxu0
  %v7229 = vadd.f32 %v7150, %v7228
  %v7230 = vpop.f32.mrf.mxu0
  %v7231 = vadd.f32 %v7152, %v7230
  %7232 = vdwg.mxu0
  %7233 = vmatpush.bf16.msra.mxu0 %v5186
  %7234 = vmatpush.bf16.msra.mxu0 %v5182
  %7235 = vmatpush.bf16.msra.mxu0 %v5178
  %7236 = vmatpush.bf16.msra.mxu0 %v5174
  %7237 = vmatpush.bf16.msra.mxu0 %v5170
  %7238 = vmatpush.bf16.msra.mxu0 %v5166
  %7239 = vmatpush.bf16.msra.mxu0 %v5162
  %7240 = vmatpush.bf16.msra.mxu0 %v5158
  %7241 = vmatmul.bf16.gmra.mxu0 %v3217
  %v7242 = vpop.f32.mrf.mxu0
  %v7243 = vadd.f32 %v7164, %v7242
  %v7244 = vpop.f32.mrf.mxu0
  %v7245 = vadd.f32 %v7166, %v7244
  %7246 = vmatmul.bf16.gmra.mxu0 %v3219
  %v7247 = vpop.f32.mrf.mxu0
  %v7248 = vadd.f32 %v7169, %v7247
  %v7249 = vpop.f32.mrf.mxu0
  %v7250 = vadd.f32 %v7171, %v7249
  %7251 = vmatmul.bf16.gmra.mxu0 %v3221
  %v7252 = vpop.f32.mrf.mxu0
  %v7253 = vadd.f32 %v7174, %v7252
  %v7254 = vpop.f32.mrf.mxu0
  %v7255 = vadd.f32 %v7176, %v7254
  %7256 = vmatmul.bf16.gmra.mxu0 %v3223
  %v7257 = vpop.f32.mrf.mxu0
  %v7258 = vadd.f32 %v7179, %v7257
  %v7259 = vpop.f32.mrf.mxu0
  %v7260 = vadd.f32 %v7181, %v7259
  %7261 = vmatmul.bf16.gmra.mxu0 %v3225
  %v7262 = vpop.f32.mrf.mxu0
  %v7263 = vadd.f32 %v7184, %v7262
  %v7264 = vpop.f32.mrf.mxu0
  %v7265 = vadd.f32 %v7186, %v7264
  %7266 = vmatmul.bf16.gmra.mxu0 %v3227
  %v7267 = vpop.f32.mrf.mxu0
  %v7268 = vadd.f32 %v7189, %v7267
  %v7269 = vpop.f32.mrf.mxu0
  %v7270 = vadd.f32 %v7191, %v7269
  %7271 = vmatmul.bf16.gmra.mxu0 %v3229
  %v7272 = vpop.f32.mrf.mxu0
  %v7273 = vadd.f32 %v7194, %v7272
  %v7274 = vpop.f32.mrf.mxu0
  %v7275 = vadd.f32 %v7196, %v7274
  %7276 = vmatmul.bf16.gmra.mxu0 %v3231
  %v7277 = vpop.f32.mrf.mxu0
  %v7278 = vadd.f32 %v7199, %v7277
  %v7279 = vpop.f32.mrf.mxu0
  %v7280 = vadd.f32 %v7201, %v7279
  %7281 = vmatmul.bf16.gmra.mxu0 %v3233
  %v7282 = vpop.f32.mrf.mxu0
  %v7283 = vadd.f32 %v7204, %v7282
  %v7284 = vpop.f32.mrf.mxu0
  %v7285 = vadd.f32 %v7206, %v7284
  %7286 = vmatmul.bf16.gmra.mxu0 %v3235
  %v7287 = vpop.f32.mrf.mxu0
  %v7288 = vadd.f32 %v7209, %v7287
  %v7289 = vpop.f32.mrf.mxu0
  %v7290 = vadd.f32 %v7211, %v7289
  %7291 = vmatmul.bf16.gmra.mxu0 %v3237
  %v7292 = vpop.f32.mrf.mxu0
  %v7293 = vadd.f32 %v7214, %v7292
  %v7294 = vpop.f32.mrf.mxu0
  %v7295 = vadd.f32 %v7216, %v7294
  %7296 = vmatmul.bf16.gmra.mxu0 %v3239
  %v7297 = vpop.f32.mrf.mxu0
  %v7298 = vadd.f32 %v7219, %v7297
  %v7299 = vpop.f32.mrf.mxu0
  %v7300 = vadd.f32 %v7221, %v7299
  %7301 = vmatmul.bf16.gmra.mxu0 %v3241
  %v7302 = vpop.f32.mrf.mxu0
  %v7303 = vadd.f32 %v7224, %v7302
  %v7304 = vpop.f32.mrf.mxu0
  %v7305 = vadd.f32 %v7226, %v7304
  %7306 = vmatmul.bf16.gmra.mxu0 %v3243
  %v7307 = vpop.f32.mrf.mxu0
  %v7308 = vadd.f32 %v7229, %v7307
  %v7309 = vpop.f32.mrf.mxu0
  %v7310 = vadd.f32 %v7231, %v7309
  %7311 = vdwg.mxu0
  %7312 = vmatpush.bf16.msra.mxu0 %v5218
  %7313 = vmatpush.bf16.msra.mxu0 %v5214
  %7314 = vmatpush.bf16.msra.mxu0 %v5210
  %7315 = vmatpush.bf16.msra.mxu0 %v5206
  %7316 = vmatpush.bf16.msra.mxu0 %v5202
  %7317 = vmatpush.bf16.msra.mxu0 %v5198
  %7318 = vmatpush.bf16.msra.mxu0 %v5194
  %7319 = vmatpush.bf16.msra.mxu0 %v5190
  %7320 = vmatmul.bf16.gmra.mxu0 %v2780
  %v7321 = vpop.f32.mrf.mxu0
  %v7322 = vadd.f32 %v7243, %v7321
  %v7323 = vpop.f32.mrf.mxu0
  %v7324 = vadd.f32 %v7245, %v7323
  %7325 = vmatmul.bf16.gmra.mxu0 %v2783
  %v7326 = vpop.f32.mrf.mxu0
  %v7327 = vadd.f32 %v7248, %v7326
  %v7328 = vpop.f32.mrf.mxu0
  %v7329 = vadd.f32 %v7250, %v7328
  %7330 = vmatmul.bf16.gmra.mxu0 %v2786
  %v7331 = vpop.f32.mrf.mxu0
  %v7332 = vadd.f32 %v7253, %v7331
  %v7333 = vpop.f32.mrf.mxu0
  %v7334 = vadd.f32 %v7255, %v7333
  %7335 = vmatmul.bf16.gmra.mxu0 %v2789
  %v7336 = vpop.f32.mrf.mxu0
  %v7337 = vadd.f32 %v7258, %v7336
  %v7338 = vpop.f32.mrf.mxu0
  %v7339 = vadd.f32 %v7260, %v7338
  %7340 = vmatmul.bf16.gmra.mxu0 %v2792
  %v7341 = vpop.f32.mrf.mxu0
  %v7342 = vadd.f32 %v7263, %v7341
  %v7343 = vpop.f32.mrf.mxu0
  %v7344 = vadd.f32 %v7265, %v7343
  %7345 = vmatmul.bf16.gmra.mxu0 %v2795
  %v7346 = vpop.f32.mrf.mxu0
  %v7347 = vadd.f32 %v7268, %v7346
  %v7348 = vpop.f32.mrf.mxu0
  %v7349 = vadd.f32 %v7270, %v7348
  %7350 = vmatmul.bf16.gmra.mxu0 %v2798
  %v7351 = vpop.f32.mrf.mxu0
  %v7352 = vadd.f32 %v7273, %v7351
  %v7353 = vpop.f32.mrf.mxu0
  %v7354 = vadd.f32 %v7275, %v7353
  %7355 = vmatmul.bf16.gmra.mxu0 %v2801
  %v7356 = vpop.f32.mrf.mxu0
  %v7357 = vadd.f32 %v7278, %v7356
  %v7358 = vpop.f32.mrf.mxu0
  %v7359 = vadd.f32 %v7280, %v7358
  %7360 = vmatmul.bf16.gmra.mxu0 %v2804
  %v7361 = vpop.f32.mrf.mxu0
  %v7362 = vadd.f32 %v7283, %v7361
  %v7363 = vpop.f32.mrf.mxu0
  %v7364 = vadd.f32 %v7285, %v7363
  %7365 = vmatmul.bf16.gmra.mxu0 %v2807
  %v7366 = vpop.f32.mrf.mxu0
  %v7367 = vadd.f32 %v7288, %v7366
  %v7368 = vpop.f32.mrf.mxu0
  %v7369 = vadd.f32 %v7290, %v7368
  %7370 = vmatmul.bf16.gmra.mxu0 %v2848
  %v7371 = vpop.f32.mrf.mxu0
  %v7372 = vadd.f32 %v7293, %v7371
  %v7373 = vpop.f32.mrf.mxu0
  %v7374 = vadd.f32 %v7295, %v7373
  %7375 = vmatmul.bf16.gmra.mxu0 %v2988
  %v7376 = vpop.f32.mrf.mxu0
  %v7377 = vadd.f32 %v7298, %v7376
  %v7378 = vpop.f32.mrf.mxu0
  %v7379 = vadd.f32 %v7300, %v7378
  %7380 = vmatmul.bf16.gmra.mxu0 %v3128
  %v7381 = vpop.f32.mrf.mxu0
  %v7382 = vadd.f32 %v7303, %v7381
  %v7383 = vpop.f32.mrf.mxu0
  %v7384 = vadd.f32 %v7305, %v7383
  %7385 = vmatmul.bf16.gmra.mxu0 %v3282
  %v7386 = vpop.f32.mrf.mxu0
  %v7387 = vadd.f32 %v7308, %v7386
  %v7388 = vpop.f32.mrf.mxu0
  %v7389 = vadd.f32 %v7310, %v7388
  %7390 = vdwg.mxu0
  %7391 = vmatpush.bf16.msra.mxu0 %v5250
  %7392 = vmatpush.bf16.msra.mxu0 %v5246
  %7393 = vmatpush.bf16.msra.mxu0 %v5242
  %7394 = vmatpush.bf16.msra.mxu0 %v5238
  %7395 = vmatpush.bf16.msra.mxu0 %v5234
  %7396 = vmatpush.bf16.msra.mxu0 %v5230
  %7397 = vmatpush.bf16.msra.mxu0 %v5226
  %7398 = vmatpush.bf16.msra.mxu0 %v5222
  %7399 = vmatmul.bf16.gmra.mxu0 %v2781
  %v7400 = vpop.f32.mrf.mxu0
  %v7401 = vadd.f32 %v7322, %v7400
  %v7402 = vpop.f32.mrf.mxu0
  %v7403 = vadd.f32 %v7324, %v7402
  %7404 = vmatmul.bf16.gmra.mxu0 %v2784
  %v7405 = vpop.f32.mrf.mxu0
  %v7406 = vadd.f32 %v7327, %v7405
  %v7407 = vpop.f32.mrf.mxu0
  %v7408 = vadd.f32 %v7329, %v7407
  %7409 = vmatmul.bf16.gmra.mxu0 %v2787
  %v7410 = vpop.f32.mrf.mxu0
  %v7411 = vadd.f32 %v7332, %v7410
  %v7412 = vpop.f32.mrf.mxu0
  %v7413 = vadd.f32 %v7334, %v7412
  %7414 = vmatmul.bf16.gmra.mxu0 %v2790
  %v7415 = vpop.f32.mrf.mxu0
  %v7416 = vadd.f32 %v7337, %v7415
  %v7417 = vpop.f32.mrf.mxu0
  %v7418 = vadd.f32 %v7339, %v7417
  %7419 = vmatmul.bf16.gmra.mxu0 %v2793
  %v7420 = vpop.f32.mrf.mxu0
  %v7421 = vadd.f32 %v7342, %v7420
  %v7422 = vpop.f32.mrf.mxu0
  %v7423 = vadd.f32 %v7344, %v7422
  %7424 = vmatmul.bf16.gmra.mxu0 %v2796
  %v7425 = vpop.f32.mrf.mxu0
  %v7426 = vadd.f32 %v7347, %v7425
  %v7427 = vpop.f32.mrf.mxu0
  %v7428 = vadd.f32 %v7349, %v7427
  %7429 = vmatmul.bf16.gmra.mxu0 %v2799
  %v7430 = vpop.f32.mrf.mxu0
  %v7431 = vadd.f32 %v7352, %v7430
  %v7432 = vpop.f32.mrf.mxu0
  %v7433 = vadd.f32 %v7354, %v7432
  %7434 = vmatmul.bf16.gmra.mxu0 %v2802
  %v7435 = vpop.f32.mrf.mxu0
  %v7436 = vadd.f32 %v7357, %v7435
  %v7437 = vpop.f32.mrf.mxu0
  %v7438 = vadd.f32 %v7359, %v7437
  %7439 = vmatmul.bf16.gmra.mxu0 %v2805
  %v7440 = vpop.f32.mrf.mxu0
  %v7441 = vadd.f32 %v7362, %v7440
  %v7442 = vpop.f32.mrf.mxu0
  %v7443 = vadd.f32 %v7364, %v7442
  %7444 = vmatmul.bf16.gmra.mxu0 %v2808
  %v7445 = vpop.f32.mrf.mxu0
  %v7446 = vadd.f32 %v7367, %v7445
  %v7447 = vpop.f32.mrf.mxu0
  %v7448 = vadd.f32 %v7369, %v7447
  %7449 = vmatmul.bf16.gmra.mxu0 %v2849
  %v7450 = vpop.f32.mrf.mxu0
  %v7451 = vadd.f32 %v7372, %v7450
  %v7452 = vpop.f32.mrf.mxu0
  %v7453 = vadd.f32 %v7374, %v7452
  %7454 = vmatmul.bf16.gmra.mxu0 %v2989
  %v7455 = vpop.f32.mrf.mxu0
  %v7456 = vadd.f32 %v7377, %v7455
  %v7457 = vpop.f32.mrf.mxu0
  %v7458 = vadd.f32 %v7379, %v7457
  %7459 = vmatmul.bf16.gmra.mxu0 %v3129
  %v7460 = vpop.f32.mrf.mxu0
  %v7461 = vadd.f32 %v7382, %v7460
  %v7462 = vpop.f32.mrf.mxu0
  %v7463 = vadd.f32 %v7384, %v7462
  %7464 = vmatmul.bf16.gmra.mxu0 %v3283
  %v7465 = vpop.f32.mrf.mxu0
  %v7466 = vadd.f32 %v7387, %v7465
  %v7467 = vpop.f32.mrf.mxu0
  %v7468 = vadd.f32 %v7389, %v7467
  %7469 = vdwg.mxu0
  %7470 = vmatpush.bf16.msra.mxu0 0
  %7471 = vmatpush.bf16.msra.mxu0 0
  %7472 = vmatpush.bf16.msra.mxu0 0
  %7473 = vmatpush.bf16.msra.mxu0 0
  %7474 = vmatpush.bf16.msra.mxu0 0
  %7475 = vmatpush.bf16.msra.mxu0 0
  %7476 = vmatpush.bf16.msra.mxu0 %v5258
  %7477 = vmatpush.bf16.msra.mxu0 %v5254
  %7478 = vmatmul.bf16.gmra.mxu0 %v5621
  %v7479 = vpop.f32.mrf.mxu0
  %v7480 = vadd.f32 %v7401, %v7479
  %v7481 = vpop.f32.mrf.mxu0
  %v7482 = vadd.f32 %v7403, %v7481
  %7483 = vmatmul.bf16.gmra.mxu0 %v5623
  %v7484 = vpop.f32.mrf.mxu0
  %v7485 = vadd.f32 %v7406, %v7484
  %v7486 = vpop.f32.mrf.mxu0
  %v7487 = vadd.f32 %v7408, %v7486
  %7488 = vmatmul.bf16.gmra.mxu0 %v5625
  %v7489 = vpop.f32.mrf.mxu0
  %v7490 = vadd.f32 %v7411, %v7489
  %v7491 = vpop.f32.mrf.mxu0
  %v7492 = vadd.f32 %v7413, %v7491
  %7493 = vmatmul.bf16.gmra.mxu0 %v5627
  %v7494 = vpop.f32.mrf.mxu0
  %v7495 = vadd.f32 %v7416, %v7494
  %v7496 = vpop.f32.mrf.mxu0
  %v7497 = vadd.f32 %v7418, %v7496
  %7498 = vmatmul.bf16.gmra.mxu0 %v5629
  %v7499 = vpop.f32.mrf.mxu0
  %v7500 = vadd.f32 %v7421, %v7499
  %v7501 = vpop.f32.mrf.mxu0
  %v7502 = vadd.f32 %v7423, %v7501
  %7503 = vmatmul.bf16.gmra.mxu0 %v5631
  %v7504 = vpop.f32.mrf.mxu0
  %v7505 = vadd.f32 %v7426, %v7504
  %v7506 = vpop.f32.mrf.mxu0
  %v7507 = vadd.f32 %v7428, %v7506
  %7508 = vmatmul.bf16.gmra.mxu0 %v5633
  %v7509 = vpop.f32.mrf.mxu0
  %v7510 = vadd.f32 %v7431, %v7509
  %v7511 = vpop.f32.mrf.mxu0
  %v7512 = vadd.f32 %v7433, %v7511
  %7513 = vmatmul.bf16.gmra.mxu0 %v5635
  %v7514 = vpop.f32.mrf.mxu0
  %v7515 = vadd.f32 %v7436, %v7514
  %v7516 = vpop.f32.mrf.mxu0
  %v7517 = vadd.f32 %v7438, %v7516
  %7518 = vmatmul.bf16.gmra.mxu0 %v5637
  %v7519 = vpop.f32.mrf.mxu0
  %v7520 = vadd.f32 %v7441, %v7519
  %v7521 = vpop.f32.mrf.mxu0
  %v7522 = vadd.f32 %v7443, %v7521
  %7523 = vmatmul.bf16.gmra.mxu0 %v5639
  %v7524 = vpop.f32.mrf.mxu0
  %v7525 = vadd.f32 %v7446, %v7524
  %v7526 = vpop.f32.mrf.mxu0
  %v7527 = vadd.f32 %v7448, %v7526
  %7528 = vmatmul.bf16.gmra.mxu0 %v5642
  %v7529 = vpop.f32.mrf.mxu0
  %v7530 = vadd.f32 %v7451, %v7529
  %v7531 = vpop.f32.mrf.mxu0
  %v7532 = vadd.f32 %v7453, %v7531
  %7533 = vmatmul.bf16.gmra.mxu0 %v5645
  %v7534 = vpop.f32.mrf.mxu0
  %v7535 = vadd.f32 %v7456, %v7534
  %v7536 = vpop.f32.mrf.mxu0
  %v7537 = vadd.f32 %v7458, %v7536
  %7538 = vmatmul.bf16.gmra.mxu0 %v5648
  %v7539 = vpop.f32.mrf.mxu0
  %v7540 = vadd.f32 %v7461, %v7539
  %v7541 = vpop.f32.mrf.mxu0
  %v7542 = vadd.f32 %v7463, %v7541
  %7543 = vmatmul.bf16.gmra.mxu0 %v5651
  %v7544 = vpop.f32.mrf.mxu0
  %v7545 = vadd.f32 %v7466, %v7544
  %v7546 = vpop.f32.mrf.mxu0
  %v7547 = vadd.f32 %v7468, %v7546
  %7548 = vdwg.mxu0
  %7549 = vmatpush.bf16.msra.mxu0 %v4931
  %7550 = vmatpush.bf16.msra.mxu0 %v4927
  %7551 = vmatpush.bf16.msra.mxu0 %v4923
  %7552 = vmatpush.bf16.msra.mxu0 %v4919
  %7553 = vmatpush.bf16.msra.mxu0 %v4915
  %7554 = vmatpush.bf16.msra.mxu0 %v4911
  %7555 = vmatpush.bf16.msra.mxu0 %v4907
  %7556 = vmatpush.bf16.msra.mxu0 %v4903
  %7557 = vmatmul.bf16.gmra.mxu0 %v2768
  %v7558 = vpop.f32.mrf.mxu0
  %v7559 = vadd.f32 0.0, %v7558
  %v7560 = vpop.f32.mrf.mxu0
  %v7561 = vadd.f32 0.0, %v7560
  %7562 = vmatmul.bf16.gmra.mxu0 %v2771
  %v7563 = vpop.f32.mrf.mxu0
  %v7564 = vadd.f32 0.0, %v7563
  %v7565 = vpop.f32.mrf.mxu0
  %v7566 = vadd.f32 0.0, %v7565
  %7567 = vmatmul.bf16.gmra.mxu0 %v2774
  %v7568 = vpop.f32.mrf.mxu0
  %v7569 = vadd.f32 0.0, %v7568
  %v7570 = vpop.f32.mrf.mxu0
  %v7571 = vadd.f32 0.0, %v7570
  %7572 = vmatmul.bf16.gmra.mxu0 %v2777
  %v7573 = vpop.f32.mrf.mxu0
  %v7574 = vadd.f32 0.0, %v7573
  %v7575 = vpop.f32.mrf.mxu0
  %v7576 = vadd.f32 0.0, %v7575
  %7577 = vmatmul.bf16.gmra.mxu0 %v2780
  %v7578 = vpop.f32.mrf.mxu0
  %v7579 = vadd.f32 0.0, %v7578
  %v7580 = vpop.f32.mrf.mxu0
  %v7581 = vadd.f32 0.0, %v7580
  %7582 = vmatmul.bf16.gmra.mxu0 %v2783
  %v7583 = vpop.f32.mrf.mxu0
  %v7584 = vadd.f32 0.0, %v7583
  %v7585 = vpop.f32.mrf.mxu0
  %v7586 = vadd.f32 0.0, %v7585
  %7587 = vmatmul.bf16.gmra.mxu0 %v2786
  %v7588 = vpop.f32.mrf.mxu0
  %v7589 = vadd.f32 0.0, %v7588
  %v7590 = vpop.f32.mrf.mxu0
  %v7591 = vadd.f32 0.0, %v7590
  %7592 = vmatmul.bf16.gmra.mxu0 %v2789
  %v7593 = vpop.f32.mrf.mxu0
  %v7594 = vadd.f32 0.0, %v7593
  %v7595 = vpop.f32.mrf.mxu0
  %v7596 = vadd.f32 0.0, %v7595
  %7597 = vmatmul.bf16.gmra.mxu0 %v2792
  %v7598 = vpop.f32.mrf.mxu0
  %v7599 = vadd.f32 0.0, %v7598
  %v7600 = vpop.f32.mrf.mxu0
  %v7601 = vadd.f32 0.0, %v7600
  %7602 = vmatmul.bf16.gmra.mxu0 %v2795
  %v7603 = vpop.f32.mrf.mxu0
  %v7604 = vadd.f32 0.0, %v7603
  %v7605 = vpop.f32.mrf.mxu0
  %v7606 = vadd.f32 0.0, %v7605
  %7607 = vmatmul.bf16.gmra.mxu0 %v2798
  %v7608 = vpop.f32.mrf.mxu0
  %v7609 = vadd.f32 0.0, %v7608
  %v7610 = vpop.f32.mrf.mxu0
  %v7611 = vadd.f32 0.0, %v7610
  %7612 = vmatmul.bf16.gmra.mxu0 %v2801
  %v7613 = vpop.f32.mrf.mxu0
  %v7614 = vadd.f32 0.0, %v7613
  %v7615 = vpop.f32.mrf.mxu0
  %v7616 = vadd.f32 0.0, %v7615
  %7617 = vmatmul.bf16.gmra.mxu0 %v2804
  %v7618 = vpop.f32.mrf.mxu0
  %v7619 = vadd.f32 0.0, %v7618
  %v7620 = vpop.f32.mrf.mxu0
  %v7621 = vadd.f32 0.0, %v7620
  %7622 = vmatmul.bf16.gmra.mxu0 %v2807
  %v7623 = vpop.f32.mrf.mxu0
  %v7624 = vadd.f32 0.0, %v7623
  %v7625 = vpop.f32.mrf.mxu0
  %v7626 = vadd.f32 0.0, %v7625
  %7627 = vdwg.mxu0
  %7628 = vmatpush.bf16.msra.mxu0 %v4963
  %7629 = vmatpush.bf16.msra.mxu0 %v4959
  %7630 = vmatpush.bf16.msra.mxu0 %v4955
  %7631 = vmatpush.bf16.msra.mxu0 %v4951
  %7632 = vmatpush.bf16.msra.mxu0 %v4947
  %7633 = vmatpush.bf16.msra.mxu0 %v4943
  %7634 = vmatpush.bf16.msra.mxu0 %v4939
  %7635 = vmatpush.bf16.msra.mxu0 %v4935
  %7636 = vmatmul.bf16.gmra.mxu0 %v2769
  %v7637 = vpop.f32.mrf.mxu0
  %v7638 = vadd.f32 %v7559, %v7637
  %v7639 = vpop.f32.mrf.mxu0
  %v7640 = vadd.f32 %v7561, %v7639
  %7641 = vmatmul.bf16.gmra.mxu0 %v2772
  %v7642 = vpop.f32.mrf.mxu0
  %v7643 = vadd.f32 %v7564, %v7642
  %v7644 = vpop.f32.mrf.mxu0
  %v7645 = vadd.f32 %v7566, %v7644
  %7646 = vmatmul.bf16.gmra.mxu0 %v2775
  %v7647 = vpop.f32.mrf.mxu0
  %v7648 = vadd.f32 %v7569, %v7647
  %v7649 = vpop.f32.mrf.mxu0
  %v7650 = vadd.f32 %v7571, %v7649
  %7651 = vmatmul.bf16.gmra.mxu0 %v2778
  %v7652 = vpop.f32.mrf.mxu0
  %v7653 = vadd.f32 %v7574, %v7652
  %v7654 = vpop.f32.mrf.mxu0
  %v7655 = vadd.f32 %v7576, %v7654
  %7656 = vmatmul.bf16.gmra.mxu0 %v2781
  %v7657 = vpop.f32.mrf.mxu0
  %v7658 = vadd.f32 %v7579, %v7657
  %v7659 = vpop.f32.mrf.mxu0
  %v7660 = vadd.f32 %v7581, %v7659
  %7661 = vmatmul.bf16.gmra.mxu0 %v2784
  %v7662 = vpop.f32.mrf.mxu0
  %v7663 = vadd.f32 %v7584, %v7662
  %v7664 = vpop.f32.mrf.mxu0
  %v7665 = vadd.f32 %v7586, %v7664
  %7666 = vmatmul.bf16.gmra.mxu0 %v2787
  %v7667 = vpop.f32.mrf.mxu0
  %v7668 = vadd.f32 %v7589, %v7667
  %v7669 = vpop.f32.mrf.mxu0
  %v7670 = vadd.f32 %v7591, %v7669
  %7671 = vmatmul.bf16.gmra.mxu0 %v2790
  %v7672 = vpop.f32.mrf.mxu0
  %v7673 = vadd.f32 %v7594, %v7672
  %v7674 = vpop.f32.mrf.mxu0
  %v7675 = vadd.f32 %v7596, %v7674
  %7676 = vmatmul.bf16.gmra.mxu0 %v2793
  %v7677 = vpop.f32.mrf.mxu0
  %v7678 = vadd.f32 %v7599, %v7677
  %v7679 = vpop.f32.mrf.mxu0
  %v7680 = vadd.f32 %v7601, %v7679
  %7681 = vmatmul.bf16.gmra.mxu0 %v2796
  %v7682 = vpop.f32.mrf.mxu0
  %v7683 = vadd.f32 %v7604, %v7682
  %v7684 = vpop.f32.mrf.mxu0
  %v7685 = vadd.f32 %v7606, %v7684
  %7686 = vmatmul.bf16.gmra.mxu0 %v2799
  %v7687 = vpop.f32.mrf.mxu0
  %v7688 = vadd.f32 %v7609, %v7687
  %v7689 = vpop.f32.mrf.mxu0
  %v7690 = vadd.f32 %v7611, %v7689
  %7691 = vmatmul.bf16.gmra.mxu0 %v2802
  %v7692 = vpop.f32.mrf.mxu0
  %v7693 = vadd.f32 %v7614, %v7692
  %v7694 = vpop.f32.mrf.mxu0
  %v7695 = vadd.f32 %v7616, %v7694
  %7696 = vmatmul.bf16.gmra.mxu0 %v2805
  %v7697 = vpop.f32.mrf.mxu0
  %v7698 = vadd.f32 %v7619, %v7697
  %v7699 = vpop.f32.mrf.mxu0
  %v7700 = vadd.f32 %v7621, %v7699
  %7701 = vmatmul.bf16.gmra.mxu0 %v2808
  %v7702 = vpop.f32.mrf.mxu0
  %v7703 = vadd.f32 %v7624, %v7702
  %v7704 = vpop.f32.mrf.mxu0
  %v7705 = vadd.f32 %v7626, %v7704
  %7706 = vdwg.mxu0
  %7707 = vmatpush.bf16.msra.mxu0 %v4995
  %7708 = vmatpush.bf16.msra.mxu0 %v4991
  %7709 = vmatpush.bf16.msra.mxu0 %v4987
  %7710 = vmatpush.bf16.msra.mxu0 %v4983
  %7711 = vmatpush.bf16.msra.mxu0 %v4979
  %7712 = vmatpush.bf16.msra.mxu0 %v4975
  %7713 = vmatpush.bf16.msra.mxu0 %v4971
  %7714 = vmatpush.bf16.msra.mxu0 %v4967
  %7715 = vmatmul.bf16.gmra.mxu0 %v3295
  %v7716 = vpop.f32.mrf.mxu0
  %v7717 = vadd.f32 %v7638, %v7716
  %v7718 = vpop.f32.mrf.mxu0
  %v7719 = vadd.f32 %v7640, %v7718
  %7720 = vmatmul.bf16.gmra.mxu0 %v3299
  %v7721 = vpop.f32.mrf.mxu0
  %v7722 = vadd.f32 %v7643, %v7721
  %v7723 = vpop.f32.mrf.mxu0
  %v7724 = vadd.f32 %v7645, %v7723
  %7725 = vmatmul.bf16.gmra.mxu0 %v3303
  %v7726 = vpop.f32.mrf.mxu0
  %v7727 = vadd.f32 %v7648, %v7726
  %v7728 = vpop.f32.mrf.mxu0
  %v7729 = vadd.f32 %v7650, %v7728
  %7730 = vmatmul.bf16.gmra.mxu0 %v3307
  %v7731 = vpop.f32.mrf.mxu0
  %v7732 = vadd.f32 %v7653, %v7731
  %v7733 = vpop.f32.mrf.mxu0
  %v7734 = vadd.f32 %v7655, %v7733
  %7735 = vmatmul.bf16.gmra.mxu0 %v3311
  %v7736 = vpop.f32.mrf.mxu0
  %v7737 = vadd.f32 %v7658, %v7736
  %v7738 = vpop.f32.mrf.mxu0
  %v7739 = vadd.f32 %v7660, %v7738
  %7740 = vmatmul.bf16.gmra.mxu0 %v3315
  %v7741 = vpop.f32.mrf.mxu0
  %v7742 = vadd.f32 %v7663, %v7741
  %v7743 = vpop.f32.mrf.mxu0
  %v7744 = vadd.f32 %v7665, %v7743
  %7745 = vmatmul.bf16.gmra.mxu0 %v3319
  %v7746 = vpop.f32.mrf.mxu0
  %v7747 = vadd.f32 %v7668, %v7746
  %v7748 = vpop.f32.mrf.mxu0
  %v7749 = vadd.f32 %v7670, %v7748
  %7750 = vmatmul.bf16.gmra.mxu0 %v3323
  %v7751 = vpop.f32.mrf.mxu0
  %v7752 = vadd.f32 %v7673, %v7751
  %v7753 = vpop.f32.mrf.mxu0
  %v7754 = vadd.f32 %v7675, %v7753
  %7755 = vmatmul.bf16.gmra.mxu0 %v3327
  %v7756 = vpop.f32.mrf.mxu0
  %v7757 = vadd.f32 %v7678, %v7756
  %v7758 = vpop.f32.mrf.mxu0
  %v7759 = vadd.f32 %v7680, %v7758
  %7760 = vmatmul.bf16.gmra.mxu0 %v3331
  %v7761 = vpop.f32.mrf.mxu0
  %v7762 = vadd.f32 %v7683, %v7761
  %v7763 = vpop.f32.mrf.mxu0
  %v7764 = vadd.f32 %v7685, %v7763
  %7765 = vmatmul.bf16.gmra.mxu0 %v3335
  %v7766 = vpop.f32.mrf.mxu0
  %v7767 = vadd.f32 %v7688, %v7766
  %v7768 = vpop.f32.mrf.mxu0
  %v7769 = vadd.f32 %v7690, %v7768
  %7770 = vmatmul.bf16.gmra.mxu0 %v3339
  %v7771 = vpop.f32.mrf.mxu0
  %v7772 = vadd.f32 %v7693, %v7771
  %v7773 = vpop.f32.mrf.mxu0
  %v7774 = vadd.f32 %v7695, %v7773
  %7775 = vmatmul.bf16.gmra.mxu0 %v3343
  %v7776 = vpop.f32.mrf.mxu0
  %v7777 = vadd.f32 %v7698, %v7776
  %v7778 = vpop.f32.mrf.mxu0
  %v7779 = vadd.f32 %v7700, %v7778
  %7780 = vmatmul.bf16.gmra.mxu0 %v3347
  %v7781 = vpop.f32.mrf.mxu0
  %v7782 = vadd.f32 %v7703, %v7781
  %v7783 = vpop.f32.mrf.mxu0
  %v7784 = vadd.f32 %v7705, %v7783
  %7785 = vdwg.mxu0
  %7786 = vmatpush.bf16.msra.mxu0 %v5027
  %7787 = vmatpush.bf16.msra.mxu0 %v5023
  %7788 = vmatpush.bf16.msra.mxu0 %v5019
  %7789 = vmatpush.bf16.msra.mxu0 %v5015
  %7790 = vmatpush.bf16.msra.mxu0 %v5011
  %7791 = vmatpush.bf16.msra.mxu0 %v5007
  %7792 = vmatpush.bf16.msra.mxu0 %v5003
  %7793 = vmatpush.bf16.msra.mxu0 %v4999
  %7794 = vmatmul.bf16.gmra.mxu0 %v2936
  %v7795 = vpop.f32.mrf.mxu0
  %v7796 = vadd.f32 %v7717, %v7795
  %v7797 = vpop.f32.mrf.mxu0
  %v7798 = vadd.f32 %v7719, %v7797
  %7799 = vmatmul.bf16.gmra.mxu0 %v2938
  %v7800 = vpop.f32.mrf.mxu0
  %v7801 = vadd.f32 %v7722, %v7800
  %v7802 = vpop.f32.mrf.mxu0
  %v7803 = vadd.f32 %v7724, %v7802
  %7804 = vmatmul.bf16.gmra.mxu0 %v2940
  %v7805 = vpop.f32.mrf.mxu0
  %v7806 = vadd.f32 %v7727, %v7805
  %v7807 = vpop.f32.mrf.mxu0
  %v7808 = vadd.f32 %v7729, %v7807
  %7809 = vmatmul.bf16.gmra.mxu0 %v2942
  %v7810 = vpop.f32.mrf.mxu0
  %v7811 = vadd.f32 %v7732, %v7810
  %v7812 = vpop.f32.mrf.mxu0
  %v7813 = vadd.f32 %v7734, %v7812
  %7814 = vmatmul.bf16.gmra.mxu0 %v2944
  %v7815 = vpop.f32.mrf.mxu0
  %v7816 = vadd.f32 %v7737, %v7815
  %v7817 = vpop.f32.mrf.mxu0
  %v7818 = vadd.f32 %v7739, %v7817
  %7819 = vmatmul.bf16.gmra.mxu0 %v2946
  %v7820 = vpop.f32.mrf.mxu0
  %v7821 = vadd.f32 %v7742, %v7820
  %v7822 = vpop.f32.mrf.mxu0
  %v7823 = vadd.f32 %v7744, %v7822
  %7824 = vmatmul.bf16.gmra.mxu0 %v2948
  %v7825 = vpop.f32.mrf.mxu0
  %v7826 = vadd.f32 %v7747, %v7825
  %v7827 = vpop.f32.mrf.mxu0
  %v7828 = vadd.f32 %v7749, %v7827
  %7829 = vmatmul.bf16.gmra.mxu0 %v2950
  %v7830 = vpop.f32.mrf.mxu0
  %v7831 = vadd.f32 %v7752, %v7830
  %v7832 = vpop.f32.mrf.mxu0
  %v7833 = vadd.f32 %v7754, %v7832
  %7834 = vmatmul.bf16.gmra.mxu0 %v2952
  %v7835 = vpop.f32.mrf.mxu0
  %v7836 = vadd.f32 %v7757, %v7835
  %v7837 = vpop.f32.mrf.mxu0
  %v7838 = vadd.f32 %v7759, %v7837
  %7839 = vmatmul.bf16.gmra.mxu0 %v2954
  %v7840 = vpop.f32.mrf.mxu0
  %v7841 = vadd.f32 %v7762, %v7840
  %v7842 = vpop.f32.mrf.mxu0
  %v7843 = vadd.f32 %v7764, %v7842
  %7844 = vmatmul.bf16.gmra.mxu0 %v2956
  %v7845 = vpop.f32.mrf.mxu0
  %v7846 = vadd.f32 %v7767, %v7845
  %v7847 = vpop.f32.mrf.mxu0
  %v7848 = vadd.f32 %v7769, %v7847
  %7849 = vmatmul.bf16.gmra.mxu0 %v2958
  %v7850 = vpop.f32.mrf.mxu0
  %v7851 = vadd.f32 %v7772, %v7850
  %v7852 = vpop.f32.mrf.mxu0
  %v7853 = vadd.f32 %v7774, %v7852
  %7854 = vmatmul.bf16.gmra.mxu0 %v2960
  %v7855 = vpop.f32.mrf.mxu0
  %v7856 = vadd.f32 %v7777, %v7855
  %v7857 = vpop.f32.mrf.mxu0
  %v7858 = vadd.f32 %v7779, %v7857
  %7859 = vmatmul.bf16.gmra.mxu0 %v2962
  %v7860 = vpop.f32.mrf.mxu0
  %v7861 = vadd.f32 %v7782, %v7860
  %v7862 = vpop.f32.mrf.mxu0
  %v7863 = vadd.f32 %v7784, %v7862
  %7864 = vdwg.mxu0
  %7865 = vmatpush.bf16.msra.mxu0 %v5059
  %7866 = vmatpush.bf16.msra.mxu0 %v5055
  %7867 = vmatpush.bf16.msra.mxu0 %v5051
  %7868 = vmatpush.bf16.msra.mxu0 %v5047
  %7869 = vmatpush.bf16.msra.mxu0 %v5043
  %7870 = vmatpush.bf16.msra.mxu0 %v5039
  %7871 = vmatpush.bf16.msra.mxu0 %v5035
  %7872 = vmatpush.bf16.msra.mxu0 %v5031
  %7873 = vmatmul.bf16.gmra.mxu0 %v3351
  %v7874 = vpop.f32.mrf.mxu0
  %v7875 = vadd.f32 %v7796, %v7874
  %v7876 = vpop.f32.mrf.mxu0
  %v7877 = vadd.f32 %v7798, %v7876
  %7878 = vmatmul.bf16.gmra.mxu0 %v3355
  %v7879 = vpop.f32.mrf.mxu0
  %v7880 = vadd.f32 %v7801, %v7879
  %v7881 = vpop.f32.mrf.mxu0
  %v7882 = vadd.f32 %v7803, %v7881
  %7883 = vmatmul.bf16.gmra.mxu0 %v3359
  %v7884 = vpop.f32.mrf.mxu0
  %v7885 = vadd.f32 %v7806, %v7884
  %v7886 = vpop.f32.mrf.mxu0
  %v7887 = vadd.f32 %v7808, %v7886
  %7888 = vmatmul.bf16.gmra.mxu0 %v3363
  %v7889 = vpop.f32.mrf.mxu0
  %v7890 = vadd.f32 %v7811, %v7889
  %v7891 = vpop.f32.mrf.mxu0
  %v7892 = vadd.f32 %v7813, %v7891
  %7893 = vmatmul.bf16.gmra.mxu0 %v3367
  %v7894 = vpop.f32.mrf.mxu0
  %v7895 = vadd.f32 %v7816, %v7894
  %v7896 = vpop.f32.mrf.mxu0
  %v7897 = vadd.f32 %v7818, %v7896
  %7898 = vmatmul.bf16.gmra.mxu0 %v3371
  %v7899 = vpop.f32.mrf.mxu0
  %v7900 = vadd.f32 %v7821, %v7899
  %v7901 = vpop.f32.mrf.mxu0
  %v7902 = vadd.f32 %v7823, %v7901
  %7903 = vmatmul.bf16.gmra.mxu0 %v3375
  %v7904 = vpop.f32.mrf.mxu0
  %v7905 = vadd.f32 %v7826, %v7904
  %v7906 = vpop.f32.mrf.mxu0
  %v7907 = vadd.f32 %v7828, %v7906
  %7908 = vmatmul.bf16.gmra.mxu0 %v3379
  %v7909 = vpop.f32.mrf.mxu0
  %v7910 = vadd.f32 %v7831, %v7909
  %v7911 = vpop.f32.mrf.mxu0
  %v7912 = vadd.f32 %v7833, %v7911
  %7913 = vmatmul.bf16.gmra.mxu0 %v3383
  %v7914 = vpop.f32.mrf.mxu0
  %v7915 = vadd.f32 %v7836, %v7914
  %v7916 = vpop.f32.mrf.mxu0
  %v7917 = vadd.f32 %v7838, %v7916
  %7918 = vmatmul.bf16.gmra.mxu0 %v3387
  %v7919 = vpop.f32.mrf.mxu0
  %v7920 = vadd.f32 %v7841, %v7919
  %v7921 = vpop.f32.mrf.mxu0
  %v7922 = vadd.f32 %v7843, %v7921
  %7923 = vmatmul.bf16.gmra.mxu0 %v3391
  %v7924 = vpop.f32.mrf.mxu0
  %v7925 = vadd.f32 %v7846, %v7924
  %v7926 = vpop.f32.mrf.mxu0
  %v7927 = vadd.f32 %v7848, %v7926
  %7928 = vmatmul.bf16.gmra.mxu0 %v3395
  %v7929 = vpop.f32.mrf.mxu0
  %v7930 = vadd.f32 %v7851, %v7929
  %v7931 = vpop.f32.mrf.mxu0
  %v7932 = vadd.f32 %v7853, %v7931
  %7933 = vmatmul.bf16.gmra.mxu0 %v3399
  %v7934 = vpop.f32.mrf.mxu0
  %v7935 = vadd.f32 %v7856, %v7934
  %v7936 = vpop.f32.mrf.mxu0
  %v7937 = vadd.f32 %v7858, %v7936
  %7938 = vmatmul.bf16.gmra.mxu0 %v3403
  %v7939 = vpop.f32.mrf.mxu0
  %v7940 = vadd.f32 %v7861, %v7939
  %v7941 = vpop.f32.mrf.mxu0
  %v7942 = vadd.f32 %v7863, %v7941
  %7943 = vdwg.mxu0
  %7944 = vmatpush.bf16.msra.mxu0 %v5091
  %7945 = vmatpush.bf16.msra.mxu0 %v5087
  %7946 = vmatpush.bf16.msra.mxu0 %v5083
  %7947 = vmatpush.bf16.msra.mxu0 %v5079
  %7948 = vmatpush.bf16.msra.mxu0 %v5075
  %7949 = vmatpush.bf16.msra.mxu0 %v5071
  %7950 = vmatpush.bf16.msra.mxu0 %v5067
  %7951 = vmatpush.bf16.msra.mxu0 %v5063
  %7952 = vmatmul.bf16.gmra.mxu0 %v3076
  %v7953 = vpop.f32.mrf.mxu0
  %v7954 = vadd.f32 %v7875, %v7953
  %v7955 = vpop.f32.mrf.mxu0
  %v7956 = vadd.f32 %v7877, %v7955
  %7957 = vmatmul.bf16.gmra.mxu0 %v3078
  %v7958 = vpop.f32.mrf.mxu0
  %v7959 = vadd.f32 %v7880, %v7958
  %v7960 = vpop.f32.mrf.mxu0
  %v7961 = vadd.f32 %v7882, %v7960
  %7962 = vmatmul.bf16.gmra.mxu0 %v3080
  %v7963 = vpop.f32.mrf.mxu0
  %v7964 = vadd.f32 %v7885, %v7963
  %v7965 = vpop.f32.mrf.mxu0
  %v7966 = vadd.f32 %v7887, %v7965
  %7967 = vmatmul.bf16.gmra.mxu0 %v3082
  %v7968 = vpop.f32.mrf.mxu0
  %v7969 = vadd.f32 %v7890, %v7968
  %v7970 = vpop.f32.mrf.mxu0
  %v7971 = vadd.f32 %v7892, %v7970
  %7972 = vmatmul.bf16.gmra.mxu0 %v3084
  %v7973 = vpop.f32.mrf.mxu0
  %v7974 = vadd.f32 %v7895, %v7973
  %v7975 = vpop.f32.mrf.mxu0
  %v7976 = vadd.f32 %v7897, %v7975
  %7977 = vmatmul.bf16.gmra.mxu0 %v3086
  %v7978 = vpop.f32.mrf.mxu0
  %v7979 = vadd.f32 %v7900, %v7978
  %v7980 = vpop.f32.mrf.mxu0
  %v7981 = vadd.f32 %v7902, %v7980
  %7982 = vmatmul.bf16.gmra.mxu0 %v3088
  %v7983 = vpop.f32.mrf.mxu0
  %v7984 = vadd.f32 %v7905, %v7983
  %v7985 = vpop.f32.mrf.mxu0
  %v7986 = vadd.f32 %v7907, %v7985
  %7987 = vmatmul.bf16.gmra.mxu0 %v3090
  %v7988 = vpop.f32.mrf.mxu0
  %v7989 = vadd.f32 %v7910, %v7988
  %v7990 = vpop.f32.mrf.mxu0
  %v7991 = vadd.f32 %v7912, %v7990
  %7992 = vmatmul.bf16.gmra.mxu0 %v3092
  %v7993 = vpop.f32.mrf.mxu0
  %v7994 = vadd.f32 %v7915, %v7993
  %v7995 = vpop.f32.mrf.mxu0
  %v7996 = vadd.f32 %v7917, %v7995
  %7997 = vmatmul.bf16.gmra.mxu0 %v3094
  %v7998 = vpop.f32.mrf.mxu0
  %v7999 = vadd.f32 %v7920, %v7998
  %v8000 = vpop.f32.mrf.mxu0
  %v8001 = vadd.f32 %v7922, %v8000
  %8002 = vmatmul.bf16.gmra.mxu0 %v3096
  %v8003 = vpop.f32.mrf.mxu0
  %v8004 = vadd.f32 %v7925, %v8003
  %v8005 = vpop.f32.mrf.mxu0
  %v8006 = vadd.f32 %v7927, %v8005
  %8007 = vmatmul.bf16.gmra.mxu0 %v3098
  %v8008 = vpop.f32.mrf.mxu0
  %v8009 = vadd.f32 %v7930, %v8008
  %v8010 = vpop.f32.mrf.mxu0
  %v8011 = vadd.f32 %v7932, %v8010
  %8012 = vmatmul.bf16.gmra.mxu0 %v3100
  %v8013 = vpop.f32.mrf.mxu0
  %v8014 = vadd.f32 %v7935, %v8013
  %v8015 = vpop.f32.mrf.mxu0
  %v8016 = vadd.f32 %v7937, %v8015
  %8017 = vmatmul.bf16.gmra.mxu0 %v3102
  %v8018 = vpop.f32.mrf.mxu0
  %v8019 = vadd.f32 %v7940, %v8018
  %v8020 = vpop.f32.mrf.mxu0
  %v8021 = vadd.f32 %v7942, %v8020
  %8022 = vdwg.mxu0
  %8023 = vmatpush.bf16.msra.mxu0 %v5123
  %8024 = vmatpush.bf16.msra.mxu0 %v5119
  %8025 = vmatpush.bf16.msra.mxu0 %v5115
  %8026 = vmatpush.bf16.msra.mxu0 %v5111
  %8027 = vmatpush.bf16.msra.mxu0 %v5107
  %8028 = vmatpush.bf16.msra.mxu0 %v5103
  %8029 = vmatpush.bf16.msra.mxu0 %v5099
  %8030 = vmatpush.bf16.msra.mxu0 %v5095
  %8031 = vmatmul.bf16.gmra.mxu0 %v3407
  %v8032 = vpop.f32.mrf.mxu0
  %v8033 = vadd.f32 %v7954, %v8032
  %v8034 = vpop.f32.mrf.mxu0
  %v8035 = vadd.f32 %v7956, %v8034
  %8036 = vmatmul.bf16.gmra.mxu0 %v3411
  %v8037 = vpop.f32.mrf.mxu0
  %v8038 = vadd.f32 %v7959, %v8037
  %v8039 = vpop.f32.mrf.mxu0
  %v8040 = vadd.f32 %v7961, %v8039
  %8041 = vmatmul.bf16.gmra.mxu0 %v3415
  %v8042 = vpop.f32.mrf.mxu0
  %v8043 = vadd.f32 %v7964, %v8042
  %v8044 = vpop.f32.mrf.mxu0
  %v8045 = vadd.f32 %v7966, %v8044
  %8046 = vmatmul.bf16.gmra.mxu0 %v3419
  %v8047 = vpop.f32.mrf.mxu0
  %v8048 = vadd.f32 %v7969, %v8047
  %v8049 = vpop.f32.mrf.mxu0
  %v8050 = vadd.f32 %v7971, %v8049
  %8051 = vmatmul.bf16.gmra.mxu0 %v3423
  %v8052 = vpop.f32.mrf.mxu0
  %v8053 = vadd.f32 %v7974, %v8052
  %v8054 = vpop.f32.mrf.mxu0
  %v8055 = vadd.f32 %v7976, %v8054
  %8056 = vmatmul.bf16.gmra.mxu0 %v3427
  %v8057 = vpop.f32.mrf.mxu0
  %v8058 = vadd.f32 %v7979, %v8057
  %v8059 = vpop.f32.mrf.mxu0
  %v8060 = vadd.f32 %v7981, %v8059
  %8061 = vmatmul.bf16.gmra.mxu0 %v3431
  %v8062 = vpop.f32.mrf.mxu0
  %v8063 = vadd.f32 %v7984, %v8062
  %v8064 = vpop.f32.mrf.mxu0
  %v8065 = vadd.f32 %v7986, %v8064
  %8066 = vmatmul.bf16.gmra.mxu0 %v3435
  %v8067 = vpop.f32.mrf.mxu0
  %v8068 = vadd.f32 %v7989, %v8067
  %v8069 = vpop.f32.mrf.mxu0
  %v8070 = vadd.f32 %v7991, %v8069
  %8071 = vmatmul.bf16.gmra.mxu0 %v3439
  %v8072 = vpop.f32.mrf.mxu0
  %v8073 = vadd.f32 %v7994, %v8072
  %v8074 = vpop.f32.mrf.mxu0
  %v8075 = vadd.f32 %v7996, %v8074
  %8076 = vmatmul.bf16.gmra.mxu0 %v3443
  %v8077 = vpop.f32.mrf.mxu0
  %v8078 = vadd.f32 %v7999, %v8077
  %v8079 = vpop.f32.mrf.mxu0
  %v8080 = vadd.f32 %v8001, %v8079
  %8081 = vmatmul.bf16.gmra.mxu0 %v3447
  %v8082 = vpop.f32.mrf.mxu0
  %v8083 = vadd.f32 %v8004, %v8082
  %v8084 = vpop.f32.mrf.mxu0
  %v8085 = vadd.f32 %v8006, %v8084
  %8086 = vmatmul.bf16.gmra.mxu0 %v3451
  %v8087 = vpop.f32.mrf.mxu0
  %v8088 = vadd.f32 %v8009, %v8087
  %v8089 = vpop.f32.mrf.mxu0
  %v8090 = vadd.f32 %v8011, %v8089
  %8091 = vmatmul.bf16.gmra.mxu0 %v3455
  %v8092 = vpop.f32.mrf.mxu0
  %v8093 = vadd.f32 %v8014, %v8092
  %v8094 = vpop.f32.mrf.mxu0
  %v8095 = vadd.f32 %v8016, %v8094
  %8096 = vmatmul.bf16.gmra.mxu0 %v3459
  %v8097 = vpop.f32.mrf.mxu0
  %v8098 = vadd.f32 %v8019, %v8097
  %v8099 = vpop.f32.mrf.mxu0
  %v8100 = vadd.f32 %v8021, %v8099
  %8101 = vdwg.mxu0
  %8102 = vmatpush.bf16.msra.mxu0 %v5155
  %8103 = vmatpush.bf16.msra.mxu0 %v5151
  %8104 = vmatpush.bf16.msra.mxu0 %v5147
  %8105 = vmatpush.bf16.msra.mxu0 %v5143
  %8106 = vmatpush.bf16.msra.mxu0 %v5139
  %8107 = vmatpush.bf16.msra.mxu0 %v5135
  %8108 = vmatpush.bf16.msra.mxu0 %v5131
  %8109 = vmatpush.bf16.msra.mxu0 %v5127
  %8110 = vmatmul.bf16.gmra.mxu0 %v3216
  %v8111 = vpop.f32.mrf.mxu0
  %v8112 = vadd.f32 %v8033, %v8111
  %v8113 = vpop.f32.mrf.mxu0
  %v8114 = vadd.f32 %v8035, %v8113
  %8115 = vmatmul.bf16.gmra.mxu0 %v3218
  %v8116 = vpop.f32.mrf.mxu0
  %v8117 = vadd.f32 %v8038, %v8116
  %v8118 = vpop.f32.mrf.mxu0
  %v8119 = vadd.f32 %v8040, %v8118
  %8120 = vmatmul.bf16.gmra.mxu0 %v3220
  %v8121 = vpop.f32.mrf.mxu0
  %v8122 = vadd.f32 %v8043, %v8121
  %v8123 = vpop.f32.mrf.mxu0
  %v8124 = vadd.f32 %v8045, %v8123
  %8125 = vmatmul.bf16.gmra.mxu0 %v3222
  %v8126 = vpop.f32.mrf.mxu0
  %v8127 = vadd.f32 %v8048, %v8126
  %v8128 = vpop.f32.mrf.mxu0
  %v8129 = vadd.f32 %v8050, %v8128
  %8130 = vmatmul.bf16.gmra.mxu0 %v3224
  %v8131 = vpop.f32.mrf.mxu0
  %v8132 = vadd.f32 %v8053, %v8131
  %v8133 = vpop.f32.mrf.mxu0
  %v8134 = vadd.f32 %v8055, %v8133
  %8135 = vmatmul.bf16.gmra.mxu0 %v3226
  %v8136 = vpop.f32.mrf.mxu0
  %v8137 = vadd.f32 %v8058, %v8136
  %v8138 = vpop.f32.mrf.mxu0
  %v8139 = vadd.f32 %v8060, %v8138
  %8140 = vmatmul.bf16.gmra.mxu0 %v3228
  %v8141 = vpop.f32.mrf.mxu0
  %v8142 = vadd.f32 %v8063, %v8141
  %v8143 = vpop.f32.mrf.mxu0
  %v8144 = vadd.f32 %v8065, %v8143
  %8145 = vmatmul.bf16.gmra.mxu0 %v3230
  %v8146 = vpop.f32.mrf.mxu0
  %v8147 = vadd.f32 %v8068, %v8146
  %v8148 = vpop.f32.mrf.mxu0
  %v8149 = vadd.f32 %v8070, %v8148
  %8150 = vmatmul.bf16.gmra.mxu0 %v3232
  %v8151 = vpop.f32.mrf.mxu0
  %v8152 = vadd.f32 %v8073, %v8151
  %v8153 = vpop.f32.mrf.mxu0
  %v8154 = vadd.f32 %v8075, %v8153
  %8155 = vmatmul.bf16.gmra.mxu0 %v3234
  %v8156 = vpop.f32.mrf.mxu0
  %v8157 = vadd.f32 %v8078, %v8156
  %v8158 = vpop.f32.mrf.mxu0
  %v8159 = vadd.f32 %v8080, %v8158
  %8160 = vmatmul.bf16.gmra.mxu0 %v3236
  %v8161 = vpop.f32.mrf.mxu0
  %v8162 = vadd.f32 %v8083, %v8161
  %v8163 = vpop.f32.mrf.mxu0
  %v8164 = vadd.f32 %v8085, %v8163
  %8165 = vmatmul.bf16.gmra.mxu0 %v3238
  %v8166 = vpop.f32.mrf.mxu0
  %v8167 = vadd.f32 %v8088, %v8166
  %v8168 = vpop.f32.mrf.mxu0
  %v8169 = vadd.f32 %v8090, %v8168
  %8170 = vmatmul.bf16.gmra.mxu0 %v3240
  %v8171 = vpop.f32.mrf.mxu0
  %v8172 = vadd.f32 %v8093, %v8171
  %v8173 = vpop.f32.mrf.mxu0
  %v8174 = vadd.f32 %v8095, %v8173
  %8175 = vmatmul.bf16.gmra.mxu0 %v3242
  %v8176 = vpop.f32.mrf.mxu0
  %v8177 = vadd.f32 %v8098, %v8176
  %v8178 = vpop.f32.mrf.mxu0
  %v8179 = vadd.f32 %v8100, %v8178
  %8180 = vdwg.mxu0
  %8181 = vmatpush.bf16.msra.mxu0 %v5187
  %8182 = vmatpush.bf16.msra.mxu0 %v5183
  %8183 = vmatpush.bf16.msra.mxu0 %v5179
  %8184 = vmatpush.bf16.msra.mxu0 %v5175
  %8185 = vmatpush.bf16.msra.mxu0 %v5171
  %8186 = vmatpush.bf16.msra.mxu0 %v5167
  %8187 = vmatpush.bf16.msra.mxu0 %v5163
  %8188 = vmatpush.bf16.msra.mxu0 %v5159
  %8189 = vmatmul.bf16.gmra.mxu0 %v3217
  %v8190 = vpop.f32.mrf.mxu0
  %v8191 = vadd.f32 %v8112, %v8190
  %v8192 = vpop.f32.mrf.mxu0
  %v8193 = vadd.f32 %v8114, %v8192
  %8194 = vmatmul.bf16.gmra.mxu0 %v3219
  %v8195 = vpop.f32.mrf.mxu0
  %v8196 = vadd.f32 %v8117, %v8195
  %v8197 = vpop.f32.mrf.mxu0
  %v8198 = vadd.f32 %v8119, %v8197
  %8199 = vmatmul.bf16.gmra.mxu0 %v3221
  %v8200 = vpop.f32.mrf.mxu0
  %v8201 = vadd.f32 %v8122, %v8200
  %v8202 = vpop.f32.mrf.mxu0
  %v8203 = vadd.f32 %v8124, %v8202
  %8204 = vmatmul.bf16.gmra.mxu0 %v3223
  %v8205 = vpop.f32.mrf.mxu0
  %v8206 = vadd.f32 %v8127, %v8205
  %v8207 = vpop.f32.mrf.mxu0
  %v8208 = vadd.f32 %v8129, %v8207
  %8209 = vmatmul.bf16.gmra.mxu0 %v3225
  %v8210 = vpop.f32.mrf.mxu0
  %v8211 = vadd.f32 %v8132, %v8210
  %v8212 = vpop.f32.mrf.mxu0
  %v8213 = vadd.f32 %v8134, %v8212
  %8214 = vmatmul.bf16.gmra.mxu0 %v3227
  %v8215 = vpop.f32.mrf.mxu0
  %v8216 = vadd.f32 %v8137, %v8215
  %v8217 = vpop.f32.mrf.mxu0
  %v8218 = vadd.f32 %v8139, %v8217
  %8219 = vmatmul.bf16.gmra.mxu0 %v3229
  %v8220 = vpop.f32.mrf.mxu0
  %v8221 = vadd.f32 %v8142, %v8220
  %v8222 = vpop.f32.mrf.mxu0
  %v8223 = vadd.f32 %v8144, %v8222
  %8224 = vmatmul.bf16.gmra.mxu0 %v3231
  %v8225 = vpop.f32.mrf.mxu0
  %v8226 = vadd.f32 %v8147, %v8225
  %v8227 = vpop.f32.mrf.mxu0
  %v8228 = vadd.f32 %v8149, %v8227
  %8229 = vmatmul.bf16.gmra.mxu0 %v3233
  %v8230 = vpop.f32.mrf.mxu0
  %v8231 = vadd.f32 %v8152, %v8230
  %v8232 = vpop.f32.mrf.mxu0
  %v8233 = vadd.f32 %v8154, %v8232
  %8234 = vmatmul.bf16.gmra.mxu0 %v3235
  %v8235 = vpop.f32.mrf.mxu0
  %v8236 = vadd.f32 %v8157, %v8235
  %v8237 = vpop.f32.mrf.mxu0
  %v8238 = vadd.f32 %v8159, %v8237
  %8239 = vmatmul.bf16.gmra.mxu0 %v3237
  %v8240 = vpop.f32.mrf.mxu0
  %v8241 = vadd.f32 %v8162, %v8240
  %v8242 = vpop.f32.mrf.mxu0
  %v8243 = vadd.f32 %v8164, %v8242
  %8244 = vmatmul.bf16.gmra.mxu0 %v3239
  %v8245 = vpop.f32.mrf.mxu0
  %v8246 = vadd.f32 %v8167, %v8245
  %v8247 = vpop.f32.mrf.mxu0
  %v8248 = vadd.f32 %v8169, %v8247
  %8249 = vmatmul.bf16.gmra.mxu0 %v3241
  %v8250 = vpop.f32.mrf.mxu0
  %v8251 = vadd.f32 %v8172, %v8250
  %v8252 = vpop.f32.mrf.mxu0
  %v8253 = vadd.f32 %v8174, %v8252
  %8254 = vmatmul.bf16.gmra.mxu0 %v3243
  %v8255 = vpop.f32.mrf.mxu0
  %v8256 = vadd.f32 %v8177, %v8255
  %v8257 = vpop.f32.mrf.mxu0
  %v8258 = vadd.f32 %v8179, %v8257
  %8259 = vdwg.mxu0
  %8260 = vmatpush.bf16.msra.mxu0 %v5219
  %8261 = vmatpush.bf16.msra.mxu0 %v5215
  %8262 = vmatpush.bf16.msra.mxu0 %v5211
  %8263 = vmatpush.bf16.msra.mxu0 %v5207
  %8264 = vmatpush.bf16.msra.mxu0 %v5203
  %8265 = vmatpush.bf16.msra.mxu0 %v5199
  %8266 = vmatpush.bf16.msra.mxu0 %v5195
  %8267 = vmatpush.bf16.msra.mxu0 %v5191
  %8268 = vmatmul.bf16.gmra.mxu0 %v2780
  %v8269 = vpop.f32.mrf.mxu0
  %v8270 = vadd.f32 %v8191, %v8269
  %v8271 = vpop.f32.mrf.mxu0
  %v8272 = vadd.f32 %v8193, %v8271
  %8273 = vmatmul.bf16.gmra.mxu0 %v2783
  %v8274 = vpop.f32.mrf.mxu0
  %v8275 = vadd.f32 %v8196, %v8274
  %v8276 = vpop.f32.mrf.mxu0
  %v8277 = vadd.f32 %v8198, %v8276
  %8278 = vmatmul.bf16.gmra.mxu0 %v2786
  %v8279 = vpop.f32.mrf.mxu0
  %v8280 = vadd.f32 %v8201, %v8279
  %v8281 = vpop.f32.mrf.mxu0
  %v8282 = vadd.f32 %v8203, %v8281
  %8283 = vmatmul.bf16.gmra.mxu0 %v2789
  %v8284 = vpop.f32.mrf.mxu0
  %v8285 = vadd.f32 %v8206, %v8284
  %v8286 = vpop.f32.mrf.mxu0
  %v8287 = vadd.f32 %v8208, %v8286
  %8288 = vmatmul.bf16.gmra.mxu0 %v2792
  %v8289 = vpop.f32.mrf.mxu0
  %v8290 = vadd.f32 %v8211, %v8289
  %v8291 = vpop.f32.mrf.mxu0
  %v8292 = vadd.f32 %v8213, %v8291
  %8293 = vmatmul.bf16.gmra.mxu0 %v2795
  %v8294 = vpop.f32.mrf.mxu0
  %v8295 = vadd.f32 %v8216, %v8294
  %v8296 = vpop.f32.mrf.mxu0
  %v8297 = vadd.f32 %v8218, %v8296
  %8298 = vmatmul.bf16.gmra.mxu0 %v2798
  %v8299 = vpop.f32.mrf.mxu0
  %v8300 = vadd.f32 %v8221, %v8299
  %v8301 = vpop.f32.mrf.mxu0
  %v8302 = vadd.f32 %v8223, %v8301
  %8303 = vmatmul.bf16.gmra.mxu0 %v2801
  %v8304 = vpop.f32.mrf.mxu0
  %v8305 = vadd.f32 %v8226, %v8304
  %v8306 = vpop.f32.mrf.mxu0
  %v8307 = vadd.f32 %v8228, %v8306
  %8308 = vmatmul.bf16.gmra.mxu0 %v2804
  %v8309 = vpop.f32.mrf.mxu0
  %v8310 = vadd.f32 %v8231, %v8309
  %v8311 = vpop.f32.mrf.mxu0
  %v8312 = vadd.f32 %v8233, %v8311
  %8313 = vmatmul.bf16.gmra.mxu0 %v2807
  %v8314 = vpop.f32.mrf.mxu0
  %v8315 = vadd.f32 %v8236, %v8314
  %v8316 = vpop.f32.mrf.mxu0
  %v8317 = vadd.f32 %v8238, %v8316
  %8318 = vmatmul.bf16.gmra.mxu0 %v2848
  %v8319 = vpop.f32.mrf.mxu0
  %v8320 = vadd.f32 %v8241, %v8319
  %v8321 = vpop.f32.mrf.mxu0
  %v8322 = vadd.f32 %v8243, %v8321
  %8323 = vmatmul.bf16.gmra.mxu0 %v2988
  %v8324 = vpop.f32.mrf.mxu0
  %v8325 = vadd.f32 %v8246, %v8324
  %v8326 = vpop.f32.mrf.mxu0
  %v8327 = vadd.f32 %v8248, %v8326
  %8328 = vmatmul.bf16.gmra.mxu0 %v3128
  %v8329 = vpop.f32.mrf.mxu0
  %v8330 = vadd.f32 %v8251, %v8329
  %v8331 = vpop.f32.mrf.mxu0
  %v8332 = vadd.f32 %v8253, %v8331
  %8333 = vmatmul.bf16.gmra.mxu0 %v3282
  %v8334 = vpop.f32.mrf.mxu0
  %v8335 = vadd.f32 %v8256, %v8334
  %v8336 = vpop.f32.mrf.mxu0
  %v8337 = vadd.f32 %v8258, %v8336
  %8338 = vdwg.mxu0
  %8339 = vmatpush.bf16.msra.mxu0 %v5251
  %8340 = vmatpush.bf16.msra.mxu0 %v5247
  %8341 = vmatpush.bf16.msra.mxu0 %v5243
  %8342 = vmatpush.bf16.msra.mxu0 %v5239
  %8343 = vmatpush.bf16.msra.mxu0 %v5235
  %8344 = vmatpush.bf16.msra.mxu0 %v5231
  %8345 = vmatpush.bf16.msra.mxu0 %v5227
  %8346 = vmatpush.bf16.msra.mxu0 %v5223
  %8347 = vmatmul.bf16.gmra.mxu0 %v2781
  %v8348 = vpop.f32.mrf.mxu0
  %v8349 = vadd.f32 %v8270, %v8348
  %v8350 = vpop.f32.mrf.mxu0
  %v8351 = vadd.f32 %v8272, %v8350
  %8352 = vmatmul.bf16.gmra.mxu0 %v2784
  %v8353 = vpop.f32.mrf.mxu0
  %v8354 = vadd.f32 %v8275, %v8353
  %v8355 = vpop.f32.mrf.mxu0
  %v8356 = vadd.f32 %v8277, %v8355
  %8357 = vmatmul.bf16.gmra.mxu0 %v2787
  %v8358 = vpop.f32.mrf.mxu0
  %v8359 = vadd.f32 %v8280, %v8358
  %v8360 = vpop.f32.mrf.mxu0
  %v8361 = vadd.f32 %v8282, %v8360
  %8362 = vmatmul.bf16.gmra.mxu0 %v2790
  %v8363 = vpop.f32.mrf.mxu0
  %v8364 = vadd.f32 %v8285, %v8363
  %v8365 = vpop.f32.mrf.mxu0
  %v8366 = vadd.f32 %v8287, %v8365
  %8367 = vmatmul.bf16.gmra.mxu0 %v2793
  %v8368 = vpop.f32.mrf.mxu0
  %v8369 = vadd.f32 %v8290, %v8368
  %v8370 = vpop.f32.mrf.mxu0
  %v8371 = vadd.f32 %v8292, %v8370
  %8372 = vmatmul.bf16.gmra.mxu0 %v2796
  %v8373 = vpop.f32.mrf.mxu0
  %v8374 = vadd.f32 %v8295, %v8373
  %v8375 = vpop.f32.mrf.mxu0
  %v8376 = vadd.f32 %v8297, %v8375
  %8377 = vmatmul.bf16.gmra.mxu0 %v2799
  %v8378 = vpop.f32.mrf.mxu0
  %v8379 = vadd.f32 %v8300, %v8378
  %v8380 = vpop.f32.mrf.mxu0
  %v8381 = vadd.f32 %v8302, %v8380
  %8382 = vmatmul.bf16.gmra.mxu0 %v2802
  %v8383 = vpop.f32.mrf.mxu0
  %v8384 = vadd.f32 %v8305, %v8383
  %v8385 = vpop.f32.mrf.mxu0
  %v8386 = vadd.f32 %v8307, %v8385
  %8387 = vmatmul.bf16.gmra.mxu0 %v2805
  %v8388 = vpop.f32.mrf.mxu0
  %v8389 = vadd.f32 %v8310, %v8388
  %v8390 = vpop.f32.mrf.mxu0
  %v8391 = vadd.f32 %v8312, %v8390
  %8392 = vmatmul.bf16.gmra.mxu0 %v2808
  %v8393 = vpop.f32.mrf.mxu0
  %v8394 = vadd.f32 %v8315, %v8393
  %v8395 = vpop.f32.mrf.mxu0
  %v8396 = vadd.f32 %v8317, %v8395
  %8397 = vmatmul.bf16.gmra.mxu0 %v2849
  %v8398 = vpop.f32.mrf.mxu0
  %v8399 = vadd.f32 %v8320, %v8398
  %v8400 = vpop.f32.mrf.mxu0
  %v8401 = vadd.f32 %v8322, %v8400
  %8402 = vmatmul.bf16.gmra.mxu0 %v2989
  %v8403 = vpop.f32.mrf.mxu0
  %v8404 = vadd.f32 %v8325, %v8403
  %v8405 = vpop.f32.mrf.mxu0
  %v8406 = vadd.f32 %v8327, %v8405
  %8407 = vmatmul.bf16.gmra.mxu0 %v3129
  %v8408 = vpop.f32.mrf.mxu0
  %v8409 = vadd.f32 %v8330, %v8408
  %v8410 = vpop.f32.mrf.mxu0
  %v8411 = vadd.f32 %v8332, %v8410
  %8412 = vmatmul.bf16.gmra.mxu0 %v3283
  %v8413 = vpop.f32.mrf.mxu0
  %v8414 = vadd.f32 %v8335, %v8413
  %v8415 = vpop.f32.mrf.mxu0
  %v8416 = vadd.f32 %v8337, %v8415
  %8417 = vdwg.mxu0
  %8418 = vmatpush.bf16.msra.mxu0 0
  %8419 = vmatpush.bf16.msra.mxu0 0
  %8420 = vmatpush.bf16.msra.mxu0 0
  %8421 = vmatpush.bf16.msra.mxu0 0
  %8422 = vmatpush.bf16.msra.mxu0 0
  %8423 = vmatpush.bf16.msra.mxu0 0
  %8424 = vmatpush.bf16.msra.mxu0 %v5259
  %8425 = vmatpush.bf16.msra.mxu0 %v5255
  %8426 = vmatmul.bf16.gmra.mxu0 %v5621
  %v8427 = vpop.f32.mrf.mxu0
  %v8428 = vadd.f32 %v8349, %v8427
  %v8429 = vpop.f32.mrf.mxu0
  %v8430 = vadd.f32 %v8351, %v8429
  %8431 = vmatmul.bf16.gmra.mxu0 %v5623
  %v8432 = vpop.f32.mrf.mxu0
  %v8433 = vadd.f32 %v8354, %v8432
  %v8434 = vpop.f32.mrf.mxu0
  %v8435 = vadd.f32 %v8356, %v8434
  %8436 = vmatmul.bf16.gmra.mxu0 %v5625
  %v8437 = vpop.f32.mrf.mxu0
  %v8438 = vadd.f32 %v8359, %v8437
  %v8439 = vpop.f32.mrf.mxu0
  %v8440 = vadd.f32 %v8361, %v8439
  %8441 = vmatmul.bf16.gmra.mxu0 %v5627
  %v8442 = vpop.f32.mrf.mxu0
  %v8443 = vadd.f32 %v8364, %v8442
  %v8444 = vpop.f32.mrf.mxu0
  %v8445 = vadd.f32 %v8366, %v8444
  %8446 = vmatmul.bf16.gmra.mxu0 %v5629
  %v8447 = vpop.f32.mrf.mxu0
  %v8448 = vadd.f32 %v8369, %v8447
  %v8449 = vpop.f32.mrf.mxu0
  %v8450 = vadd.f32 %v8371, %v8449
  %8451 = vmatmul.bf16.gmra.mxu0 %v5631
  %v8452 = vpop.f32.mrf.mxu0
  %v8453 = vadd.f32 %v8374, %v8452
  %v8454 = vpop.f32.mrf.mxu0
  %v8455 = vadd.f32 %v8376, %v8454
  %8456 = vmatmul.bf16.gmra.mxu0 %v5633
  %v8457 = vpop.f32.mrf.mxu0
  %v8458 = vadd.f32 %v8379, %v8457
  %v8459 = vpop.f32.mrf.mxu0
  %v8460 = vadd.f32 %v8381, %v8459
  %8461 = vmatmul.bf16.gmra.mxu0 %v5635
  %v8462 = vpop.f32.mrf.mxu0
  %v8463 = vadd.f32 %v8384, %v8462
  %v8464 = vpop.f32.mrf.mxu0
  %v8465 = vadd.f32 %v8386, %v8464
  %8466 = vmatmul.bf16.gmra.mxu0 %v5637
  %v8467 = vpop.f32.mrf.mxu0
  %v8468 = vadd.f32 %v8389, %v8467
  %v8469 = vpop.f32.mrf.mxu0
  %v8470 = vadd.f32 %v8391, %v8469
  %8471 = vmatmul.bf16.gmra.mxu0 %v5639
  %v8472 = vpop.f32.mrf.mxu0
  %v8473 = vadd.f32 %v8394, %v8472
  %v8474 = vpop.f32.mrf.mxu0
  %v8475 = vadd.f32 %v8396, %v8474
  %8476 = vmatmul.bf16.gmra.mxu0 %v5642
  %v8477 = vpop.f32.mrf.mxu0
  %v8478 = vadd.f32 %v8399, %v8477
  %v8479 = vpop.f32.mrf.mxu0
  %v8480 = vadd.f32 %v8401, %v8479
  %8481 = vmatmul.bf16.gmra.mxu0 %v5645
  %v8482 = vpop.f32.mrf.mxu0
  %v8483 = vadd.f32 %v8404, %v8482
  %v8484 = vpop.f32.mrf.mxu0
  %v8485 = vadd.f32 %v8406, %v8484
  %8486 = vmatmul.bf16.gmra.mxu0 %v5648
  %v8487 = vpop.f32.mrf.mxu0
  %v8488 = vadd.f32 %v8409, %v8487
  %v8489 = vpop.f32.mrf.mxu0
  %v8490 = vadd.f32 %v8411, %v8489
  %8491 = vmatmul.bf16.gmra.mxu0 %v5651
  %v8492 = vpop.f32.mrf.mxu0
  %v8493 = vadd.f32 %v8414, %v8492
  %v8494 = vpop.f32.mrf.mxu0
  %v8495 = vadd.f32 %v8416, %v8494
  %8496 = vdwg.mxu0
  %8497 = vmatpush.bf16.msra.mxu0 %v4932
  %8498 = vmatpush.bf16.msra.mxu0 %v4928
  %8499 = vmatpush.bf16.msra.mxu0 %v4924
  %8500 = vmatpush.bf16.msra.mxu0 %v4920
  %8501 = vmatpush.bf16.msra.mxu0 %v4916
  %8502 = vmatpush.bf16.msra.mxu0 %v4912
  %8503 = vmatpush.bf16.msra.mxu0 %v4908
  %8504 = vmatpush.bf16.msra.mxu0 %v4904
  %8505 = vmatmul.bf16.gmra.mxu0 %v2768
  %v8506 = vpop.f32.mrf.mxu0
  %v8507 = vadd.f32 0.0, %v8506
  %v8508 = vpop.f32.mrf.mxu0
  %v8509 = vadd.f32 0.0, %v8508
  %8510 = vmatmul.bf16.gmra.mxu0 %v2771
  %v8511 = vpop.f32.mrf.mxu0
  %v8512 = vadd.f32 0.0, %v8511
  %v8513 = vpop.f32.mrf.mxu0
  %v8514 = vadd.f32 0.0, %v8513
  %8515 = vmatmul.bf16.gmra.mxu0 %v2774
  %v8516 = vpop.f32.mrf.mxu0
  %v8517 = vadd.f32 0.0, %v8516
  %v8518 = vpop.f32.mrf.mxu0
  %v8519 = vadd.f32 0.0, %v8518
  %8520 = vmatmul.bf16.gmra.mxu0 %v2777
  %v8521 = vpop.f32.mrf.mxu0
  %v8522 = vadd.f32 0.0, %v8521
  %v8523 = vpop.f32.mrf.mxu0
  %v8524 = vadd.f32 0.0, %v8523
  %8525 = vmatmul.bf16.gmra.mxu0 %v2780
  %v8526 = vpop.f32.mrf.mxu0
  %v8527 = vadd.f32 0.0, %v8526
  %v8528 = vpop.f32.mrf.mxu0
  %v8529 = vadd.f32 0.0, %v8528
  %8530 = vmatmul.bf16.gmra.mxu0 %v2783
  %v8531 = vpop.f32.mrf.mxu0
  %v8532 = vadd.f32 0.0, %v8531
  %v8533 = vpop.f32.mrf.mxu0
  %v8534 = vadd.f32 0.0, %v8533
  %8535 = vmatmul.bf16.gmra.mxu0 %v2786
  %v8536 = vpop.f32.mrf.mxu0
  %v8537 = vadd.f32 0.0, %v8536
  %v8538 = vpop.f32.mrf.mxu0
  %v8539 = vadd.f32 0.0, %v8538
  %8540 = vmatmul.bf16.gmra.mxu0 %v2789
  %v8541 = vpop.f32.mrf.mxu0
  %v8542 = vadd.f32 0.0, %v8541
  %v8543 = vpop.f32.mrf.mxu0
  %v8544 = vadd.f32 0.0, %v8543
  %8545 = vmatmul.bf16.gmra.mxu0 %v2792
  %v8546 = vpop.f32.mrf.mxu0
  %v8547 = vadd.f32 0.0, %v8546
  %v8548 = vpop.f32.mrf.mxu0
  %v8549 = vadd.f32 0.0, %v8548
  %8550 = vmatmul.bf16.gmra.mxu0 %v2795
  %v8551 = vpop.f32.mrf.mxu0
  %v8552 = vadd.f32 0.0, %v8551
  %v8553 = vpop.f32.mrf.mxu0
  %v8554 = vadd.f32 0.0, %v8553
  %8555 = vmatmul.bf16.gmra.mxu0 %v2798
  %v8556 = vpop.f32.mrf.mxu0
  %v8557 = vadd.f32 0.0, %v8556
  %v8558 = vpop.f32.mrf.mxu0
  %v8559 = vadd.f32 0.0, %v8558
  %8560 = vmatmul.bf16.gmra.mxu0 %v2801
  %v8561 = vpop.f32.mrf.mxu0
  %v8562 = vadd.f32 0.0, %v8561
  %v8563 = vpop.f32.mrf.mxu0
  %v8564 = vadd.f32 0.0, %v8563
  %8565 = vmatmul.bf16.gmra.mxu0 %v2804
  %v8566 = vpop.f32.mrf.mxu0
  %v8567 = vadd.f32 0.0, %v8566
  %v8568 = vpop.f32.mrf.mxu0
  %v8569 = vadd.f32 0.0, %v8568
  %8570 = vmatmul.bf16.gmra.mxu0 %v2807
  %v8571 = vpop.f32.mrf.mxu0
  %v8572 = vadd.f32 0.0, %v8571
  %v8573 = vpop.f32.mrf.mxu0
  %v8574 = vadd.f32 0.0, %v8573
  %8575 = vdwg.mxu0
  %8576 = vmatpush.bf16.msra.mxu0 %v4964
  %8577 = vmatpush.bf16.msra.mxu0 %v4960
  %8578 = vmatpush.bf16.msra.mxu0 %v4956
  %8579 = vmatpush.bf16.msra.mxu0 %v4952
  %8580 = vmatpush.bf16.msra.mxu0 %v4948
  %8581 = vmatpush.bf16.msra.mxu0 %v4944
  %8582 = vmatpush.bf16.msra.mxu0 %v4940
  %8583 = vmatpush.bf16.msra.mxu0 %v4936
  %8584 = vmatmul.bf16.gmra.mxu0 %v2769
  %v8585 = vpop.f32.mrf.mxu0
  %v8586 = vadd.f32 %v8507, %v8585
  %v8587 = vpop.f32.mrf.mxu0
  %v8588 = vadd.f32 %v8509, %v8587
  %8589 = vmatmul.bf16.gmra.mxu0 %v2772
  %v8590 = vpop.f32.mrf.mxu0
  %v8591 = vadd.f32 %v8512, %v8590
  %v8592 = vpop.f32.mrf.mxu0
  %v8593 = vadd.f32 %v8514, %v8592
  %8594 = vmatmul.bf16.gmra.mxu0 %v2775
  %v8595 = vpop.f32.mrf.mxu0
  %v8596 = vadd.f32 %v8517, %v8595
  %v8597 = vpop.f32.mrf.mxu0
  %v8598 = vadd.f32 %v8519, %v8597
  %8599 = vmatmul.bf16.gmra.mxu0 %v2778
  %v8600 = vpop.f32.mrf.mxu0
  %v8601 = vadd.f32 %v8522, %v8600
  %v8602 = vpop.f32.mrf.mxu0
  %v8603 = vadd.f32 %v8524, %v8602
  %8604 = vmatmul.bf16.gmra.mxu0 %v2781
  %v8605 = vpop.f32.mrf.mxu0
  %v8606 = vadd.f32 %v8527, %v8605
  %v8607 = vpop.f32.mrf.mxu0
  %v8608 = vadd.f32 %v8529, %v8607
  %8609 = vmatmul.bf16.gmra.mxu0 %v2784
  %v8610 = vpop.f32.mrf.mxu0
  %v8611 = vadd.f32 %v8532, %v8610
  %v8612 = vpop.f32.mrf.mxu0
  %v8613 = vadd.f32 %v8534, %v8612
  %8614 = vmatmul.bf16.gmra.mxu0 %v2787
  %v8615 = vpop.f32.mrf.mxu0
  %v8616 = vadd.f32 %v8537, %v8615
  %v8617 = vpop.f32.mrf.mxu0
  %v8618 = vadd.f32 %v8539, %v8617
  %8619 = vmatmul.bf16.gmra.mxu0 %v2790
  %v8620 = vpop.f32.mrf.mxu0
  %v8621 = vadd.f32 %v8542, %v8620
  %v8622 = vpop.f32.mrf.mxu0
  %v8623 = vadd.f32 %v8544, %v8622
  %8624 = vmatmul.bf16.gmra.mxu0 %v2793
  %v8625 = vpop.f32.mrf.mxu0
  %v8626 = vadd.f32 %v8547, %v8625
  %v8627 = vpop.f32.mrf.mxu0
  %v8628 = vadd.f32 %v8549, %v8627
  %8629 = vmatmul.bf16.gmra.mxu0 %v2796
  %v8630 = vpop.f32.mrf.mxu0
  %v8631 = vadd.f32 %v8552, %v8630
  %v8632 = vpop.f32.mrf.mxu0
  %v8633 = vadd.f32 %v8554, %v8632
  %8634 = vmatmul.bf16.gmra.mxu0 %v2799
  %v8635 = vpop.f32.mrf.mxu0
  %v8636 = vadd.f32 %v8557, %v8635
  %v8637 = vpop.f32.mrf.mxu0
  %v8638 = vadd.f32 %v8559, %v8637
  %8639 = vmatmul.bf16.gmra.mxu0 %v2802
  %v8640 = vpop.f32.mrf.mxu0
  %v8641 = vadd.f32 %v8562, %v8640
  %v8642 = vpop.f32.mrf.mxu0
  %v8643 = vadd.f32 %v8564, %v8642
  %8644 = vmatmul.bf16.gmra.mxu0 %v2805
  %v8645 = vpop.f32.mrf.mxu0
  %v8646 = vadd.f32 %v8567, %v8645
  %v8647 = vpop.f32.mrf.mxu0
  %v8648 = vadd.f32 %v8569, %v8647
  %8649 = vmatmul.bf16.gmra.mxu0 %v2808
  %v8650 = vpop.f32.mrf.mxu0
  %v8651 = vadd.f32 %v8572, %v8650
  %v8652 = vpop.f32.mrf.mxu0
  %v8653 = vadd.f32 %v8574, %v8652
  %8654 = vdwg.mxu0
  %8655 = vmatpush.bf16.msra.mxu0 %v4996
  %8656 = vmatpush.bf16.msra.mxu0 %v4992
  %8657 = vmatpush.bf16.msra.mxu0 %v4988
  %8658 = vmatpush.bf16.msra.mxu0 %v4984
  %8659 = vmatpush.bf16.msra.mxu0 %v4980
  %8660 = vmatpush.bf16.msra.mxu0 %v4976
  %8661 = vmatpush.bf16.msra.mxu0 %v4972
  %8662 = vmatpush.bf16.msra.mxu0 %v4968
  %8663 = vmatmul.bf16.gmra.mxu0 %v3295
  %v8664 = vpop.f32.mrf.mxu0
  %v8665 = vadd.f32 %v8586, %v8664
  %v8666 = vpop.f32.mrf.mxu0
  %v8667 = vadd.f32 %v8588, %v8666
  %8668 = vmatmul.bf16.gmra.mxu0 %v3299
  %v8669 = vpop.f32.mrf.mxu0
  %v8670 = vadd.f32 %v8591, %v8669
  %v8671 = vpop.f32.mrf.mxu0
  %v8672 = vadd.f32 %v8593, %v8671
  %8673 = vmatmul.bf16.gmra.mxu0 %v3303
  %v8674 = vpop.f32.mrf.mxu0
  %v8675 = vadd.f32 %v8596, %v8674
  %v8676 = vpop.f32.mrf.mxu0
  %v8677 = vadd.f32 %v8598, %v8676
  %8678 = vmatmul.bf16.gmra.mxu0 %v3307
  %v8679 = vpop.f32.mrf.mxu0
  %v8680 = vadd.f32 %v8601, %v8679
  %v8681 = vpop.f32.mrf.mxu0
  %v8682 = vadd.f32 %v8603, %v8681
  %8683 = vmatmul.bf16.gmra.mxu0 %v3311
  %v8684 = vpop.f32.mrf.mxu0
  %v8685 = vadd.f32 %v8606, %v8684
  %v8686 = vpop.f32.mrf.mxu0
  %v8687 = vadd.f32 %v8608, %v8686
  %8688 = vmatmul.bf16.gmra.mxu0 %v3315
  %v8689 = vpop.f32.mrf.mxu0
  %v8690 = vadd.f32 %v8611, %v8689
  %v8691 = vpop.f32.mrf.mxu0
  %v8692 = vadd.f32 %v8613, %v8691
  %8693 = vmatmul.bf16.gmra.mxu0 %v3319
  %v8694 = vpop.f32.mrf.mxu0
  %v8695 = vadd.f32 %v8616, %v8694
  %v8696 = vpop.f32.mrf.mxu0
  %v8697 = vadd.f32 %v8618, %v8696
  %8698 = vmatmul.bf16.gmra.mxu0 %v3323
  %v8699 = vpop.f32.mrf.mxu0
  %v8700 = vadd.f32 %v8621, %v8699
  %v8701 = vpop.f32.mrf.mxu0
  %v8702 = vadd.f32 %v8623, %v8701
  %8703 = vmatmul.bf16.gmra.mxu0 %v3327
  %v8704 = vpop.f32.mrf.mxu0
  %v8705 = vadd.f32 %v8626, %v8704
  %v8706 = vpop.f32.mrf.mxu0
  %v8707 = vadd.f32 %v8628, %v8706
  %8708 = vmatmul.bf16.gmra.mxu0 %v3331
  %v8709 = vpop.f32.mrf.mxu0
  %v8710 = vadd.f32 %v8631, %v8709
  %v8711 = vpop.f32.mrf.mxu0
  %v8712 = vadd.f32 %v8633, %v8711
  %8713 = vmatmul.bf16.gmra.mxu0 %v3335
  %v8714 = vpop.f32.mrf.mxu0
  %v8715 = vadd.f32 %v8636, %v8714
  %v8716 = vpop.f32.mrf.mxu0
  %v8717 = vadd.f32 %v8638, %v8716
  %8718 = vmatmul.bf16.gmra.mxu0 %v3339
  %v8719 = vpop.f32.mrf.mxu0
  %v8720 = vadd.f32 %v8641, %v8719
  %v8721 = vpop.f32.mrf.mxu0
  %v8722 = vadd.f32 %v8643, %v8721
  %8723 = vmatmul.bf16.gmra.mxu0 %v3343
  %v8724 = vpop.f32.mrf.mxu0
  %v8725 = vadd.f32 %v8646, %v8724
  %v8726 = vpop.f32.mrf.mxu0
  %v8727 = vadd.f32 %v8648, %v8726
  %8728 = vmatmul.bf16.gmra.mxu0 %v3347
  %v8729 = vpop.f32.mrf.mxu0
  %v8730 = vadd.f32 %v8651, %v8729
  %v8731 = vpop.f32.mrf.mxu0
  %v8732 = vadd.f32 %v8653, %v8731
  %8733 = vdwg.mxu0
  %8734 = vmatpush.bf16.msra.mxu0 %v5028
  %8735 = vmatpush.bf16.msra.mxu0 %v5024
  %8736 = vmatpush.bf16.msra.mxu0 %v5020
  %8737 = vmatpush.bf16.msra.mxu0 %v5016
  %8738 = vmatpush.bf16.msra.mxu0 %v5012
  %8739 = vmatpush.bf16.msra.mxu0 %v5008
  %8740 = vmatpush.bf16.msra.mxu0 %v5004
  %8741 = vmatpush.bf16.msra.mxu0 %v5000
  %8742 = vmatmul.bf16.gmra.mxu0 %v2936
  %v8743 = vpop.f32.mrf.mxu0
  %v8744 = vadd.f32 %v8665, %v8743
  %v8745 = vpop.f32.mrf.mxu0
  %v8746 = vadd.f32 %v8667, %v8745
  %8747 = vmatmul.bf16.gmra.mxu0 %v2938
  %v8748 = vpop.f32.mrf.mxu0
  %v8749 = vadd.f32 %v8670, %v8748
  %v8750 = vpop.f32.mrf.mxu0
  %v8751 = vadd.f32 %v8672, %v8750
  %8752 = vmatmul.bf16.gmra.mxu0 %v2940
  %v8753 = vpop.f32.mrf.mxu0
  %v8754 = vadd.f32 %v8675, %v8753
  %v8755 = vpop.f32.mrf.mxu0
  %v8756 = vadd.f32 %v8677, %v8755
  %8757 = vmatmul.bf16.gmra.mxu0 %v2942
  %v8758 = vpop.f32.mrf.mxu0
  %v8759 = vadd.f32 %v8680, %v8758
  %v8760 = vpop.f32.mrf.mxu0
  %v8761 = vadd.f32 %v8682, %v8760
  %8762 = vmatmul.bf16.gmra.mxu0 %v2944
  %v8763 = vpop.f32.mrf.mxu0
  %v8764 = vadd.f32 %v8685, %v8763
  %v8765 = vpop.f32.mrf.mxu0
  %v8766 = vadd.f32 %v8687, %v8765
  %8767 = vmatmul.bf16.gmra.mxu0 %v2946
  %v8768 = vpop.f32.mrf.mxu0
  %v8769 = vadd.f32 %v8690, %v8768
  %v8770 = vpop.f32.mrf.mxu0
  %v8771 = vadd.f32 %v8692, %v8770
  %8772 = vmatmul.bf16.gmra.mxu0 %v2948
  %v8773 = vpop.f32.mrf.mxu0
  %v8774 = vadd.f32 %v8695, %v8773
  %v8775 = vpop.f32.mrf.mxu0
  %v8776 = vadd.f32 %v8697, %v8775
  %8777 = vmatmul.bf16.gmra.mxu0 %v2950
  %v8778 = vpop.f32.mrf.mxu0
  %v8779 = vadd.f32 %v8700, %v8778
  %v8780 = vpop.f32.mrf.mxu0
  %v8781 = vadd.f32 %v8702, %v8780
  %8782 = vmatmul.bf16.gmra.mxu0 %v2952
  %v8783 = vpop.f32.mrf.mxu0
  %v8784 = vadd.f32 %v8705, %v8783
  %v8785 = vpop.f32.mrf.mxu0
  %v8786 = vadd.f32 %v8707, %v8785
  %8787 = vmatmul.bf16.gmra.mxu0 %v2954
  %v8788 = vpop.f32.mrf.mxu0
  %v8789 = vadd.f32 %v8710, %v8788
  %v8790 = vpop.f32.mrf.mxu0
  %v8791 = vadd.f32 %v8712, %v8790
  %8792 = vmatmul.bf16.gmra.mxu0 %v2956
  %v8793 = vpop.f32.mrf.mxu0
  %v8794 = vadd.f32 %v8715, %v8793
  %v8795 = vpop.f32.mrf.mxu0
  %v8796 = vadd.f32 %v8717, %v8795
  %8797 = vmatmul.bf16.gmra.mxu0 %v2958
  %v8798 = vpop.f32.mrf.mxu0
  %v8799 = vadd.f32 %v8720, %v8798
  %v8800 = vpop.f32.mrf.mxu0
  %v8801 = vadd.f32 %v8722, %v8800
  %8802 = vmatmul.bf16.gmra.mxu0 %v2960
  %v8803 = vpop.f32.mrf.mxu0
  %v8804 = vadd.f32 %v8725, %v8803
  %v8805 = vpop.f32.mrf.mxu0
  %v8806 = vadd.f32 %v8727, %v8805
  %8807 = vmatmul.bf16.gmra.mxu0 %v2962
  %v8808 = vpop.f32.mrf.mxu0
  %v8809 = vadd.f32 %v8730, %v8808
  %v8810 = vpop.f32.mrf.mxu0
  %v8811 = vadd.f32 %v8732, %v8810
  %8812 = vdwg.mxu0
  %8813 = vmatpush.bf16.msra.mxu0 %v5060
  %8814 = vmatpush.bf16.msra.mxu0 %v5056
  %8815 = vmatpush.bf16.msra.mxu0 %v5052
  %8816 = vmatpush.bf16.msra.mxu0 %v5048
  %8817 = vmatpush.bf16.msra.mxu0 %v5044
  %8818 = vmatpush.bf16.msra.mxu0 %v5040
  %8819 = vmatpush.bf16.msra.mxu0 %v5036
  %8820 = vmatpush.bf16.msra.mxu0 %v5032
  %8821 = vmatmul.bf16.gmra.mxu0 %v3351
  %v8822 = vpop.f32.mrf.mxu0
  %v8823 = vadd.f32 %v8744, %v8822
  %v8824 = vpop.f32.mrf.mxu0
  %v8825 = vadd.f32 %v8746, %v8824
  %8826 = vmatmul.bf16.gmra.mxu0 %v3355
  %v8827 = vpop.f32.mrf.mxu0
  %v8828 = vadd.f32 %v8749, %v8827
  %v8829 = vpop.f32.mrf.mxu0
  %v8830 = vadd.f32 %v8751, %v8829
  %8831 = vmatmul.bf16.gmra.mxu0 %v3359
  %v8832 = vpop.f32.mrf.mxu0
  %v8833 = vadd.f32 %v8754, %v8832
  %v8834 = vpop.f32.mrf.mxu0
  %v8835 = vadd.f32 %v8756, %v8834
  %8836 = vmatmul.bf16.gmra.mxu0 %v3363
  %v8837 = vpop.f32.mrf.mxu0
  %v8838 = vadd.f32 %v8759, %v8837
  %v8839 = vpop.f32.mrf.mxu0
  %v8840 = vadd.f32 %v8761, %v8839
  %8841 = vmatmul.bf16.gmra.mxu0 %v3367
  %v8842 = vpop.f32.mrf.mxu0
  %v8843 = vadd.f32 %v8764, %v8842
  %v8844 = vpop.f32.mrf.mxu0
  %v8845 = vadd.f32 %v8766, %v8844
  %8846 = vmatmul.bf16.gmra.mxu0 %v3371
  %v8847 = vpop.f32.mrf.mxu0
  %v8848 = vadd.f32 %v8769, %v8847
  %v8849 = vpop.f32.mrf.mxu0
  %v8850 = vadd.f32 %v8771, %v8849
  %8851 = vmatmul.bf16.gmra.mxu0 %v3375
  %v8852 = vpop.f32.mrf.mxu0
  %v8853 = vadd.f32 %v8774, %v8852
  %v8854 = vpop.f32.mrf.mxu0
  %v8855 = vadd.f32 %v8776, %v8854
  %8856 = vmatmul.bf16.gmra.mxu0 %v3379
  %v8857 = vpop.f32.mrf.mxu0
  %v8858 = vadd.f32 %v8779, %v8857
  %v8859 = vpop.f32.mrf.mxu0
  %v8860 = vadd.f32 %v8781, %v8859
  %8861 = vmatmul.bf16.gmra.mxu0 %v3383
  %v8862 = vpop.f32.mrf.mxu0
  %v8863 = vadd.f32 %v8784, %v8862
  %v8864 = vpop.f32.mrf.mxu0
  %v8865 = vadd.f32 %v8786, %v8864
  %8866 = vmatmul.bf16.gmra.mxu0 %v3387
  %v8867 = vpop.f32.mrf.mxu0
  %v8868 = vadd.f32 %v8789, %v8867
  %v8869 = vpop.f32.mrf.mxu0
  %v8870 = vadd.f32 %v8791, %v8869
  %8871 = vmatmul.bf16.gmra.mxu0 %v3391
  %v8872 = vpop.f32.mrf.mxu0
  %v8873 = vadd.f32 %v8794, %v8872
  %v8874 = vpop.f32.mrf.mxu0
  %v8875 = vadd.f32 %v8796, %v8874
  %8876 = vmatmul.bf16.gmra.mxu0 %v3395
  %v8877 = vpop.f32.mrf.mxu0
  %v8878 = vadd.f32 %v8799, %v8877
  %v8879 = vpop.f32.mrf.mxu0
  %v8880 = vadd.f32 %v8801, %v8879
  %8881 = vmatmul.bf16.gmra.mxu0 %v3399
  %v8882 = vpop.f32.mrf.mxu0
  %v8883 = vadd.f32 %v8804, %v8882
  %v8884 = vpop.f32.mrf.mxu0
  %v8885 = vadd.f32 %v8806, %v8884
  %8886 = vmatmul.bf16.gmra.mxu0 %v3403
  %v8887 = vpop.f32.mrf.mxu0
  %v8888 = vadd.f32 %v8809, %v8887
  %v8889 = vpop.f32.mrf.mxu0
  %v8890 = vadd.f32 %v8811, %v8889
  %8891 = vdwg.mxu0
  %8892 = vmatpush.bf16.msra.mxu0 %v5092
  %8893 = vmatpush.bf16.msra.mxu0 %v5088
  %8894 = vmatpush.bf16.msra.mxu0 %v5084
  %8895 = vmatpush.bf16.msra.mxu0 %v5080
  %8896 = vmatpush.bf16.msra.mxu0 %v5076
  %8897 = vmatpush.bf16.msra.mxu0 %v5072
  %8898 = vmatpush.bf16.msra.mxu0 %v5068
  %8899 = vmatpush.bf16.msra.mxu0 %v5064
  %8900 = vmatmul.bf16.gmra.mxu0 %v3076
  %v8901 = vpop.f32.mrf.mxu0
  %v8902 = vadd.f32 %v8823, %v8901
  %v8903 = vpop.f32.mrf.mxu0
  %v8904 = vadd.f32 %v8825, %v8903
  %8905 = vmatmul.bf16.gmra.mxu0 %v3078
  %v8906 = vpop.f32.mrf.mxu0
  %v8907 = vadd.f32 %v8828, %v8906
  %v8908 = vpop.f32.mrf.mxu0
  %v8909 = vadd.f32 %v8830, %v8908
  %8910 = vmatmul.bf16.gmra.mxu0 %v3080
  %v8911 = vpop.f32.mrf.mxu0
  %v8912 = vadd.f32 %v8833, %v8911
  %v8913 = vpop.f32.mrf.mxu0
  %v8914 = vadd.f32 %v8835, %v8913
  %8915 = vmatmul.bf16.gmra.mxu0 %v3082
  %v8916 = vpop.f32.mrf.mxu0
  %v8917 = vadd.f32 %v8838, %v8916
  %v8918 = vpop.f32.mrf.mxu0
  %v8919 = vadd.f32 %v8840, %v8918
  %8920 = vmatmul.bf16.gmra.mxu0 %v3084
  %v8921 = vpop.f32.mrf.mxu0
  %v8922 = vadd.f32 %v8843, %v8921
  %v8923 = vpop.f32.mrf.mxu0
  %v8924 = vadd.f32 %v8845, %v8923
  %8925 = vmatmul.bf16.gmra.mxu0 %v3086
  %v8926 = vpop.f32.mrf.mxu0
  %v8927 = vadd.f32 %v8848, %v8926
  %v8928 = vpop.f32.mrf.mxu0
  %v8929 = vadd.f32 %v8850, %v8928
  %8930 = vmatmul.bf16.gmra.mxu0 %v3088
  %v8931 = vpop.f32.mrf.mxu0
  %v8932 = vadd.f32 %v8853, %v8931
  %v8933 = vpop.f32.mrf.mxu0
  %v8934 = vadd.f32 %v8855, %v8933
  %8935 = vmatmul.bf16.gmra.mxu0 %v3090
  %v8936 = vpop.f32.mrf.mxu0
  %v8937 = vadd.f32 %v8858, %v8936
  %v8938 = vpop.f32.mrf.mxu0
  %v8939 = vadd.f32 %v8860, %v8938
  %8940 = vmatmul.bf16.gmra.mxu0 %v3092
  %v8941 = vpop.f32.mrf.mxu0
  %v8942 = vadd.f32 %v8863, %v8941
  %v8943 = vpop.f32.mrf.mxu0
  %v8944 = vadd.f32 %v8865, %v8943
  %8945 = vmatmul.bf16.gmra.mxu0 %v3094
  %v8946 = vpop.f32.mrf.mxu0
  %v8947 = vadd.f32 %v8868, %v8946
  %v8948 = vpop.f32.mrf.mxu0
  %v8949 = vadd.f32 %v8870, %v8948
  %8950 = vmatmul.bf16.gmra.mxu0 %v3096
  %v8951 = vpop.f32.mrf.mxu0
  %v8952 = vadd.f32 %v8873, %v8951
  %v8953 = vpop.f32.mrf.mxu0
  %v8954 = vadd.f32 %v8875, %v8953
  %8955 = vmatmul.bf16.gmra.mxu0 %v3098
  %v8956 = vpop.f32.mrf.mxu0
  %v8957 = vadd.f32 %v8878, %v8956
  %v8958 = vpop.f32.mrf.mxu0
  %v8959 = vadd.f32 %v8880, %v8958
  %8960 = vmatmul.bf16.gmra.mxu0 %v3100
  %v8961 = vpop.f32.mrf.mxu0
  %v8962 = vadd.f32 %v8883, %v8961
  %v8963 = vpop.f32.mrf.mxu0
  %v8964 = vadd.f32 %v8885, %v8963
  %8965 = vmatmul.bf16.gmra.mxu0 %v3102
  %v8966 = vpop.f32.mrf.mxu0
  %v8967 = vadd.f32 %v8888, %v8966
  %v8968 = vpop.f32.mrf.mxu0
  %v8969 = vadd.f32 %v8890, %v8968
  %8970 = vdwg.mxu0
  %8971 = vmatpush.bf16.msra.mxu0 %v5124
  %8972 = vmatpush.bf16.msra.mxu0 %v5120
  %8973 = vmatpush.bf16.msra.mxu0 %v5116
  %8974 = vmatpush.bf16.msra.mxu0 %v5112
  %8975 = vmatpush.bf16.msra.mxu0 %v5108
  %8976 = vmatpush.bf16.msra.mxu0 %v5104
  %8977 = vmatpush.bf16.msra.mxu0 %v5100
  %8978 = vmatpush.bf16.msra.mxu0 %v5096
  %8979 = vmatmul.bf16.gmra.mxu0 %v3407
  %v8980 = vpop.f32.mrf.mxu0
  %v8981 = vadd.f32 %v8902, %v8980
  %v8982 = vpop.f32.mrf.mxu0
  %v8983 = vadd.f32 %v8904, %v8982
  %8984 = vmatmul.bf16.gmra.mxu0 %v3411
  %v8985 = vpop.f32.mrf.mxu0
  %v8986 = vadd.f32 %v8907, %v8985
  %v8987 = vpop.f32.mrf.mxu0
  %v8988 = vadd.f32 %v8909, %v8987
  %8989 = vmatmul.bf16.gmra.mxu0 %v3415
  %v8990 = vpop.f32.mrf.mxu0
  %v8991 = vadd.f32 %v8912, %v8990
  %v8992 = vpop.f32.mrf.mxu0
  %v8993 = vadd.f32 %v8914, %v8992
  %8994 = vmatmul.bf16.gmra.mxu0 %v3419
  %v8995 = vpop.f32.mrf.mxu0
  %v8996 = vadd.f32 %v8917, %v8995
  %v8997 = vpop.f32.mrf.mxu0
  %v8998 = vadd.f32 %v8919, %v8997
  %8999 = vmatmul.bf16.gmra.mxu0 %v3423
  %v9000 = vpop.f32.mrf.mxu0
  %v9001 = vadd.f32 %v8922, %v9000
  %v9002 = vpop.f32.mrf.mxu0
  %v9003 = vadd.f32 %v8924, %v9002
  %9004 = vmatmul.bf16.gmra.mxu0 %v3427
  %v9005 = vpop.f32.mrf.mxu0
  %v9006 = vadd.f32 %v8927, %v9005
  %v9007 = vpop.f32.mrf.mxu0
  %v9008 = vadd.f32 %v8929, %v9007
  %9009 = vmatmul.bf16.gmra.mxu0 %v3431
  %v9010 = vpop.f32.mrf.mxu0
  %v9011 = vadd.f32 %v8932, %v9010
  %v9012 = vpop.f32.mrf.mxu0
  %v9013 = vadd.f32 %v8934, %v9012
  %9014 = vmatmul.bf16.gmra.mxu0 %v3435
  %v9015 = vpop.f32.mrf.mxu0
  %v9016 = vadd.f32 %v8937, %v9015
  %v9017 = vpop.f32.mrf.mxu0
  %v9018 = vadd.f32 %v8939, %v9017
  %9019 = vmatmul.bf16.gmra.mxu0 %v3439
  %v9020 = vpop.f32.mrf.mxu0
  %v9021 = vadd.f32 %v8942, %v9020
  %v9022 = vpop.f32.mrf.mxu0
  %v9023 = vadd.f32 %v8944, %v9022
  %9024 = vmatmul.bf16.gmra.mxu0 %v3443
  %v9025 = vpop.f32.mrf.mxu0
  %v9026 = vadd.f32 %v8947, %v9025
  %v9027 = vpop.f32.mrf.mxu0
  %v9028 = vadd.f32 %v8949, %v9027
  %9029 = vmatmul.bf16.gmra.mxu0 %v3447
  %v9030 = vpop.f32.mrf.mxu0
  %v9031 = vadd.f32 %v8952, %v9030
  %v9032 = vpop.f32.mrf.mxu0
  %v9033 = vadd.f32 %v8954, %v9032
  %9034 = vmatmul.bf16.gmra.mxu0 %v3451
  %v9035 = vpop.f32.mrf.mxu0
  %v9036 = vadd.f32 %v8957, %v9035
  %v9037 = vpop.f32.mrf.mxu0
  %v9038 = vadd.f32 %v8959, %v9037
  %9039 = vmatmul.bf16.gmra.mxu0 %v3455
  %v9040 = vpop.f32.mrf.mxu0
  %v9041 = vadd.f32 %v8962, %v9040
  %v9042 = vpop.f32.mrf.mxu0
  %v9043 = vadd.f32 %v8964, %v9042
  %9044 = vmatmul.bf16.gmra.mxu0 %v3459
  %v9045 = vpop.f32.mrf.mxu0
  %v9046 = vadd.f32 %v8967, %v9045
  %v9047 = vpop.f32.mrf.mxu0
  %v9048 = vadd.f32 %v8969, %v9047
  %9049 = vdwg.mxu0
  %9050 = vmatpush.bf16.msra.mxu0 %v5156
  %9051 = vmatpush.bf16.msra.mxu0 %v5152
  %9052 = vmatpush.bf16.msra.mxu0 %v5148
  %9053 = vmatpush.bf16.msra.mxu0 %v5144
  %9054 = vmatpush.bf16.msra.mxu0 %v5140
  %9055 = vmatpush.bf16.msra.mxu0 %v5136
  %9056 = vmatpush.bf16.msra.mxu0 %v5132
  %9057 = vmatpush.bf16.msra.mxu0 %v5128
  %9058 = vmatmul.bf16.gmra.mxu0 %v3216
  %v9059 = vpop.f32.mrf.mxu0
  %v9060 = vadd.f32 %v8981, %v9059
  %v9061 = vpop.f32.mrf.mxu0
  %v9062 = vadd.f32 %v8983, %v9061
  %9063 = vmatmul.bf16.gmra.mxu0 %v3218
  %v9064 = vpop.f32.mrf.mxu0
  %v9065 = vadd.f32 %v8986, %v9064
  %v9066 = vpop.f32.mrf.mxu0
  %v9067 = vadd.f32 %v8988, %v9066
  %9068 = vmatmul.bf16.gmra.mxu0 %v3220
  %v9069 = vpop.f32.mrf.mxu0
  %v9070 = vadd.f32 %v8991, %v9069
  %v9071 = vpop.f32.mrf.mxu0
  %v9072 = vadd.f32 %v8993, %v9071
  %9073 = vmatmul.bf16.gmra.mxu0 %v3222
  %v9074 = vpop.f32.mrf.mxu0
  %v9075 = vadd.f32 %v8996, %v9074
  %v9076 = vpop.f32.mrf.mxu0
  %v9077 = vadd.f32 %v8998, %v9076
  %9078 = vmatmul.bf16.gmra.mxu0 %v3224
  %v9079 = vpop.f32.mrf.mxu0
  %v9080 = vadd.f32 %v9001, %v9079
  %v9081 = vpop.f32.mrf.mxu0
  %v9082 = vadd.f32 %v9003, %v9081
  %9083 = vmatmul.bf16.gmra.mxu0 %v3226
  %v9084 = vpop.f32.mrf.mxu0
  %v9085 = vadd.f32 %v9006, %v9084
  %v9086 = vpop.f32.mrf.mxu0
  %v9087 = vadd.f32 %v9008, %v9086
  %9088 = vmatmul.bf16.gmra.mxu0 %v3228
  %v9089 = vpop.f32.mrf.mxu0
  %v9090 = vadd.f32 %v9011, %v9089
  %v9091 = vpop.f32.mrf.mxu0
  %v9092 = vadd.f32 %v9013, %v9091
  %9093 = vmatmul.bf16.gmra.mxu0 %v3230
  %v9094 = vpop.f32.mrf.mxu0
  %v9095 = vadd.f32 %v9016, %v9094
  %v9096 = vpop.f32.mrf.mxu0
  %v9097 = vadd.f32 %v9018, %v9096
  %9098 = vmatmul.bf16.gmra.mxu0 %v3232
  %v9099 = vpop.f32.mrf.mxu0
  %v9100 = vadd.f32 %v9021, %v9099
  %v9101 = vpop.f32.mrf.mxu0
  %v9102 = vadd.f32 %v9023, %v9101
  %9103 = vmatmul.bf16.gmra.mxu0 %v3234
  %v9104 = vpop.f32.mrf.mxu0
  %v9105 = vadd.f32 %v9026, %v9104
  %v9106 = vpop.f32.mrf.mxu0
  %v9107 = vadd.f32 %v9028, %v9106
  %9108 = vmatmul.bf16.gmra.mxu0 %v3236
  %v9109 = vpop.f32.mrf.mxu0
  %v9110 = vadd.f32 %v9031, %v9109
  %v9111 = vpop.f32.mrf.mxu0
  %v9112 = vadd.f32 %v9033, %v9111
  %9113 = vmatmul.bf16.gmra.mxu0 %v3238
  %v9114 = vpop.f32.mrf.mxu0
  %v9115 = vadd.f32 %v9036, %v9114
  %v9116 = vpop.f32.mrf.mxu0
  %v9117 = vadd.f32 %v9038, %v9116
  %9118 = vmatmul.bf16.gmra.mxu0 %v3240
  %v9119 = vpop.f32.mrf.mxu0
  %v9120 = vadd.f32 %v9041, %v9119
  %v9121 = vpop.f32.mrf.mxu0
  %v9122 = vadd.f32 %v9043, %v9121
  %9123 = vmatmul.bf16.gmra.mxu0 %v3242
  %v9124 = vpop.f32.mrf.mxu0
  %v9125 = vadd.f32 %v9046, %v9124
  %v9126 = vpop.f32.mrf.mxu0
  %v9127 = vadd.f32 %v9048, %v9126
  %9128 = vdwg.mxu0
  %9129 = vmatpush.bf16.msra.mxu0 %v5188
  %9130 = vmatpush.bf16.msra.mxu0 %v5184
  %9131 = vmatpush.bf16.msra.mxu0 %v5180
  %9132 = vmatpush.bf16.msra.mxu0 %v5176
  %9133 = vmatpush.bf16.msra.mxu0 %v5172
  %9134 = vmatpush.bf16.msra.mxu0 %v5168
  %9135 = vmatpush.bf16.msra.mxu0 %v5164
  %9136 = vmatpush.bf16.msra.mxu0 %v5160
  %9137 = vmatmul.bf16.gmra.mxu0 %v3217
  %v9138 = vpop.f32.mrf.mxu0
  %v9139 = vadd.f32 %v9060, %v9138
  %v9140 = vpop.f32.mrf.mxu0
  %v9141 = vadd.f32 %v9062, %v9140
  %9142 = vmatmul.bf16.gmra.mxu0 %v3219
  %v9143 = vpop.f32.mrf.mxu0
  %v9144 = vadd.f32 %v9065, %v9143
  %v9145 = vpop.f32.mrf.mxu0
  %v9146 = vadd.f32 %v9067, %v9145
  %9147 = vmatmul.bf16.gmra.mxu0 %v3221
  %v9148 = vpop.f32.mrf.mxu0
  %v9149 = vadd.f32 %v9070, %v9148
  %v9150 = vpop.f32.mrf.mxu0
  %v9151 = vadd.f32 %v9072, %v9150
  %9152 = vmatmul.bf16.gmra.mxu0 %v3223
  %v9153 = vpop.f32.mrf.mxu0
  %v9154 = vadd.f32 %v9075, %v9153
  %v9155 = vpop.f32.mrf.mxu0
  %v9156 = vadd.f32 %v9077, %v9155
  %9157 = vmatmul.bf16.gmra.mxu0 %v3225
  %v9158 = vpop.f32.mrf.mxu0
  %v9159 = vadd.f32 %v9080, %v9158
  %v9160 = vpop.f32.mrf.mxu0
  %v9161 = vadd.f32 %v9082, %v9160
  %9162 = vmatmul.bf16.gmra.mxu0 %v3227
  %v9163 = vpop.f32.mrf.mxu0
  %v9164 = vadd.f32 %v9085, %v9163
  %v9165 = vpop.f32.mrf.mxu0
  %v9166 = vadd.f32 %v9087, %v9165
  %9167 = vmatmul.bf16.gmra.mxu0 %v3229
  %v9168 = vpop.f32.mrf.mxu0
  %v9169 = vadd.f32 %v9090, %v9168
  %v9170 = vpop.f32.mrf.mxu0
  %v9171 = vadd.f32 %v9092, %v9170
  %9172 = vmatmul.bf16.gmra.mxu0 %v3231
  %v9173 = vpop.f32.mrf.mxu0
  %v9174 = vadd.f32 %v9095, %v9173
  %v9175 = vpop.f32.mrf.mxu0
  %v9176 = vadd.f32 %v9097, %v9175
  %9177 = vmatmul.bf16.gmra.mxu0 %v3233
  %v9178 = vpop.f32.mrf.mxu0
  %v9179 = vadd.f32 %v9100, %v9178
  %v9180 = vpop.f32.mrf.mxu0
  %v9181 = vadd.f32 %v9102, %v9180
  %9182 = vmatmul.bf16.gmra.mxu0 %v3235
  %v9183 = vpop.f32.mrf.mxu0
  %v9184 = vadd.f32 %v9105, %v9183
  %v9185 = vpop.f32.mrf.mxu0
  %v9186 = vadd.f32 %v9107, %v9185
  %9187 = vmatmul.bf16.gmra.mxu0 %v3237
  %v9188 = vpop.f32.mrf.mxu0
  %v9189 = vadd.f32 %v9110, %v9188
  %v9190 = vpop.f32.mrf.mxu0
  %v9191 = vadd.f32 %v9112, %v9190
  %9192 = vmatmul.bf16.gmra.mxu0 %v3239
  %v9193 = vpop.f32.mrf.mxu0
  %v9194 = vadd.f32 %v9115, %v9193
  %v9195 = vpop.f32.mrf.mxu0
  %v9196 = vadd.f32 %v9117, %v9195
  %9197 = vmatmul.bf16.gmra.mxu0 %v3241
  %v9198 = vpop.f32.mrf.mxu0
  %v9199 = vadd.f32 %v9120, %v9198
  %v9200 = vpop.f32.mrf.mxu0
  %v9201 = vadd.f32 %v9122, %v9200
  %9202 = vmatmul.bf16.gmra.mxu0 %v3243
  %v9203 = vpop.f32.mrf.mxu0
  %v9204 = vadd.f32 %v9125, %v9203
  %v9205 = vpop.f32.mrf.mxu0
  %v9206 = vadd.f32 %v9127, %v9205
  %9207 = vdwg.mxu0
  %9208 = vmatpush.bf16.msra.mxu0 %v5220
  %9209 = vmatpush.bf16.msra.mxu0 %v5216
  %9210 = vmatpush.bf16.msra.mxu0 %v5212
  %9211 = vmatpush.bf16.msra.mxu0 %v5208
  %9212 = vmatpush.bf16.msra.mxu0 %v5204
  %9213 = vmatpush.bf16.msra.mxu0 %v5200
  %9214 = vmatpush.bf16.msra.mxu0 %v5196
  %9215 = vmatpush.bf16.msra.mxu0 %v5192
  %9216 = vmatmul.bf16.gmra.mxu0 %v2780
  %v9217 = vpop.f32.mrf.mxu0
  %v9218 = vadd.f32 %v9139, %v9217
  %v9219 = vpop.f32.mrf.mxu0
  %v9220 = vadd.f32 %v9141, %v9219
  %9221 = vmatmul.bf16.gmra.mxu0 %v2783
  %v9222 = vpop.f32.mrf.mxu0
  %v9223 = vadd.f32 %v9144, %v9222
  %v9224 = vpop.f32.mrf.mxu0
  %v9225 = vadd.f32 %v9146, %v9224
  %9226 = vmatmul.bf16.gmra.mxu0 %v2786
  %v9227 = vpop.f32.mrf.mxu0
  %v9228 = vadd.f32 %v9149, %v9227
  %v9229 = vpop.f32.mrf.mxu0
  %v9230 = vadd.f32 %v9151, %v9229
  %9231 = vmatmul.bf16.gmra.mxu0 %v2789
  %v9232 = vpop.f32.mrf.mxu0
  %v9233 = vadd.f32 %v9154, %v9232
  %v9234 = vpop.f32.mrf.mxu0
  %v9235 = vadd.f32 %v9156, %v9234
  %9236 = vmatmul.bf16.gmra.mxu0 %v2792
  %v9237 = vpop.f32.mrf.mxu0
  %v9238 = vadd.f32 %v9159, %v9237
  %v9239 = vpop.f32.mrf.mxu0
  %v9240 = vadd.f32 %v9161, %v9239
  %9241 = vmatmul.bf16.gmra.mxu0 %v2795
  %v9242 = vpop.f32.mrf.mxu0
  %v9243 = vadd.f32 %v9164, %v9242
  %v9244 = vpop.f32.mrf.mxu0
  %v9245 = vadd.f32 %v9166, %v9244
  %9246 = vmatmul.bf16.gmra.mxu0 %v2798
  %v9247 = vpop.f32.mrf.mxu0
  %v9248 = vadd.f32 %v9169, %v9247
  %v9249 = vpop.f32.mrf.mxu0
  %v9250 = vadd.f32 %v9171, %v9249
  %9251 = vmatmul.bf16.gmra.mxu0 %v2801
  %v9252 = vpop.f32.mrf.mxu0
  %v9253 = vadd.f32 %v9174, %v9252
  %v9254 = vpop.f32.mrf.mxu0
  %v9255 = vadd.f32 %v9176, %v9254
  %9256 = vmatmul.bf16.gmra.mxu0 %v2804
  %v9257 = vpop.f32.mrf.mxu0
  %v9258 = vadd.f32 %v9179, %v9257
  %v9259 = vpop.f32.mrf.mxu0
  %v9260 = vadd.f32 %v9181, %v9259
  %9261 = vmatmul.bf16.gmra.mxu0 %v2807
  %v9262 = vpop.f32.mrf.mxu0
  %v9263 = vadd.f32 %v9184, %v9262
  %v9264 = vpop.f32.mrf.mxu0
  %v9265 = vadd.f32 %v9186, %v9264
  %9266 = vmatmul.bf16.gmra.mxu0 %v2848
  %v9267 = vpop.f32.mrf.mxu0
  %v9268 = vadd.f32 %v9189, %v9267
  %v9269 = vpop.f32.mrf.mxu0
  %v9270 = vadd.f32 %v9191, %v9269
  %9271 = vmatmul.bf16.gmra.mxu0 %v2988
  %v9272 = vpop.f32.mrf.mxu0
  %v9273 = vadd.f32 %v9194, %v9272
  %v9274 = vpop.f32.mrf.mxu0
  %v9275 = vadd.f32 %v9196, %v9274
  %9276 = vmatmul.bf16.gmra.mxu0 %v3128
  %v9277 = vpop.f32.mrf.mxu0
  %v9278 = vadd.f32 %v9199, %v9277
  %v9279 = vpop.f32.mrf.mxu0
  %v9280 = vadd.f32 %v9201, %v9279
  %9281 = vmatmul.bf16.gmra.mxu0 %v3282
  %v9282 = vpop.f32.mrf.mxu0
  %v9283 = vadd.f32 %v9204, %v9282
  %v9284 = vpop.f32.mrf.mxu0
  %v9285 = vadd.f32 %v9206, %v9284
  %9286 = vdwg.mxu0
  %9287 = vmatpush.bf16.msra.mxu0 %v5252
  %9288 = vmatpush.bf16.msra.mxu0 %v5248
  %9289 = vmatpush.bf16.msra.mxu0 %v5244
  %9290 = vmatpush.bf16.msra.mxu0 %v5240
  %9291 = vmatpush.bf16.msra.mxu0 %v5236
  %9292 = vmatpush.bf16.msra.mxu0 %v5232
  %9293 = vmatpush.bf16.msra.mxu0 %v5228
  %9294 = vmatpush.bf16.msra.mxu0 %v5224
  %9295 = vmatmul.bf16.gmra.mxu0 %v2781
  %v9296 = vpop.f32.mrf.mxu0
  %v9297 = vadd.f32 %v9218, %v9296
  %v9298 = vpop.f32.mrf.mxu0
  %v9299 = vadd.f32 %v9220, %v9298
  %9300 = vmatmul.bf16.gmra.mxu0 %v2784
  %v9301 = vpop.f32.mrf.mxu0
  %v9302 = vadd.f32 %v9223, %v9301
  %v9303 = vpop.f32.mrf.mxu0
  %v9304 = vadd.f32 %v9225, %v9303
  %9305 = vmatmul.bf16.gmra.mxu0 %v2787
  %v9306 = vpop.f32.mrf.mxu0
  %v9307 = vadd.f32 %v9228, %v9306
  %v9308 = vpop.f32.mrf.mxu0
  %v9309 = vadd.f32 %v9230, %v9308
  %9310 = vmatmul.bf16.gmra.mxu0 %v2790
  %v9311 = vpop.f32.mrf.mxu0
  %v9312 = vadd.f32 %v9233, %v9311
  %v9313 = vpop.f32.mrf.mxu0
  %v9314 = vadd.f32 %v9235, %v9313
  %9315 = vmatmul.bf16.gmra.mxu0 %v2793
  %v9316 = vpop.f32.mrf.mxu0
  %v9317 = vadd.f32 %v9238, %v9316
  %v9318 = vpop.f32.mrf.mxu0
  %v9319 = vadd.f32 %v9240, %v9318
  %9320 = vmatmul.bf16.gmra.mxu0 %v2796
  %v9321 = vpop.f32.mrf.mxu0
  %v9322 = vadd.f32 %v9243, %v9321
  %v9323 = vpop.f32.mrf.mxu0
  %v9324 = vadd.f32 %v9245, %v9323
  %9325 = vmatmul.bf16.gmra.mxu0 %v2799
  %v9326 = vpop.f32.mrf.mxu0
  %v9327 = vadd.f32 %v9248, %v9326
  %v9328 = vpop.f32.mrf.mxu0
  %v9329 = vadd.f32 %v9250, %v9328
  %9330 = vmatmul.bf16.gmra.mxu0 %v2802
  %v9331 = vpop.f32.mrf.mxu0
  %v9332 = vadd.f32 %v9253, %v9331
  %v9333 = vpop.f32.mrf.mxu0
  %v9334 = vadd.f32 %v9255, %v9333
  %9335 = vmatmul.bf16.gmra.mxu0 %v2805
  %v9336 = vpop.f32.mrf.mxu0
  %v9337 = vadd.f32 %v9258, %v9336
  %v9338 = vpop.f32.mrf.mxu0
  %v9339 = vadd.f32 %v9260, %v9338
  %9340 = vmatmul.bf16.gmra.mxu0 %v2808
  %v9341 = vpop.f32.mrf.mxu0
  %v9342 = vadd.f32 %v9263, %v9341
  %v9343 = vpop.f32.mrf.mxu0
  %v9344 = vadd.f32 %v9265, %v9343
  %9345 = vmatmul.bf16.gmra.mxu0 %v2849
  %v9346 = vpop.f32.mrf.mxu0
  %v9347 = vadd.f32 %v9268, %v9346
  %v9348 = vpop.f32.mrf.mxu0
  %v9349 = vadd.f32 %v9270, %v9348
  %9350 = vmatmul.bf16.gmra.mxu0 %v2989
  %v9351 = vpop.f32.mrf.mxu0
  %v9352 = vadd.f32 %v9273, %v9351
  %v9353 = vpop.f32.mrf.mxu0
  %v9354 = vadd.f32 %v9275, %v9353
  %9355 = vmatmul.bf16.gmra.mxu0 %v3129
  %v9356 = vpop.f32.mrf.mxu0
  %v9357 = vadd.f32 %v9278, %v9356
  %v9358 = vpop.f32.mrf.mxu0
  %v9359 = vadd.f32 %v9280, %v9358
  %9360 = vmatmul.bf16.gmra.mxu0 %v3283
  %v9361 = vpop.f32.mrf.mxu0
  %v9362 = vadd.f32 %v9283, %v9361
  %v9363 = vpop.f32.mrf.mxu0
  %v9364 = vadd.f32 %v9285, %v9363
  %9365 = vdwg.mxu0
  %9366 = vmatpush.bf16.msra.mxu0 0
  %9367 = vmatpush.bf16.msra.mxu0 0
  %9368 = vmatpush.bf16.msra.mxu0 0
  %9369 = vmatpush.bf16.msra.mxu0 0
  %9370 = vmatpush.bf16.msra.mxu0 0
  %9371 = vmatpush.bf16.msra.mxu0 0
  %9372 = vmatpush.bf16.msra.mxu0 %v5260
  %9373 = vmatpush.bf16.msra.mxu0 %v5256
  %9374 = vmatmul.bf16.gmra.mxu0 %v5621
  %v9375 = vpop.f32.mrf.mxu0
  %v9376 = vadd.f32 %v9297, %v9375
  %v9377 = vpop.f32.mrf.mxu0
  %v9378 = vadd.f32 %v9299, %v9377
  %9379 = vmatmul.bf16.gmra.mxu0 %v5623
  %v9380 = vpop.f32.mrf.mxu0
  %v9381 = vadd.f32 %v9302, %v9380
  %v9382 = vpop.f32.mrf.mxu0
  %v9383 = vadd.f32 %v9304, %v9382
  %9384 = vmatmul.bf16.gmra.mxu0 %v5625
  %v9385 = vpop.f32.mrf.mxu0
  %v9386 = vadd.f32 %v9307, %v9385
  %v9387 = vpop.f32.mrf.mxu0
  %v9388 = vadd.f32 %v9309, %v9387
  %9389 = vmatmul.bf16.gmra.mxu0 %v5627
  %v9390 = vpop.f32.mrf.mxu0
  %v9391 = vadd.f32 %v9312, %v9390
  %v9392 = vpop.f32.mrf.mxu0
  %v9393 = vadd.f32 %v9314, %v9392
  %9394 = vmatmul.bf16.gmra.mxu0 %v5629
  %v9395 = vpop.f32.mrf.mxu0
  %v9396 = vadd.f32 %v9317, %v9395
  %v9397 = vpop.f32.mrf.mxu0
  %v9398 = vadd.f32 %v9319, %v9397
  %9399 = vmatmul.bf16.gmra.mxu0 %v5631
  %v9400 = vpop.f32.mrf.mxu0
  %v9401 = vadd.f32 %v9322, %v9400
  %v9402 = vpop.f32.mrf.mxu0
  %v9403 = vadd.f32 %v9324, %v9402
  %9404 = vmatmul.bf16.gmra.mxu0 %v5633
  %v9405 = vpop.f32.mrf.mxu0
  %v9406 = vadd.f32 %v9327, %v9405
  %v9407 = vpop.f32.mrf.mxu0
  %v9408 = vadd.f32 %v9329, %v9407
  %9409 = vmatmul.bf16.gmra.mxu0 %v5635
  %v9410 = vpop.f32.mrf.mxu0
  %v9411 = vadd.f32 %v9332, %v9410
  %v9412 = vpop.f32.mrf.mxu0
  %v9413 = vadd.f32 %v9334, %v9412
  %9414 = vmatmul.bf16.gmra.mxu0 %v5637
  %v9415 = vpop.f32.mrf.mxu0
  %v9416 = vadd.f32 %v9337, %v9415
  %v9417 = vpop.f32.mrf.mxu0
  %v9418 = vadd.f32 %v9339, %v9417
  %9419 = vmatmul.bf16.gmra.mxu0 %v5639
  %v9420 = vpop.f32.mrf.mxu0
  %v9421 = vadd.f32 %v9342, %v9420
  %v9422 = vpop.f32.mrf.mxu0
  %v9423 = vadd.f32 %v9344, %v9422
  %9424 = vmatmul.bf16.gmra.mxu0 %v5642
  %v9425 = vpop.f32.mrf.mxu0
  %v9426 = vadd.f32 %v9347, %v9425
  %v9427 = vpop.f32.mrf.mxu0
  %v9428 = vadd.f32 %v9349, %v9427
  %9429 = vmatmul.bf16.gmra.mxu0 %v5645
  %v9430 = vpop.f32.mrf.mxu0
  %v9431 = vadd.f32 %v9352, %v9430
  %v9432 = vpop.f32.mrf.mxu0
  %v9433 = vadd.f32 %v9354, %v9432
  %9434 = vmatmul.bf16.gmra.mxu0 %v5648
  %v9435 = vpop.f32.mrf.mxu0
  %v9436 = vadd.f32 %v9357, %v9435
  %v9437 = vpop.f32.mrf.mxu0
  %v9438 = vadd.f32 %v9359, %v9437
  %9439 = vmatmul.bf16.gmra.mxu0 %v5651
  %v9440 = vpop.f32.mrf.mxu0
  %v9441 = vadd.f32 %v9362, %v9440
  %v9442 = vpop.f32.mrf.mxu0
  %v9443 = vadd.f32 %v9364, %v9442
  %9444 = vdwg.mxu0
  %v9445 = vld [vmem:[%s4] sm:$0x3]
  %v9446 = vmax.f32 %v6532, %v6537
  %v9447 = vmax.f32 %v7480, %v7485
  %v9448 = vmax.f32 %v8428, %v8433
  %v9449 = vmax.f32 %v9376, %v9381
  %v9450 = vmax.f32 %v6534, %v6539
  %v9451 = vmax.f32 %v7482, %v7487
  %v9452 = vmax.f32 %v8430, %v8435
  %v9453 = vmax.f32 %v9378, %v9383
  %v9454 = vmax.f32 %v9446, %v9448
  %v9455 = vmax.f32 %v9447, %v9449
  %v9456 = vmax.f32 %v9450, %v9452
  %v9457 = vmax.f32 %v9451, %v9453
  %v9459 = vperm.slane %v9445, 0
  %v9460 = vperm.slane %v9445, 1
  %v9463 = vadd.f32 %v9454, %v9459
  %v9464 = vadd.f32 %v9455, %v9460
  %v9465 = vadd.f32 %v9456, %v9459
  %v9466 = vadd.f32 %v9457, %v9460
  %v9467 = vmax.f32 %v9463, 0.0
  %v9468 = vmax.f32 %v9464, 0.0
  %v9469 = vmax.f32 %v9465, 0.0
  %v9470 = vmax.f32 %v9466, 0.0
  %v9471 = vpack.c.bf16 %v9469, %v9467
  %v9472 = vpack.c.bf16 %v9470, %v9468
  %v9473 = vld [vmem:[%s5] sm:$0xf]
  %v9474 = vld [vmem:[%s5 + $0x4] sm:$0xf]
  %v9475 = vld [vmem:[%s5 + $0x8] sm:$0xf]
  %v9476 = vld [vmem:[%s5 + $0xc] sm:$0xf]
  %v9477 = vld [vmem:[%s5 + $0x10] sm:$0xf]
  %v9478 = vld [vmem:[%s5 + $0x14] sm:$0xf]
  %v9479 = vld [vmem:[%s5 + $0x18] sm:$0xf]
  %v9480 = vld [vmem:[%s5 + $0x1c] sm:$0xf]
  %v9481 = vld [vmem:[%s5 + $0x20] sm:$0xf]
  %v9482 = vld [vmem:[%s5 + $0x24] sm:$0xf]
  %v9483 = vld [vmem:[%s5 + $0x28] sm:$0xf]
  %v9484 = vld [vmem:[%s5 + $0x2c] sm:$0xf]
  %v9485 = vld [vmem:[%s5 + $0x30] sm:$0xf]
  %v9486 = vld [vmem:[%s5 + $0x34] sm:$0xf]
  %v9487 = vld [vmem:[%s5 + $0x38] sm:$0xf]
  %v9488 = vld [vmem:[%s5 + $0x3c] sm:$0xf]
  %v9489 = vld [vmem:[%s5 + $0x40] sm:$0xf]
  %v9490 = vld [vmem:[%s5 + $0x44] sm:$0xf]
  %v9491 = vld [vmem:[%s5 + $0x48] sm:$0xf]
  %v9492 = vld [vmem:[%s5 + $0x4c] sm:$0xf]
  %v9493 = vld [vmem:[%s5 + $0x50] sm:$0xf]
  %v9494 = vld [vmem:[%s5 + $0x54] sm:$0xf]
  %v9495 = vld [vmem:[%s5 + $0x58] sm:$0xf]
  %v9496 = vld [vmem:[%s5 + $0x5c] sm:$0xf]
  %v9497 = vld [vmem:[%s5 + $0x60] sm:$0xf]
  %v9498 = vld [vmem:[%s5 + $0x64] sm:$0xf]
  %v9499 = vld [vmem:[%s5 + $0x68] sm:$0xf]
  %v9500 = vld [vmem:[%s5 + $0x6c] sm:$0xf]
  %v9501 = vld [vmem:[%s5 + $0x70] sm:$0xf]
  %v9502 = vld [vmem:[%s5 + $0x74] sm:$0xf]
  %v9503 = vld [vmem:[%s5 + $0x78] sm:$0xf]
  %v9504 = vld [vmem:[%s5 + $0x7c] sm:$0xf]
  %v9505 = vmax.f32 %v6542, %v6547
  %v9506 = vmax.f32 %v7490, %v7495
  %v9507 = vmax.f32 %v8438, %v8443
  %v9508 = vmax.f32 %v9386, %v9391
  %v9509 = vmax.f32 %v6544, %v6549
  %v9510 = vmax.f32 %v7492, %v7497
  %v9511 = vmax.f32 %v8440, %v8445
  %v9512 = vmax.f32 %v9388, %v9393
  %v9513 = vmax.f32 %v9505, %v9507
  %v9514 = vmax.f32 %v9506, %v9508
  %v9515 = vmax.f32 %v9509, %v9511
  %v9516 = vmax.f32 %v9510, %v9512
  %v9517 = vadd.f32 %v9513, %v9459
  %v9518 = vadd.f32 %v9514, %v9460
  %v9519 = vadd.f32 %v9515, %v9459
  %v9520 = vadd.f32 %v9516, %v9460
  %v9521 = vmax.f32 %v9517, 0.0
  %v9522 = vmax.f32 %v9518, 0.0
  %v9523 = vmax.f32 %v9519, 0.0
  %v9524 = vmax.f32 %v9520, 0.0
  %v9525 = vpack.c.bf16 %v9523, %v9521
  %v9526 = vpack.c.bf16 %v9524, %v9522
  %s9527 = scalar_lea.vmem %s5, 128
  %v9528 = vld [vmem:[%s9527] sm:$0xf]
  %v9529 = vld [vmem:[%s9527 + $0x4] sm:$0xf]
  %v9530 = vld [vmem:[%s9527 + $0x8] sm:$0xf]
  %v9531 = vld [vmem:[%s9527 + $0xc] sm:$0xf]
  %v9532 = vld [vmem:[%s9527 + $0x10] sm:$0xf]
  %v9533 = vld [vmem:[%s9527 + $0x14] sm:$0xf]
  %v9534 = vld [vmem:[%s9527 + $0x18] sm:$0xf]
  %v9535 = vld [vmem:[%s9527 + $0x1c] sm:$0xf]
  %v9536 = vld [vmem:[%s9527 + $0x20] sm:$0xf]
  %v9537 = vld [vmem:[%s9527 + $0x24] sm:$0xf]
  %v9538 = vld [vmem:[%s9527 + $0x28] sm:$0xf]
  %v9539 = vld [vmem:[%s9527 + $0x2c] sm:$0xf]
  %v9540 = vld [vmem:[%s9527 + $0x30] sm:$0xf]
  %v9541 = vld [vmem:[%s9527 + $0x34] sm:$0xf]
  %v9542 = vld [vmem:[%s9527 + $0x38] sm:$0xf]
  %v9543 = vld [vmem:[%s9527 + $0x3c] sm:$0xf]
  %v9544 = vld [vmem:[%s9527 + $0x40] sm:$0xf]
  %v9545 = vld [vmem:[%s9527 + $0x44] sm:$0xf]
  %v9546 = vld [vmem:[%s9527 + $0x48] sm:$0xf]
  %v9547 = vld [vmem:[%s9527 + $0x4c] sm:$0xf]
  %v9548 = vld [vmem:[%s9527 + $0x50] sm:$0xf]
  %v9549 = vld [vmem:[%s9527 + $0x54] sm:$0xf]
  %v9550 = vld [vmem:[%s9527 + $0x58] sm:$0xf]
  %v9551 = vld [vmem:[%s9527 + $0x5c] sm:$0xf]
  %v9552 = vld [vmem:[%s9527 + $0x60] sm:$0xf]
  %v9553 = vld [vmem:[%s9527 + $0x64] sm:$0xf]
  %v9554 = vld [vmem:[%s9527 + $0x68] sm:$0xf]
  %v9555 = vld [vmem:[%s9527 + $0x6c] sm:$0xf]
  %v9556 = vld [vmem:[%s9527 + $0x70] sm:$0xf]
  %v9557 = vld [vmem:[%s9527 + $0x74] sm:$0xf]
  %v9558 = vld [vmem:[%s9527 + $0x78] sm:$0xf]
  %v9559 = vld [vmem:[%s9527 + $0x7c] sm:$0xf]
  %v9592 = vunpack.c.l.b16 %v9528
  %v9593 = vunpack.c.l.b16 %v9529
  %v9594 = vunpack.c.l.b16 %v9530
  %v9595 = vunpack.c.l.b16 %v9531
  %v9596 = vunpack.c.l.b16 %v9532
  %v9597 = vunpack.c.l.b16 %v9533
  %v9598 = vunpack.c.l.b16 %v9534
  %v9599 = vunpack.c.l.b16 %v9535
  %v9600 = vunpack.c.l.b16 %v9536
  %v9601 = vunpack.c.l.b16 %v9537
  %v9602 = vunpack.c.l.b16 %v9538
  %v9603 = vunpack.c.l.b16 %v9539
  %v9604 = vunpack.c.l.b16 %v9540
  %v9605 = vunpack.c.l.b16 %v9541
  %v9606 = vunpack.c.l.b16 %v9542
  %v9607 = vunpack.c.l.b16 %v9543
  %v9608 = vunpack.c.l.b16 %v9544
  %v9609 = vunpack.c.l.b16 %v9545
  %v9610 = vunpack.c.l.b16 %v9546
  %v9611 = vunpack.c.l.b16 %v9547
  %v9612 = vunpack.c.l.b16 %v9548
  %v9613 = vunpack.c.l.b16 %v9549
  %v9614 = vunpack.c.l.b16 %v9550
  %v9615 = vunpack.c.l.b16 %v9551
  %v9616 = vunpack.c.l.b16 %v9552
  %v9617 = vunpack.c.l.b16 %v9553
  %v9618 = vunpack.c.l.b16 %v9554
  %v9619 = vunpack.c.l.b16 %v9555
  %v9620 = vunpack.c.l.b16 %v9556
  %v9621 = vunpack.c.l.b16 %v9557
  %v9622 = vunpack.c.l.b16 %v9558
  %v9623 = vunpack.c.l.b16 %v9559
  %v9624 = vpack.c.b16 %v9593, %v9592
  %v9625 = vpack.c.b16 %v9595, %v9594
  %v9626 = vpack.c.b16 %v9597, %v9596
  %v9627 = vpack.c.b16 %v9599, %v9598
  %v9628 = vpack.c.b16 %v9601, %v9600
  %v9629 = vpack.c.b16 %v9603, %v9602
  %v9630 = vpack.c.b16 %v9605, %v9604
  %v9631 = vpack.c.b16 %v9607, %v9606
  %v9632 = vpack.c.b16 %v9609, %v9608
  %v9633 = vpack.c.b16 %v9611, %v9610
  %v9634 = vpack.c.b16 %v9613, %v9612
  %v9635 = vpack.c.b16 %v9615, %v9614
  %v9636 = vpack.c.b16 %v9617, %v9616
  %v9637 = vpack.c.b16 %v9619, %v9618
  %v9638 = vpack.c.b16 %v9621, %v9620
  %v9639 = vpack.c.b16 %v9623, %v9622
  %9656 = vmatpush.bf16.msra.mxu0 %v9631
  %9657 = vmatpush.bf16.msra.mxu0 %v9630
  %9658 = vmatpush.bf16.msra.mxu0 %v9629
  %9659 = vmatpush.bf16.msra.mxu0 %v9628
  %9660 = vmatpush.bf16.msra.mxu0 %v9627
  %9661 = vmatpush.bf16.msra.mxu0 %v9626
  %9662 = vmatpush.bf16.msra.mxu0 %v9625
  %9663 = vmatpush.bf16.msra.mxu0 %v9624
  %9664 = vmatmul.bf16.gmra.mxu0 %v9525
  %v9665 = vpop.f32.mrf.mxu0
  %v9666 = vadd.f32 0.0, %v9665
  %v9667 = vpop.f32.mrf.mxu0
  %v9668 = vadd.f32 0.0, %v9667
  %9669 = vdwg.mxu0
  %9670 = vmatpush.bf16.msra.mxu0 %v9639
  %9671 = vmatpush.bf16.msra.mxu0 %v9638
  %9672 = vmatpush.bf16.msra.mxu0 %v9637
  %9673 = vmatpush.bf16.msra.mxu0 %v9636
  %9674 = vmatpush.bf16.msra.mxu0 %v9635
  %9675 = vmatpush.bf16.msra.mxu0 %v9634
  %9676 = vmatpush.bf16.msra.mxu0 %v9633
  %9677 = vmatpush.bf16.msra.mxu0 %v9632
  %9678 = vmatmul.bf16.gmra.mxu0 %v9526
  %v9679 = vpop.f32.mrf.mxu0
  %v9680 = vadd.f32 %v9666, %v9679
  %v9681 = vpop.f32.mrf.mxu0
  %v9682 = vadd.f32 %v9668, %v9681
  %9683 = vdwg.mxu0
  %v9716 = vunpack.c.l.b16 %v9473
  %v9717 = vunpack.c.l.b16 %v9474
  %v9718 = vunpack.c.l.b16 %v9475
  %v9719 = vunpack.c.l.b16 %v9476
  %v9720 = vunpack.c.l.b16 %v9477
  %v9721 = vunpack.c.l.b16 %v9478
  %v9722 = vunpack.c.l.b16 %v9479
  %v9723 = vunpack.c.l.b16 %v9480
  %v9724 = vunpack.c.l.b16 %v9481
  %v9725 = vunpack.c.l.b16 %v9482
  %v9726 = vunpack.c.l.b16 %v9483
  %v9727 = vunpack.c.l.b16 %v9484
  %v9728 = vunpack.c.l.b16 %v9485
  %v9729 = vunpack.c.l.b16 %v9486
  %v9730 = vunpack.c.l.b16 %v9487
  %v9731 = vunpack.c.l.b16 %v9488
  %v9732 = vunpack.c.l.b16 %v9489
  %v9733 = vunpack.c.l.b16 %v9490
  %v9734 = vunpack.c.l.b16 %v9491
  %v9735 = vunpack.c.l.b16 %v9492
  %v9736 = vunpack.c.l.b16 %v9493
  %v9737 = vunpack.c.l.b16 %v9494
  %v9738 = vunpack.c.l.b16 %v9495
  %v9739 = vunpack.c.l.b16 %v9496
  %v9740 = vunpack.c.l.b16 %v9497
  %v9741 = vunpack.c.l.b16 %v9498
  %v9742 = vunpack.c.l.b16 %v9499
  %v9743 = vunpack.c.l.b16 %v9500
  %v9744 = vunpack.c.l.b16 %v9501
  %v9745 = vunpack.c.l.b16 %v9502
  %v9746 = vunpack.c.l.b16 %v9503
  %v9747 = vunpack.c.l.b16 %v9504
  %v9748 = vpack.c.b16 %v9717, %v9716
  %v9749 = vpack.c.b16 %v9719, %v9718
  %v9750 = vpack.c.b16 %v9721, %v9720
  %v9751 = vpack.c.b16 %v9723, %v9722
  %v9752 = vpack.c.b16 %v9725, %v9724
  %v9753 = vpack.c.b16 %v9727, %v9726
  %v9754 = vpack.c.b16 %v9729, %v9728
  %v9755 = vpack.c.b16 %v9731, %v9730
  %v9756 = vpack.c.b16 %v9733, %v9732
  %v9757 = vpack.c.b16 %v9735, %v9734
  %v9758 = vpack.c.b16 %v9737, %v9736
  %v9759 = vpack.c.b16 %v9739, %v9738
  %v9760 = vpack.c.b16 %v9741, %v9740
  %v9761 = vpack.c.b16 %v9743, %v9742
  %v9762 = vpack.c.b16 %v9745, %v9744
  %v9763 = vpack.c.b16 %v9747, %v9746
  %9780 = vmatpush.bf16.msra.mxu0 %v9755
  %9781 = vmatpush.bf16.msra.mxu0 %v9754
  %9782 = vmatpush.bf16.msra.mxu0 %v9753
  %9783 = vmatpush.bf16.msra.mxu0 %v9752
  %9784 = vmatpush.bf16.msra.mxu0 %v9751
  %9785 = vmatpush.bf16.msra.mxu0 %v9750
  %9786 = vmatpush.bf16.msra.mxu0 %v9749
  %9787 = vmatpush.bf16.msra.mxu0 %v9748
  %9788 = vmatmul.bf16.gmra.mxu0 %v9471
  %v9789 = vpop.f32.mrf.mxu0
  %v9790 = vadd.f32 %v9680, %v9789
  %v9791 = vpop.f32.mrf.mxu0
  %v9792 = vadd.f32 %v9682, %v9791
  %9793 = vdwg.mxu0
  %9794 = vmatpush.bf16.msra.mxu0 %v9763
  %9795 = vmatpush.bf16.msra.mxu0 %v9762
  %9796 = vmatpush.bf16.msra.mxu0 %v9761
  %9797 = vmatpush.bf16.msra.mxu0 %v9760
  %9798 = vmatpush.bf16.msra.mxu0 %v9759
  %9799 = vmatpush.bf16.msra.mxu0 %v9758
  %9800 = vmatpush.bf16.msra.mxu0 %v9757
  %9801 = vmatpush.bf16.msra.mxu0 %v9756
  %9802 = vmatmul.bf16.gmra.mxu0 %v9472
  %v9803 = vpop.f32.mrf.mxu0
  %v9804 = vadd.f32 %v9790, %v9803
  %v9805 = vpop.f32.mrf.mxu0
  %v9806 = vadd.f32 %v9792, %v9805
  %9807 = vdwg.mxu0
  %v9808 = vmax.f32 %v6552, %v6557
  %v9809 = vmax.f32 %v7500, %v7505
  %v9810 = vmax.f32 %v8448, %v8453
  %v9811 = vmax.f32 %v9396, %v9401
  %v9812 = vmax.f32 %v6554, %v6559
  %v9813 = vmax.f32 %v7502, %v7507
  %v9814 = vmax.f32 %v8450, %v8455
  %v9815 = vmax.f32 %v9398, %v9403
  %v9816 = vmax.f32 %v9808, %v9810
  %v9817 = vmax.f32 %v9809, %v9811
  %v9818 = vmax.f32 %v9812, %v9814
  %v9819 = vmax.f32 %v9813, %v9815
  %v9820 = vadd.f32 %v9816, %v9459
  %v9821 = vadd.f32 %v9817, %v9460
  %v9822 = vadd.f32 %v9818, %v9459
  %v9823 = vadd.f32 %v9819, %v9460
  %v9824 = vmax.f32 %v9820, 0.0
  %v9825 = vmax.f32 %v9821, 0.0
  %v9826 = vmax.f32 %v9822, 0.0
  %v9827 = vmax.f32 %v9823, 0.0
  %v9828 = vpack.c.bf16 %v9826, %v9824
  %v9829 = vpack.c.bf16 %v9827, %v9825
  %s9830 = scalar_lea.vmem %s5, 256
  %v9831 = vld [vmem:[%s9830] sm:$0xf]
  %v9832 = vld [vmem:[%s9830 + $0x4] sm:$0xf]
  %v9833 = vld [vmem:[%s9830 + $0x8] sm:$0xf]
  %v9834 = vld [vmem:[%s9830 + $0xc] sm:$0xf]
  %v9835 = vld [vmem:[%s9830 + $0x10] sm:$0xf]
  %v9836 = vld [vmem:[%s9830 + $0x14] sm:$0xf]
  %v9837 = vld [vmem:[%s9830 + $0x18] sm:$0xf]
  %v9838 = vld [vmem:[%s9830 + $0x1c] sm:$0xf]
  %v9839 = vld [vmem:[%s9830 + $0x20] sm:$0xf]
  %v9840 = vld [vmem:[%s9830 + $0x24] sm:$0xf]
  %v9841 = vld [vmem:[%s9830 + $0x28] sm:$0xf]
  %v9842 = vld [vmem:[%s9830 + $0x2c] sm:$0xf]
  %v9843 = vld [vmem:[%s9830 + $0x30] sm:$0xf]
  %v9844 = vld [vmem:[%s9830 + $0x34] sm:$0xf]
  %v9845 = vld [vmem:[%s9830 + $0x38] sm:$0xf]
  %v9846 = vld [vmem:[%s9830 + $0x3c] sm:$0xf]
  %v9847 = vld [vmem:[%s9830 + $0x40] sm:$0xf]
  %v9848 = vld [vmem:[%s9830 + $0x44] sm:$0xf]
  %v9849 = vld [vmem:[%s9830 + $0x48] sm:$0xf]
  %v9850 = vld [vmem:[%s9830 + $0x4c] sm:$0xf]
  %v9851 = vld [vmem:[%s9830 + $0x50] sm:$0xf]
  %v9852 = vld [vmem:[%s9830 + $0x54] sm:$0xf]
  %v9853 = vld [vmem:[%s9830 + $0x58] sm:$0xf]
  %v9854 = vld [vmem:[%s9830 + $0x5c] sm:$0xf]
  %v9855 = vld [vmem:[%s9830 + $0x60] sm:$0xf]
  %v9856 = vld [vmem:[%s9830 + $0x64] sm:$0xf]
  %v9857 = vld [vmem:[%s9830 + $0x68] sm:$0xf]
  %v9858 = vld [vmem:[%s9830 + $0x6c] sm:$0xf]
  %v9859 = vld [vmem:[%s9830 + $0x70] sm:$0xf]
  %v9860 = vld [vmem:[%s9830 + $0x74] sm:$0xf]
  %v9861 = vld [vmem:[%s9830 + $0x78] sm:$0xf]
  %v9862 = vld [vmem:[%s9830 + $0x7c] sm:$0xf]
  %v9895 = vunpack.c.l.b16 %v9831
  %v9896 = vunpack.c.l.b16 %v9832
  %v9897 = vunpack.c.l.b16 %v9833
  %v9898 = vunpack.c.l.b16 %v9834
  %v9899 = vunpack.c.l.b16 %v9835
  %v9900 = vunpack.c.l.b16 %v9836
  %v9901 = vunpack.c.l.b16 %v9837
  %v9902 = vunpack.c.l.b16 %v9838
  %v9903 = vunpack.c.l.b16 %v9839
  %v9904 = vunpack.c.l.b16 %v9840
  %v9905 = vunpack.c.l.b16 %v9841
  %v9906 = vunpack.c.l.b16 %v9842
  %v9907 = vunpack.c.l.b16 %v9843
  %v9908 = vunpack.c.l.b16 %v9844
  %v9909 = vunpack.c.l.b16 %v9845
  %v9910 = vunpack.c.l.b16 %v9846
  %v9911 = vunpack.c.l.b16 %v9847
  %v9912 = vunpack.c.l.b16 %v9848
  %v9913 = vunpack.c.l.b16 %v9849
  %v9914 = vunpack.c.l.b16 %v9850
  %v9915 = vunpack.c.l.b16 %v9851
  %v9916 = vunpack.c.l.b16 %v9852
  %v9917 = vunpack.c.l.b16 %v9853
  %v9918 = vunpack.c.l.b16 %v9854
  %v9919 = vunpack.c.l.b16 %v9855
  %v9920 = vunpack.c.l.b16 %v9856
  %v9921 = vunpack.c.l.b16 %v9857
  %v9922 = vunpack.c.l.b16 %v9858
  %v9923 = vunpack.c.l.b16 %v9859
  %v9924 = vunpack.c.l.b16 %v9860
  %v9925 = vunpack.c.l.b16 %v9861
  %v9926 = vunpack.c.l.b16 %v9862
  %v9927 = vpack.c.b16 %v9896, %v9895
  %v9928 = vpack.c.b16 %v9898, %v9897
  %v9929 = vpack.c.b16 %v9900, %v9899
  %v9930 = vpack.c.b16 %v9902, %v9901
  %v9931 = vpack.c.b16 %v9904, %v9903
  %v9932 = vpack.c.b16 %v9906, %v9905
  %v9933 = vpack.c.b16 %v9908, %v9907
  %v9934 = vpack.c.b16 %v9910, %v9909
  %v9935 = vpack.c.b16 %v9912, %v9911
  %v9936 = vpack.c.b16 %v9914, %v9913
  %v9937 = vpack.c.b16 %v9916, %v9915
  %v9938 = vpack.c.b16 %v9918, %v9917
  %v9939 = vpack.c.b16 %v9920, %v9919
  %v9940 = vpack.c.b16 %v9922, %v9921
  %v9941 = vpack.c.b16 %v9924, %v9923
  %v9942 = vpack.c.b16 %v9926, %v9925
  %9959 = vmatpush.bf16.msra.mxu0 %v9934
  %9960 = vmatpush.bf16.msra.mxu0 %v9933
  %9961 = vmatpush.bf16.msra.mxu0 %v9932
  %9962 = vmatpush.bf16.msra.mxu0 %v9931
  %9963 = vmatpush.bf16.msra.mxu0 %v9930
  %9964 = vmatpush.bf16.msra.mxu0 %v9929
  %9965 = vmatpush.bf16.msra.mxu0 %v9928
  %9966 = vmatpush.bf16.msra.mxu0 %v9927
  %9967 = vmatmul.bf16.gmra.mxu0 %v9828
  %v9968 = vpop.f32.mrf.mxu0
  %v9969 = vadd.f32 0.0, %v9968
  %v9970 = vpop.f32.mrf.mxu0
  %v9971 = vadd.f32 0.0, %v9970
  %9972 = vdwg.mxu0
  %9973 = vmatpush.bf16.msra.mxu0 %v9942
  %9974 = vmatpush.bf16.msra.mxu0 %v9941
  %9975 = vmatpush.bf16.msra.mxu0 %v9940
  %9976 = vmatpush.bf16.msra.mxu0 %v9939
  %9977 = vmatpush.bf16.msra.mxu0 %v9938
  %9978 = vmatpush.bf16.msra.mxu0 %v9937
  %9979 = vmatpush.bf16.msra.mxu0 %v9936
  %9980 = vmatpush.bf16.msra.mxu0 %v9935
  %9981 = vmatmul.bf16.gmra.mxu0 %v9829
  %v9982 = vpop.f32.mrf.mxu0
  %v9983 = vadd.f32 %v9969, %v9982
  %v9984 = vpop.f32.mrf.mxu0
  %v9985 = vadd.f32 %v9971, %v9984
  %9986 = vdwg.mxu0
  %v9987 = vadd.f32 %v9804, %v9983
  %v9988 = vadd.f32 %v9806, %v9985
  %v9989 = vmax.f32 %v6562, %v6567
  %v9990 = vmax.f32 %v7510, %v7515
  %v9991 = vmax.f32 %v8458, %v8463
  %v9992 = vmax.f32 %v9406, %v9411
  %v9993 = vmax.f32 %v6564, %v6569
  %v9994 = vmax.f32 %v7512, %v7517
  %v9995 = vmax.f32 %v8460, %v8465
  %v9996 = vmax.f32 %v9408, %v9413
  %v9997 = vmax.f32 %v9989, %v9991
  %v9998 = vmax.f32 %v9990, %v9992
  %v9999 = vmax.f32 %v9993, %v9995
  %v10000 = vmax.f32 %v9994, %v9996
  %v10001 = vadd.f32 %v9997, %v9459
  %v10002 = vadd.f32 %v9998, %v9460
  %v10003 = vadd.f32 %v9999, %v9459
  %v10004 = vadd.f32 %v10000, %v9460
  %v10005 = vmax.f32 %v10001, 0.0
  %v10006 = vmax.f32 %v10002, 0.0
  %v10007 = vmax.f32 %v10003, 0.0
  %v10008 = vmax.f32 %v10004, 0.0
  %v10009 = vpack.c.bf16 %v10007, %v10005
  %v10010 = vpack.c.bf16 %v10008, %v10006
  %s10011 = scalar_lea.vmem %s5, 384
  %v10012 = vld [vmem:[%s10011] sm:$0xf]
  %v10013 = vld [vmem:[%s10011 + $0x4] sm:$0xf]
  %v10014 = vld [vmem:[%s10011 + $0x8] sm:$0xf]
  %v10015 = vld [vmem:[%s10011 + $0xc] sm:$0xf]
  %v10016 = vld [vmem:[%s10011 + $0x10] sm:$0xf]
  %v10017 = vld [vmem:[%s10011 + $0x14] sm:$0xf]
  %v10018 = vld [vmem:[%s10011 + $0x18] sm:$0xf]
  %v10019 = vld [vmem:[%s10011 + $0x1c] sm:$0xf]
  %v10020 = vld [vmem:[%s10011 + $0x20] sm:$0xf]
  %v10021 = vld [vmem:[%s10011 + $0x24] sm:$0xf]
  %v10022 = vld [vmem:[%s10011 + $0x28] sm:$0xf]
  %v10023 = vld [vmem:[%s10011 + $0x2c] sm:$0xf]
  %v10024 = vld [vmem:[%s10011 + $0x30] sm:$0xf]
  %v10025 = vld [vmem:[%s10011 + $0x34] sm:$0xf]
  %v10026 = vld [vmem:[%s10011 + $0x38] sm:$0xf]
  %v10027 = vld [vmem:[%s10011 + $0x3c] sm:$0xf]
  %v10028 = vld [vmem:[%s10011 + $0x40] sm:$0xf]
  %v10029 = vld [vmem:[%s10011 + $0x44] sm:$0xf]
  %v10030 = vld [vmem:[%s10011 + $0x48] sm:$0xf]
  %v10031 = vld [vmem:[%s10011 + $0x4c] sm:$0xf]
  %v10032 = vld [vmem:[%s10011 + $0x50] sm:$0xf]
  %v10033 = vld [vmem:[%s10011 + $0x54] sm:$0xf]
  %v10034 = vld [vmem:[%s10011 + $0x58] sm:$0xf]
  %v10035 = vld [vmem:[%s10011 + $0x5c] sm:$0xf]
  %v10036 = vld [vmem:[%s10011 + $0x60] sm:$0xf]
  %v10037 = vld [vmem:[%s10011 + $0x64] sm:$0xf]
  %v10038 = vld [vmem:[%s10011 + $0x68] sm:$0xf]
  %v10039 = vld [vmem:[%s10011 + $0x6c] sm:$0xf]
  %v10040 = vld [vmem:[%s10011 + $0x70] sm:$0xf]
  %v10041 = vld [vmem:[%s10011 + $0x74] sm:$0xf]
  %v10042 = vld [vmem:[%s10011 + $0x78] sm:$0xf]
  %v10043 = vld [vmem:[%s10011 + $0x7c] sm:$0xf]
  %v10076 = vunpack.c.l.b16 %v10012
  %v10077 = vunpack.c.l.b16 %v10013
  %v10078 = vunpack.c.l.b16 %v10014
  %v10079 = vunpack.c.l.b16 %v10015
  %v10080 = vunpack.c.l.b16 %v10016
  %v10081 = vunpack.c.l.b16 %v10017
  %v10082 = vunpack.c.l.b16 %v10018
  %v10083 = vunpack.c.l.b16 %v10019
  %v10084 = vunpack.c.l.b16 %v10020
  %v10085 = vunpack.c.l.b16 %v10021
  %v10086 = vunpack.c.l.b16 %v10022
  %v10087 = vunpack.c.l.b16 %v10023
  %v10088 = vunpack.c.l.b16 %v10024
  %v10089 = vunpack.c.l.b16 %v10025
  %v10090 = vunpack.c.l.b16 %v10026
  %v10091 = vunpack.c.l.b16 %v10027
  %v10092 = vunpack.c.l.b16 %v10028
  %v10093 = vunpack.c.l.b16 %v10029
  %v10094 = vunpack.c.l.b16 %v10030
  %v10095 = vunpack.c.l.b16 %v10031
  %v10096 = vunpack.c.l.b16 %v10032
  %v10097 = vunpack.c.l.b16 %v10033
  %v10098 = vunpack.c.l.b16 %v10034
  %v10099 = vunpack.c.l.b16 %v10035
  %v10100 = vunpack.c.l.b16 %v10036
  %v10101 = vunpack.c.l.b16 %v10037
  %v10102 = vunpack.c.l.b16 %v10038
  %v10103 = vunpack.c.l.b16 %v10039
  %v10104 = vunpack.c.l.b16 %v10040
  %v10105 = vunpack.c.l.b16 %v10041
  %v10106 = vunpack.c.l.b16 %v10042
  %v10107 = vunpack.c.l.b16 %v10043
  %v10108 = vpack.c.b16 %v10077, %v10076
  %v10109 = vpack.c.b16 %v10079, %v10078
  %v10110 = vpack.c.b16 %v10081, %v10080
  %v10111 = vpack.c.b16 %v10083, %v10082
  %v10112 = vpack.c.b16 %v10085, %v10084
  %v10113 = vpack.c.b16 %v10087, %v10086
  %v10114 = vpack.c.b16 %v10089, %v10088
  %v10115 = vpack.c.b16 %v10091, %v10090
  %v10116 = vpack.c.b16 %v10093, %v10092
  %v10117 = vpack.c.b16 %v10095, %v10094
  %v10118 = vpack.c.b16 %v10097, %v10096
  %v10119 = vpack.c.b16 %v10099, %v10098
  %v10120 = vpack.c.b16 %v10101, %v10100
  %v10121 = vpack.c.b16 %v10103, %v10102
  %v10122 = vpack.c.b16 %v10105, %v10104
  %v10123 = vpack.c.b16 %v10107, %v10106
  %10140 = vmatpush.bf16.msra.mxu0 %v10115
  %10141 = vmatpush.bf16.msra.mxu0 %v10114
  %10142 = vmatpush.bf16.msra.mxu0 %v10113
  %10143 = vmatpush.bf16.msra.mxu0 %v10112
  %10144 = vmatpush.bf16.msra.mxu0 %v10111
  %10145 = vmatpush.bf16.msra.mxu0 %v10110
  %10146 = vmatpush.bf16.msra.mxu0 %v10109
  %10147 = vmatpush.bf16.msra.mxu0 %v10108
  %10148 = vmatmul.bf16.gmra.mxu0 %v10009
  %v10149 = vpop.f32.mrf.mxu0
  %v10150 = vadd.f32 0.0, %v10149
  %v10151 = vpop.f32.mrf.mxu0
  %v10152 = vadd.f32 0.0, %v10151
  %10153 = vdwg.mxu0
  %10154 = vmatpush.bf16.msra.mxu0 %v10123
  %10155 = vmatpush.bf16.msra.mxu0 %v10122
  %10156 = vmatpush.bf16.msra.mxu0 %v10121
  %10157 = vmatpush.bf16.msra.mxu0 %v10120
  %10158 = vmatpush.bf16.msra.mxu0 %v10119
  %10159 = vmatpush.bf16.msra.mxu0 %v10118
  %10160 = vmatpush.bf16.msra.mxu0 %v10117
  %10161 = vmatpush.bf16.msra.mxu0 %v10116
  %10162 = vmatmul.bf16.gmra.mxu0 %v10010
  %v10163 = vpop.f32.mrf.mxu0
  %v10164 = vadd.f32 %v10150, %v10163
  %v10165 = vpop.f32.mrf.mxu0
  %v10166 = vadd.f32 %v10152, %v10165
  %10167 = vdwg.mxu0
  %v10168 = vadd.f32 %v9987, %v10164
  %v10169 = vadd.f32 %v9988, %v10166
  %v10170 = vmax.f32 %v6572, %v6577
  %v10171 = vmax.f32 %v7520, %v7525
  %v10172 = vmax.f32 %v8468, %v8473
  %v10173 = vmax.f32 %v9416, %v9421
  %v10174 = vmax.f32 %v6574, %v6579
  %v10175 = vmax.f32 %v7522, %v7527
  %v10176 = vmax.f32 %v8470, %v8475
  %v10177 = vmax.f32 %v9418, %v9423
  %v10178 = vmax.f32 %v10170, %v10172
  %v10179 = vmax.f32 %v10171, %v10173
  %v10180 = vmax.f32 %v10174, %v10176
  %v10181 = vmax.f32 %v10175, %v10177
  %v10182 = vadd.f32 %v10178, %v9459
  %v10183 = vadd.f32 %v10179, %v9460
  %v10184 = vadd.f32 %v10180, %v9459
  %v10185 = vadd.f32 %v10181, %v9460
  %v10186 = vmax.f32 %v10182, 0.0
  %v10187 = vmax.f32 %v10183, 0.0
  %v10188 = vmax.f32 %v10184, 0.0
  %v10189 = vmax.f32 %v10185, 0.0
  %v10190 = vpack.c.bf16 %v10188, %v10186
  %v10191 = vpack.c.bf16 %v10189, %v10187
  %s10192 = scalar_lea.vmem %s5, 512
  %v10193 = vld [vmem:[%s10192] sm:$0xf]
  %v10194 = vld [vmem:[%s10192 + $0x4] sm:$0xf]
  %v10195 = vld [vmem:[%s10192 + $0x8] sm:$0xf]
  %v10196 = vld [vmem:[%s10192 + $0xc] sm:$0xf]
  %v10197 = vld [vmem:[%s10192 + $0x10] sm:$0xf]
  %v10198 = vld [vmem:[%s10192 + $0x14] sm:$0xf]
  %v10199 = vld [vmem:[%s10192 + $0x18] sm:$0xf]
  %v10200 = vld [vmem:[%s10192 + $0x1c] sm:$0xf]
  %v10201 = vld [vmem:[%s10192 + $0x20] sm:$0xf]
  %v10202 = vld [vmem:[%s10192 + $0x24] sm:$0xf]
  %v10203 = vld [vmem:[%s10192 + $0x28] sm:$0xf]
  %v10204 = vld [vmem:[%s10192 + $0x2c] sm:$0xf]
  %v10205 = vld [vmem:[%s10192 + $0x30] sm:$0xf]
  %v10206 = vld [vmem:[%s10192 + $0x34] sm:$0xf]
  %v10207 = vld [vmem:[%s10192 + $0x38] sm:$0xf]
  %v10208 = vld [vmem:[%s10192 + $0x3c] sm:$0xf]
  %v10209 = vld [vmem:[%s10192 + $0x40] sm:$0xf]
  %v10210 = vld [vmem:[%s10192 + $0x44] sm:$0xf]
  %v10211 = vld [vmem:[%s10192 + $0x48] sm:$0xf]
  %v10212 = vld [vmem:[%s10192 + $0x4c] sm:$0xf]
  %v10213 = vld [vmem:[%s10192 + $0x50] sm:$0xf]
  %v10214 = vld [vmem:[%s10192 + $0x54] sm:$0xf]
  %v10215 = vld [vmem:[%s10192 + $0x58] sm:$0xf]
  %v10216 = vld [vmem:[%s10192 + $0x5c] sm:$0xf]
  %v10217 = vld [vmem:[%s10192 + $0x60] sm:$0xf]
  %v10218 = vld [vmem:[%s10192 + $0x64] sm:$0xf]
  %v10219 = vld [vmem:[%s10192 + $0x68] sm:$0xf]
  %v10220 = vld [vmem:[%s10192 + $0x6c] sm:$0xf]
  %v10221 = vld [vmem:[%s10192 + $0x70] sm:$0xf]
  %v10222 = vld [vmem:[%s10192 + $0x74] sm:$0xf]
  %v10223 = vld [vmem:[%s10192 + $0x78] sm:$0xf]
  %v10224 = vld [vmem:[%s10192 + $0x7c] sm:$0xf]
  %v10257 = vunpack.c.l.b16 %v10193
  %v10258 = vunpack.c.l.b16 %v10194
  %v10259 = vunpack.c.l.b16 %v10195
  %v10260 = vunpack.c.l.b16 %v10196
  %v10261 = vunpack.c.l.b16 %v10197
  %v10262 = vunpack.c.l.b16 %v10198
  %v10263 = vunpack.c.l.b16 %v10199
  %v10264 = vunpack.c.l.b16 %v10200
  %v10265 = vunpack.c.l.b16 %v10201
  %v10266 = vunpack.c.l.b16 %v10202
  %v10267 = vunpack.c.l.b16 %v10203
  %v10268 = vunpack.c.l.b16 %v10204
  %v10269 = vunpack.c.l.b16 %v10205
  %v10270 = vunpack.c.l.b16 %v10206
  %v10271 = vunpack.c.l.b16 %v10207
  %v10272 = vunpack.c.l.b16 %v10208
  %v10273 = vunpack.c.l.b16 %v10209
  %v10274 = vunpack.c.l.b16 %v10210
  %v10275 = vunpack.c.l.b16 %v10211
  %v10276 = vunpack.c.l.b16 %v10212
  %v10277 = vunpack.c.l.b16 %v10213
  %v10278 = vunpack.c.l.b16 %v10214
  %v10279 = vunpack.c.l.b16 %v10215
  %v10280 = vunpack.c.l.b16 %v10216
  %v10281 = vunpack.c.l.b16 %v10217
  %v10282 = vunpack.c.l.b16 %v10218
  %v10283 = vunpack.c.l.b16 %v10219
  %v10284 = vunpack.c.l.b16 %v10220
  %v10285 = vunpack.c.l.b16 %v10221
  %v10286 = vunpack.c.l.b16 %v10222
  %v10287 = vunpack.c.l.b16 %v10223
  %v10288 = vunpack.c.l.b16 %v10224
  %v10289 = vpack.c.b16 %v10258, %v10257
  %v10290 = vpack.c.b16 %v10260, %v10259
  %v10291 = vpack.c.b16 %v10262, %v10261
  %v10292 = vpack.c.b16 %v10264, %v10263
  %v10293 = vpack.c.b16 %v10266, %v10265
  %v10294 = vpack.c.b16 %v10268, %v10267
  %v10295 = vpack.c.b16 %v10270, %v10269
  %v10296 = vpack.c.b16 %v10272, %v10271
  %v10297 = vpack.c.b16 %v10274, %v10273
  %v10298 = vpack.c.b16 %v10276, %v10275
  %v10299 = vpack.c.b16 %v10278, %v10277
  %v10300 = vpack.c.b16 %v10280, %v10279
  %v10301 = vpack.c.b16 %v10282, %v10281
  %v10302 = vpack.c.b16 %v10284, %v10283
  %v10303 = vpack.c.b16 %v10286, %v10285
  %v10304 = vpack.c.b16 %v10288, %v10287
  %10321 = vmatpush.bf16.msra.mxu0 %v10296
  %10322 = vmatpush.bf16.msra.mxu0 %v10295
  %10323 = vmatpush.bf16.msra.mxu0 %v10294
  %10324 = vmatpush.bf16.msra.mxu0 %v10293
  %10325 = vmatpush.bf16.msra.mxu0 %v10292
  %10326 = vmatpush.bf16.msra.mxu0 %v10291
  %10327 = vmatpush.bf16.msra.mxu0 %v10290
  %10328 = vmatpush.bf16.msra.mxu0 %v10289
  %10329 = vmatmul.bf16.gmra.mxu0 %v10190
  %v10330 = vpop.f32.mrf.mxu0
  %v10331 = vadd.f32 0.0, %v10330
  %v10332 = vpop.f32.mrf.mxu0
  %v10333 = vadd.f32 0.0, %v10332
  %10334 = vdwg.mxu0
  %10335 = vmatpush.bf16.msra.mxu0 %v10304
  %10336 = vmatpush.bf16.msra.mxu0 %v10303
  %10337 = vmatpush.bf16.msra.mxu0 %v10302
  %10338 = vmatpush.bf16.msra.mxu0 %v10301
  %10339 = vmatpush.bf16.msra.mxu0 %v10300
  %10340 = vmatpush.bf16.msra.mxu0 %v10299
  %10341 = vmatpush.bf16.msra.mxu0 %v10298
  %10342 = vmatpush.bf16.msra.mxu0 %v10297
  %10343 = vmatmul.bf16.gmra.mxu0 %v10191
  %v10344 = vpop.f32.mrf.mxu0
  %v10345 = vadd.f32 %v10331, %v10344
  %v10346 = vpop.f32.mrf.mxu0
  %v10347 = vadd.f32 %v10333, %v10346
  %10348 = vdwg.mxu0
  %v10349 = vadd.f32 %v10168, %v10345
  %v10350 = vadd.f32 %v10169, %v10347
  %v10351 = vmax.f32 %v6582, %v6587
  %v10352 = vmax.f32 %v7530, %v7535
  %v10353 = vmax.f32 %v8478, %v8483
  %v10354 = vmax.f32 %v9426, %v9431
  %v10355 = vmax.f32 %v6584, %v6589
  %v10356 = vmax.f32 %v7532, %v7537
  %v10357 = vmax.f32 %v8480, %v8485
  %v10358 = vmax.f32 %v9428, %v9433
  %v10359 = vmax.f32 %v10351, %v10353
  %v10360 = vmax.f32 %v10352, %v10354
  %v10361 = vmax.f32 %v10355, %v10357
  %v10362 = vmax.f32 %v10356, %v10358
  %v10363 = vadd.f32 %v10359, %v9459
  %v10364 = vadd.f32 %v10360, %v9460
  %v10365 = vadd.f32 %v10361, %v9459
  %v10366 = vadd.f32 %v10362, %v9460
  %v10367 = vmax.f32 %v10363, 0.0
  %v10368 = vmax.f32 %v10364, 0.0
  %v10369 = vmax.f32 %v10365, 0.0
  %v10370 = vmax.f32 %v10366, 0.0
  %v10371 = vpack.c.bf16 %v10369, %v10367
  %v10372 = vpack.c.bf16 %v10370, %v10368
  %s10373 = scalar_lea.vmem %s5, 640
  %v10374 = vld [vmem:[%s10373] sm:$0xf]
  %v10375 = vld [vmem:[%s10373 + $0x4] sm:$0xf]
  %v10376 = vld [vmem:[%s10373 + $0x8] sm:$0xf]
  %v10377 = vld [vmem:[%s10373 + $0xc] sm:$0xf]
  %v10378 = vld [vmem:[%s10373 + $0x10] sm:$0xf]
  %v10379 = vld [vmem:[%s10373 + $0x14] sm:$0xf]
  %v10380 = vld [vmem:[%s10373 + $0x18] sm:$0xf]
  %v10381 = vld [vmem:[%s10373 + $0x1c] sm:$0xf]
  %v10382 = vld [vmem:[%s10373 + $0x20] sm:$0xf]
  %v10383 = vld [vmem:[%s10373 + $0x24] sm:$0xf]
  %v10384 = vld [vmem:[%s10373 + $0x28] sm:$0xf]
  %v10385 = vld [vmem:[%s10373 + $0x2c] sm:$0xf]
  %v10386 = vld [vmem:[%s10373 + $0x30] sm:$0xf]
  %v10387 = vld [vmem:[%s10373 + $0x34] sm:$0xf]
  %v10388 = vld [vmem:[%s10373 + $0x38] sm:$0xf]
  %v10389 = vld [vmem:[%s10373 + $0x3c] sm:$0xf]
  %v10390 = vld [vmem:[%s10373 + $0x40] sm:$0xf]
  %v10391 = vld [vmem:[%s10373 + $0x44] sm:$0xf]
  %v10392 = vld [vmem:[%s10373 + $0x48] sm:$0xf]
  %v10393 = vld [vmem:[%s10373 + $0x4c] sm:$0xf]
  %v10394 = vld [vmem:[%s10373 + $0x50] sm:$0xf]
  %v10395 = vld [vmem:[%s10373 + $0x54] sm:$0xf]
  %v10396 = vld [vmem:[%s10373 + $0x58] sm:$0xf]
  %v10397 = vld [vmem:[%s10373 + $0x5c] sm:$0xf]
  %v10398 = vld [vmem:[%s10373 + $0x60] sm:$0xf]
  %v10399 = vld [vmem:[%s10373 + $0x64] sm:$0xf]
  %v10400 = vld [vmem:[%s10373 + $0x68] sm:$0xf]
  %v10401 = vld [vmem:[%s10373 + $0x6c] sm:$0xf]
  %v10402 = vld [vmem:[%s10373 + $0x70] sm:$0xf]
  %v10403 = vld [vmem:[%s10373 + $0x74] sm:$0xf]
  %v10404 = vld [vmem:[%s10373 + $0x78] sm:$0xf]
  %v10405 = vld [vmem:[%s10373 + $0x7c] sm:$0xf]
  %v10438 = vunpack.c.l.b16 %v10374
  %v10439 = vunpack.c.l.b16 %v10375
  %v10440 = vunpack.c.l.b16 %v10376
  %v10441 = vunpack.c.l.b16 %v10377
  %v10442 = vunpack.c.l.b16 %v10378
  %v10443 = vunpack.c.l.b16 %v10379
  %v10444 = vunpack.c.l.b16 %v10380
  %v10445 = vunpack.c.l.b16 %v10381
  %v10446 = vunpack.c.l.b16 %v10382
  %v10447 = vunpack.c.l.b16 %v10383
  %v10448 = vunpack.c.l.b16 %v10384
  %v10449 = vunpack.c.l.b16 %v10385
  %v10450 = vunpack.c.l.b16 %v10386
  %v10451 = vunpack.c.l.b16 %v10387
  %v10452 = vunpack.c.l.b16 %v10388
  %v10453 = vunpack.c.l.b16 %v10389
  %v10454 = vunpack.c.l.b16 %v10390
  %v10455 = vunpack.c.l.b16 %v10391
  %v10456 = vunpack.c.l.b16 %v10392
  %v10457 = vunpack.c.l.b16 %v10393
  %v10458 = vunpack.c.l.b16 %v10394
  %v10459 = vunpack.c.l.b16 %v10395
  %v10460 = vunpack.c.l.b16 %v10396
  %v10461 = vunpack.c.l.b16 %v10397
  %v10462 = vunpack.c.l.b16 %v10398
  %v10463 = vunpack.c.l.b16 %v10399
  %v10464 = vunpack.c.l.b16 %v10400
  %v10465 = vunpack.c.l.b16 %v10401
  %v10466 = vunpack.c.l.b16 %v10402
  %v10467 = vunpack.c.l.b16 %v10403
  %v10468 = vunpack.c.l.b16 %v10404
  %v10469 = vunpack.c.l.b16 %v10405
  %v10470 = vpack.c.b16 %v10439, %v10438
  %v10471 = vpack.c.b16 %v10441, %v10440
  %v10472 = vpack.c.b16 %v10443, %v10442
  %v10473 = vpack.c.b16 %v10445, %v10444
  %v10474 = vpack.c.b16 %v10447, %v10446
  %v10475 = vpack.c.b16 %v10449, %v10448
  %v10476 = vpack.c.b16 %v10451, %v10450
  %v10477 = vpack.c.b16 %v10453, %v10452
  %v10478 = vpack.c.b16 %v10455, %v10454
  %v10479 = vpack.c.b16 %v10457, %v10456
  %v10480 = vpack.c.b16 %v10459, %v10458
  %v10481 = vpack.c.b16 %v10461, %v10460
  %v10482 = vpack.c.b16 %v10463, %v10462
  %v10483 = vpack.c.b16 %v10465, %v10464
  %v10484 = vpack.c.b16 %v10467, %v10466
  %v10485 = vpack.c.b16 %v10469, %v10468
  %10502 = vmatpush.bf16.msra.mxu0 %v10477
  %10503 = vmatpush.bf16.msra.mxu0 %v10476
  %10504 = vmatpush.bf16.msra.mxu0 %v10475
  %10505 = vmatpush.bf16.msra.mxu0 %v10474
  %10506 = vmatpush.bf16.msra.mxu0 %v10473
  %10507 = vmatpush.bf16.msra.mxu0 %v10472
  %10508 = vmatpush.bf16.msra.mxu0 %v10471
  %10509 = vmatpush.bf16.msra.mxu0 %v10470
  %10510 = vmatmul.bf16.gmra.mxu0 %v10371
  %v10511 = vpop.f32.mrf.mxu0
  %v10512 = vadd.f32 0.0, %v10511
  %v10513 = vpop.f32.mrf.mxu0
  %v10514 = vadd.f32 0.0, %v10513
  %10515 = vdwg.mxu0
  %10516 = vmatpush.bf16.msra.mxu0 %v10485
  %10517 = vmatpush.bf16.msra.mxu0 %v10484
  %10518 = vmatpush.bf16.msra.mxu0 %v10483
  %10519 = vmatpush.bf16.msra.mxu0 %v10482
  %10520 = vmatpush.bf16.msra.mxu0 %v10481
  %10521 = vmatpush.bf16.msra.mxu0 %v10480
  %10522 = vmatpush.bf16.msra.mxu0 %v10479
  %10523 = vmatpush.bf16.msra.mxu0 %v10478
  %10524 = vmatmul.bf16.gmra.mxu0 %v10372
  %v10525 = vpop.f32.mrf.mxu0
  %v10526 = vadd.f32 %v10512, %v10525
  %v10527 = vpop.f32.mrf.mxu0
  %v10528 = vadd.f32 %v10514, %v10527
  %10529 = vdwg.mxu0
  %v10530 = vadd.f32 %v10349, %v10526
  %v10531 = vadd.f32 %v10350, %v10528
  %v10532 = vmax.f32 %v6592, %v6597
  %v10533 = vmax.f32 %v7540, %v7545
  %v10534 = vmax.f32 %v8488, %v8493
  %v10535 = vmax.f32 %v9436, %v9441
  %v10536 = vmax.f32 %v6594, %v6599
  %v10537 = vmax.f32 %v7542, %v7547
  %v10538 = vmax.f32 %v8490, %v8495
  %v10539 = vmax.f32 %v9438, %v9443
  %v10540 = vmax.f32 %v10532, %v10534
  %v10541 = vmax.f32 %v10533, %v10535
  %v10542 = vmax.f32 %v10536, %v10538
  %v10543 = vmax.f32 %v10537, %v10539
  %v10544 = vadd.f32 %v10540, %v9459
  %v10545 = vadd.f32 %v10541, %v9460
  %v10546 = vadd.f32 %v10542, %v9459
  %v10547 = vadd.f32 %v10543, %v9460
  %v10548 = vmax.f32 %v10544, 0.0
  %v10549 = vmax.f32 %v10545, 0.0
  %v10550 = vmax.f32 %v10546, 0.0
  %v10551 = vmax.f32 %v10547, 0.0
  %v10552 = vpack.c.bf16 %v10550, %v10548
  %v10553 = vpack.c.bf16 %v10551, %v10549
  %s10554 = scalar_lea.vmem %s5, 768
  %v10555 = vld [vmem:[%s10554] sm:$0xf]
  %v10556 = vld [vmem:[%s10554 + $0x4] sm:$0xf]
  %v10557 = vld [vmem:[%s10554 + $0x8] sm:$0xf]
  %v10558 = vld [vmem:[%s10554 + $0xc] sm:$0xf]
  %v10559 = vld [vmem:[%s10554 + $0x10] sm:$0xf]
  %v10560 = vld [vmem:[%s10554 + $0x14] sm:$0xf]
  %v10561 = vld [vmem:[%s10554 + $0x18] sm:$0xf]
  %v10562 = vld [vmem:[%s10554 + $0x1c] sm:$0xf]
  %v10563 = vld [vmem:[%s10554 + $0x20] sm:$0xf]
  %v10564 = vld [vmem:[%s10554 + $0x24] sm:$0xf]
  %v10565 = vld [vmem:[%s10554 + $0x28] sm:$0xf]
  %v10566 = vld [vmem:[%s10554 + $0x2c] sm:$0xf]
  %v10567 = vld [vmem:[%s10554 + $0x30] sm:$0xf]
  %v10568 = vld [vmem:[%s10554 + $0x34] sm:$0xf]
  %v10569 = vld [vmem:[%s10554 + $0x38] sm:$0xf]
  %v10570 = vld [vmem:[%s10554 + $0x3c] sm:$0xf]
  %v10571 = vld [vmem:[%s10554 + $0x40] sm:$0xf]
  %v10572 = vld [vmem:[%s10554 + $0x44] sm:$0xf]
  %v10573 = vld [vmem:[%s10554 + $0x48] sm:$0xf]
  %v10574 = vld [vmem:[%s10554 + $0x4c] sm:$0xf]
  %v10575 = vld [vmem:[%s10554 + $0x50] sm:$0xf]
  %v10576 = vld [vmem:[%s10554 + $0x54] sm:$0xf]
  %v10577 = vld [vmem:[%s10554 + $0x58] sm:$0xf]
  %v10578 = vld [vmem:[%s10554 + $0x5c] sm:$0xf]
  %v10579 = vld [vmem:[%s10554 + $0x60] sm:$0xf]
  %v10580 = vld [vmem:[%s10554 + $0x64] sm:$0xf]
  %v10581 = vld [vmem:[%s10554 + $0x68] sm:$0xf]
  %v10582 = vld [vmem:[%s10554 + $0x6c] sm:$0xf]
  %v10583 = vld [vmem:[%s10554 + $0x70] sm:$0xf]
  %v10584 = vld [vmem:[%s10554 + $0x74] sm:$0xf]
  %v10585 = vld [vmem:[%s10554 + $0x78] sm:$0xf]
  %v10586 = vld [vmem:[%s10554 + $0x7c] sm:$0xf]
  %v10619 = vunpack.c.l.b16 %v10555
  %v10620 = vunpack.c.l.b16 %v10556
  %v10621 = vunpack.c.l.b16 %v10557
  %v10622 = vunpack.c.l.b16 %v10558
  %v10623 = vunpack.c.l.b16 %v10559
  %v10624 = vunpack.c.l.b16 %v10560
  %v10625 = vunpack.c.l.b16 %v10561
  %v10626 = vunpack.c.l.b16 %v10562
  %v10627 = vunpack.c.l.b16 %v10563
  %v10628 = vunpack.c.l.b16 %v10564
  %v10629 = vunpack.c.l.b16 %v10565
  %v10630 = vunpack.c.l.b16 %v10566
  %v10631 = vunpack.c.l.b16 %v10567
  %v10632 = vunpack.c.l.b16 %v10568
  %v10633 = vunpack.c.l.b16 %v10569
  %v10634 = vunpack.c.l.b16 %v10570
  %v10635 = vunpack.c.l.b16 %v10571
  %v10636 = vunpack.c.l.b16 %v10572
  %v10637 = vunpack.c.l.b16 %v10573
  %v10638 = vunpack.c.l.b16 %v10574
  %v10639 = vunpack.c.l.b16 %v10575
  %v10640 = vunpack.c.l.b16 %v10576
  %v10641 = vunpack.c.l.b16 %v10577
  %v10642 = vunpack.c.l.b16 %v10578
  %v10643 = vunpack.c.l.b16 %v10579
  %v10644 = vunpack.c.l.b16 %v10580
  %v10645 = vunpack.c.l.b16 %v10581
  %v10646 = vunpack.c.l.b16 %v10582
  %v10647 = vunpack.c.l.b16 %v10583
  %v10648 = vunpack.c.l.b16 %v10584
  %v10649 = vunpack.c.l.b16 %v10585
  %v10650 = vunpack.c.l.b16 %v10586
  %v10651 = vpack.c.b16 %v10620, %v10619
  %v10652 = vpack.c.b16 %v10622, %v10621
  %v10653 = vpack.c.b16 %v10624, %v10623
  %v10654 = vpack.c.b16 %v10626, %v10625
  %v10655 = vpack.c.b16 %v10628, %v10627
  %v10656 = vpack.c.b16 %v10630, %v10629
  %v10657 = vpack.c.b16 %v10632, %v10631
  %v10658 = vpack.c.b16 %v10634, %v10633
  %v10659 = vpack.c.b16 %v10636, %v10635
  %v10660 = vpack.c.b16 %v10638, %v10637
  %v10661 = vpack.c.b16 %v10640, %v10639
  %v10662 = vpack.c.b16 %v10642, %v10641
  %v10663 = vpack.c.b16 %v10644, %v10643
  %v10664 = vpack.c.b16 %v10646, %v10645
  %v10665 = vpack.c.b16 %v10648, %v10647
  %v10666 = vpack.c.b16 %v10650, %v10649
  %10683 = vmatpush.bf16.msra.mxu0 %v10658
  %10684 = vmatpush.bf16.msra.mxu0 %v10657
  %10685 = vmatpush.bf16.msra.mxu0 %v10656
  %10686 = vmatpush.bf16.msra.mxu0 %v10655
  %10687 = vmatpush.bf16.msra.mxu0 %v10654
  %10688 = vmatpush.bf16.msra.mxu0 %v10653
  %10689 = vmatpush.bf16.msra.mxu0 %v10652
  %10690 = vmatpush.bf16.msra.mxu0 %v10651
  %10691 = vmatmul.bf16.gmra.mxu0 %v10552
  %v10692 = vpop.f32.mrf.mxu0
  %v10693 = vadd.f32 0.0, %v10692
  %v10694 = vpop.f32.mrf.mxu0
  %v10695 = vadd.f32 0.0, %v10694
  %10696 = vdwg.mxu0
  %10697 = vmatpush.bf16.msra.mxu0 %v10666
  %10698 = vmatpush.bf16.msra.mxu0 %v10665
  %10699 = vmatpush.bf16.msra.mxu0 %v10664
  %10700 = vmatpush.bf16.msra.mxu0 %v10663
  %10701 = vmatpush.bf16.msra.mxu0 %v10662
  %10702 = vmatpush.bf16.msra.mxu0 %v10661
  %10703 = vmatpush.bf16.msra.mxu0 %v10660
  %10704 = vmatpush.bf16.msra.mxu0 %v10659
  %10705 = vmatmul.bf16.gmra.mxu0 %v10553
  %v10706 = vpop.f32.mrf.mxu0
  %v10707 = vadd.f32 %v10693, %v10706
  %v10708 = vpop.f32.mrf.mxu0
  %v10709 = vadd.f32 %v10695, %v10708
  %10710 = vdwg.mxu0
  %v10711 = vadd.f32 %v10530, %v10707
  %v10712 = vadd.f32 %v10531, %v10709
  %v10713 = vld [vmem:[%s6] sm:$0x1]
  %v10715 = vperm.slane %v10713, 0
  %v10717 = vadd.f32 %v10711, %v10715
  %v10718 = vadd.f32 %v10712, %v10715
  %10719 = vst [vmem:[%s7] sm:$0xff] %v10717
  %10720 = vst [vmem:[%s7 + $0x8] sm:$0xff] %v10718
  // Predicated region
  $region30: #{my_cnn_forward.1} parent=0 // pred_check
    _
  $region31: #{my_cnn_forward.1} parent=0 // pred_check_branch
    %10722 = sbr.rel (0) target = $region33
  $region32: #{my_cnn_forward.1} parent=0 // pred_region
    _
  $region33: #{my_cnn_forward.1} parent=0 // pred_fallthru
    _
  // Predicated region
  $region34: #{my_cnn_forward.1} parent=0 // pred_check
    _
  $region35: #{my_cnn_forward.1} parent=0 // pred_check_branch
    %10724 = sbr.rel (0) target = $region37
  $region36: #{my_cnn_forward.1} parent=0 // pred_region
    _
  $region37: #{my_cnn_forward.1} parent=0 // pred_fallthru
    _

</llo_original>
